<compile_context>
chip_gen: v7x
topology: tpu7x:2x2x1
jax: 0.10.0
libtpu: 0.0.40
codegen_flags: <defaults>
</compile_context>

<pallas_src>
import jax
import jax.numpy as jnp
from jax import lax
from jax.experimental import pallas as pl
from jax.experimental.pallas import tpu as pltpu

K = 96        # channel count fixed by the module (k = 96)
CPAD = 128    # channel count padded to a full vreg lane width


# ---------------------------------------------------------------------------
# Fused kernel: 3 x (conv3x3 + folded BN + ReLU) + 1x1 head for one row tile.
# ---------------------------------------------------------------------------
def _make_score_kernel(h_true, w_true, th, w, cp, dy_packed):
    cp3 = 3 * cp

    def kernel(x_ref, w_ref, s_ref, b_ref, wh_ref, bh_ref, o_ref, slab):
        # x_ref : (1, th+6, w+2, cp) bf16   input row window (3-row / 1-col halo)
        # w_ref : (3, 3*cp, 3*cp)    bf16   [layer, dx*cp + cin, dy*cp + cout]
        # s_ref : (3, cp) f32 folded-BN scale     b_ref : (3, cp) f32 bias
        # wh_ref: (1, cp) f32 1x1 head weights    bh_ref: (1, 1) f32 head bias
        # o_ref : (1, th, w) f32 score tile
        # slab  : (th+6, w, 3*cp) bf16  dx-expanded activations (reused per layer)
        t = pl.program_id(1)

        # ---- layer-1 slab: 3 column-shifted copies of the input window.
        # (the zero W-halo / padded columns of the input give the conv padding)
        for dx in range(3):
            slab[:, :, dx * cp:(dx + 1) * cp] = x_ref[0, :, dx:dx + w, :]

        def conv_bn_relu(layer, rows_out):
            """3x3 conv + folded BN + ReLU over slab rows [0, rows_out + 2)."""
            rows_in = rows_out + 2
            n_in, n_out = rows_in * w, rows_out * w
            flat = slab[0:rows_in, :, :].reshape(n_in, cp3)          # bf16
            if dy_packed:
                # One (K=384, N=384) matmul; combine the 3 dy column groups
                # with w-aligned row-shifted adds (v6e/v7x: 256-wide MXU).
                p = jnp.dot(flat, w_ref[layer],
                            preferred_element_type=jnp.float32)
                acc = (p[0:n_out, 0:cp]
                       + p[w:w + n_out, cp:2 * cp]
                       + p[2 * w:2 * w + n_out, 2 * cp:3 * cp])
            else:
                # v5e (128-wide MXU): 3 per-dy (K=384, N=128) matmuls.
                acc = None
                for dy in range(3):
                    part = jnp.dot(flat[dy * w:dy * w + n_out, :],
                                   w_ref[layer, :, dy * cp:(dy + 1) * cp],
                                   preferred_element_type=jnp.float32)
                    acc = part if acc is None else acc + part
            y = jnp.maximum(acc * s_ref[layer] + b_ref[layer], 0.0)
            return y.reshape(rows_out, w, cp)                        # f32

        def store_next_slab(y, rows_out, row_off):
            """Mask out-of-image rows/cols, cast to bf16 and scatter the
            activation into the slab as the next layer's dx-expanded input."""
            j = lax.broadcasted_iota(jnp.int32, (rows_out, 1, 1), 0)
            g = t * th + row_off + j
            ok = jnp.logical_and(g >= 0, g < h_true)
            if w != w_true:                      # static: zero padded columns
                cj = lax.broadcasted_iota(jnp.int32, (1, w, 1), 1)
                ok = jnp.logical_and(ok, cj < w_true)
            yb = jnp.where(ok, y, 0.0).astype(jnp.bfloat16)
            zcol = jnp.zeros((rows_out, 1, cp), jnp.bfloat16)
            r = slice(0, rows_out)
            slab[r, :, cp:2 * cp] = yb                               # dx = 1
            slab[r, 1:w, 0:cp] = yb[:, 0:w - 1, :]                   # dx = 0
            slab[r, 0:1, 0:cp] = zcol                                # left halo
            slab[r, 0:w - 1, 2 * cp:3 * cp] = yb[:, 1:w, :]          # dx = 2
            slab[r, w - 1:w, 2 * cp:3 * cp] = zcol                   # right halo

        # Layer 1: global output rows [t*th - 2, t*th + th + 2).
        store_next_slab(conv_bn_relu(0, th + 4), th + 4, -2)
        # Layer 2: global output rows [t*th - 1, t*th + th + 1).
        store_next_slab(conv_bn_relu(1, th + 2), th + 2, -1)
        # Layer 3 + fused 1x1 head: global output rows [t*th, t*th + th).
        y3 = conv_bn_relu(2, th)                                     # f32
        score = jnp.sum(y3 * wh_ref[0], axis=-1) + bh_ref[0, 0]
        o_ref[...] = score[None]

    return kernel


# ---------------------------------------------------------------------------
# Generation-aware planning (dy-packing, VMEM budget, tile height)
# ---------------------------------------------------------------------------
def _tpu_plan():
    """Return (dy_packed, vmem_budget_bytes, vmem_limit_bytes, device_kind)."""
    try:
        kind = jax.devices()[0].device_kind.lower()
    except Exception:
        kind = ""
    if "v7" in kind:     # 64 MiB VMEM, 256-wide MXU, 2 TensorCores
        return True, 40 << 20, 50 << 20, kind
    if "v6" in kind:     # 128 MiB VMEM, 256-wide MXU
        return True, 80 << 20, 100 << 20, kind
    if "v5" in kind:     # 128 MiB VMEM, 128-wide MXU -> per-dy matmuls
        return False, 80 << 20, 100 << 20, kind
    return False, 24 << 20, 32 << 20, kind          # unknown: conservative


def _estimate_vmem(th, w, cp, dy_packed):
    rows_in = th + 6
    b = 2 * rows_in * (w + 2) * cp * 2          # double-buffered bf16 input block
    b += rows_in * w * 3 * cp * 2               # bf16 dx-expanded slab (scratch)
    b += (th + 4) * w * cp * (4 + 2)            # f32 activation value + bf16 copy
    if dy_packed:
        b += rows_in * w * 3 * cp * 4           # f32 dy-packed matmul product
    b += 2 * 3 * (3 * cp) * (3 * cp) * 2        # double-buffered weights
    b += 2 * th * w * 4                         # double-buffered output block
    b += 2 << 20                                # scalars / headroom
    return b


def _pick_tile_h(h, w, cp, dy_packed, budget):
    if h <= 8:
        return h
    cap = min(64, ((h + 7) // 8) * 8)
    th = 8
    for cand in range(8, cap + 1, 8):
        if _estimate_vmem(cand, w, cp, dy_packed) <= budget:
            th = cand
    return h if th >= h else th


# ---------------------------------------------------------------------------
# Pallas wrapper: ScoreModule forward (NCHW in / NCHW out, like PyTorch)
# ---------------------------------------------------------------------------
def score_module_forward(x_nchw, params, tile_h=None):
    n, c, h, w_true = x_nchw.shape
    cp = CPAD
    dy_packed, budget, vmem_limit, kind = _tpu_plan()
    w = ((w_true + 7) // 8) * 8                 # pad W to a sublane multiple

    if tile_h is None:
        th = _pick_tile_h(h, w, cp, dy_packed, budget)
        # v7x has two TensorCores: make sure the parallel grid has >= 2 steps.
        if "v7" in kind and n * ((h + th - 1) // th) < 2 and h > 8:
            th = max(8, (th // 2) // 8 * 8)
    else:
        th = tile_h
    if th >= h:
        th, n_tiles = h, 1
    else:
        th = max(8, th // 8 * 8)                # multiple of 8 when tiling rows
        n_tiles = (h + th - 1) // th
    h_pad = n_tiles * th

    # NCHW -> NHWC, bf16, pad channels to 128 and add the conv halo
    # (3 rows top/bottom for 3 fused layers, 1 column each side) plus the
    # tile / sublane padding, all in one host-side pad.
    x = jnp.transpose(x_nchw, (0, 2, 3, 1)).astype(jnp.bfloat16)
    xp = jnp.pad(x, ((0, 0), (3, 3 + h_pad - h), (1, 1 + w - w_true),
                     (0, cp - c)))

    if n_tiles == 1:
        x_tiles = xp                            # (n, th+6, w+2, cp), no copy
    else:
        # Overlapping (th+6)-row windows; one restructuring copy for the whole
        # fused network (intermediates never touch HBM).
        x_tiles = jnp.stack(
            [xp[:, t * th:t * th + th + 6] for t in range(n_tiles)],
            axis=1).reshape(n * n_tiles, th + 6, w + 2, cp)

    kernel = _make_score_kernel(h, w_true, th, w, cp, dy_packed)
    out = pl.pallas_call(
        kernel,
        out_shape=jax.ShapeDtypeStruct((n, h_pad, w), jnp.float32),
        grid_spec=pltpu.PrefetchScalarGridSpec(
            num_scalar_prefetch=0,
            grid=(n, n_tiles),
            in_specs=[
                pl.BlockSpec((1, th + 6, w + 2, cp),
                             lambda i, t: (i * n_tiles + t, 0, 0, 0)),
                # grid-invariant operands (constant index maps -> no re-fetch)
                pl.BlockSpec((3, 3 * cp, 3 * cp), lambda i, t: (0, 0, 0)),
                pl.BlockSpec((3, cp), lambda i, t: (0, 0)),
                pl.BlockSpec((3, cp), lambda i, t: (0, 0)),
                pl.BlockSpec((1, cp), lambda i, t: (0, 0)),
                pl.BlockSpec((1, 1), lambda i, t: (0, 0)),
            ],
            out_specs=pl.BlockSpec((1, th, w), lambda i, t: (i, t, 0)),
            scratch_shapes=[
                pltpu.VMEM((th + 6, w, 3 * cp), jnp.bfloat16),   # dx-expanded slab
            ]),
        compiler_params=pltpu.CompilerParams(
            dimension_semantics=("parallel", "parallel"),
            vmem_limit_bytes=vmem_limit),
    )(x_tiles, params["w_all"], params["s_all"], params["b_all"],
      params["wh"], params["bh"])

    return out[:, None, :h, :w_true]            # (N, 1, H, W)


# ---------------------------------------------------------------------------
# Parameter construction (deterministic, synthetic, BN folded + channel-padded)
# ---------------------------------------------------------------------------
def make_params():
    key = jax.random.PRNGKey(42)
    w_list, s_list, b_list = [], [], []
    for _ in range(3):
        key, k0, k1, k2, k3, k4, k5 = jax.random.split(key, 7)
        wgt = jax.random.normal(k0, (3, 3, K, K), jnp.float32) * 0.05   # (dy,dx,ci,co)
        cb = jax.random.normal(k1, (K,), jnp.float32) * 0.05            # conv bias
        gamma = 1.0 + 0.1 * jax.random.normal(k2, (K,), jnp.float32)
        beta = 0.1 * jax.random.normal(k3, (K,), jnp.float32)
        mean = 0.1 * jax.random.normal(k4, (K,), jnp.float32)
        var = jnp.abs(jax.random.normal(k5, (K,), jnp.float32)) * 0.1 + 0.9
        scale = gamma / jnp.sqrt(var + 1e-5)
        bias = (cb - mean) * scale + beta
        # pad channels 96 -> 128 with zeros; padded lanes stay exactly zero.
        wp = jnp.zeros((3, 3, CPAD, CPAD), jnp.float32).at[:, :, :K, :K].set(wgt)
        # pack: rows = dx*cp + cin (matmul K dim), cols = dy*cp + cout (dy-packed N)
        wcat = jnp.transpose(wp, (1, 2, 0, 3)).reshape(3 * CPAD, 3 * CPAD)
        w_list.append(wcat)
        s_list.append(jnp.pad(scale, (0, CPAD - K)))
        b_list.append(jnp.pad(bias, (0, CPAD - K)))
    key, k0, k1 = jax.random.split(key, 3)
    wh = jax.random.normal(k0, (K,), jnp.float32) * 0.05
    bh = jax.random.normal(k1, (1,), jnp.float32) * 0.05
    return dict(
        w_all=jnp.stack(w_list).astype(jnp.bfloat16),           # (3, 384, 384)
        s_all=jnp.stack(s_list).astype(jnp.float32),            # (3, 128)
        b_all=jnp.stack(b_list).astype(jnp.float32),            # (3, 128)
        wh=jnp.pad(wh, (0, CPAD - K)).reshape(1, CPAD).astype(jnp.float32),
        bh=bh.reshape(1, 1).astype(jnp.float32),
    )


# ---------------------------------------------------------------------------
# Pure-JAX reference (same bf16 numerics) for the correctness check
# ---------------------------------------------------------------------------
def score_module_reference(x_nchw, params):
    n, c, h, w = x_nchw.shape
    cp = CPAD
    x = jnp.transpose(x_nchw, (0, 2, 3, 1))
    x = jnp.pad(x, ((0, 0), (0, 0), (0, 0), (0, cp - c))).astype(jnp.bfloat16)
    dn = ("NHWC", "HWIO", "NHWC")
    for l in range(3):
        # (dx*cp+ci, dy*cp+co) -> HWIO (dy, dx, ci, co)
        wl = params["w_all"][l].reshape(3, cp, 3, cp).transpose(2, 0, 1, 3)
        y = lax.conv_general_dilated(
            x, wl, (1, 1), "SAME", dimension_numbers=dn,
            preferred_element_type=jnp.float32)
        y = jnp.maximum(y * params["s_all"][l] + params["b_all"][l], 0.0)
        x = y.astype(jnp.bfloat16) if l < 2 else y              # keep f32 for head
    score = jnp.sum(x * params["wh"][0], axis=-1) + params["bh"][0, 0]
    return score[:, None, :, :]                                 # (N, 1, H, W)


if __name__ == "__main__":
    N, H, W = 2, 16, 16
    x = jax.random.normal(jax.random.PRNGKey(0), (N, K, H, W), jnp.float32)

    params = make_params()

    out = jax.block_until_ready(score_module_forward(x, params))
    assert out.shape == (N, 1, H, W), out.shape

    ref = jax.block_until_ready(score_module_reference(x, params))
    max_err = float(jnp.max(jnp.abs(out - ref)))
    if not jnp.allclose(out, ref, rtol=1e-2, atol=1e-2):
        raise AssertionError(
            f"Pallas output does not match JAX reference (max abs err {max_err})")

    print("KERNEL_OK")
</pallas_src>

<mosaic_0001>
module attributes {stable_mosaic.version = 11 : i64} {
  func.func @kernel(%arg0: i32, %arg1: i32, %arg2: memref<1x22x18x128xbf16, #tpu.memory_space<vmem>>, %arg3: memref<3x384x384xbf16, #tpu.memory_space<vmem>>, %arg4: memref<3x128xf32, #tpu.memory_space<vmem>>, %arg5: memref<3x128xf32, #tpu.memory_space<vmem>>, %arg6: memref<1x128xf32, #tpu.memory_space<vmem>>, %arg7: memref<1x1xf32, #tpu.memory_space<vmem>>, %arg8: memref<1x16x16xf32, #tpu.memory_space<vmem>>, %arg9: memref<22x16x384xbf16, #tpu.memory_space<vmem>>) attributes {dimension_semantics = [#tpu.dimension_semantics<parallel>, #tpu.dimension_semantics<parallel>], iteration_bounds = array<i64: 2, 1>, scalar_prefetch = 0 : i64, scratch_operands = 1 : i64, tpu.core_type = #tpu.core_type<tc>, window_params = [{transform_indices = @transform_0, window_bounds = array<i64: 1, 22, 18, 128>}, {pipeline_mode = #tpu.pipeline_mode<synchronous>, transform_indices = @transform_1, window_bounds = array<i64: 3, 384, 384>}, {pipeline_mode = #tpu.pipeline_mode<synchronous>, transform_indices = @transform_2, window_bounds = array<i64: 3, 128>}, {pipeline_mode = #tpu.pipeline_mode<synchronous>, transform_indices = @transform_3, window_bounds = array<i64: 3, 128>}, {pipeline_mode = #tpu.pipeline_mode<synchronous>, transform_indices = @transform_4, window_bounds = array<i64: 1, 128>}, {pipeline_mode = #tpu.pipeline_mode<synchronous>, transform_indices = @transform_5, window_bounds = array<i64: 1, 1>}, {transform_indices = @transform_6, window_bounds = array<i64: 1, 16, 16>}]} {
    %c0 = arith.constant 0 : index
    %c0_0 = arith.constant 0 : index
    %c0_1 = arith.constant 0 : index
    %c0_2 = arith.constant 0 : index
    %0 = vector.load %arg2[%c0, %c0_0, %c0_1, %c0_2] : memref<1x22x18x128xbf16, #tpu.memory_space<vmem>>, vector<1x22x16x128xbf16>
    %1 = vector.shape_cast %0 : vector<1x22x16x128xbf16> to vector<22x16x128xbf16>
    %c0_3 = arith.constant 0 : index
    %c0_4 = arith.constant 0 : index
    %c0_5 = arith.constant 0 : index
    %2 = vector.load %arg9[%c0_3, %c0_4, %c0_5] : memref<22x16x384xbf16, #tpu.memory_space<vmem>>, vector<22x16x128xbf16>
    tpu.vector_store %arg9[%c0_3, %c0_4, %c0_5], %1 {strides = array<i32>} : memref<22x16x384xbf16, #tpu.memory_space<vmem>>, vector<22x16x128xbf16>,
    %c0_6 = arith.constant 0 : index
    %c0_7 = arith.constant 0 : index
    %c1 = arith.constant 1 : index
    %c0_8 = arith.constant 0 : index
    %3 = vector.load %arg2[%c0_6, %c0_7, %c1, %c0_8] : memref<1x22x18x128xbf16, #tpu.memory_space<vmem>>, vector<1x22x16x128xbf16>
    %4 = vector.shape_cast %3 : vector<1x22x16x128xbf16> to vector<22x16x128xbf16>
    %c0_9 = arith.constant 0 : index
    %c0_10 = arith.constant 0 : index
    %c128 = arith.constant 128 : index
    %5 = vector.load %arg9[%c0_9, %c0_10, %c128] : memref<22x16x384xbf16, #tpu.memory_space<vmem>>, vector<22x16x128xbf16>
    tpu.vector_store %arg9[%c0_9, %c0_10, %c128], %4 {strides = array<i32>} : memref<22x16x384xbf16, #tpu.memory_space<vmem>>, vector<22x16x128xbf16>,
    %c0_11 = arith.constant 0 : index
    %c0_12 = arith.constant 0 : index
    %c2 = arith.constant 2 : index
    %c0_13 = arith.constant 0 : index
    %6 = vector.load %arg2[%c0_11, %c0_12, %c2, %c0_13] : memref<1x22x18x128xbf16, #tpu.memory_space<vmem>>, vector<1x22x16x128xbf16>
    %7 = vector.shape_cast %6 : vector<1x22x16x128xbf16> to vector<22x16x128xbf16>
    %c0_14 = arith.constant 0 : index
    %c0_15 = arith.constant 0 : index
    %c256 = arith.constant 256 : index
    %8 = vector.load %arg9[%c0_14, %c0_15, %c256] : memref<22x16x384xbf16, #tpu.memory_space<vmem>>, vector<22x16x128xbf16>
    tpu.vector_store %arg9[%c0_14, %c0_15, %c256], %7 {strides = array<i32>} : memref<22x16x384xbf16, #tpu.memory_space<vmem>>, vector<22x16x128xbf16>,
    %c0_16 = arith.constant 0 : index
    %c0_17 = arith.constant 0 : index
    %c0_18 = arith.constant 0 : index
    %9 = vector.load %arg9[%c0_16, %c0_17, %c0_18] : memref<22x16x384xbf16, #tpu.memory_space<vmem>>, vector<22x16x384xbf16>
    %10 = vector.shape_cast %9 : vector<22x16x384xbf16> to vector<352x384xbf16>
    %11 = vector.extract_strided_slice %10 {offsets = [0, 0], sizes = [320, 384], strides = [1, 1]} : vector<352x384xbf16> to vector<320x384xbf16>
    %c0_19 = arith.constant 0 : index
    %c0_20 = arith.constant 0 : index
    %c0_21 = arith.constant 0 : index
    %12 = vector.load %arg3[%c0_19, %c0_20, %c0_21] : memref<3x384x384xbf16, #tpu.memory_space<vmem>>, vector<1x384x128xbf16>
    %13 = vector.shape_cast %12 : vector<1x384x128xbf16> to vector<384x128xbf16>
    %cst = arith.constant dense<0.000000e+00> : vector<320x128xf32>
    %14 = tpu.matmul %11, %13, %cst {dimension_numbers = #tpu.dot_dimension_numbers<[1], [0], [0], [1], [0, 0, 1, 1], [], []>} : vector<320x384xbf16>, vector<384x128xbf16>, vector<320x128xf32> -> vector<320x128xf32>
    %15 = vector.extract_strided_slice %10 {offsets = [16, 0], sizes = [320, 384], strides = [1, 1]} : vector<352x384xbf16> to vector<320x384xbf16>
    %c0_22 = arith.constant 0 : index
    %c0_23 = arith.constant 0 : index
    %c128_24 = arith.constant 128 : index
    %16 = vector.load %arg3[%c0_22, %c0_23, %c128_24] : memref<3x384x384xbf16, #tpu.memory_space<vmem>>, vector<1x384x128xbf16>
    %17 = vector.shape_cast %16 : vector<1x384x128xbf16> to vector<384x128xbf16>
    %cst_25 = arith.constant dense<0.000000e+00> : vector<320x128xf32>
    %18 = tpu.matmul %15, %17, %cst_25 {dimension_numbers = #tpu.dot_dimension_numbers<[1], [0], [0], [1], [0, 0, 1, 1], [], []>} : vector<320x384xbf16>, vector<384x128xbf16>, vector<320x128xf32> -> vector<320x128xf32>
    %19 = arith.addf %14, %18 : vector<320x128xf32>
    %20 = vector.extract_strided_slice %10 {offsets = [32, 0], sizes = [320, 384], strides = [1, 1]} : vector<352x384xbf16> to vector<320x384xbf16>
    %c0_26 = arith.constant 0 : index
    %c0_27 = arith.constant 0 : index
    %c256_28 = arith.constant 256 : index
    %21 = vector.load %arg3[%c0_26, %c0_27, %c256_28] : memref<3x384x384xbf16, #tpu.memory_space<vmem>>, vector<1x384x128xbf16>
    %22 = vector.shape_cast %21 : vector<1x384x128xbf16> to vector<384x128xbf16>
    %cst_29 = arith.constant dense<0.000000e+00> : vector<320x128xf32>
    %23 = tpu.matmul %20, %22, %cst_29 {dimension_numbers = #tpu.dot_dimension_numbers<[1], [0], [0], [1], [0, 0, 1, 1], [], []>} : vector<320x384xbf16>, vector<384x128xbf16>, vector<320x128xf32> -> vector<320x128xf32>
    %24 = arith.addf %19, %23 : vector<320x128xf32>
    %c0_30 = arith.constant 0 : index
    %c0_31 = arith.constant 0 : index
    %25 = vector.load %arg4[%c0_30, %c0_31] : memref<3x128xf32, #tpu.memory_space<vmem>>, vector<1x128xf32>
    %26 = vector.shape_cast %25 : vector<1x128xf32> to vector<128xf32>
    %27 = vector.shape_cast %26 : vector<128xf32> to vector<1x128xf32>
    %28 = vector.broadcast %27 : vector<1x128xf32> to vector<320x128xf32>
    %29 = arith.mulf %24, %28 : vector<320x128xf32>
    %c0_32 = arith.constant 0 : index
    %c0_33 = arith.constant 0 : index
    %30 = vector.load %arg5[%c0_32, %c0_33] : memref<3x128xf32, #tpu.memory_space<vmem>>, vector<1x128xf32>
    %31 = vector.shape_cast %30 : vector<1x128xf32> to vector<128xf32>
    %32 = vector.shape_cast %31 : vector<128xf32> to vector<1x128xf32>
    %33 = vector.broadcast %32 : vector<1x128xf32> to vector<320x128xf32>
    %34 = arith.addf %29, %33 : vector<320x128xf32>
    %cst_34 = arith.constant 0.000000e+00 : f32
    %35 = vector.broadcast %cst_34 : f32 to vector<320x128xf32>
    %36 = arith.maximumf %34, %35 : vector<320x128xf32>
    %37 = vector.shape_cast %36 : vector<320x128xf32> to vector<20x16x128xf32>
    %38 = tpu.iota {dimensions = array<i32: 0>} : vector<20x1x1xi32>
    %c16_i32 = arith.constant 16 : i32
    %39 = arith.muli %arg1, %c16_i32 : i32
    %c-2_i32 = arith.constant -2 : i32
    %40 = arith.addi %39, %c-2_i32 : i32
    %41 = vector.broadcast %40 : i32 to vector<20x1x1xi32>
    %42 = arith.addi %41, %38 : vector<20x1x1xi32>
    %c0_i32 = arith.constant 0 : i32
    %43 = vector.broadcast %c0_i32 : i32 to vector<20x1x1xi32>
    %44 = arith.cmpi sge, %42, %43 : vector<20x1x1xi32>
    %c16_i32_35 = arith.constant 16 : i32
    %45 = vector.broadcast %c16_i32_35 : i32 to vector<20x1x1xi32>
    %46 = arith.cmpi slt, %42, %45 : vector<20x1x1xi32>
    %47 = arith.andi %44, %46 : vector<20x1x1xi1>
    %cst_36 = arith.constant 0.000000e+00 : f32
    %48 = vector.shape_cast %47 : vector<20x1x1xi1> to vector<20x1x1xi1>
    %49 = vector.broadcast %48 : vector<20x1x1xi1> to vector<20x16x128xi1>
    %50 = vector.broadcast %cst_36 : f32 to vector<20x16x128xf32>
    %51 = arith.select %49, %37, %50 : vector<20x16x128xi1>, vector<20x16x128xf32>
    %52 = arith.truncf %51 : vector<20x16x128xf32> to vector<20x16x128xbf16>
    %cst_37 = arith.constant 0.000000e+00 : bf16
    %53 = vector.broadcast %cst_37 : bf16 to vector<20x1x128xbf16>
    %c0_38 = arith.constant 0 : index
    %c0_39 = arith.constant 0 : index
    %c128_40 = arith.constant 128 : index
    %54 = vector.load %arg9[%c0_38, %c0_39, %c128_40] : memref<22x16x384xbf16, #tpu.memory_space<vmem>>, vector<20x16x128xbf16>
    tpu.vector_store %arg9[%c0_38, %c0_39, %c128_40], %52 {strides = array<i32>} : memref<22x16x384xbf16, #tpu.memory_space<vmem>>, vector<20x16x128xbf16>,
    %55 = vector.extract_strided_slice %52 {offsets = [0, 0, 0], sizes = [20, 15, 128], strides = [1, 1, 1]} : vector<20x16x128xbf16> to vector<20x15x128xbf16>
    %c0_41 = arith.constant 0 : index
    %c1_42 = arith.constant 1 : index
    %c0_43 = arith.constant 0 : index
    %56 = vector.load %arg9[%c0_41, %c1_42, %c0_43] : memref<22x16x384xbf16, #tpu.memory_space<vmem>>, vector<20x15x128xbf16>
    tpu.vector_store %arg9[%c0_41, %c1_42, %c0_43], %55 {strides = array<i32>} : memref<22x16x384xbf16, #tpu.memory_space<vmem>>, vector<20x15x128xbf16>,
    %c0_44 = arith.constant 0 : index
    %c0_45 = arith.constant 0 : index
    %c0_46 = arith.constant 0 : index
    %57 = vector.load %arg9[%c0_44, %c0_45, %c0_46] : memref<22x16x384xbf16, #tpu.memory_space<vmem>>, vector<20x1x128xbf16>
    tpu.vector_store %arg9[%c0_44, %c0_45, %c0_46], %53 {strides = array<i32>} : memref<22x16x384xbf16, #tpu.memory_space<vmem>>, vector<20x1x128xbf16>,
    %58 = vector.extract_strided_slice %52 {offsets = [0, 1, 0], sizes = [20, 15, 128], strides = [1, 1, 1]} : vector<20x16x128xbf16> to vector<20x15x128xbf16>
    %c0_47 = arith.constant 0 : index
    %c0_48 = arith.constant 0 : index
    %c256_49 = arith.constant 256 : index
    %59 = vector.load %arg9[%c0_47, %c0_48, %c256_49] : memref<22x16x384xbf16, #tpu.memory_space<vmem>>, vector<20x15x128xbf16>
    tpu.vector_store %arg9[%c0_47, %c0_48, %c256_49], %58 {strides = array<i32>} : memref<22x16x384xbf16, #tpu.memory_space<vmem>>, vector<20x15x128xbf16>,
    %c0_50 = arith.constant 0 : index
    %c15 = arith.constant 15 : index
    %c256_51 = arith.constant 256 : index
    %60 = vector.load %arg9[%c0_50, %c15, %c256_51] : memref<22x16x384xbf16, #tpu.memory_space<vmem>>, vector<20x1x128xbf16>
    tpu.vector_store %arg9[%c0_50, %c15, %c256_51], %53 {strides = array<i32>} : memref<22x16x384xbf16, #tpu.memory_space<vmem>>, vector<20x1x128xbf16>,
    %c0_52 = arith.constant 0 : index
    %c0_53 = arith.constant 0 : index
    %c0_54 = arith.constant 0 : index
    %61 = vector.load %arg9[%c0_52, %c0_53, %c0_54] : memref<22x16x384xbf16, #tpu.memory_space<vmem>>, vector<20x16x384xbf16>
    %62 = vector.shape_cast %61 : vector<20x16x384xbf16> to vector<320x384xbf16>
    %63 = vector.extract_strided_slice %62 {offsets = [0, 0], sizes = [288, 384], strides = [1, 1]} : vector<320x384xbf16> to vector<288x384xbf16>
    %c1_55 = arith.constant 1 : index
    %c0_56 = arith.constant 0 : index
    %c0_57 = arith.constant 0 : index
    %64 = vector.load %arg3[%c1_55, %c0_56, %c0_57] : memref<3x384x384xbf16, #tpu.memory_space<vmem>>, vector<1x384x128xbf16>
    %65 = vector.shape_cast %64 : vector<1x384x128xbf16> to vector<384x128xbf16>
    %cst_58 = arith.constant dense<0.000000e+00> : vector<288x128xf32>
    %66 = tpu.matmul %63, %65, %cst_58 {dimension_numbers = #tpu.dot_dimension_numbers<[1], [0], [0], [1], [0, 0, 1, 1], [], []>} : vector<288x384xbf16>, vector<384x128xbf16>, vector<288x128xf32> -> vector<288x128xf32>
    %67 = vector.extract_strided_slice %62 {offsets = [16, 0], sizes = [288, 384], strides = [1, 1]} : vector<320x384xbf16> to vector<288x384xbf16>
    %c1_59 = arith.constant 1 : index
    %c0_60 = arith.constant 0 : index
    %c128_61 = arith.constant 128 : index
    %68 = vector.load %arg3[%c1_59, %c0_60, %c128_61] : memref<3x384x384xbf16, #tpu.memory_space<vmem>>, vector<1x384x128xbf16>
    %69 = vector.shape_cast %68 : vector<1x384x128xbf16> to vector<384x128xbf16>
    %cst_62 = arith.constant dense<0.000000e+00> : vector<288x128xf32>
    %70 = tpu.matmul %67, %69, %cst_62 {dimension_numbers = #tpu.dot_dimension_numbers<[1], [0], [0], [1], [0, 0, 1, 1], [], []>} : vector<288x384xbf16>, vector<384x128xbf16>, vector<288x128xf32> -> vector<288x128xf32>
    %71 = arith.addf %66, %70 : vector<288x128xf32>
    %72 = vector.extract_strided_slice %62 {offsets = [32, 0], sizes = [288, 384], strides = [1, 1]} : vector<320x384xbf16> to vector<288x384xbf16>
    %c1_63 = arith.constant 1 : index
    %c0_64 = arith.constant 0 : index
    %c256_65 = arith.constant 256 : index
    %73 = vector.load %arg3[%c1_63, %c0_64, %c256_65] : memref<3x384x384xbf16, #tpu.memory_space<vmem>>, vector<1x384x128xbf16>
    %74 = vector.shape_cast %73 : vector<1x384x128xbf16> to vector<384x128xbf16>
    %cst_66 = arith.constant dense<0.000000e+00> : vector<288x128xf32>
    %75 = tpu.matmul %72, %74, %cst_66 {dimension_numbers = #tpu.dot_dimension_numbers<[1], [0], [0], [1], [0, 0, 1, 1], [], []>} : vector<288x384xbf16>, vector<384x128xbf16>, vector<288x128xf32> -> vector<288x128xf32>
    %76 = arith.addf %71, %75 : vector<288x128xf32>
    %c1_67 = arith.constant 1 : index
    %c0_68 = arith.constant 0 : index
    %77 = vector.load %arg4[%c1_67, %c0_68] : memref<3x128xf32, #tpu.memory_space<vmem>>, vector<1x128xf32>
    %78 = vector.shape_cast %77 : vector<1x128xf32> to vector<128xf32>
    %79 = vector.shape_cast %78 : vector<128xf32> to vector<1x128xf32>
    %80 = vector.broadcast %79 : vector<1x128xf32> to vector<288x128xf32>
    %81 = arith.mulf %76, %80 : vector<288x128xf32>
    %c1_69 = arith.constant 1 : index
    %c0_70 = arith.constant 0 : index
    %82 = vector.load %arg5[%c1_69, %c0_70] : memref<3x128xf32, #tpu.memory_space<vmem>>, vector<1x128xf32>
    %83 = vector.shape_cast %82 : vector<1x128xf32> to vector<128xf32>
    %84 = vector.shape_cast %83 : vector<128xf32> to vector<1x128xf32>
    %85 = vector.broadcast %84 : vector<1x128xf32> to vector<288x128xf32>
    %86 = arith.addf %81, %85 : vector<288x128xf32>
    %cst_71 = arith.constant 0.000000e+00 : f32
    %87 = vector.broadcast %cst_71 : f32 to vector<288x128xf32>
    %88 = arith.maximumf %86, %87 : vector<288x128xf32>
    %89 = vector.shape_cast %88 : vector<288x128xf32> to vector<18x16x128xf32>
    %90 = tpu.iota {dimensions = array<i32: 0>} : vector<18x1x1xi32>
    %c16_i32_72 = arith.constant 16 : i32
    %91 = arith.muli %arg1, %c16_i32_72 : i32
    %c-1_i32 = arith.constant -1 : i32
    %92 = arith.addi %91, %c-1_i32 : i32
    %93 = vector.broadcast %92 : i32 to vector<18x1x1xi32>
    %94 = arith.addi %93, %90 : vector<18x1x1xi32>
    %c0_i32_73 = arith.constant 0 : i32
    %95 = vector.broadcast %c0_i32_73 : i32 to vector<18x1x1xi32>
    %96 = arith.cmpi sge, %94, %95 : vector<18x1x1xi32>
    %c16_i32_74 = arith.constant 16 : i32
    %97 = vector.broadcast %c16_i32_74 : i32 to vector<18x1x1xi32>
    %98 = arith.cmpi slt, %94, %97 : vector<18x1x1xi32>
    %99 = arith.andi %96, %98 : vector<18x1x1xi1>
    %cst_75 = arith.constant 0.000000e+00 : f32
    %100 = vector.shape_cast %99 : vector<18x1x1xi1> to vector<18x1x1xi1>
    %101 = vector.broadcast %100 : vector<18x1x1xi1> to vector<18x16x128xi1>
    %102 = vector.broadcast %cst_75 : f32 to vector<18x16x128xf32>
    %103 = arith.select %101, %89, %102 : vector<18x16x128xi1>, vector<18x16x128xf32>
    %104 = arith.truncf %103 : vector<18x16x128xf32> to vector<18x16x128xbf16>
    %cst_76 = arith.constant 0.000000e+00 : bf16
    %105 = vector.broadcast %cst_76 : bf16 to vector<18x1x128xbf16>
    %c0_77 = arith.constant 0 : index
    %c0_78 = arith.constant 0 : index
    %c128_79 = arith.constant 128 : index
    %106 = vector.load %arg9[%c0_77, %c0_78, %c128_79] : memref<22x16x384xbf16, #tpu.memory_space<vmem>>, vector<18x16x128xbf16>
    tpu.vector_store %arg9[%c0_77, %c0_78, %c128_79], %104 {strides = array<i32>} : memref<22x16x384xbf16, #tpu.memory_space<vmem>>, vector<18x16x128xbf16>,
    %107 = vector.extract_strided_slice %104 {offsets = [0, 0, 0], sizes = [18, 15, 128], strides = [1, 1, 1]} : vector<18x16x128xbf16> to vector<18x15x128xbf16>
    %c0_80 = arith.constant 0 : index
    %c1_81 = arith.constant 1 : index
    %c0_82 = arith.constant 0 : index
    %108 = vector.load %arg9[%c0_80, %c1_81, %c0_82] : memref<22x16x384xbf16, #tpu.memory_space<vmem>>, vector<18x15x128xbf16>
    tpu.vector_store %arg9[%c0_80, %c1_81, %c0_82], %107 {strides = array<i32>} : memref<22x16x384xbf16, #tpu.memory_space<vmem>>, vector<18x15x128xbf16>,
    %c0_83 = arith.constant 0 : index
    %c0_84 = arith.constant 0 : index
    %c0_85 = arith.constant 0 : index
    %109 = vector.load %arg9[%c0_83, %c0_84, %c0_85] : memref<22x16x384xbf16, #tpu.memory_space<vmem>>, vector<18x1x128xbf16>
    tpu.vector_store %arg9[%c0_83, %c0_84, %c0_85], %105 {strides = array<i32>} : memref<22x16x384xbf16, #tpu.memory_space<vmem>>, vector<18x1x128xbf16>,
    %110 = vector.extract_strided_slice %104 {offsets = [0, 1, 0], sizes = [18, 15, 128], strides = [1, 1, 1]} : vector<18x16x128xbf16> to vector<18x15x128xbf16>
    %c0_86 = arith.constant 0 : index
    %c0_87 = arith.constant 0 : index
    %c256_88 = arith.constant 256 : index
    %111 = vector.load %arg9[%c0_86, %c0_87, %c256_88] : memref<22x16x384xbf16, #tpu.memory_space<vmem>>, vector<18x15x128xbf16>
    tpu.vector_store %arg9[%c0_86, %c0_87, %c256_88], %110 {strides = array<i32>} : memref<22x16x384xbf16, #tpu.memory_space<vmem>>, vector<18x15x128xbf16>,
    %c0_89 = arith.constant 0 : index
    %c15_90 = arith.constant 15 : index
    %c256_91 = arith.constant 256 : index
    %112 = vector.load %arg9[%c0_89, %c15_90, %c256_91] : memref<22x16x384xbf16, #tpu.memory_space<vmem>>, vector<18x1x128xbf16>
    tpu.vector_store %arg9[%c0_89, %c15_90, %c256_91], %105 {strides = array<i32>} : memref<22x16x384xbf16, #tpu.memory_space<vmem>>, vector<18x1x128xbf16>,
    %c0_92 = arith.constant 0 : index
    %c0_93 = arith.constant 0 : index
    %c0_94 = arith.constant 0 : index
    %113 = vector.load %arg9[%c0_92, %c0_93, %c0_94] : memref<22x16x384xbf16, #tpu.memory_space<vmem>>, vector<18x16x384xbf16>
    %114 = vector.shape_cast %113 : vector<18x16x384xbf16> to vector<288x384xbf16>
    %115 = vector.extract_strided_slice %114 {offsets = [0, 0], sizes = [256, 384], strides = [1, 1]} : vector<288x384xbf16> to vector<256x384xbf16>
    %c2_95 = arith.constant 2 : index
    %c0_96 = arith.constant 0 : index
    %c0_97 = arith.constant 0 : index
    %116 = vector.load %arg3[%c2_95, %c0_96, %c0_97] : memref<3x384x384xbf16, #tpu.memory_space<vmem>>, vector<1x384x128xbf16>
    %117 = vector.shape_cast %116 : vector<1x384x128xbf16> to vector<384x128xbf16>
    %cst_98 = arith.constant dense<0.000000e+00> : vector<256x128xf32>
    %118 = tpu.matmul %115, %117, %cst_98 {dimension_numbers = #tpu.dot_dimension_numbers<[1], [0], [0], [1], [0, 0, 1, 1], [], []>} : vector<256x384xbf16>, vector<384x128xbf16>, vector<256x128xf32> -> vector<256x128xf32>
    %119 = vector.extract_strided_slice %114 {offsets = [16, 0], sizes = [256, 384], strides = [1, 1]} : vector<288x384xbf16> to vector<256x384xbf16>
    %c2_99 = arith.constant 2 : index
    %c0_100 = arith.constant 0 : index
    %c128_101 = arith.constant 128 : index
    %120 = vector.load %arg3[%c2_99, %c0_100, %c128_101] : memref<3x384x384xbf16, #tpu.memory_space<vmem>>, vector<1x384x128xbf16>
    %121 = vector.shape_cast %120 : vector<1x384x128xbf16> to vector<384x128xbf16>
    %cst_102 = arith.constant dense<0.000000e+00> : vector<256x128xf32>
    %122 = tpu.matmul %119, %121, %cst_102 {dimension_numbers = #tpu.dot_dimension_numbers<[1], [0], [0], [1], [0, 0, 1, 1], [], []>} : vector<256x384xbf16>, vector<384x128xbf16>, vector<256x128xf32> -> vector<256x128xf32>
    %123 = arith.addf %118, %122 : vector<256x128xf32>
    %124 = vector.extract_strided_slice %114 {offsets = [32, 0], sizes = [256, 384], strides = [1, 1]} : vector<288x384xbf16> to vector<256x384xbf16>
    %c2_103 = arith.constant 2 : index
    %c0_104 = arith.constant 0 : index
    %c256_105 = arith.constant 256 : index
    %125 = vector.load %arg3[%c2_103, %c0_104, %c256_105] : memref<3x384x384xbf16, #tpu.memory_space<vmem>>, vector<1x384x128xbf16>
    %126 = vector.shape_cast %125 : vector<1x384x128xbf16> to vector<384x128xbf16>
    %cst_106 = arith.constant dense<0.000000e+00> : vector<256x128xf32>
    %127 = tpu.matmul %124, %126, %cst_106 {dimension_numbers = #tpu.dot_dimension_numbers<[1], [0], [0], [1], [0, 0, 1, 1], [], []>} : vector<256x384xbf16>, vector<384x128xbf16>, vector<256x128xf32> -> vector<256x128xf32>
    %128 = arith.addf %123, %127 : vector<256x128xf32>
    %c2_107 = arith.constant 2 : index
    %c0_108 = arith.constant 0 : index
    %129 = vector.load %arg4[%c2_107, %c0_108] : memref<3x128xf32, #tpu.memory_space<vmem>>, vector<1x128xf32>
    %130 = vector.shape_cast %129 : vector<1x128xf32> to vector<128xf32>
    %131 = vector.shape_cast %130 : vector<128xf32> to vector<1x128xf32>
    %132 = vector.broadcast %131 : vector<1x128xf32> to vector<256x128xf32>
    %133 = arith.mulf %128, %132 : vector<256x128xf32>
    %c2_109 = arith.constant 2 : index
    %c0_110 = arith.constant 0 : index
    %134 = vector.load %arg5[%c2_109, %c0_110] : memref<3x128xf32, #tpu.memory_space<vmem>>, vector<1x128xf32>
    %135 = vector.shape_cast %134 : vector<1x128xf32> to vector<128xf32>
    %136 = vector.shape_cast %135 : vector<128xf32> to vector<1x128xf32>
    %137 = vector.broadcast %136 : vector<1x128xf32> to vector<256x128xf32>
    %138 = arith.addf %133, %137 : vector<256x128xf32>
    %cst_111 = arith.constant 0.000000e+00 : f32
    %139 = vector.broadcast %cst_111 : f32 to vector<256x128xf32>
    %140 = arith.maximumf %138, %139 : vector<256x128xf32>
    %141 = vector.shape_cast %140 : vector<256x128xf32> to vector<16x16x128xf32>
    %c0_112 = arith.constant 0 : index
    %c0_113 = arith.constant 0 : index
    %142 = vector.load %arg6[%c0_112, %c0_113] : memref<1x128xf32, #tpu.memory_space<vmem>>, vector<1x128xf32>
    %143 = vector.shape_cast %142 : vector<1x128xf32> to vector<128xf32>
    %144 = vector.shape_cast %143 : vector<128xf32> to vector<1x1x128xf32>
    %145 = vector.broadcast %144 : vector<1x1x128xf32> to vector<16x16x128xf32>
    %146 = arith.mulf %141, %145 : vector<16x16x128xf32>
    %cst_114 = arith.constant dense<0.000000e+00> : vector<16x16xf32>
    %147 = vector.multi_reduction <add>, %146, %cst_114 [2] : vector<16x16x128xf32> to vector<16x16xf32>
    %c0_115 = arith.constant 0 : index
    %c0_116 = arith.constant 0 : index
    %148 = vector.load %arg7[%c0_115, %c0_116] : memref<1x1xf32, #tpu.memory_space<vmem>>, vector<1x1xf32>
    %149 = vector.extract %148[0, 0] : f32 from vector<1x1xf32>
    %150 = vector.broadcast %149 : f32 to vector<16x16xf32>
    %151 = arith.addf %147, %150 : vector<16x16xf32>
    %152 = vector.shape_cast %151 : vector<16x16xf32> to vector<1x16x16xf32>
    %c0_117 = arith.constant 0 : index
    %c0_118 = arith.constant 0 : index
    %c0_119 = arith.constant 0 : index
    %153 = vector.load %arg8[%c0_117, %c0_118, %c0_119] : memref<1x16x16xf32, #tpu.memory_space<vmem>>, vector<1x16x16xf32>
    tpu.vector_store %arg8[%c0_117, %c0_118, %c0_119], %152 {strides = array<i32>} : memref<1x16x16xf32, #tpu.memory_space<vmem>>, vector<1x16x16xf32>,
    return
  }
  func.func @transform_0(%arg0: i32, %arg1: i32) -> (i32, i32, i32, i32) {
    %c1_i32 = arith.constant 1 : i32
    %0 = arith.muli %arg0, %c1_i32 : i32
    %1 = arith.addi %0, %arg1 : i32
    %c0_i32 = arith.constant 0 : i32
    %c0_i32_0 = arith.constant 0 : i32
    %c0_i32_1 = arith.constant 0 : i32
    %c0_i32_2 = arith.constant 0 : i32
    return %1, %c0_i32, %c0_i32_0, %c0_i32_1 : i32, i32, i32, i32
  }
  func.func @transform_1(%arg0: i32, %arg1: i32) -> (i32, i32, i32) {
    %c0_i32 = arith.constant 0 : i32
    %c0_i32_0 = arith.constant 0 : i32
    %c0_i32_1 = arith.constant 0 : i32
    %c0_i32_2 = arith.constant 0 : i32
    return %c0_i32, %c0_i32_0, %c0_i32_1 : i32, i32, i32
  }
  func.func @transform_2(%arg0: i32, %arg1: i32) -> (i32, i32) {
    %c0_i32 = arith.constant 0 : i32
    %c0_i32_0 = arith.constant 0 : i32
    %c0_i32_1 = arith.constant 0 : i32
    return %c0_i32, %c0_i32_0 : i32, i32
  }
  func.func @transform_3(%arg0: i32, %arg1: i32) -> (i32, i32) {
    %c0_i32 = arith.constant 0 : i32
    %c0_i32_0 = arith.constant 0 : i32
    %c0_i32_1 = arith.constant 0 : i32
    return %c0_i32, %c0_i32_0 : i32, i32
  }
  func.func @transform_4(%arg0: i32, %arg1: i32) -> (i32, i32) {
    %c0_i32 = arith.constant 0 : i32
    %c0_i32_0 = arith.constant 0 : i32
    %c0_i32_1 = arith.constant 0 : i32
    return %c0_i32, %c0_i32_0 : i32, i32
  }
  func.func @transform_5(%arg0: i32, %arg1: i32) -> (i32, i32) {
    %c0_i32 = arith.constant 0 : i32
    %c0_i32_0 = arith.constant 0 : i32
    %c0_i32_1 = arith.constant 0 : i32
    return %c0_i32, %c0_i32_0 : i32, i32
  }
  func.func @transform_6(%arg0: i32, %arg1: i32) -> (i32, i32, i32) {
    %c0_i32 = arith.constant 0 : i32
    %c0_i32_0 = arith.constant 0 : i32
    return %arg0, %arg1, %c0_i32 : i32, i32, i32
  }
}

</mosaic_0001>

<llo_original>
// kernel: tpu_custom_call.1
$region0: #{tpu_custom_call.1}
  #allocation0 [shape = 'u32[]', space=smem, size = 0x4, offset = 0x4, fixed_abs, tag = 'smem constant byte address 0x4 - core index']
  #allocation1 [shape = 'u32[144,128]{1,0:T(1,128)}', space=vmem, size = 0x12000, scoped, tag = 'internal scratch']
  #allocation2 [shape = 'bf16[22,16,384]{2,1,0:T(16,128)(2,1)}', space=vmem, size = 0x42000, scoped, tag = 'scratch operand']
  #allocation3 [shape = 'f32[1,1]{1,0:T(1,128)S(1)}', space=vmem, size = 0x200, scoped, tag = 'scoped memory for tpu_custom_call.1']
  %s0 = inlined_call_operand.vmem [shape: bf16[2,22,18,128], index: 0, kind: input, shape index: {}]
  %s1 = inlined_call_operand.hbm [shape: bf16[3,384,384], index: 1, kind: input, shape index: {}]
  %s2 = inlined_call_operand.vmem [shape: f32[3,128], index: 2, kind: input, shape index: {}]
  %s3 = inlined_call_operand.vmem [shape: f32[3,128], index: 3, kind: input, shape index: {}]
  %s4 = inlined_call_operand.vmem [shape: f32[1,128], index: 4, kind: input, shape index: {}]
  %s5 = inlined_call_operand.<no memory space> [shape: f32[1,1], index: 5, kind: input, shape index: {}]
  %s6 = inlined_call_operand.hbm [shape: f32[2,16,16], index: 6, kind: output, shape index: {}]
  %s7 = sld [smem:[#allocation0]]
  $region61: #{tpu_custom_call.1} parent=0
    _
  %s9 = ssub.s32 1, %s7
  %s10 = scalar_select 0, %s9, %s7
  %v11 = vstv %s5
  %12 = vst [vmem:[#allocation3] sm:$0x1] %v11
  $region1: #{tpu_custom_call.1} parent=0
    #allocation4 [shape = 'u8[884736]{0}', space=vmem, size = 0xd8000, scoped, tag = 'input window, operand 1, single buffered']
    #allocation5 [shape = 's32[2]{0}', space=sflag, size = 0x8, scoped, tag = 'scoped memory for tpu_custom_call.1']
    #allocation6 [shape = 's32[2]{0}', space=sflag, size = 0x8, scoped, tag = 'scoped memory for tpu_custom_call.1']
    #allocation7 [shape = 'u8[16384]{0}', space=vmem, size = 0x4000, scoped, tag = 'output window, operand 0']
    %13 = vsyncpa [#allocation5], 0
    %14 = vsyncpa [#allocation6], 0
    %s15 = scalar_lea.sflag [#allocation6], 1
    %16 = vsyncpa %s15, 0
    loop: start=0, step=1, limit=4
    $region2: #{tpu_custom_call.1} parent=1 // loop_pre_header
      _
    $region3: #{tpu_custom_call.1} parent=1 // loop_header
      %s18 = sphi 0, %s22
      %p19 = scmp.ge.s32.totalorder %s18, 4
      %s25 = sphi 0, %s37
      %s26 = sphi 0, %s33
      %s27 = sphi 0, %s25
      %s28 = sphi 0, %s26
      %s29 = sphi 0, %s27
      %s30 = sphi 0, %s28
      %s42 = sphi 0, %s44
      %s45 = sphi 0, %s42
      %s46 = sphi 0, %s45
      %s62 = sphi 0, %s46
      %s66 = sphi 0, %s66
      %s68 = sphi 0, %s66
      %s69 = sphi 0, %s68
      %s83 = sphi 0, %s69
      %s87 = sphi 0, %s87
      %s89 = sphi 0, %s87
      %s90 = sphi 0, %s89
      %s104 = sphi 0, %s90
      %s108 = sphi 0, %s108
      %s110 = sphi 0, %s108
      %s111 = sphi 0, %s110
      %s125 = sphi 0, %s111
      %s129 = sphi 0, %s129
      %s131 = sphi 0, %s129
      %s132 = sphi 0, %s131
      %s146 = sphi 0, %s132
      %s150 = sphi 0, %s150
      %s152 = sphi 0, %s150
      %s153 = sphi 0, %s152
      %s167 = sphi 0, %s153
      %s175 = sphi 0, %s177
      %s178 = sphi 0, %s175
      %s179 = sphi 0, %s178
      %s195 = sphi 0, %s179
    $region4: #{tpu_custom_call.1} parent=1 // loop_header_branch
      %21 = sbr.rel (%p19) target = $region8
    $region5: #{tpu_custom_call.1} parent=1 // loop_body
      %s23 = ssub.s32 %s18, 1
      %s24 = ssub.s32 %s18, 2
      %s31 = sadd.s32 1, %s26
      %p32 = scmp.ge.s32.totalorder %s31, 1
      %s33 = scalar_select %p32, 0, %s31
      %s34 = sadd.s32 1, %s25
      %s35 = scalar_select %p32, %s34, %s25
      %p36 = scmp.ge.s32.totalorder %s35, 2
      %s37 = scalar_select %p36, 0, %s35
      %s38 = sadd.s32 %s25, %s26
      %s39 = sadd.s32 %s37, %s33
      %s40 = ssub.s32 %s38, %s39
      %p41 = scmp.eq.s32.totalorder %s40, 0
      %s43 = sadd.s32 %s42, 1
      %s44 = scalar_select %p41, %s42, %s43
      %p47 = pneg %p41
      %p48 = scmp.eq.s32.totalorder %s18, 1
      %p49 = por %p47, %p48
      %p50 = scmp.ne.s32.totalorder %s42, %s45
      %p51 = scmp.eq.s32.totalorder %s18, 0
      %p52 = por %p50, %p51
      %p53 = scmp.ne.s32.totalorder %s42, %s45
      %p54 = scmp.eq.s32.totalorder %s23, 1
      %p55 = por %p53, %p54
      %p56 = scmp.ne.s32.totalorder %s45, %s46
      %p57 = scmp.eq.s32.totalorder %s23, 0
      %p58 = por %p56, %p57
      %p59 = scmp.ne.s32.totalorder %s45, %s46
      %p60 = scmp.eq.s32.totalorder %s24, 1
      %p61 = por %p59, %p60
      %p63 = scmp.ne.s32.totalorder %s46, %s62
      %p64 = scmp.eq.s32.totalorder %s24, 0
      %p65 = por %p63, %p64
      %s67 = sadd.s32 %s66, 1
      %p70 = scmp.eq.s32.totalorder %s18, 1
      %p71 = scmp.ne.s32.totalorder %s66, %s68
      %p72 = scmp.eq.s32.totalorder %s18, 0
      %p73 = por %p71, %p72
      %p74 = scmp.ne.s32.totalorder %s66, %s68
      %p75 = scmp.eq.s32.totalorder %s23, 1
      %p76 = por %p74, %p75
      %p77 = scmp.ne.s32.totalorder %s68, %s69
      %p78 = scmp.eq.s32.totalorder %s23, 0
      %p79 = por %p77, %p78
      %p80 = scmp.ne.s32.totalorder %s68, %s69
      %p81 = scmp.eq.s32.totalorder %s24, 1
      %p82 = por %p80, %p81
      %p84 = scmp.ne.s32.totalorder %s69, %s83
      %p85 = scmp.eq.s32.totalorder %s24, 0
      %p86 = por %p84, %p85
      %s88 = sadd.s32 %s87, 1
      %p91 = scmp.eq.s32.totalorder %s18, 1
      %p92 = scmp.ne.s32.totalorder %s87, %s89
      %p93 = scmp.eq.s32.totalorder %s18, 0
      %p94 = por %p92, %p93
      %p95 = scmp.ne.s32.totalorder %s87, %s89
      %p96 = scmp.eq.s32.totalorder %s23, 1
      %p97 = por %p95, %p96
      %p98 = scmp.ne.s32.totalorder %s89, %s90
      %p99 = scmp.eq.s32.totalorder %s23, 0
      %p100 = por %p98, %p99
      %p101 = scmp.ne.s32.totalorder %s89, %s90
      %p102 = scmp.eq.s32.totalorder %s24, 1
      %p103 = por %p101, %p102
      %p105 = scmp.ne.s32.totalorder %s90, %s104
      %p106 = scmp.eq.s32.totalorder %s24, 0
      %p107 = por %p105, %p106
      %s109 = sadd.s32 %s108, 1
      %p112 = scmp.eq.s32.totalorder %s18, 1
      %p113 = scmp.ne.s32.totalorder %s108, %s110
      %p114 = scmp.eq.s32.totalorder %s18, 0
      %p115 = por %p113, %p114
      %p116 = scmp.ne.s32.totalorder %s108, %s110
      %p117 = scmp.eq.s32.totalorder %s23, 1
      %p118 = por %p116, %p117
      %p119 = scmp.ne.s32.totalorder %s110, %s111
      %p120 = scmp.eq.s32.totalorder %s23, 0
      %p121 = por %p119, %p120
      %p122 = scmp.ne.s32.totalorder %s110, %s111
      %p123 = scmp.eq.s32.totalorder %s24, 1
      %p124 = por %p122, %p123
      %p126 = scmp.ne.s32.totalorder %s111, %s125
      %p127 = scmp.eq.s32.totalorder %s24, 0
      %p128 = por %p126, %p127
      %s130 = sadd.s32 %s129, 1
      %p133 = scmp.eq.s32.totalorder %s18, 1
      %p134 = scmp.ne.s32.totalorder %s129, %s131
      %p135 = scmp.eq.s32.totalorder %s18, 0
      %p136 = por %p134, %p135
      %p137 = scmp.ne.s32.totalorder %s129, %s131
      %p138 = scmp.eq.s32.totalorder %s23, 1
      %p139 = por %p137, %p138
      %p140 = scmp.ne.s32.totalorder %s131, %s132
      %p141 = scmp.eq.s32.totalorder %s23, 0
      %p142 = por %p140, %p141
      %p143 = scmp.ne.s32.totalorder %s131, %s132
      %p144 = scmp.eq.s32.totalorder %s24, 1
      %p145 = por %p143, %p144
      %p147 = scmp.ne.s32.totalorder %s132, %s146
      %p148 = scmp.eq.s32.totalorder %s24, 0
      %p149 = por %p147, %p148
      %s151 = sadd.s32 %s150, 1
      %p154 = scmp.eq.s32.totalorder %s18, 1
      %p155 = scmp.ne.s32.totalorder %s150, %s152
      %p156 = scmp.eq.s32.totalorder %s18, 0
      %p157 = por %p155, %p156
      %p158 = scmp.ne.s32.totalorder %s150, %s152
      %p159 = scmp.eq.s32.totalorder %s23, 1
      %p160 = por %p158, %p159
      %p161 = scmp.ne.s32.totalorder %s152, %s153
      %p162 = scmp.eq.s32.totalorder %s23, 0
      %p163 = por %p161, %p162
      %p164 = scmp.ne.s32.totalorder %s152, %s153
      %p165 = scmp.eq.s32.totalorder %s24, 1
      %p166 = por %p164, %p165
      %p168 = scmp.ne.s32.totalorder %s153, %s167
      %p169 = scmp.eq.s32.totalorder %s24, 0
      %p170 = por %p168, %p169
      %s171 = ssub.s32 %s25, %s37
      %s172 = ssub.s32 %s26, %s33
      %s173 = sor.u32 %s171, %s172
      %p174 = scmp.eq.s32.totalorder %s173, 0
      %s176 = sadd.s32 %s175, 1
      %s177 = scalar_select %p174, %s175, %s176
      %p180 = pneg %p174
      %p181 = scmp.eq.s32.totalorder %s18, 1
      %p182 = por %p180, %p181
      %p183 = scmp.ne.s32.totalorder %s175, %s178
      %p184 = scmp.eq.s32.totalorder %s18, 0
      %p185 = por %p183, %p184
      %p186 = scmp.ne.s32.totalorder %s175, %s178
      %p187 = scmp.eq.s32.totalorder %s23, 1
      %p188 = por %p186, %p187
      %p189 = scmp.ne.s32.totalorder %s178, %s179
      %p190 = scmp.eq.s32.totalorder %s23, 0
      %p191 = por %p189, %p190
      %p192 = scmp.ne.s32.totalorder %s178, %s179
      %p193 = scmp.eq.s32.totalorder %s24, 1
      %p194 = por %p192, %p193
      %p196 = scmp.ne.s32.totalorder %s179, %s195
      %p197 = scmp.eq.s32.totalorder %s24, 0
      %p198 = por %p196, %p197
      %p199 = scmp.le.s32.totalorder 1, %s18
      %p200 = scmp.lt.s32.totalorder %s18, 3
      %p201 = pnand %p199, %p200
      %p202 = pneg %p201
      // Predicated region
      $region9: #{tpu_custom_call.1} parent=5 // pred_check
        _
      $region10: #{tpu_custom_call.1} parent=5 // pred_check_branch
        %204 = sbr.rel (%p201) target = $region12
      $region11: #{tpu_custom_call.1} parent=5 // pred_region
        %s205 = ssub.s32 %s18, 1
        // Predicated region
        $region13: #{tpu_custom_call.1} parent=11 // pred_check
          %p206 = pneg %p79
        $region14: #{tpu_custom_call.1} parent=11 // pred_check_branch
          %208 = sbr.rel (%p206) target = $region16
        $region15: #{tpu_custom_call.1} parent=11 // pred_region
          %s210 = ssub.s32 27648, 27648
          %211 = vsyncadd [#allocation5], %s210
          %s212 = sshll.u32 [#allocation4], 4
          %s213 = int_to_ptr.vmem [resolvable:$true] %s212
          %218 = dma.hbm_to_vmem [thread:$0]  %s1, 27648, %s213, [#allocation5], 192, 192, 12
        $region16: #{tpu_custom_call.1} parent=11 // pred_fallthru
          _
        // Predicated region
        $region17: #{tpu_custom_call.1} parent=11 // pred_check
          %p219 = pneg %p100
        $region18: #{tpu_custom_call.1} parent=11 // pred_check_branch
          %221 = sbr.rel (%p219) target = $region20
        $region19: #{tpu_custom_call.1} parent=11 // pred_region
          _
        $region20: #{tpu_custom_call.1} parent=11 // pred_fallthru
          _
        // Predicated region
        $region21: #{tpu_custom_call.1} parent=11 // pred_check
          %p222 = pneg %p121
        $region22: #{tpu_custom_call.1} parent=11 // pred_check_branch
          %224 = sbr.rel (%p222) target = $region24
        $region23: #{tpu_custom_call.1} parent=11 // pred_region
          _
        $region24: #{tpu_custom_call.1} parent=11 // pred_fallthru
          _
        // Predicated region
        $region25: #{tpu_custom_call.1} parent=11 // pred_check
          %p225 = pneg %p142
        $region26: #{tpu_custom_call.1} parent=11 // pred_check_branch
          %227 = sbr.rel (%p225) target = $region28
        $region27: #{tpu_custom_call.1} parent=11 // pred_region
          _
        $region28: #{tpu_custom_call.1} parent=11 // pred_fallthru
          _
        // Predicated region
        $region29: #{tpu_custom_call.1} parent=11 // pred_check
          %p228 = pneg %p163
        $region30: #{tpu_custom_call.1} parent=11 // pred_check_branch
          %230 = sbr.rel (%p228) target = $region32
        $region31: #{tpu_custom_call.1} parent=11 // pred_region
          _
        $region32: #{tpu_custom_call.1} parent=11 // pred_fallthru
          _
      $region12: #{tpu_custom_call.1} parent=5 // pred_fallthru
        _
      %p231 = scmp.lt.s32.totalorder %s18, 2
      // Predicated region
      $region33: #{tpu_custom_call.1} parent=5 // pred_check
        %p232 = pneg %p231
      $region34: #{tpu_custom_call.1} parent=5 // pred_check_branch
        %234 = sbr.rel (%p232) target = $region36
      $region35: #{tpu_custom_call.1} parent=5 // pred_region
        // Predicated region
        $region37: #{tpu_custom_call.1} parent=35 // pred_check
          %p235 = pneg %p52
        $region38: #{tpu_custom_call.1} parent=35 // pred_check_branch
          %237 = sbr.rel (%p235) target = $region40
        $region39: #{tpu_custom_call.1} parent=35 // pred_region
          %s238 = sadd.s32 %s25, %s26
          %p239 = scmp.lt.s32.totalorder %s238, 1
          %s240 = scalar_select %p239, %s238, 1
          %s241 = smul.addr %s240, 66
          %s242 = smul.addr %s241, 4
          %s243 = scalar_lea.vmem %s0, %s242
          %s244 = sadd.s32 %s25, %s26
        $region40: #{tpu_custom_call.1} parent=35 // pred_fallthru
          _
      $region36: #{tpu_custom_call.1} parent=5 // pred_fallthru
        _
      %p245 = scmp.le.s32.totalorder 1, %s18
      %p246 = scmp.lt.s32.totalorder %s18, 3
      %p247 = pnand %p245, %p246
      %p248 = pneg %p247
      // Predicated region
      $region41: #{tpu_custom_call.1} parent=5 // pred_check
        _
      $region42: #{tpu_custom_call.1} parent=5 // pred_check_branch
        %250 = sbr.rel (%p247) target = $region44
      $region43: #{tpu_custom_call.1} parent=5 // pred_region
        %s251 = ssub.s32 %s18, 1
        // Predicated region
        $region45: #{tpu_custom_call.1} parent=43 // pred_check
          %p252 = pneg %p79
        $region46: #{tpu_custom_call.1} parent=43 // pred_check_branch
          %254 = sbr.rel (%p252) target = $region48
        $region47: #{tpu_custom_call.1} parent=43 // pred_region
          %255 = dma.done [#allocation5], 27648
        $region48: #{tpu_custom_call.1} parent=43 // pred_fallthru
          _
        %s256 = sadd.s32 %s27, %s28
        %p257 = scmp.lt.s32.totalorder %s256, 1
        %s258 = scalar_select %p257, %s256, 1
        %s259 = smul.addr %s258, 66
        %s260 = smul.addr %s259, 4
        %s261 = scalar_lea.vmem %s0, %s260
        %p262 = pneg %p58
        %p263 = pneg %p55
        %p264 = pneg %p79
        %p265 = pneg %p76
        %p266 = pneg %p100
        %p267 = pneg %p97
        %p268 = pneg %p121
        %p269 = pneg %p118
        %p270 = pneg %p142
        %p271 = pneg %p139
        %p272 = pneg %p163
        %p273 = pneg %p160
        %p274 = pneg %p191
        %p275 = pneg %p188
        %s276 = sand.u32 %s178, 1
        %s277 = scalar_lea.sflag [#allocation6], %s276
        %s278 = sand.u32 %s178, 1
        %s279 = smul.addr %s278, 16
        %s280 = scalar_lea.vmem [#allocation7], %s279
        %s281 = sadd.s32 %s27, %s28
        %p282 = scmp.lt.s32.totalorder %s281, 1
        %s283 = scalar_select %p282, %s281, 1
        %s284 = smul.addr %s283, 66
        %s285 = smul.addr %s284, 4
        %s286 = scalar_lea.vmem %s0, %s285
        %s287 = sadd.s32 %s27, %s28
        %s288 = smul.u32 2, %s28
        %v290 = vld [vmem:[%s286] sm:$0xf]
        %v291 = vld [vmem:[%s286 + $0x4] sm:$0xf]
        %v292 = vld [vmem:[%s286 + $0xc] sm:$0xf]
        %v293 = vld [vmem:[%s286 + $0x10] sm:$0xf]
        %v294 = vld [vmem:[%s286 + $0x18] sm:$0xf]
        %v295 = vld [vmem:[%s286 + $0x1c] sm:$0xf]
        %v296 = vld [vmem:[%s286 + $0x24] sm:$0xf]
        %v297 = vld [vmem:[%s286 + $0x28] sm:$0xf]
        %v298 = vld [vmem:[%s286 + $0x30] sm:$0xf]
        %v299 = vld [vmem:[%s286 + $0x34] sm:$0xf]
        %v300 = vld [vmem:[%s286 + $0x3c] sm:$0xf]
        %v301 = vld [vmem:[%s286 + $0x40] sm:$0xf]
        %v302 = vld [vmem:[%s286 + $0x48] sm:$0xf]
        %v303 = vld [vmem:[%s286 + $0x4c] sm:$0xf]
        %v304 = vld [vmem:[%s286 + $0x54] sm:$0xf]
        %v305 = vld [vmem:[%s286 + $0x58] sm:$0xf]
        %v306 = vld [vmem:[%s286 + $0x60] sm:$0xf]
        %v307 = vld [vmem:[%s286 + $0x64] sm:$0xf]
        %v308 = vld [vmem:[%s286 + $0x6c] sm:$0xf]
        %v309 = vld [vmem:[%s286 + $0x70] sm:$0xf]
        %v310 = vld [vmem:[%s286 + $0x78] sm:$0xf]
        %v311 = vld [vmem:[%s286 + $0x7c] sm:$0xf]
        %v312 = vld [vmem:[%s286 + $0x84] sm:$0xf]
        %v313 = vld [vmem:[%s286 + $0x88] sm:$0xf]
        %v314 = vld [vmem:[%s286 + $0x90] sm:$0xf]
        %v315 = vld [vmem:[%s286 + $0x94] sm:$0xf]
        %v316 = vld [vmem:[%s286 + $0x9c] sm:$0xf]
        %v317 = vld [vmem:[%s286 + $0xa0] sm:$0xf]
        %v318 = vld [vmem:[%s286 + $0xa8] sm:$0xf]
        %v319 = vld [vmem:[%s286 + $0xac] sm:$0xf]
        %v320 = vld [vmem:[%s286 + $0xb4] sm:$0xf]
        %v321 = vld [vmem:[%s286 + $0xb8] sm:$0xf]
        %v322 = vld [vmem:[%s286 + $0xc0] sm:$0xf]
        %v323 = vld [vmem:[%s286 + $0xc4] sm:$0xf]
        %v324 = vld [vmem:[%s286 + $0xcc] sm:$0xf]
        %v325 = vld [vmem:[%s286 + $0xd0] sm:$0xf]
        %v326 = vld [vmem:[%s286 + $0xd8] sm:$0xf]
        %v327 = vld [vmem:[%s286 + $0xdc] sm:$0xf]
        %v328 = vld [vmem:[%s286 + $0xe4] sm:$0xf]
        %v329 = vld [vmem:[%s286 + $0xe8] sm:$0xf]
        %v330 = vld [vmem:[%s286 + $0xf0] sm:$0xf]
        %v331 = vld [vmem:[%s286 + $0xf4] sm:$0xf]
        %v332 = vld [vmem:[%s286 + $0xfc] sm:$0xf]
        %v333 = vld [vmem:[%s286 + $0x100] sm:$0xf]
        %v378 = vunpack.c.l.b16 %v290
        %v379 = vunpack.c.l.b16 %v291
        %v380 = vunpack.c.l.b16 %v292
        %v381 = vunpack.c.l.b16 %v293
        %v382 = vunpack.c.l.b16 %v294
        %v383 = vunpack.c.l.b16 %v295
        %v384 = vunpack.c.l.b16 %v296
        %v385 = vunpack.c.l.b16 %v297
        %v386 = vunpack.c.l.b16 %v298
        %v387 = vunpack.c.l.b16 %v299
        %v388 = vunpack.c.l.b16 %v300
        %v389 = vunpack.c.l.b16 %v301
        %v390 = vunpack.c.l.b16 %v302
        %v391 = vunpack.c.l.b16 %v303
        %v392 = vunpack.c.l.b16 %v304
        %v393 = vunpack.c.l.b16 %v305
        %v394 = vunpack.c.l.b16 %v306
        %v395 = vunpack.c.l.b16 %v307
        %v396 = vunpack.c.l.b16 %v308
        %v397 = vunpack.c.l.b16 %v309
        %v398 = vunpack.c.l.b16 %v310
        %v399 = vunpack.c.l.b16 %v311
        %v400 = vunpack.c.l.b16 %v312
        %v401 = vunpack.c.l.b16 %v313
        %v402 = vunpack.c.l.b16 %v314
        %v403 = vunpack.c.l.b16 %v315
        %v404 = vunpack.c.l.b16 %v316
        %v405 = vunpack.c.l.b16 %v317
        %v406 = vunpack.c.l.b16 %v318
        %v407 = vunpack.c.l.b16 %v319
        %v408 = vunpack.c.l.b16 %v320
        %v409 = vunpack.c.l.b16 %v321
        %v410 = vunpack.c.l.b16 %v322
        %v411 = vunpack.c.l.b16 %v323
        %v412 = vunpack.c.l.b16 %v324
        %v413 = vunpack.c.l.b16 %v325
        %v414 = vunpack.c.l.b16 %v326
        %v415 = vunpack.c.l.b16 %v327
        %v416 = vunpack.c.l.b16 %v328
        %v417 = vunpack.c.l.b16 %v329
        %v418 = vunpack.c.l.b16 %v330
        %v419 = vunpack.c.l.b16 %v331
        %v420 = vunpack.c.l.b16 %v332
        %v421 = vunpack.c.l.b16 %v333
        %v422 = vpack.c.b16 %v379, %v378
        %v423 = vpack.c.b16 %v381, %v380
        %v424 = vpack.c.b16 %v383, %v382
        %v425 = vpack.c.b16 %v385, %v384
        %v426 = vpack.c.b16 %v387, %v386
        %v427 = vpack.c.b16 %v389, %v388
        %v428 = vpack.c.b16 %v391, %v390
        %v429 = vpack.c.b16 %v393, %v392
        %v430 = vpack.c.b16 %v395, %v394
        %v431 = vpack.c.b16 %v397, %v396
        %v432 = vpack.c.b16 %v399, %v398
        %v433 = vpack.c.b16 %v401, %v400
        %v434 = vpack.c.b16 %v403, %v402
        %v435 = vpack.c.b16 %v405, %v404
        %v436 = vpack.c.b16 %v407, %v406
        %v437 = vpack.c.b16 %v409, %v408
        %v438 = vpack.c.b16 %v411, %v410
        %v439 = vpack.c.b16 %v413, %v412
        %v440 = vpack.c.b16 %v415, %v414
        %v441 = vpack.c.b16 %v417, %v416
        %v442 = vpack.c.b16 %v419, %v418
        %v443 = vpack.c.b16 %v421, %v420
        %466 = vst [vmem:[#allocation2] sm:$0xff] %v422
        %467 = vst [vmem:[#allocation2 + $0x18] sm:$0xff] %v423
        %468 = vst [vmem:[#allocation2 + $0x30] sm:$0xff] %v424
        %469 = vst [vmem:[#allocation2 + $0x48] sm:$0xff] %v425
        %470 = vst [vmem:[#allocation2 + $0x60] sm:$0xff] %v426
        %471 = vst [vmem:[#allocation2 + $0x78] sm:$0xff] %v427
        %472 = vst [vmem:[#allocation2 + $0x90] sm:$0xff] %v428
        %473 = vst [vmem:[#allocation2 + $0xa8] sm:$0xff] %v429
        %474 = vst [vmem:[#allocation2 + $0xc0] sm:$0xff] %v430
        %475 = vst [vmem:[#allocation2 + $0xd8] sm:$0xff] %v431
        %476 = vst [vmem:[#allocation2 + $0xf0] sm:$0xff] %v432
        %477 = vst [vmem:[#allocation2 + $0x108] sm:$0xff] %v433
        %478 = vst [vmem:[#allocation2 + $0x120] sm:$0xff] %v434
        %479 = vst [vmem:[#allocation2 + $0x138] sm:$0xff] %v435
        %480 = vst [vmem:[#allocation2 + $0x150] sm:$0xff] %v436
        %481 = vst [vmem:[#allocation2 + $0x168] sm:$0xff] %v437
        %482 = vst [vmem:[#allocation2 + $0x180] sm:$0xff] %v438
        %483 = vst [vmem:[#allocation2 + $0x198] sm:$0xff] %v439
        %484 = vst [vmem:[#allocation2 + $0x1b0] sm:$0xff] %v440
        %485 = vst [vmem:[#allocation2 + $0x1c8] sm:$0xff] %v441
        %486 = vst [vmem:[#allocation2 + $0x1e0] sm:$0xff] %v442
        %487 = vst [vmem:[#allocation2 + $0x1f8] sm:$0xff] %v443
        %v488 = vld [vmem:[%s286] sm:$0xf]
        %v489 = vld [vmem:[%s286 + $0x4] sm:$0xf]
        %v490 = vld [vmem:[%s286 + $0x8] sm:$0x1]
        %v491 = vld [vmem:[%s286 + $0xc] sm:$0xf]
        %v492 = vld [vmem:[%s286 + $0x10] sm:$0xf]
        %v493 = vld [vmem:[%s286 + $0x14] sm:$0x1]
        %v494 = vld [vmem:[%s286 + $0x18] sm:$0xf]
        %v495 = vld [vmem:[%s286 + $0x1c] sm:$0xf]
        %v496 = vld [vmem:[%s286 + $0x20] sm:$0x1]
        %v497 = vld [vmem:[%s286 + $0x24] sm:$0xf]
        %v498 = vld [vmem:[%s286 + $0x28] sm:$0xf]
        %v499 = vld [vmem:[%s286 + $0x2c] sm:$0x1]
        %v500 = vld [vmem:[%s286 + $0x30] sm:$0xf]
        %v501 = vld [vmem:[%s286 + $0x34] sm:$0xf]
        %v502 = vld [vmem:[%s286 + $0x38] sm:$0x1]
        %v503 = vld [vmem:[%s286 + $0x3c] sm:$0xf]
        %v504 = vld [vmem:[%s286 + $0x40] sm:$0xf]
        %v505 = vld [vmem:[%s286 + $0x44] sm:$0x1]
        %v506 = vld [vmem:[%s286 + $0x48] sm:$0xf]
        %v507 = vld [vmem:[%s286 + $0x4c] sm:$0xf]
        %v508 = vld [vmem:[%s286 + $0x50] sm:$0x1]
        %v509 = vld [vmem:[%s286 + $0x54] sm:$0xf]
        %v510 = vld [vmem:[%s286 + $0x58] sm:$0xf]
        %v511 = vld [vmem:[%s286 + $0x5c] sm:$0x1]
        %v512 = vld [vmem:[%s286 + $0x60] sm:$0xf]
        %v513 = vld [vmem:[%s286 + $0x64] sm:$0xf]
        %v514 = vld [vmem:[%s286 + $0x68] sm:$0x1]
        %v515 = vld [vmem:[%s286 + $0x6c] sm:$0xf]
        %v516 = vld [vmem:[%s286 + $0x70] sm:$0xf]
        %v517 = vld [vmem:[%s286 + $0x74] sm:$0x1]
        %v518 = vld [vmem:[%s286 + $0x78] sm:$0xf]
        %v519 = vld [vmem:[%s286 + $0x7c] sm:$0xf]
        %v520 = vld [vmem:[%s286 + $0x80] sm:$0x1]
        %v521 = vld [vmem:[%s286 + $0x84] sm:$0xf]
        %v522 = vld [vmem:[%s286 + $0x88] sm:$0xf]
        %v523 = vld [vmem:[%s286 + $0x8c] sm:$0x1]
        %v524 = vld [vmem:[%s286 + $0x90] sm:$0xf]
        %v525 = vld [vmem:[%s286 + $0x94] sm:$0xf]
        %v526 = vld [vmem:[%s286 + $0x98] sm:$0x1]
        %v527 = vld [vmem:[%s286 + $0x9c] sm:$0xf]
        %v528 = vld [vmem:[%s286 + $0xa0] sm:$0xf]
        %v529 = vld [vmem:[%s286 + $0xa4] sm:$0x1]
        %v530 = vld [vmem:[%s286 + $0xa8] sm:$0xf]
        %v531 = vld [vmem:[%s286 + $0xac] sm:$0xf]
        %v532 = vld [vmem:[%s286 + $0xb0] sm:$0x1]
        %v533 = vld [vmem:[%s286 + $0xb4] sm:$0xf]
        %v534 = vld [vmem:[%s286 + $0xb8] sm:$0xf]
        %v535 = vld [vmem:[%s286 + $0xbc] sm:$0x1]
        %v536 = vld [vmem:[%s286 + $0xc0] sm:$0xf]
        %v537 = vld [vmem:[%s286 + $0xc4] sm:$0xf]
        %v538 = vld [vmem:[%s286 + $0xc8] sm:$0x1]
        %v539 = vld [vmem:[%s286 + $0xcc] sm:$0xf]
        %v540 = vld [vmem:[%s286 + $0xd0] sm:$0xf]
        %v541 = vld [vmem:[%s286 + $0xd4] sm:$0x1]
        %v542 = vld [vmem:[%s286 + $0xd8] sm:$0xf]
        %v543 = vld [vmem:[%s286 + $0xdc] sm:$0xf]
        %v544 = vld [vmem:[%s286 + $0xe0] sm:$0x1]
        %v545 = vld [vmem:[%s286 + $0xe4] sm:$0xf]
        %v546 = vld [vmem:[%s286 + $0xe8] sm:$0xf]
        %v547 = vld [vmem:[%s286 + $0xec] sm:$0x1]
        %v548 = vld [vmem:[%s286 + $0xf0] sm:$0xf]
        %v549 = vld [vmem:[%s286 + $0xf4] sm:$0xf]
        %v550 = vld [vmem:[%s286 + $0xf8] sm:$0x1]
        %v551 = vld [vmem:[%s286 + $0xfc] sm:$0xf]
        %v552 = vld [vmem:[%s286 + $0x100] sm:$0xf]
        %v553 = vld [vmem:[%s286 + $0x104] sm:$0x1]
        %v620 = vunpack.c.l.b16 %v488
        %v621 = vunpack.c.l.b16 %v489
        %v622 = vunpack.c.l.b16 %v490
        %v623 = vunpack.c.l.b16 %v491
        %v624 = vunpack.c.l.b16 %v492
        %v625 = vunpack.c.l.b16 %v493
        %v626 = vunpack.c.l.b16 %v494
        %v627 = vunpack.c.l.b16 %v495
        %v628 = vunpack.c.l.b16 %v496
        %v629 = vunpack.c.l.b16 %v497
        %v630 = vunpack.c.l.b16 %v498
        %v631 = vunpack.c.l.b16 %v499
        %v632 = vunpack.c.l.b16 %v500
        %v633 = vunpack.c.l.b16 %v501
        %v634 = vunpack.c.l.b16 %v502
        %v635 = vunpack.c.l.b16 %v503
        %v636 = vunpack.c.l.b16 %v504
        %v637 = vunpack.c.l.b16 %v505
        %v638 = vunpack.c.l.b16 %v506
        %v639 = vunpack.c.l.b16 %v507
        %v640 = vunpack.c.l.b16 %v508
        %v641 = vunpack.c.l.b16 %v509
        %v642 = vunpack.c.l.b16 %v510
        %v643 = vunpack.c.l.b16 %v511
        %v644 = vunpack.c.l.b16 %v512
        %v645 = vunpack.c.l.b16 %v513
        %v646 = vunpack.c.l.b16 %v514
        %v647 = vunpack.c.l.b16 %v515
        %v648 = vunpack.c.l.b16 %v516
        %v649 = vunpack.c.l.b16 %v517
        %v650 = vunpack.c.l.b16 %v518
        %v651 = vunpack.c.l.b16 %v519
        %v652 = vunpack.c.l.b16 %v520
        %v653 = vunpack.c.l.b16 %v521
        %v654 = vunpack.c.l.b16 %v522
        %v655 = vunpack.c.l.b16 %v523
        %v656 = vunpack.c.l.b16 %v524
        %v657 = vunpack.c.l.b16 %v525
        %v658 = vunpack.c.l.b16 %v526
        %v659 = vunpack.c.l.b16 %v527
        %v660 = vunpack.c.l.b16 %v528
        %v661 = vunpack.c.l.b16 %v529
        %v662 = vunpack.c.l.b16 %v530
        %v663 = vunpack.c.l.b16 %v531
        %v664 = vunpack.c.l.b16 %v532
        %v665 = vunpack.c.l.b16 %v533
        %v666 = vunpack.c.l.b16 %v534
        %v667 = vunpack.c.l.b16 %v535
        %v668 = vunpack.c.l.b16 %v536
        %v669 = vunpack.c.l.b16 %v537
        %v670 = vunpack.c.l.b16 %v538
        %v671 = vunpack.c.l.b16 %v539
        %v672 = vunpack.c.l.b16 %v540
        %v673 = vunpack.c.l.b16 %v541
        %v674 = vunpack.c.l.b16 %v542
        %v675 = vunpack.c.l.b16 %v543
        %v676 = vunpack.c.l.b16 %v544
        %v677 = vunpack.c.l.b16 %v545
        %v678 = vunpack.c.l.b16 %v546
        %v679 = vunpack.c.l.b16 %v547
        %v680 = vunpack.c.l.b16 %v548
        %v681 = vunpack.c.l.b16 %v549
        %v682 = vunpack.c.l.b16 %v550
        %v683 = vunpack.c.l.b16 %v551
        %v684 = vunpack.c.l.b16 %v552
        %v685 = vunpack.c.l.b16 %v553
        %v686 = vpack.c.b16 %v621, %v620
        %v687 = vpack.c.b16 %v622, %v622
        %v688 = vpack.c.b16 %v624, %v623
        %v689 = vpack.c.b16 %v625, %v625
        %v690 = vpack.c.b16 %v627, %v626
        %v691 = vpack.c.b16 %v628, %v628
        %v692 = vpack.c.b16 %v630, %v629
        %v693 = vpack.c.b16 %v631, %v631
        %v694 = vpack.c.b16 %v633, %v632
        %v695 = vpack.c.b16 %v634, %v634
        %v696 = vpack.c.b16 %v636, %v635
        %v697 = vpack.c.b16 %v637, %v637
        %v698 = vpack.c.b16 %v639, %v638
        %v699 = vpack.c.b16 %v640, %v640
        %v700 = vpack.c.b16 %v642, %v641
        %v701 = vpack.c.b16 %v643, %v643
        %v702 = vpack.c.b16 %v645, %v644
        %v703 = vpack.c.b16 %v646, %v646
        %v704 = vpack.c.b16 %v648, %v647
        %v705 = vpack.c.b16 %v649, %v649
        %v706 = vpack.c.b16 %v651, %v650
        %v707 = vpack.c.b16 %v652, %v652
        %v708 = vpack.c.b16 %v654, %v653
        %v709 = vpack.c.b16 %v655, %v655
        %v710 = vpack.c.b16 %v657, %v656
        %v711 = vpack.c.b16 %v658, %v658
        %v712 = vpack.c.b16 %v660, %v659
        %v713 = vpack.c.b16 %v661, %v661
        %v714 = vpack.c.b16 %v663, %v662
        %v715 = vpack.c.b16 %v664, %v664
        %v716 = vpack.c.b16 %v666, %v665
        %v717 = vpack.c.b16 %v667, %v667
        %v718 = vpack.c.b16 %v669, %v668
        %v719 = vpack.c.b16 %v670, %v670
        %v720 = vpack.c.b16 %v672, %v671
        %v721 = vpack.c.b16 %v673, %v673
        %v722 = vpack.c.b16 %v675, %v674
        %v723 = vpack.c.b16 %v676, %v676
        %v724 = vpack.c.b16 %v678, %v677
        %v725 = vpack.c.b16 %v679, %v679
        %v726 = vpack.c.b16 %v681, %v680
        %v727 = vpack.c.b16 %v682, %v682
        %v728 = vpack.c.b16 %v684, %v683
        %v729 = vpack.c.b16 %v685, %v685
        %vm730 = vsmask.f32 7424
        %v732 = vshrl.u32 %v686, 16
        %v734 = vshll.u32 %v686, 16
        %v736 = vrot.slane %v734, 1
        %v737 = vor.u32 %v732, %v736
        %v739 = vshll.u32 %v687, 16
        %v741 = vrot.slane %v739, 1
        %v742 = vsel %vm730, %v737, %v741
        %v744 = vshrl.u32 %v688, 16
        %v746 = vshll.u32 %v688, 16
        %v748 = vrot.slane %v746, 1
        %v749 = vor.u32 %v744, %v748
        %v751 = vshll.u32 %v689, 16
        %v753 = vrot.slane %v751, 1
        %v754 = vsel %vm730, %v749, %v753
        %v756 = vshrl.u32 %v690, 16
        %v758 = vshll.u32 %v690, 16
        %v760 = vrot.slane %v758, 1
        %v761 = vor.u32 %v756, %v760
        %v763 = vshll.u32 %v691, 16
        %v765 = vrot.slane %v763, 1
        %v766 = vsel %vm730, %v761, %v765
        %v768 = vshrl.u32 %v692, 16
        %v770 = vshll.u32 %v692, 16
        %v772 = vrot.slane %v770, 1
        %v773 = vor.u32 %v768, %v772
        %v775 = vshll.u32 %v693, 16
        %v777 = vrot.slane %v775, 1
        %v778 = vsel %vm730, %v773, %v777
        %v780 = vshrl.u32 %v694, 16
        %v782 = vshll.u32 %v694, 16
        %v784 = vrot.slane %v782, 1
        %v785 = vor.u32 %v780, %v784
        %v787 = vshll.u32 %v695, 16
        %v789 = vrot.slane %v787, 1
        %v790 = vsel %vm730, %v785, %v789
        %v792 = vshrl.u32 %v696, 16
        %v794 = vshll.u32 %v696, 16
        %v796 = vrot.slane %v794, 1
        %v797 = vor.u32 %v792, %v796
        %v799 = vshll.u32 %v697, 16
        %v801 = vrot.slane %v799, 1
        %v802 = vsel %vm730, %v797, %v801
        %v804 = vshrl.u32 %v698, 16
        %v806 = vshll.u32 %v698, 16
        %v808 = vrot.slane %v806, 1
        %v809 = vor.u32 %v804, %v808
        %v811 = vshll.u32 %v699, 16
        %v813 = vrot.slane %v811, 1
        %v814 = vsel %vm730, %v809, %v813
        %v816 = vshrl.u32 %v700, 16
        %v818 = vshll.u32 %v700, 16
        %v820 = vrot.slane %v818, 1
        %v821 = vor.u32 %v816, %v820
        %v823 = vshll.u32 %v701, 16
        %v825 = vrot.slane %v823, 1
        %v826 = vsel %vm730, %v821, %v825
        %v828 = vshrl.u32 %v702, 16
        %v830 = vshll.u32 %v702, 16
        %v832 = vrot.slane %v830, 1
        %v833 = vor.u32 %v828, %v832
        %v835 = vshll.u32 %v703, 16
        %v837 = vrot.slane %v835, 1
        %v838 = vsel %vm730, %v833, %v837
        %v840 = vshrl.u32 %v704, 16
        %v842 = vshll.u32 %v704, 16
        %v844 = vrot.slane %v842, 1
        %v845 = vor.u32 %v840, %v844
        %v847 = vshll.u32 %v705, 16
        %v849 = vrot.slane %v847, 1
        %v850 = vsel %vm730, %v845, %v849
        %v852 = vshrl.u32 %v706, 16
        %v854 = vshll.u32 %v706, 16
        %v856 = vrot.slane %v854, 1
        %v857 = vor.u32 %v852, %v856
        %v859 = vshll.u32 %v707, 16
        %v861 = vrot.slane %v859, 1
        %v862 = vsel %vm730, %v857, %v861
        %v864 = vshrl.u32 %v708, 16
        %v866 = vshll.u32 %v708, 16
        %v868 = vrot.slane %v866, 1
        %v869 = vor.u32 %v864, %v868
        %v871 = vshll.u32 %v709, 16
        %v873 = vrot.slane %v871, 1
        %v874 = vsel %vm730, %v869, %v873
        %v876 = vshrl.u32 %v710, 16
        %v878 = vshll.u32 %v710, 16
        %v880 = vrot.slane %v878, 1
        %v881 = vor.u32 %v876, %v880
        %v883 = vshll.u32 %v711, 16
        %v885 = vrot.slane %v883, 1
        %v886 = vsel %vm730, %v881, %v885
        %v888 = vshrl.u32 %v712, 16
        %v890 = vshll.u32 %v712, 16
        %v892 = vrot.slane %v890, 1
        %v893 = vor.u32 %v888, %v892
        %v895 = vshll.u32 %v713, 16
        %v897 = vrot.slane %v895, 1
        %v898 = vsel %vm730, %v893, %v897
        %v900 = vshrl.u32 %v714, 16
        %v902 = vshll.u32 %v714, 16
        %v904 = vrot.slane %v902, 1
        %v905 = vor.u32 %v900, %v904
        %v907 = vshll.u32 %v715, 16
        %v909 = vrot.slane %v907, 1
        %v910 = vsel %vm730, %v905, %v909
        %v912 = vshrl.u32 %v716, 16
        %v914 = vshll.u32 %v716, 16
        %v916 = vrot.slane %v914, 1
        %v917 = vor.u32 %v912, %v916
        %v919 = vshll.u32 %v717, 16
        %v921 = vrot.slane %v919, 1
        %v922 = vsel %vm730, %v917, %v921
        %v924 = vshrl.u32 %v718, 16
        %v926 = vshll.u32 %v718, 16
        %v928 = vrot.slane %v926, 1
        %v929 = vor.u32 %v924, %v928
        %v931 = vshll.u32 %v719, 16
        %v933 = vrot.slane %v931, 1
        %v934 = vsel %vm730, %v929, %v933
        %v936 = vshrl.u32 %v720, 16
        %v938 = vshll.u32 %v720, 16
        %v940 = vrot.slane %v938, 1
        %v941 = vor.u32 %v936, %v940
        %v943 = vshll.u32 %v721, 16
        %v945 = vrot.slane %v943, 1
        %v946 = vsel %vm730, %v941, %v945
        %v948 = vshrl.u32 %v722, 16
        %v950 = vshll.u32 %v722, 16
        %v952 = vrot.slane %v950, 1
        %v953 = vor.u32 %v948, %v952
        %v955 = vshll.u32 %v723, 16
        %v957 = vrot.slane %v955, 1
        %v958 = vsel %vm730, %v953, %v957
        %v960 = vshrl.u32 %v724, 16
        %v962 = vshll.u32 %v724, 16
        %v964 = vrot.slane %v962, 1
        %v965 = vor.u32 %v960, %v964
        %v967 = vshll.u32 %v725, 16
        %v969 = vrot.slane %v967, 1
        %v970 = vsel %vm730, %v965, %v969
        %v972 = vshrl.u32 %v726, 16
        %v974 = vshll.u32 %v726, 16
        %v976 = vrot.slane %v974, 1
        %v977 = vor.u32 %v972, %v976
        %v979 = vshll.u32 %v727, 16
        %v981 = vrot.slane %v979, 1
        %v982 = vsel %vm730, %v977, %v981
        %v984 = vshrl.u32 %v728, 16
        %v986 = vshll.u32 %v728, 16
        %v988 = vrot.slane %v986, 1
        %v989 = vor.u32 %v984, %v988
        %v991 = vshll.u32 %v729, 16
        %v993 = vrot.slane %v991, 1
        %v994 = vsel %vm730, %v989, %v993
        %1017 = vst [vmem:[#allocation2 + $0x8] sm:$0xff] %v742
        %1018 = vst [vmem:[#allocation2 + $0x20] sm:$0xff] %v754
        %1019 = vst [vmem:[#allocation2 + $0x38] sm:$0xff] %v766
        %1020 = vst [vmem:[#allocation2 + $0x50] sm:$0xff] %v778
        %1021 = vst [vmem:[#allocation2 + $0x68] sm:$0xff] %v790
        %1022 = vst [vmem:[#allocation2 + $0x80] sm:$0xff] %v802
        %1023 = vst [vmem:[#allocation2 + $0x98] sm:$0xff] %v814
        %1024 = vst [vmem:[#allocation2 + $0xb0] sm:$0xff] %v826
        %1025 = vst [vmem:[#allocation2 + $0xc8] sm:$0xff] %v838
        %1026 = vst [vmem:[#allocation2 + $0xe0] sm:$0xff] %v850
        %1027 = vst [vmem:[#allocation2 + $0xf8] sm:$0xff] %v862
        %1028 = vst [vmem:[#allocation2 + $0x110] sm:$0xff] %v874
        %1029 = vst [vmem:[#allocation2 + $0x128] sm:$0xff] %v886
        %1030 = vst [vmem:[#allocation2 + $0x140] sm:$0xff] %v898
        %1031 = vst [vmem:[#allocation2 + $0x158] sm:$0xff] %v910
        %1032 = vst [vmem:[#allocation2 + $0x170] sm:$0xff] %v922
        %1033 = vst [vmem:[#allocation2 + $0x188] sm:$0xff] %v934
        %1034 = vst [vmem:[#allocation2 + $0x1a0] sm:$0xff] %v946
        %1035 = vst [vmem:[#allocation2 + $0x1b8] sm:$0xff] %v958
        %1036 = vst [vmem:[#allocation2 + $0x1d0] sm:$0xff] %v970
        %1037 = vst [vmem:[#allocation2 + $0x1e8] sm:$0xff] %v982
        %1038 = vst [vmem:[#allocation2 + $0x200] sm:$0xff] %v994
        %v1039 = vld [vmem:[%s286] sm:$0xe]
        %v1040 = vld [vmem:[%s286 + $0x4] sm:$0xf]
        %v1041 = vld [vmem:[%s286 + $0x8] sm:$0x1]
        %v1042 = vld [vmem:[%s286 + $0xc] sm:$0xe]
        %v1043 = vld [vmem:[%s286 + $0x10] sm:$0xf]
        %v1044 = vld [vmem:[%s286 + $0x14] sm:$0x1]
        %v1045 = vld [vmem:[%s286 + $0x18] sm:$0xe]
        %v1046 = vld [vmem:[%s286 + $0x1c] sm:$0xf]
        %v1047 = vld [vmem:[%s286 + $0x20] sm:$0x1]
        %v1048 = vld [vmem:[%s286 + $0x24] sm:$0xe]
        %v1049 = vld [vmem:[%s286 + $0x28] sm:$0xf]
        %v1050 = vld [vmem:[%s286 + $0x2c] sm:$0x1]
        %v1051 = vld [vmem:[%s286 + $0x30] sm:$0xe]
        %v1052 = vld [vmem:[%s286 + $0x34] sm:$0xf]
        %v1053 = vld [vmem:[%s286 + $0x38] sm:$0x1]
        %v1054 = vld [vmem:[%s286 + $0x3c] sm:$0xe]
        %v1055 = vld [vmem:[%s286 + $0x40] sm:$0xf]
        %v1056 = vld [vmem:[%s286 + $0x44] sm:$0x1]
        %v1057 = vld [vmem:[%s286 + $0x48] sm:$0xe]
        %v1058 = vld [vmem:[%s286 + $0x4c] sm:$0xf]
        %v1059 = vld [vmem:[%s286 + $0x50] sm:$0x1]
        %v1060 = vld [vmem:[%s286 + $0x54] sm:$0xe]
        %v1061 = vld [vmem:[%s286 + $0x58] sm:$0xf]
        %v1062 = vld [vmem:[%s286 + $0x5c] sm:$0x1]
        %v1063 = vld [vmem:[%s286 + $0x60] sm:$0xe]
        %v1064 = vld [vmem:[%s286 + $0x64] sm:$0xf]
        %v1065 = vld [vmem:[%s286 + $0x68] sm:$0x1]
        %v1066 = vld [vmem:[%s286 + $0x6c] sm:$0xe]
        %v1067 = vld [vmem:[%s286 + $0x70] sm:$0xf]
        %v1068 = vld [vmem:[%s286 + $0x74] sm:$0x1]
        %v1069 = vld [vmem:[%s286 + $0x78] sm:$0xe]
        %v1070 = vld [vmem:[%s286 + $0x7c] sm:$0xf]
        %v1071 = vld [vmem:[%s286 + $0x80] sm:$0x1]
        %v1072 = vld [vmem:[%s286 + $0x84] sm:$0xe]
        %v1073 = vld [vmem:[%s286 + $0x88] sm:$0xf]
        %v1074 = vld [vmem:[%s286 + $0x8c] sm:$0x1]
        %v1075 = vld [vmem:[%s286 + $0x90] sm:$0xe]
        %v1076 = vld [vmem:[%s286 + $0x94] sm:$0xf]
        %v1077 = vld [vmem:[%s286 + $0x98] sm:$0x1]
        %v1078 = vld [vmem:[%s286 + $0x9c] sm:$0xe]
        %v1079 = vld [vmem:[%s286 + $0xa0] sm:$0xf]
        %v1080 = vld [vmem:[%s286 + $0xa4] sm:$0x1]
        %v1081 = vld [vmem:[%s286 + $0xa8] sm:$0xe]
        %v1082 = vld [vmem:[%s286 + $0xac] sm:$0xf]
        %v1083 = vld [vmem:[%s286 + $0xb0] sm:$0x1]
        %v1084 = vld [vmem:[%s286 + $0xb4] sm:$0xe]
        %v1085 = vld [vmem:[%s286 + $0xb8] sm:$0xf]
        %v1086 = vld [vmem:[%s286 + $0xbc] sm:$0x1]
        %v1087 = vld [vmem:[%s286 + $0xc0] sm:$0xe]
        %v1088 = vld [vmem:[%s286 + $0xc4] sm:$0xf]
        %v1089 = vld [vmem:[%s286 + $0xc8] sm:$0x1]
        %v1090 = vld [vmem:[%s286 + $0xcc] sm:$0xe]
        %v1091 = vld [vmem:[%s286 + $0xd0] sm:$0xf]
        %v1092 = vld [vmem:[%s286 + $0xd4] sm:$0x1]
        %v1093 = vld [vmem:[%s286 + $0xd8] sm:$0xe]
        %v1094 = vld [vmem:[%s286 + $0xdc] sm:$0xf]
        %v1095 = vld [vmem:[%s286 + $0xe0] sm:$0x1]
        %v1096 = vld [vmem:[%s286 + $0xe4] sm:$0xe]
        %v1097 = vld [vmem:[%s286 + $0xe8] sm:$0xf]
        %v1098 = vld [vmem:[%s286 + $0xec] sm:$0x1]
        %v1099 = vld [vmem:[%s286 + $0xf0] sm:$0xe]
        %v1100 = vld [vmem:[%s286 + $0xf4] sm:$0xf]
        %v1101 = vld [vmem:[%s286 + $0xf8] sm:$0x1]
        %v1102 = vld [vmem:[%s286 + $0xfc] sm:$0xe]
        %v1103 = vld [vmem:[%s286 + $0x100] sm:$0xf]
        %v1104 = vld [vmem:[%s286 + $0x104] sm:$0x1]
        %v1171 = vunpack.c.l.b16 %v1039
        %v1172 = vunpack.c.l.b16 %v1040
        %v1173 = vunpack.c.l.b16 %v1041
        %v1174 = vunpack.c.l.b16 %v1042
        %v1175 = vunpack.c.l.b16 %v1043
        %v1176 = vunpack.c.l.b16 %v1044
        %v1177 = vunpack.c.l.b16 %v1045
        %v1178 = vunpack.c.l.b16 %v1046
        %v1179 = vunpack.c.l.b16 %v1047
        %v1180 = vunpack.c.l.b16 %v1048
        %v1181 = vunpack.c.l.b16 %v1049
        %v1182 = vunpack.c.l.b16 %v1050
        %v1183 = vunpack.c.l.b16 %v1051
        %v1184 = vunpack.c.l.b16 %v1052
        %v1185 = vunpack.c.l.b16 %v1053
        %v1186 = vunpack.c.l.b16 %v1054
        %v1187 = vunpack.c.l.b16 %v1055
        %v1188 = vunpack.c.l.b16 %v1056
        %v1189 = vunpack.c.l.b16 %v1057
        %v1190 = vunpack.c.l.b16 %v1058
        %v1191 = vunpack.c.l.b16 %v1059
        %v1192 = vunpack.c.l.b16 %v1060
        %v1193 = vunpack.c.l.b16 %v1061
        %v1194 = vunpack.c.l.b16 %v1062
        %v1195 = vunpack.c.l.b16 %v1063
        %v1196 = vunpack.c.l.b16 %v1064
        %v1197 = vunpack.c.l.b16 %v1065
        %v1198 = vunpack.c.l.b16 %v1066
        %v1199 = vunpack.c.l.b16 %v1067
        %v1200 = vunpack.c.l.b16 %v1068
        %v1201 = vunpack.c.l.b16 %v1069
        %v1202 = vunpack.c.l.b16 %v1070
        %v1203 = vunpack.c.l.b16 %v1071
        %v1204 = vunpack.c.l.b16 %v1072
        %v1205 = vunpack.c.l.b16 %v1073
        %v1206 = vunpack.c.l.b16 %v1074
        %v1207 = vunpack.c.l.b16 %v1075
        %v1208 = vunpack.c.l.b16 %v1076
        %v1209 = vunpack.c.l.b16 %v1077
        %v1210 = vunpack.c.l.b16 %v1078
        %v1211 = vunpack.c.l.b16 %v1079
        %v1212 = vunpack.c.l.b16 %v1080
        %v1213 = vunpack.c.l.b16 %v1081
        %v1214 = vunpack.c.l.b16 %v1082
        %v1215 = vunpack.c.l.b16 %v1083
        %v1216 = vunpack.c.l.b16 %v1084
        %v1217 = vunpack.c.l.b16 %v1085
        %v1218 = vunpack.c.l.b16 %v1086
        %v1219 = vunpack.c.l.b16 %v1087
        %v1220 = vunpack.c.l.b16 %v1088
        %v1221 = vunpack.c.l.b16 %v1089
        %v1222 = vunpack.c.l.b16 %v1090
        %v1223 = vunpack.c.l.b16 %v1091
        %v1224 = vunpack.c.l.b16 %v1092
        %v1225 = vunpack.c.l.b16 %v1093
        %v1226 = vunpack.c.l.b16 %v1094
        %v1227 = vunpack.c.l.b16 %v1095
        %v1228 = vunpack.c.l.b16 %v1096
        %v1229 = vunpack.c.l.b16 %v1097
        %v1230 = vunpack.c.l.b16 %v1098
        %v1231 = vunpack.c.l.b16 %v1099
        %v1232 = vunpack.c.l.b16 %v1100
        %v1233 = vunpack.c.l.b16 %v1101
        %v1234 = vunpack.c.l.b16 %v1102
        %v1235 = vunpack.c.l.b16 %v1103
        %v1236 = vunpack.c.l.b16 %v1104
        %v1237 = vpack.c.b16 %v1172, %v1171
        %v1238 = vpack.c.b16 %v1173, %v1173
        %v1239 = vpack.c.b16 %v1175, %v1174
        %v1240 = vpack.c.b16 %v1176, %v1176
        %v1241 = vpack.c.b16 %v1178, %v1177
        %v1242 = vpack.c.b16 %v1179, %v1179
        %v1243 = vpack.c.b16 %v1181, %v1180
        %v1244 = vpack.c.b16 %v1182, %v1182
        %v1245 = vpack.c.b16 %v1184, %v1183
        %v1246 = vpack.c.b16 %v1185, %v1185
        %v1247 = vpack.c.b16 %v1187, %v1186
        %v1248 = vpack.c.b16 %v1188, %v1188
        %v1249 = vpack.c.b16 %v1190, %v1189
        %v1250 = vpack.c.b16 %v1191, %v1191
        %v1251 = vpack.c.b16 %v1193, %v1192
        %v1252 = vpack.c.b16 %v1194, %v1194
        %v1253 = vpack.c.b16 %v1196, %v1195
        %v1254 = vpack.c.b16 %v1197, %v1197
        %v1255 = vpack.c.b16 %v1199, %v1198
        %v1256 = vpack.c.b16 %v1200, %v1200
        %v1257 = vpack.c.b16 %v1202, %v1201
        %v1258 = vpack.c.b16 %v1203, %v1203
        %v1259 = vpack.c.b16 %v1205, %v1204
        %v1260 = vpack.c.b16 %v1206, %v1206
        %v1261 = vpack.c.b16 %v1208, %v1207
        %v1262 = vpack.c.b16 %v1209, %v1209
        %v1263 = vpack.c.b16 %v1211, %v1210
        %v1264 = vpack.c.b16 %v1212, %v1212
        %v1265 = vpack.c.b16 %v1214, %v1213
        %v1266 = vpack.c.b16 %v1215, %v1215
        %v1267 = vpack.c.b16 %v1217, %v1216
        %v1268 = vpack.c.b16 %v1218, %v1218
        %v1269 = vpack.c.b16 %v1220, %v1219
        %v1270 = vpack.c.b16 %v1221, %v1221
        %v1271 = vpack.c.b16 %v1223, %v1222
        %v1272 = vpack.c.b16 %v1224, %v1224
        %v1273 = vpack.c.b16 %v1226, %v1225
        %v1274 = vpack.c.b16 %v1227, %v1227
        %v1275 = vpack.c.b16 %v1229, %v1228
        %v1276 = vpack.c.b16 %v1230, %v1230
        %v1277 = vpack.c.b16 %v1232, %v1231
        %v1278 = vpack.c.b16 %v1233, %v1233
        %v1279 = vpack.c.b16 %v1235, %v1234
        %v1280 = vpack.c.b16 %v1236, %v1236
        %vm1281 = vcmask 1046528
        %v1282 = vrot.slane %v1237, 1
        %v1283 = vrot.slane %v1238, 1
        %v1284 = vsel %vm1281, %v1282, %v1283
        %v1285 = vrot.slane %v1239, 1
        %v1286 = vrot.slane %v1240, 1
        %v1287 = vsel %vm1281, %v1285, %v1286
        %v1288 = vrot.slane %v1241, 1
        %v1289 = vrot.slane %v1242, 1
        %v1290 = vsel %vm1281, %v1288, %v1289
        %v1291 = vrot.slane %v1243, 1
        %v1292 = vrot.slane %v1244, 1
        %v1293 = vsel %vm1281, %v1291, %v1292
        %v1294 = vrot.slane %v1245, 1
        %v1295 = vrot.slane %v1246, 1
        %v1296 = vsel %vm1281, %v1294, %v1295
        %v1297 = vrot.slane %v1247, 1
        %v1298 = vrot.slane %v1248, 1
        %v1299 = vsel %vm1281, %v1297, %v1298
        %v1300 = vrot.slane %v1249, 1
        %v1301 = vrot.slane %v1250, 1
        %v1302 = vsel %vm1281, %v1300, %v1301
        %v1303 = vrot.slane %v1251, 1
        %v1304 = vrot.slane %v1252, 1
        %v1305 = vsel %vm1281, %v1303, %v1304
        %v1306 = vrot.slane %v1253, 1
        %v1307 = vrot.slane %v1254, 1
        %v1308 = vsel %vm1281, %v1306, %v1307
        %v1309 = vrot.slane %v1255, 1
        %v1310 = vrot.slane %v1256, 1
        %v1311 = vsel %vm1281, %v1309, %v1310
        %v1312 = vrot.slane %v1257, 1
        %v1313 = vrot.slane %v1258, 1
        %v1314 = vsel %vm1281, %v1312, %v1313
        %v1315 = vrot.slane %v1259, 1
        %v1316 = vrot.slane %v1260, 1
        %v1317 = vsel %vm1281, %v1315, %v1316
        %v1318 = vrot.slane %v1261, 1
        %v1319 = vrot.slane %v1262, 1
        %v1320 = vsel %vm1281, %v1318, %v1319
        %v1321 = vrot.slane %v1263, 1
        %v1322 = vrot.slane %v1264, 1
        %v1323 = vsel %vm1281, %v1321, %v1322
        %v1324 = vrot.slane %v1265, 1
        %v1325 = vrot.slane %v1266, 1
        %v1326 = vsel %vm1281, %v1324, %v1325
        %v1327 = vrot.slane %v1267, 1
        %v1328 = vrot.slane %v1268, 1
        %v1329 = vsel %vm1281, %v1327, %v1328
        %v1330 = vrot.slane %v1269, 1
        %v1331 = vrot.slane %v1270, 1
        %v1332 = vsel %vm1281, %v1330, %v1331
        %v1333 = vrot.slane %v1271, 1
        %v1334 = vrot.slane %v1272, 1
        %v1335 = vsel %vm1281, %v1333, %v1334
        %v1336 = vrot.slane %v1273, 1
        %v1337 = vrot.slane %v1274, 1
        %v1338 = vsel %vm1281, %v1336, %v1337
        %v1339 = vrot.slane %v1275, 1
        %v1340 = vrot.slane %v1276, 1
        %v1341 = vsel %vm1281, %v1339, %v1340
        %v1342 = vrot.slane %v1277, 1
        %v1343 = vrot.slane %v1278, 1
        %v1344 = vsel %vm1281, %v1342, %v1343
        %v1345 = vrot.slane %v1279, 1
        %v1346 = vrot.slane %v1280, 1
        %v1347 = vsel %vm1281, %v1345, %v1346
        %1370 = vst [vmem:[#allocation2 + $0x10] sm:$0xff] %v1284
        %1371 = vst [vmem:[#allocation2 + $0x28] sm:$0xff] %v1287
        %1372 = vst [vmem:[#allocation2 + $0x40] sm:$0xff] %v1290
        %1373 = vst [vmem:[#allocation2 + $0x58] sm:$0xff] %v1293
        %1374 = vst [vmem:[#allocation2 + $0x70] sm:$0xff] %v1296
        %1375 = vst [vmem:[#allocation2 + $0x88] sm:$0xff] %v1299
        %1376 = vst [vmem:[#allocation2 + $0xa0] sm:$0xff] %v1302
        %1377 = vst [vmem:[#allocation2 + $0xb8] sm:$0xff] %v1305
        %1378 = vst [vmem:[#allocation2 + $0xd0] sm:$0xff] %v1308
        %1379 = vst [vmem:[#allocation2 + $0xe8] sm:$0xff] %v1311
        %1380 = vst [vmem:[#allocation2 + $0x100] sm:$0xff] %v1314
        %1381 = vst [vmem:[#allocation2 + $0x118] sm:$0xff] %v1317
        %1382 = vst [vmem:[#allocation2 + $0x130] sm:$0xff] %v1320
        %1383 = vst [vmem:[#allocation2 + $0x148] sm:$0xff] %v1323
        %1384 = vst [vmem:[#allocation2 + $0x160] sm:$0xff] %v1326
        %1385 = vst [vmem:[#allocation2 + $0x178] sm:$0xff] %v1329
        %1386 = vst [vmem:[#allocation2 + $0x190] sm:$0xff] %v1332
        %1387 = vst [vmem:[#allocation2 + $0x1a8] sm:$0xff] %v1335
        %1388 = vst [vmem:[#allocation2 + $0x1c0] sm:$0xff] %v1338
        %1389 = vst [vmem:[#allocation2 + $0x1d8] sm:$0xff] %v1341
        %1390 = vst [vmem:[#allocation2 + $0x1f0] sm:$0xff] %v1344
        %1391 = vst [vmem:[#allocation2 + $0x208] sm:$0xff] %v1347
        %v1392 = vld [vmem:[#allocation2] sm:$0xff]
        %v1393 = vld [vmem:[#allocation2 + $0x8] sm:$0xff]
        %v1394 = vld [vmem:[#allocation2 + $0x10] sm:$0xff]
        %v1395 = vld [vmem:[#allocation2 + $0x18] sm:$0xff]
        %v1396 = vld [vmem:[#allocation2 + $0x20] sm:$0xff]
        %v1397 = vld [vmem:[#allocation2 + $0x28] sm:$0xff]
        %v1398 = vld [vmem:[#allocation2 + $0x30] sm:$0xff]
        %v1399 = vld [vmem:[#allocation2 + $0x38] sm:$0xff]
        %v1400 = vld [vmem:[#allocation2 + $0x40] sm:$0xff]
        %v1401 = vld [vmem:[#allocation2 + $0x48] sm:$0xff]
        %v1402 = vld [vmem:[#allocation2 + $0x50] sm:$0xff]
        %v1403 = vld [vmem:[#allocation2 + $0x58] sm:$0xff]
        %v1404 = vld [vmem:[#allocation2 + $0x60] sm:$0xff]
        %v1405 = vld [vmem:[#allocation2 + $0x68] sm:$0xff]
        %v1406 = vld [vmem:[#allocation2 + $0x70] sm:$0xff]
        %v1407 = vld [vmem:[#allocation2 + $0x78] sm:$0xff]
        %v1408 = vld [vmem:[#allocation2 + $0x80] sm:$0xff]
        %v1409 = vld [vmem:[#allocation2 + $0x88] sm:$0xff]
        %v1410 = vld [vmem:[#allocation2 + $0x90] sm:$0xff]
        %v1411 = vld [vmem:[#allocation2 + $0x98] sm:$0xff]
        %v1412 = vld [vmem:[#allocation2 + $0xa0] sm:$0xff]
        %v1413 = vld [vmem:[#allocation2 + $0xa8] sm:$0xff]
        %v1414 = vld [vmem:[#allocation2 + $0xb0] sm:$0xff]
        %v1415 = vld [vmem:[#allocation2 + $0xb8] sm:$0xff]
        %v1416 = vld [vmem:[#allocation2 + $0xc0] sm:$0xff]
        %v1417 = vld [vmem:[#allocation2 + $0xc8] sm:$0xff]
        %v1418 = vld [vmem:[#allocation2 + $0xd0] sm:$0xff]
        %v1419 = vld [vmem:[#allocation2 + $0xd8] sm:$0xff]
        %v1420 = vld [vmem:[#allocation2 + $0xe0] sm:$0xff]
        %v1421 = vld [vmem:[#allocation2 + $0xe8] sm:$0xff]
        %v1422 = vld [vmem:[#allocation2 + $0xf0] sm:$0xff]
        %v1423 = vld [vmem:[#allocation2 + $0xf8] sm:$0xff]
        %v1424 = vld [vmem:[#allocation2 + $0x100] sm:$0xff]
        %v1425 = vld [vmem:[#allocation2 + $0x108] sm:$0xff]
        %v1426 = vld [vmem:[#allocation2 + $0x110] sm:$0xff]
        %v1427 = vld [vmem:[#allocation2 + $0x118] sm:$0xff]
        %v1428 = vld [vmem:[#allocation2 + $0x120] sm:$0xff]
        %v1429 = vld [vmem:[#allocation2 + $0x128] sm:$0xff]
        %v1430 = vld [vmem:[#allocation2 + $0x130] sm:$0xff]
        %v1431 = vld [vmem:[#allocation2 + $0x138] sm:$0xff]
        %v1432 = vld [vmem:[#allocation2 + $0x140] sm:$0xff]
        %v1433 = vld [vmem:[#allocation2 + $0x148] sm:$0xff]
        %v1434 = vld [vmem:[#allocation2 + $0x150] sm:$0xff]
        %v1435 = vld [vmem:[#allocation2 + $0x158] sm:$0xff]
        %v1436 = vld [vmem:[#allocation2 + $0x160] sm:$0xff]
        %v1437 = vld [vmem:[#allocation2 + $0x168] sm:$0xff]
        %v1438 = vld [vmem:[#allocation2 + $0x170] sm:$0xff]
        %v1439 = vld [vmem:[#allocation2 + $0x178] sm:$0xff]
        %v1440 = vld [vmem:[#allocation2 + $0x180] sm:$0xff]
        %v1441 = vld [vmem:[#allocation2 + $0x188] sm:$0xff]
        %v1442 = vld [vmem:[#allocation2 + $0x190] sm:$0xff]
        %v1443 = vld [vmem:[#allocation2 + $0x198] sm:$0xff]
        %v1444 = vld [vmem:[#allocation2 + $0x1a0] sm:$0xff]
        %v1445 = vld [vmem:[#allocation2 + $0x1a8] sm:$0xff]
        %v1446 = vld [vmem:[#allocation2 + $0x1b0] sm:$0xff]
        %v1447 = vld [vmem:[#allocation2 + $0x1b8] sm:$0xff]
        %v1448 = vld [vmem:[#allocation2 + $0x1c0] sm:$0xff]
        %v1449 = vld [vmem:[#allocation2 + $0x1c8] sm:$0xff]
        %v1450 = vld [vmem:[#allocation2 + $0x1d0] sm:$0xff]
        %v1451 = vld [vmem:[#allocation2 + $0x1d8] sm:$0xff]
        %v1452 = vld [vmem:[#allocation2 + $0x1e0] sm:$0xff]
        %v1453 = vld [vmem:[#allocation2 + $0x1e8] sm:$0xff]
        %v1454 = vld [vmem:[#allocation2 + $0x1f0] sm:$0xff]
        %v1455 = vld [vmem:[#allocation2 + $0x1f8] sm:$0xff]
        %v1456 = vld [vmem:[#allocation2 + $0x200] sm:$0xff]
        %v1457 = vld [vmem:[#allocation2 + $0x208] sm:$0xff]
        %v1458 = vld [vmem:[#allocation4] sm:$0xf]
        %v1459 = vld [vmem:[#allocation4 + $0xc] sm:$0xf]
        %v1460 = vld [vmem:[#allocation4 + $0x18] sm:$0xf]
        %v1461 = vld [vmem:[#allocation4 + $0x24] sm:$0xf]
        %v1462 = vld [vmem:[#allocation4 + $0x30] sm:$0xf]
        %v1463 = vld [vmem:[#allocation4 + $0x3c] sm:$0xf]
        %v1464 = vld [vmem:[#allocation4 + $0x48] sm:$0xf]
        %v1465 = vld [vmem:[#allocation4 + $0x54] sm:$0xf]
        %v1466 = vld [vmem:[#allocation4 + $0x60] sm:$0xf]
        %v1467 = vld [vmem:[#allocation4 + $0x6c] sm:$0xf]
        %v1468 = vld [vmem:[#allocation4 + $0x78] sm:$0xf]
        %v1469 = vld [vmem:[#allocation4 + $0x84] sm:$0xf]
        %v1470 = vld [vmem:[#allocation4 + $0x90] sm:$0xf]
        %v1471 = vld [vmem:[#allocation4 + $0x9c] sm:$0xf]
        %v1472 = vld [vmem:[#allocation4 + $0xa8] sm:$0xf]
        %v1473 = vld [vmem:[#allocation4 + $0xb4] sm:$0xf]
        %v1474 = vld [vmem:[#allocation4 + $0xc0] sm:$0xf]
        %v1475 = vld [vmem:[#allocation4 + $0xcc] sm:$0xf]
        %v1476 = vld [vmem:[#allocation4 + $0xd8] sm:$0xf]
        %v1477 = vld [vmem:[#allocation4 + $0xe4] sm:$0xf]
        %v1478 = vld [vmem:[#allocation4 + $0xf0] sm:$0xf]
        %v1479 = vld [vmem:[#allocation4 + $0xfc] sm:$0xf]
        %v1480 = vld [vmem:[#allocation4 + $0x108] sm:$0xf]
        %v1481 = vld [vmem:[#allocation4 + $0x114] sm:$0xf]
        %v1482 = vld [vmem:[#allocation4 + $0x120] sm:$0xf]
        %v1483 = vld [vmem:[#allocation4 + $0x12c] sm:$0xf]
        %v1484 = vld [vmem:[#allocation4 + $0x138] sm:$0xf]
        %v1485 = vld [vmem:[#allocation4 + $0x144] sm:$0xf]
        %v1486 = vld [vmem:[#allocation4 + $0x150] sm:$0xf]
        %v1487 = vld [vmem:[#allocation4 + $0x15c] sm:$0xf]
        %v1488 = vld [vmem:[#allocation4 + $0x168] sm:$0xf]
        %v1489 = vld [vmem:[#allocation4 + $0x174] sm:$0xf]
        %v1490 = vld [vmem:[#allocation4 + $0x180] sm:$0xf]
        %v1491 = vld [vmem:[#allocation4 + $0x18c] sm:$0xf]
        %v1492 = vld [vmem:[#allocation4 + $0x198] sm:$0xf]
        %v1493 = vld [vmem:[#allocation4 + $0x1a4] sm:$0xf]
        %v1494 = vld [vmem:[#allocation4 + $0x1b0] sm:$0xf]
        %v1495 = vld [vmem:[#allocation4 + $0x1bc] sm:$0xf]
        %v1496 = vld [vmem:[#allocation4 + $0x1c8] sm:$0xf]
        %v1497 = vld [vmem:[#allocation4 + $0x1d4] sm:$0xf]
        %v1498 = vld [vmem:[#allocation4 + $0x1e0] sm:$0xf]
        %v1499 = vld [vmem:[#allocation4 + $0x1ec] sm:$0xf]
        %v1500 = vld [vmem:[#allocation4 + $0x1f8] sm:$0xf]
        %v1501 = vld [vmem:[#allocation4 + $0x204] sm:$0xf]
        %v1502 = vld [vmem:[#allocation4 + $0x210] sm:$0xf]
        %v1503 = vld [vmem:[#allocation4 + $0x21c] sm:$0xf]
        %v1504 = vld [vmem:[#allocation4 + $0x228] sm:$0xf]
        %v1505 = vld [vmem:[#allocation4 + $0x234] sm:$0xf]
        %v1506 = vld [vmem:[#allocation4 + $0x4] sm:$0xf]
        %v1507 = vld [vmem:[#allocation4 + $0x10] sm:$0xf]
        %v1508 = vld [vmem:[#allocation4 + $0x1c] sm:$0xf]
        %v1509 = vld [vmem:[#allocation4 + $0x28] sm:$0xf]
        %v1510 = vld [vmem:[#allocation4 + $0x34] sm:$0xf]
        %v1511 = vld [vmem:[#allocation4 + $0x40] sm:$0xf]
        %v1512 = vld [vmem:[#allocation4 + $0x4c] sm:$0xf]
        %v1513 = vld [vmem:[#allocation4 + $0x58] sm:$0xf]
        %v1514 = vld [vmem:[#allocation4 + $0x64] sm:$0xf]
        %v1515 = vld [vmem:[#allocation4 + $0x70] sm:$0xf]
        %v1516 = vld [vmem:[#allocation4 + $0x7c] sm:$0xf]
        %v1517 = vld [vmem:[#allocation4 + $0x88] sm:$0xf]
        %v1518 = vld [vmem:[#allocation4 + $0x94] sm:$0xf]
        %v1519 = vld [vmem:[#allocation4 + $0xa0] sm:$0xf]
        %v1520 = vld [vmem:[#allocation4 + $0xac] sm:$0xf]
        %v1521 = vld [vmem:[#allocation4 + $0xb8] sm:$0xf]
        %v1522 = vld [vmem:[#allocation4 + $0xc4] sm:$0xf]
        %v1523 = vld [vmem:[#allocation4 + $0xd0] sm:$0xf]
        %v1524 = vld [vmem:[#allocation4 + $0xdc] sm:$0xf]
        %v1525 = vld [vmem:[#allocation4 + $0xe8] sm:$0xf]
        %v1526 = vld [vmem:[#allocation4 + $0xf4] sm:$0xf]
        %v1527 = vld [vmem:[#allocation4 + $0x100] sm:$0xf]
        %v1528 = vld [vmem:[#allocation4 + $0x10c] sm:$0xf]
        %v1529 = vld [vmem:[#allocation4 + $0x118] sm:$0xf]
        %v1530 = vld [vmem:[#allocation4 + $0x124] sm:$0xf]
        %v1531 = vld [vmem:[#allocation4 + $0x130] sm:$0xf]
        %v1532 = vld [vmem:[#allocation4 + $0x13c] sm:$0xf]
        %v1533 = vld [vmem:[#allocation4 + $0x148] sm:$0xf]
        %v1534 = vld [vmem:[#allocation4 + $0x154] sm:$0xf]
        %v1535 = vld [vmem:[#allocation4 + $0x160] sm:$0xf]
        %v1536 = vld [vmem:[#allocation4 + $0x16c] sm:$0xf]
        %v1537 = vld [vmem:[#allocation4 + $0x178] sm:$0xf]
        %v1538 = vld [vmem:[#allocation4 + $0x184] sm:$0xf]
        %v1539 = vld [vmem:[#allocation4 + $0x190] sm:$0xf]
        %v1540 = vld [vmem:[#allocation4 + $0x19c] sm:$0xf]
        %v1541 = vld [vmem:[#allocation4 + $0x1a8] sm:$0xf]
        %v1542 = vld [vmem:[#allocation4 + $0x1b4] sm:$0xf]
        %v1543 = vld [vmem:[#allocation4 + $0x1c0] sm:$0xf]
        %v1544 = vld [vmem:[#allocation4 + $0x1cc] sm:$0xf]
        %v1545 = vld [vmem:[#allocation4 + $0x1d8] sm:$0xf]
        %v1546 = vld [vmem:[#allocation4 + $0x1e4] sm:$0xf]
        %v1547 = vld [vmem:[#allocation4 + $0x1f0] sm:$0xf]
        %v1548 = vld [vmem:[#allocation4 + $0x1fc] sm:$0xf]
        %v1549 = vld [vmem:[#allocation4 + $0x208] sm:$0xf]
        %v1550 = vld [vmem:[#allocation4 + $0x214] sm:$0xf]
        %v1551 = vld [vmem:[#allocation4 + $0x220] sm:$0xf]
        %v1552 = vld [vmem:[#allocation4 + $0x22c] sm:$0xf]
        %v1553 = vld [vmem:[#allocation4 + $0x238] sm:$0xf]
        %v1602 = vunpack.c.l.b16 %v1506
        %v1603 = vunpack.c.l.b16 %v1507
        %v1604 = vunpack.c.l.b16 %v1508
        %v1605 = vunpack.c.l.b16 %v1509
        %v1606 = vunpack.c.l.b16 %v1510
        %v1607 = vunpack.c.l.b16 %v1511
        %v1608 = vunpack.c.l.b16 %v1512
        %v1609 = vunpack.c.l.b16 %v1513
        %v1610 = vunpack.c.l.b16 %v1514
        %v1611 = vunpack.c.l.b16 %v1515
        %v1612 = vunpack.c.l.b16 %v1516
        %v1613 = vunpack.c.l.b16 %v1517
        %v1614 = vunpack.c.l.b16 %v1518
        %v1615 = vunpack.c.l.b16 %v1519
        %v1616 = vunpack.c.l.b16 %v1520
        %v1617 = vunpack.c.l.b16 %v1521
        %v1618 = vunpack.c.l.b16 %v1522
        %v1619 = vunpack.c.l.b16 %v1523
        %v1620 = vunpack.c.l.b16 %v1524
        %v1621 = vunpack.c.l.b16 %v1525
        %v1622 = vunpack.c.l.b16 %v1526
        %v1623 = vunpack.c.l.b16 %v1527
        %v1624 = vunpack.c.l.b16 %v1528
        %v1625 = vunpack.c.l.b16 %v1529
        %v1626 = vunpack.c.l.b16 %v1530
        %v1627 = vunpack.c.l.b16 %v1531
        %v1628 = vunpack.c.l.b16 %v1532
        %v1629 = vunpack.c.l.b16 %v1533
        %v1630 = vunpack.c.l.b16 %v1534
        %v1631 = vunpack.c.l.b16 %v1535
        %v1632 = vunpack.c.l.b16 %v1536
        %v1633 = vunpack.c.l.b16 %v1537
        %v1634 = vunpack.c.l.b16 %v1538
        %v1635 = vunpack.c.l.b16 %v1539
        %v1636 = vunpack.c.l.b16 %v1540
        %v1637 = vunpack.c.l.b16 %v1541
        %v1638 = vunpack.c.l.b16 %v1542
        %v1639 = vunpack.c.l.b16 %v1543
        %v1640 = vunpack.c.l.b16 %v1544
        %v1641 = vunpack.c.l.b16 %v1545
        %v1642 = vunpack.c.l.b16 %v1546
        %v1643 = vunpack.c.l.b16 %v1547
        %v1644 = vunpack.c.l.b16 %v1548
        %v1645 = vunpack.c.l.b16 %v1549
        %v1646 = vunpack.c.l.b16 %v1550
        %v1647 = vunpack.c.l.b16 %v1551
        %v1648 = vunpack.c.l.b16 %v1552
        %v1649 = vunpack.c.l.b16 %v1553
        %v1650 = vpack.c.b16 %v1603, %v1602
        %v1651 = vpack.c.b16 %v1605, %v1604
        %v1652 = vpack.c.b16 %v1607, %v1606
        %v1653 = vpack.c.b16 %v1609, %v1608
        %v1654 = vpack.c.b16 %v1611, %v1610
        %v1655 = vpack.c.b16 %v1613, %v1612
        %v1656 = vpack.c.b16 %v1615, %v1614
        %v1657 = vpack.c.b16 %v1617, %v1616
        %v1658 = vpack.c.b16 %v1619, %v1618
        %v1659 = vpack.c.b16 %v1621, %v1620
        %v1660 = vpack.c.b16 %v1623, %v1622
        %v1661 = vpack.c.b16 %v1625, %v1624
        %v1662 = vpack.c.b16 %v1627, %v1626
        %v1663 = vpack.c.b16 %v1629, %v1628
        %v1664 = vpack.c.b16 %v1631, %v1630
        %v1665 = vpack.c.b16 %v1633, %v1632
        %v1666 = vpack.c.b16 %v1635, %v1634
        %v1667 = vpack.c.b16 %v1637, %v1636
        %v1668 = vpack.c.b16 %v1639, %v1638
        %v1669 = vpack.c.b16 %v1641, %v1640
        %v1670 = vpack.c.b16 %v1643, %v1642
        %v1671 = vpack.c.b16 %v1645, %v1644
        %v1672 = vpack.c.b16 %v1647, %v1646
        %v1673 = vpack.c.b16 %v1649, %v1648
        %1698 = vmatprep.subr.bf16.mxu0 0
        %1699 = vmatpush1.bf16.msra.mxu0 %v1650
        %1700 = vmatprep.subr.bf16.mxu0 0
        %1701 = vmatpush1.bf16.msra.mxu0 %v1651
        %1702 = vmatprep.subr.bf16.mxu0 0
        %1703 = vmatpush1.bf16.msra.mxu0 %v1652
        %1704 = vmatprep.subr.bf16.mxu0 0
        %1705 = vmatpush1.bf16.msra.mxu0 %v1653
        %1706 = vmatprep.subr.bf16.mxu0 0
        %1707 = vmatpush1.bf16.msra.mxu0 %v1654
        %1708 = vmatprep.subr.bf16.mxu0 0
        %1709 = vmatpush1.bf16.msra.mxu0 %v1655
        %1710 = vmatprep.subr.bf16.mxu0 0
        %1711 = vmatpush1.bf16.msra.mxu0 %v1656
        %1712 = vmatprep.subr.bf16.mxu0 0
        %1713 = vmatpush1.bf16.msra.mxu0 %v1657
        %1714 = vmatprep.subr.bf16.mxu0 0
        %1715 = vmatpush1.bf16.msra.mxu0 %v1658
        %1716 = vmatprep.subr.bf16.mxu0 0
        %1717 = vmatpush1.bf16.msra.mxu0 %v1659
        %1718 = vmatprep.subr.bf16.mxu0 0
        %1719 = vmatpush1.bf16.msra.mxu0 %v1660
        %1720 = vmatprep.subr.bf16.mxu0 0
        %1721 = vmatpush1.bf16.msra.mxu0 %v1661
        %1722 = vmatprep.subr.bf16.mxu0 0
        %1723 = vmatpush1.bf16.msra.mxu0 %v1662
        %1724 = vmatprep.subr.bf16.mxu0 0
        %1725 = vmatpush1.bf16.msra.mxu0 %v1663
        %1726 = vmatprep.subr.bf16.mxu0 0
        %1727 = vmatpush1.bf16.msra.mxu0 %v1664
        %1728 = vmatprep.subr.bf16.mxu0 0
        %1729 = vmatpush1.bf16.msra.mxu0 %v1665
        %1730 = vmatprep.mubr.bf16.mxu0 %v1396
        %1731 = vmatmul.mubr.bf16.gmra.mrb[0].mxu0 %v1395
        %v1732 = vpop.f32.mrb[0].mxu0
        %v1733 = vadd.f32 0.0, %v1732
        %v1734 = vpop.f32.mrb[0].mxu0
        %v1735 = vpop.f32.mrb[0].mxu0
        %v1736 = vadd.f32 0.0, %v1735
        %v1737 = vpop.f32.mrb[0].mxu0
        %1738 = vmatprep.mubr.bf16.mxu0 %v1399
        %1739 = vmatmul.mubr.bf16.gmra.mrb[0].mxu0 %v1398
        %v1740 = vpop.f32.mrb[0].mxu0
        %v1741 = vadd.f32 0.0, %v1740
        %v1742 = vpop.f32.mrb[0].mxu0
        %v1743 = vpop.f32.mrb[0].mxu0
        %v1744 = vadd.f32 0.0, %v1743
        %v1745 = vpop.f32.mrb[0].mxu0
        %1746 = vmatprep.mubr.bf16.mxu0 %v1402
        %1747 = vmatmul.mubr.bf16.gmra.mrb[0].mxu0 %v1401
        %v1748 = vpop.f32.mrb[0].mxu0
        %v1749 = vadd.f32 0.0, %v1748
        %v1750 = vpop.f32.mrb[0].mxu0
        %v1751 = vpop.f32.mrb[0].mxu0
        %v1752 = vadd.f32 0.0, %v1751
        %v1753 = vpop.f32.mrb[0].mxu0
        %1754 = vmatprep.mubr.bf16.mxu0 %v1405
        %1755 = vmatmul.mubr.bf16.gmra.mrb[0].mxu0 %v1404
        %v1756 = vpop.f32.mrb[0].mxu0
        %v1757 = vadd.f32 0.0, %v1756
        %v1758 = vpop.f32.mrb[0].mxu0
        %v1759 = vpop.f32.mrb[0].mxu0
        %v1760 = vadd.f32 0.0, %v1759
        %v1761 = vpop.f32.mrb[0].mxu0
        %1762 = vmatprep.mubr.bf16.mxu0 %v1408
        %1763 = vmatmul.mubr.bf16.gmra.mrb[0].mxu0 %v1407
        %v1764 = vpop.f32.mrb[0].mxu0
        %v1765 = vadd.f32 0.0, %v1764
        %v1766 = vpop.f32.mrb[0].mxu0
        %v1767 = vpop.f32.mrb[0].mxu0
        %v1768 = vadd.f32 0.0, %v1767
        %v1769 = vpop.f32.mrb[0].mxu0
        %1770 = vmatprep.mubr.bf16.mxu0 %v1411
        %1771 = vmatmul.mubr.bf16.gmra.mrb[0].mxu0 %v1410
        %v1772 = vpop.f32.mrb[0].mxu0
        %v1773 = vadd.f32 0.0, %v1772
        %v1774 = vpop.f32.mrb[0].mxu0
        %v1775 = vpop.f32.mrb[0].mxu0
        %v1776 = vadd.f32 0.0, %v1775
        %v1777 = vpop.f32.mrb[0].mxu0
        %1778 = vmatprep.mubr.bf16.mxu0 %v1414
        %1779 = vmatmul.mubr.bf16.gmra.mrb[0].mxu0 %v1413
        %v1780 = vpop.f32.mrb[0].mxu0
        %v1781 = vadd.f32 0.0, %v1780
        %v1782 = vpop.f32.mrb[0].mxu0
        %v1783 = vpop.f32.mrb[0].mxu0
        %v1784 = vadd.f32 0.0, %v1783
        %v1785 = vpop.f32.mrb[0].mxu0
        %1786 = vmatprep.mubr.bf16.mxu0 %v1417
        %1787 = vmatmul.mubr.bf16.gmra.mrb[0].mxu0 %v1416
        %v1788 = vpop.f32.mrb[0].mxu0
        %v1789 = vadd.f32 0.0, %v1788
        %v1790 = vpop.f32.mrb[0].mxu0
        %v1791 = vpop.f32.mrb[0].mxu0
        %v1792 = vadd.f32 0.0, %v1791
        %v1793 = vpop.f32.mrb[0].mxu0
        %1794 = vmatprep.mubr.bf16.mxu0 %v1420
        %1795 = vmatmul.mubr.bf16.gmra.mrb[0].mxu0 %v1419
        %v1796 = vpop.f32.mrb[0].mxu0
        %v1797 = vadd.f32 0.0, %v1796
        %v1798 = vpop.f32.mrb[0].mxu0
        %v1799 = vpop.f32.mrb[0].mxu0
        %v1800 = vadd.f32 0.0, %v1799
        %v1801 = vpop.f32.mrb[0].mxu0
        %1802 = vmatprep.mubr.bf16.mxu0 %v1423
        %1803 = vmatmul.mubr.bf16.gmra.mrb[0].mxu0 %v1422
        %v1804 = vpop.f32.mrb[0].mxu0
        %v1805 = vadd.f32 0.0, %v1804
        %v1806 = vpop.f32.mrb[0].mxu0
        %v1807 = vpop.f32.mrb[0].mxu0
        %v1808 = vadd.f32 0.0, %v1807
        %v1809 = vpop.f32.mrb[0].mxu0
        %1810 = vmatprep.mubr.bf16.mxu0 %v1426
        %1811 = vmatmul.mubr.bf16.gmra.mrb[0].mxu0 %v1425
        %v1812 = vpop.f32.mrb[0].mxu0
        %v1813 = vadd.f32 0.0, %v1812
        %v1814 = vpop.f32.mrb[0].mxu0
        %v1815 = vpop.f32.mrb[0].mxu0
        %v1816 = vadd.f32 0.0, %v1815
        %v1817 = vpop.f32.mrb[0].mxu0
        %1818 = vmatprep.mubr.bf16.mxu0 %v1429
        %1819 = vmatmul.mubr.bf16.gmra.mrb[0].mxu0 %v1428
        %v1820 = vpop.f32.mrb[0].mxu0
        %v1821 = vadd.f32 0.0, %v1820
        %v1822 = vpop.f32.mrb[0].mxu0
        %v1823 = vpop.f32.mrb[0].mxu0
        %v1824 = vadd.f32 0.0, %v1823
        %v1825 = vpop.f32.mrb[0].mxu0
        %1826 = vmatprep.mubr.bf16.mxu0 %v1432
        %1827 = vmatmul.mubr.bf16.gmra.mrb[0].mxu0 %v1431
        %v1828 = vpop.f32.mrb[0].mxu0
        %v1829 = vadd.f32 0.0, %v1828
        %v1830 = vpop.f32.mrb[0].mxu0
        %v1831 = vpop.f32.mrb[0].mxu0
        %v1832 = vadd.f32 0.0, %v1831
        %v1833 = vpop.f32.mrb[0].mxu0
        %1834 = vmatprep.mubr.bf16.mxu0 %v1435
        %1835 = vmatmul.mubr.bf16.gmra.mrb[0].mxu0 %v1434
        %v1836 = vpop.f32.mrb[0].mxu0
        %v1837 = vadd.f32 0.0, %v1836
        %v1838 = vpop.f32.mrb[0].mxu0
        %v1839 = vpop.f32.mrb[0].mxu0
        %v1840 = vadd.f32 0.0, %v1839
        %v1841 = vpop.f32.mrb[0].mxu0
        %1842 = vmatprep.mubr.bf16.mxu0 %v1438
        %1843 = vmatmul.mubr.bf16.gmra.mrb[0].mxu0 %v1437
        %v1844 = vpop.f32.mrb[0].mxu0
        %v1845 = vadd.f32 0.0, %v1844
        %v1846 = vpop.f32.mrb[0].mxu0
        %v1847 = vpop.f32.mrb[0].mxu0
        %v1848 = vadd.f32 0.0, %v1847
        %v1849 = vpop.f32.mrb[0].mxu0
        %1850 = vmatprep.mubr.bf16.mxu0 %v1441
        %1851 = vmatmul.mubr.bf16.gmra.mrb[0].mxu0 %v1440
        %v1852 = vpop.f32.mrb[0].mxu0
        %v1853 = vadd.f32 0.0, %v1852
        %v1854 = vpop.f32.mrb[0].mxu0
        %v1855 = vpop.f32.mrb[0].mxu0
        %v1856 = vadd.f32 0.0, %v1855
        %v1857 = vpop.f32.mrb[0].mxu0
        %1858 = vmatprep.mubr.bf16.mxu0 %v1444
        %1859 = vmatmul.mubr.bf16.gmra.mrb[0].mxu0 %v1443
        %v1860 = vpop.f32.mrb[0].mxu0
        %v1861 = vadd.f32 0.0, %v1860
        %v1862 = vpop.f32.mrb[0].mxu0
        %v1863 = vpop.f32.mrb[0].mxu0
        %v1864 = vadd.f32 0.0, %v1863
        %v1865 = vpop.f32.mrb[0].mxu0
        %1866 = vmatprep.mubr.bf16.mxu0 %v1447
        %1867 = vmatmul.mubr.bf16.gmra.mrb[0].mxu0 %v1446
        %v1868 = vpop.f32.mrb[0].mxu0
        %v1869 = vadd.f32 0.0, %v1868
        %v1870 = vpop.f32.mrb[0].mxu0
        %v1871 = vpop.f32.mrb[0].mxu0
        %v1872 = vadd.f32 0.0, %v1871
        %v1873 = vpop.f32.mrb[0].mxu0
        %1874 = vmatprep.mubr.bf16.mxu0 %v1450
        %1875 = vmatmul.mubr.bf16.gmra.mrb[0].mxu0 %v1449
        %v1876 = vpop.f32.mrb[0].mxu0
        %v1877 = vadd.f32 0.0, %v1876
        %v1878 = vpop.f32.mrb[0].mxu0
        %v1879 = vpop.f32.mrb[0].mxu0
        %v1880 = vadd.f32 0.0, %v1879
        %v1881 = vpop.f32.mrb[0].mxu0
        %1882 = vmatprep.mubr.bf16.mxu0 %v1453
        %1883 = vmatmul.mubr.bf16.gmra.mrb[0].mxu0 %v1452
        %v1884 = vpop.f32.mrb[0].mxu0
        %v1885 = vadd.f32 0.0, %v1884
        %v1886 = vpop.f32.mrb[0].mxu0
        %v1887 = vpop.f32.mrb[0].mxu0
        %v1888 = vadd.f32 0.0, %v1887
        %v1889 = vpop.f32.mrb[0].mxu0
        %1890 = vdwg.mxu0
        %1891 = vmatprep.subr.bf16.mxu0 0
        %1892 = vmatpush1.bf16.msra.mxu0 %v1666
        %1893 = vmatprep.subr.bf16.mxu0 0
        %1894 = vmatpush1.bf16.msra.mxu0 %v1667
        %1895 = vmatprep.subr.bf16.mxu0 0
        %1896 = vmatpush1.bf16.msra.mxu0 %v1668
        %1897 = vmatprep.subr.bf16.mxu0 0
        %1898 = vmatpush1.bf16.msra.mxu0 %v1669
        %1899 = vmatprep.subr.bf16.mxu0 0
        %1900 = vmatpush1.bf16.msra.mxu0 %v1670
        %1901 = vmatprep.subr.bf16.mxu0 0
        %1902 = vmatpush1.bf16.msra.mxu0 %v1671
        %1903 = vmatprep.subr.bf16.mxu0 0
        %1904 = vmatpush1.bf16.msra.mxu0 %v1672
        %1905 = vmatprep.subr.bf16.mxu0 0
        %1906 = vmatpush1.bf16.msra.mxu0 %v1673
        %1907 = vmatprep.subr.bf16.mxu0 0
        %1908 = vmatpush1.bf16.msra.mxu0 0
        %1909 = vmatprep.subr.bf16.mxu0 0
        %1910 = vmatpush1.bf16.msra.mxu0 0
        %1911 = vmatprep.subr.bf16.mxu0 0
        %1912 = vmatpush1.bf16.msra.mxu0 0
        %1913 = vmatprep.subr.bf16.mxu0 0
        %1914 = vmatpush1.bf16.msra.mxu0 0
        %1915 = vmatprep.subr.bf16.mxu0 0
        %1916 = vmatpush1.bf16.msra.mxu0 0
        %1917 = vmatprep.subr.bf16.mxu0 0
        %1918 = vmatpush1.bf16.msra.mxu0 0
        %1919 = vmatprep.subr.bf16.mxu0 0
        %1920 = vmatpush1.bf16.msra.mxu0 0
        %1921 = vmatprep.subr.bf16.mxu0 0
        %1922 = vmatpush1.bf16.msra.mxu0 0
        %1923 = vmatprep.mubr.bf16.mxu0 0
        %1924 = vmatmul.mubr.bf16.gmra.mrb[0].mxu0 %v1397
        %v1925 = vpop.f32.mrb[0].mxu0
        %v1926 = vadd.f32 %v1733, %v1925
        %v1927 = vpop.f32.mrb[0].mxu0
        %v1928 = vpop.f32.mrb[0].mxu0
        %v1929 = vadd.f32 %v1736, %v1928
        %v1930 = vpop.f32.mrb[0].mxu0
        %1931 = vmatprep.mubr.bf16.mxu0 0
        %1932 = vmatmul.mubr.bf16.gmra.mrb[0].mxu0 %v1400
        %v1933 = vpop.f32.mrb[0].mxu0
        %v1934 = vadd.f32 %v1741, %v1933
        %v1935 = vpop.f32.mrb[0].mxu0
        %v1936 = vpop.f32.mrb[0].mxu0
        %v1937 = vadd.f32 %v1744, %v1936
        %v1938 = vpop.f32.mrb[0].mxu0
        %1939 = vmatprep.mubr.bf16.mxu0 0
        %1940 = vmatmul.mubr.bf16.gmra.mrb[0].mxu0 %v1403
        %v1941 = vpop.f32.mrb[0].mxu0
        %v1942 = vadd.f32 %v1749, %v1941
        %v1943 = vpop.f32.mrb[0].mxu0
        %v1944 = vpop.f32.mrb[0].mxu0
        %v1945 = vadd.f32 %v1752, %v1944
        %v1946 = vpop.f32.mrb[0].mxu0
        %1947 = vmatprep.mubr.bf16.mxu0 0
        %1948 = vmatmul.mubr.bf16.gmra.mrb[0].mxu0 %v1406
        %v1949 = vpop.f32.mrb[0].mxu0
        %v1950 = vadd.f32 %v1757, %v1949
        %v1951 = vpop.f32.mrb[0].mxu0
        %v1952 = vpop.f32.mrb[0].mxu0
        %v1953 = vadd.f32 %v1760, %v1952
        %v1954 = vpop.f32.mrb[0].mxu0
        %1955 = vmatprep.mubr.bf16.mxu0 0
        %1956 = vmatmul.mubr.bf16.gmra.mrb[0].mxu0 %v1409
        %v1957 = vpop.f32.mrb[0].mxu0
        %v1958 = vadd.f32 %v1765, %v1957
        %v1959 = vpop.f32.mrb[0].mxu0
        %v1960 = vpop.f32.mrb[0].mxu0
        %v1961 = vadd.f32 %v1768, %v1960
        %v1962 = vpop.f32.mrb[0].mxu0
        %1963 = vmatprep.mubr.bf16.mxu0 0
        %1964 = vmatmul.mubr.bf16.gmra.mrb[0].mxu0 %v1412
        %v1965 = vpop.f32.mrb[0].mxu0
        %v1966 = vadd.f32 %v1773, %v1965
        %v1967 = vpop.f32.mrb[0].mxu0
        %v1968 = vpop.f32.mrb[0].mxu0
        %v1969 = vadd.f32 %v1776, %v1968
        %v1970 = vpop.f32.mrb[0].mxu0
        %1971 = vmatprep.mubr.bf16.mxu0 0
        %1972 = vmatmul.mubr.bf16.gmra.mrb[0].mxu0 %v1415
        %v1973 = vpop.f32.mrb[0].mxu0
        %v1974 = vadd.f32 %v1781, %v1973
        %v1975 = vpop.f32.mrb[0].mxu0
        %v1976 = vpop.f32.mrb[0].mxu0
        %v1977 = vadd.f32 %v1784, %v1976
        %v1978 = vpop.f32.mrb[0].mxu0
        %1979 = vmatprep.mubr.bf16.mxu0 0
        %1980 = vmatmul.mubr.bf16.gmra.mrb[0].mxu0 %v1418
        %v1981 = vpop.f32.mrb[0].mxu0
        %v1982 = vadd.f32 %v1789, %v1981
        %v1983 = vpop.f32.mrb[0].mxu0
        %v1984 = vpop.f32.mrb[0].mxu0
        %v1985 = vadd.f32 %v1792, %v1984
        %v1986 = vpop.f32.mrb[0].mxu0
        %1987 = vmatprep.mubr.bf16.mxu0 0
        %1988 = vmatmul.mubr.bf16.gmra.mrb[0].mxu0 %v1421
        %v1989 = vpop.f32.mrb[0].mxu0
        %v1990 = vadd.f32 %v1797, %v1989
        %v1991 = vpop.f32.mrb[0].mxu0
        %v1992 = vpop.f32.mrb[0].mxu0
        %v1993 = vadd.f32 %v1800, %v1992
        %v1994 = vpop.f32.mrb[0].mxu0
        %1995 = vmatprep.mubr.bf16.mxu0 0
        %1996 = vmatmul.mubr.bf16.gmra.mrb[0].mxu0 %v1424
        %v1997 = vpop.f32.mrb[0].mxu0
        %v1998 = vadd.f32 %v1805, %v1997
        %v1999 = vpop.f32.mrb[0].mxu0
        %v2000 = vpop.f32.mrb[0].mxu0
        %v2001 = vadd.f32 %v1808, %v2000
        %v2002 = vpop.f32.mrb[0].mxu0
        %2003 = vmatprep.mubr.bf16.mxu0 0
        %2004 = vmatmul.mubr.bf16.gmra.mrb[0].mxu0 %v1427
        %v2005 = vpop.f32.mrb[0].mxu0
        %v2006 = vadd.f32 %v1813, %v2005
        %v2007 = vpop.f32.mrb[0].mxu0
        %v2008 = vpop.f32.mrb[0].mxu0
        %v2009 = vadd.f32 %v1816, %v2008
        %v2010 = vpop.f32.mrb[0].mxu0
        %2011 = vmatprep.mubr.bf16.mxu0 0
        %2012 = vmatmul.mubr.bf16.gmra.mrb[0].mxu0 %v1430
        %v2013 = vpop.f32.mrb[0].mxu0
        %v2014 = vadd.f32 %v1821, %v2013
        %v2015 = vpop.f32.mrb[0].mxu0
        %v2016 = vpop.f32.mrb[0].mxu0
        %v2017 = vadd.f32 %v1824, %v2016
        %v2018 = vpop.f32.mrb[0].mxu0
        %2019 = vmatprep.mubr.bf16.mxu0 0
        %2020 = vmatmul.mubr.bf16.gmra.mrb[0].mxu0 %v1433
        %v2021 = vpop.f32.mrb[0].mxu0
        %v2022 = vadd.f32 %v1829, %v2021
        %v2023 = vpop.f32.mrb[0].mxu0
        %v2024 = vpop.f32.mrb[0].mxu0
        %v2025 = vadd.f32 %v1832, %v2024
        %v2026 = vpop.f32.mrb[0].mxu0
        %2027 = vmatprep.mubr.bf16.mxu0 0
        %2028 = vmatmul.mubr.bf16.gmra.mrb[0].mxu0 %v1436
        %v2029 = vpop.f32.mrb[0].mxu0
        %v2030 = vadd.f32 %v1837, %v2029
        %v2031 = vpop.f32.mrb[0].mxu0
        %v2032 = vpop.f32.mrb[0].mxu0
        %v2033 = vadd.f32 %v1840, %v2032
        %v2034 = vpop.f32.mrb[0].mxu0
        %2035 = vmatprep.mubr.bf16.mxu0 0
        %2036 = vmatmul.mubr.bf16.gmra.mrb[0].mxu0 %v1439
        %v2037 = vpop.f32.mrb[0].mxu0
        %v2038 = vadd.f32 %v1845, %v2037
        %v2039 = vpop.f32.mrb[0].mxu0
        %v2040 = vpop.f32.mrb[0].mxu0
        %v2041 = vadd.f32 %v1848, %v2040
        %v2042 = vpop.f32.mrb[0].mxu0
        %2043 = vmatprep.mubr.bf16.mxu0 0
        %2044 = vmatmul.mubr.bf16.gmra.mrb[0].mxu0 %v1442
        %v2045 = vpop.f32.mrb[0].mxu0
        %v2046 = vadd.f32 %v1853, %v2045
        %v2047 = vpop.f32.mrb[0].mxu0
        %v2048 = vpop.f32.mrb[0].mxu0
        %v2049 = vadd.f32 %v1856, %v2048
        %v2050 = vpop.f32.mrb[0].mxu0
        %2051 = vmatprep.mubr.bf16.mxu0 0
        %2052 = vmatmul.mubr.bf16.gmra.mrb[0].mxu0 %v1445
        %v2053 = vpop.f32.mrb[0].mxu0
        %v2054 = vadd.f32 %v1861, %v2053
        %v2055 = vpop.f32.mrb[0].mxu0
        %v2056 = vpop.f32.mrb[0].mxu0
        %v2057 = vadd.f32 %v1864, %v2056
        %v2058 = vpop.f32.mrb[0].mxu0
        %2059 = vmatprep.mubr.bf16.mxu0 0
        %2060 = vmatmul.mubr.bf16.gmra.mrb[0].mxu0 %v1448
        %v2061 = vpop.f32.mrb[0].mxu0
        %v2062 = vadd.f32 %v1869, %v2061
        %v2063 = vpop.f32.mrb[0].mxu0
        %v2064 = vpop.f32.mrb[0].mxu0
        %v2065 = vadd.f32 %v1872, %v2064
        %v2066 = vpop.f32.mrb[0].mxu0
        %2067 = vmatprep.mubr.bf16.mxu0 0
        %2068 = vmatmul.mubr.bf16.gmra.mrb[0].mxu0 %v1451
        %v2069 = vpop.f32.mrb[0].mxu0
        %v2070 = vadd.f32 %v1877, %v2069
        %v2071 = vpop.f32.mrb[0].mxu0
        %v2072 = vpop.f32.mrb[0].mxu0
        %v2073 = vadd.f32 %v1880, %v2072
        %v2074 = vpop.f32.mrb[0].mxu0
        %2075 = vmatprep.mubr.bf16.mxu0 0
        %2076 = vmatmul.mubr.bf16.gmra.mrb[0].mxu0 %v1454
        %v2077 = vpop.f32.mrb[0].mxu0
        %v2078 = vadd.f32 %v1885, %v2077
        %v2079 = vpop.f32.mrb[0].mxu0
        %v2080 = vpop.f32.mrb[0].mxu0
        %v2081 = vadd.f32 %v1888, %v2080
        %v2082 = vpop.f32.mrb[0].mxu0
        %2083 = vdwg.mxu0
        %v2132 = vunpack.c.l.b16 %v1458
        %v2133 = vunpack.c.l.b16 %v1459
        %v2134 = vunpack.c.l.b16 %v1460
        %v2135 = vunpack.c.l.b16 %v1461
        %v2136 = vunpack.c.l.b16 %v1462
        %v2137 = vunpack.c.l.b16 %v1463
        %v2138 = vunpack.c.l.b16 %v1464
        %v2139 = vunpack.c.l.b16 %v1465
        %v2140 = vunpack.c.l.b16 %v1466
        %v2141 = vunpack.c.l.b16 %v1467
        %v2142 = vunpack.c.l.b16 %v1468
        %v2143 = vunpack.c.l.b16 %v1469
        %v2144 = vunpack.c.l.b16 %v1470
        %v2145 = vunpack.c.l.b16 %v1471
        %v2146 = vunpack.c.l.b16 %v1472
        %v2147 = vunpack.c.l.b16 %v1473
        %v2148 = vunpack.c.l.b16 %v1474
        %v2149 = vunpack.c.l.b16 %v1475
        %v2150 = vunpack.c.l.b16 %v1476
        %v2151 = vunpack.c.l.b16 %v1477
        %v2152 = vunpack.c.l.b16 %v1478
        %v2153 = vunpack.c.l.b16 %v1479
        %v2154 = vunpack.c.l.b16 %v1480
        %v2155 = vunpack.c.l.b16 %v1481
        %v2156 = vunpack.c.l.b16 %v1482
        %v2157 = vunpack.c.l.b16 %v1483
        %v2158 = vunpack.c.l.b16 %v1484
        %v2159 = vunpack.c.l.b16 %v1485
        %v2160 = vunpack.c.l.b16 %v1486
        %v2161 = vunpack.c.l.b16 %v1487
        %v2162 = vunpack.c.l.b16 %v1488
        %v2163 = vunpack.c.l.b16 %v1489
        %v2164 = vunpack.c.l.b16 %v1490
        %v2165 = vunpack.c.l.b16 %v1491
        %v2166 = vunpack.c.l.b16 %v1492
        %v2167 = vunpack.c.l.b16 %v1493
        %v2168 = vunpack.c.l.b16 %v1494
        %v2169 = vunpack.c.l.b16 %v1495
        %v2170 = vunpack.c.l.b16 %v1496
        %v2171 = vunpack.c.l.b16 %v1497
        %v2172 = vunpack.c.l.b16 %v1498
        %v2173 = vunpack.c.l.b16 %v1499
        %v2174 = vunpack.c.l.b16 %v1500
        %v2175 = vunpack.c.l.b16 %v1501
        %v2176 = vunpack.c.l.b16 %v1502
        %v2177 = vunpack.c.l.b16 %v1503
        %v2178 = vunpack.c.l.b16 %v1504
        %v2179 = vunpack.c.l.b16 %v1505
        %v2180 = vpack.c.b16 %v2133, %v2132
        %v2181 = vpack.c.b16 %v2135, %v2134
        %v2182 = vpack.c.b16 %v2137, %v2136
        %v2183 = vpack.c.b16 %v2139, %v2138
        %v2184 = vpack.c.b16 %v2141, %v2140
        %v2185 = vpack.c.b16 %v2143, %v2142
        %v2186 = vpack.c.b16 %v2145, %v2144
        %v2187 = vpack.c.b16 %v2147, %v2146
        %v2188 = vpack.c.b16 %v2149, %v2148
        %v2189 = vpack.c.b16 %v2151, %v2150
        %v2190 = vpack.c.b16 %v2153, %v2152
        %v2191 = vpack.c.b16 %v2155, %v2154
        %v2192 = vpack.c.b16 %v2157, %v2156
        %v2193 = vpack.c.b16 %v2159, %v2158
        %v2194 = vpack.c.b16 %v2161, %v2160
        %v2195 = vpack.c.b16 %v2163, %v2162
        %v2196 = vpack.c.b16 %v2165, %v2164
        %v2197 = vpack.c.b16 %v2167, %v2166
        %v2198 = vpack.c.b16 %v2169, %v2168
        %v2199 = vpack.c.b16 %v2171, %v2170
        %v2200 = vpack.c.b16 %v2173, %v2172
        %v2201 = vpack.c.b16 %v2175, %v2174
        %v2202 = vpack.c.b16 %v2177, %v2176
        %v2203 = vpack.c.b16 %v2179, %v2178
        %2228 = vmatprep.subr.bf16.mxu0 0
        %2229 = vmatpush1.bf16.msra.mxu0 %v2180
        %2230 = vmatprep.subr.bf16.mxu0 0
        %2231 = vmatpush1.bf16.msra.mxu0 %v2181
        %2232 = vmatprep.subr.bf16.mxu0 0
        %2233 = vmatpush1.bf16.msra.mxu0 %v2182
        %2234 = vmatprep.subr.bf16.mxu0 0
        %2235 = vmatpush1.bf16.msra.mxu0 %v2183
        %2236 = vmatprep.subr.bf16.mxu0 0
        %2237 = vmatpush1.bf16.msra.mxu0 %v2184
        %2238 = vmatprep.subr.bf16.mxu0 0
        %2239 = vmatpush1.bf16.msra.mxu0 %v2185
        %2240 = vmatprep.subr.bf16.mxu0 0
        %2241 = vmatpush1.bf16.msra.mxu0 %v2186
        %2242 = vmatprep.subr.bf16.mxu0 0
        %2243 = vmatpush1.bf16.msra.mxu0 %v2187
        %2244 = vmatprep.subr.bf16.mxu0 0
        %2245 = vmatpush1.bf16.msra.mxu0 %v2188
        %2246 = vmatprep.subr.bf16.mxu0 0
        %2247 = vmatpush1.bf16.msra.mxu0 %v2189
        %2248 = vmatprep.subr.bf16.mxu0 0
        %2249 = vmatpush1.bf16.msra.mxu0 %v2190
        %2250 = vmatprep.subr.bf16.mxu0 0
        %2251 = vmatpush1.bf16.msra.mxu0 %v2191
        %2252 = vmatprep.subr.bf16.mxu0 0
        %2253 = vmatpush1.bf16.msra.mxu0 %v2192
        %2254 = vmatprep.subr.bf16.mxu0 0
        %2255 = vmatpush1.bf16.msra.mxu0 %v2193
        %2256 = vmatprep.subr.bf16.mxu0 0
        %2257 = vmatpush1.bf16.msra.mxu0 %v2194
        %2258 = vmatprep.subr.bf16.mxu0 0
        %2259 = vmatpush1.bf16.msra.mxu0 %v2195
        %2260 = vmatprep.mubr.bf16.mxu0 %v1393
        %2261 = vmatmul.mubr.bf16.gmra.mrb[0].mxu0 %v1392
        %v2262 = vpop.f32.mrb[0].mxu0
        %v2263 = vadd.f32 %v1926, %v2262
        %v2264 = vpop.f32.mrb[0].mxu0
        %v2265 = vpop.f32.mrb[0].mxu0
        %v2266 = vadd.f32 %v1929, %v2265
        %v2267 = vpop.f32.mrb[0].mxu0
        %2268 = vmatprep.mubr.bf16.mxu0 %v1396
        %2269 = vmatmul.mubr.bf16.gmra.mrb[0].mxu0 %v1395
        %v2270 = vpop.f32.mrb[0].mxu0
        %v2271 = vadd.f32 %v1934, %v2270
        %v2272 = vpop.f32.mrb[0].mxu0
        %v2273 = vpop.f32.mrb[0].mxu0
        %v2274 = vadd.f32 %v1937, %v2273
        %v2275 = vpop.f32.mrb[0].mxu0
        %2276 = vmatprep.mubr.bf16.mxu0 %v1399
        %2277 = vmatmul.mubr.bf16.gmra.mrb[0].mxu0 %v1398
        %v2278 = vpop.f32.mrb[0].mxu0
        %v2279 = vadd.f32 %v1942, %v2278
        %v2280 = vpop.f32.mrb[0].mxu0
        %v2281 = vpop.f32.mrb[0].mxu0
        %v2282 = vadd.f32 %v1945, %v2281
        %v2283 = vpop.f32.mrb[0].mxu0
        %2284 = vmatprep.mubr.bf16.mxu0 %v1402
        %2285 = vmatmul.mubr.bf16.gmra.mrb[0].mxu0 %v1401
        %v2286 = vpop.f32.mrb[0].mxu0
        %v2287 = vadd.f32 %v1950, %v2286
        %v2288 = vpop.f32.mrb[0].mxu0
        %v2289 = vpop.f32.mrb[0].mxu0
        %v2290 = vadd.f32 %v1953, %v2289
        %v2291 = vpop.f32.mrb[0].mxu0
        %2292 = vmatprep.mubr.bf16.mxu0 %v1405
        %2293 = vmatmul.mubr.bf16.gmra.mrb[0].mxu0 %v1404
        %v2294 = vpop.f32.mrb[0].mxu0
        %v2295 = vadd.f32 %v1958, %v2294
        %v2296 = vpop.f32.mrb[0].mxu0
        %v2297 = vpop.f32.mrb[0].mxu0
        %v2298 = vadd.f32 %v1961, %v2297
        %v2299 = vpop.f32.mrb[0].mxu0
        %2300 = vmatprep.mubr.bf16.mxu0 %v1408
        %2301 = vmatmul.mubr.bf16.gmra.mrb[0].mxu0 %v1407
        %v2302 = vpop.f32.mrb[0].mxu0
        %v2303 = vadd.f32 %v1966, %v2302
        %v2304 = vpop.f32.mrb[0].mxu0
        %v2305 = vpop.f32.mrb[0].mxu0
        %v2306 = vadd.f32 %v1969, %v2305
        %v2307 = vpop.f32.mrb[0].mxu0
        %2308 = vmatprep.mubr.bf16.mxu0 %v1411
        %2309 = vmatmul.mubr.bf16.gmra.mrb[0].mxu0 %v1410
        %v2310 = vpop.f32.mrb[0].mxu0
        %v2311 = vadd.f32 %v1974, %v2310
        %v2312 = vpop.f32.mrb[0].mxu0
        %v2313 = vpop.f32.mrb[0].mxu0
        %v2314 = vadd.f32 %v1977, %v2313
        %v2315 = vpop.f32.mrb[0].mxu0
        %2316 = vmatprep.mubr.bf16.mxu0 %v1414
        %2317 = vmatmul.mubr.bf16.gmra.mrb[0].mxu0 %v1413
        %v2318 = vpop.f32.mrb[0].mxu0
        %v2319 = vadd.f32 %v1982, %v2318
        %v2320 = vpop.f32.mrb[0].mxu0
        %v2321 = vpop.f32.mrb[0].mxu0
        %v2322 = vadd.f32 %v1985, %v2321
        %v2323 = vpop.f32.mrb[0].mxu0
        %2324 = vmatprep.mubr.bf16.mxu0 %v1417
        %2325 = vmatmul.mubr.bf16.gmra.mrb[0].mxu0 %v1416
        %v2326 = vpop.f32.mrb[0].mxu0
        %v2327 = vadd.f32 %v1990, %v2326
        %v2328 = vpop.f32.mrb[0].mxu0
        %v2329 = vpop.f32.mrb[0].mxu0
        %v2330 = vadd.f32 %v1993, %v2329
        %v2331 = vpop.f32.mrb[0].mxu0
        %2332 = vmatprep.mubr.bf16.mxu0 %v1420
        %2333 = vmatmul.mubr.bf16.gmra.mrb[0].mxu0 %v1419
        %v2334 = vpop.f32.mrb[0].mxu0
        %v2335 = vadd.f32 %v1998, %v2334
        %v2336 = vpop.f32.mrb[0].mxu0
        %v2337 = vpop.f32.mrb[0].mxu0
        %v2338 = vadd.f32 %v2001, %v2337
        %v2339 = vpop.f32.mrb[0].mxu0
        %2340 = vmatprep.mubr.bf16.mxu0 %v1423
        %2341 = vmatmul.mubr.bf16.gmra.mrb[0].mxu0 %v1422
        %v2342 = vpop.f32.mrb[0].mxu0
        %v2343 = vadd.f32 %v2006, %v2342
        %v2344 = vpop.f32.mrb[0].mxu0
        %v2345 = vpop.f32.mrb[0].mxu0
        %v2346 = vadd.f32 %v2009, %v2345
        %v2347 = vpop.f32.mrb[0].mxu0
        %2348 = vmatprep.mubr.bf16.mxu0 %v1426
        %2349 = vmatmul.mubr.bf16.gmra.mrb[0].mxu0 %v1425
        %v2350 = vpop.f32.mrb[0].mxu0
        %v2351 = vadd.f32 %v2014, %v2350
        %v2352 = vpop.f32.mrb[0].mxu0
        %v2353 = vpop.f32.mrb[0].mxu0
        %v2354 = vadd.f32 %v2017, %v2353
        %v2355 = vpop.f32.mrb[0].mxu0
        %2356 = vmatprep.mubr.bf16.mxu0 %v1429
        %2357 = vmatmul.mubr.bf16.gmra.mrb[0].mxu0 %v1428
        %v2358 = vpop.f32.mrb[0].mxu0
        %v2359 = vadd.f32 %v2022, %v2358
        %v2360 = vpop.f32.mrb[0].mxu0
        %v2361 = vpop.f32.mrb[0].mxu0
        %v2362 = vadd.f32 %v2025, %v2361
        %v2363 = vpop.f32.mrb[0].mxu0
        %2364 = vmatprep.mubr.bf16.mxu0 %v1432
        %2365 = vmatmul.mubr.bf16.gmra.mrb[0].mxu0 %v1431
        %v2366 = vpop.f32.mrb[0].mxu0
        %v2367 = vadd.f32 %v2030, %v2366
        %v2368 = vpop.f32.mrb[0].mxu0
        %v2369 = vpop.f32.mrb[0].mxu0
        %v2370 = vadd.f32 %v2033, %v2369
        %v2371 = vpop.f32.mrb[0].mxu0
        %2372 = vmatprep.mubr.bf16.mxu0 %v1435
        %2373 = vmatmul.mubr.bf16.gmra.mrb[0].mxu0 %v1434
        %v2374 = vpop.f32.mrb[0].mxu0
        %v2375 = vadd.f32 %v2038, %v2374
        %v2376 = vpop.f32.mrb[0].mxu0
        %v2377 = vpop.f32.mrb[0].mxu0
        %v2378 = vadd.f32 %v2041, %v2377
        %v2379 = vpop.f32.mrb[0].mxu0
        %2380 = vmatprep.mubr.bf16.mxu0 %v1438
        %2381 = vmatmul.mubr.bf16.gmra.mrb[0].mxu0 %v1437
        %v2382 = vpop.f32.mrb[0].mxu0
        %v2383 = vadd.f32 %v2046, %v2382
        %v2384 = vpop.f32.mrb[0].mxu0
        %v2385 = vpop.f32.mrb[0].mxu0
        %v2386 = vadd.f32 %v2049, %v2385
        %v2387 = vpop.f32.mrb[0].mxu0
        %2388 = vmatprep.mubr.bf16.mxu0 %v1441
        %2389 = vmatmul.mubr.bf16.gmra.mrb[0].mxu0 %v1440
        %v2390 = vpop.f32.mrb[0].mxu0
        %v2391 = vadd.f32 %v2054, %v2390
        %v2392 = vpop.f32.mrb[0].mxu0
        %v2393 = vpop.f32.mrb[0].mxu0
        %v2394 = vadd.f32 %v2057, %v2393
        %v2395 = vpop.f32.mrb[0].mxu0
        %2396 = vmatprep.mubr.bf16.mxu0 %v1444
        %2397 = vmatmul.mubr.bf16.gmra.mrb[0].mxu0 %v1443
        %v2398 = vpop.f32.mrb[0].mxu0
        %v2399 = vadd.f32 %v2062, %v2398
        %v2400 = vpop.f32.mrb[0].mxu0
        %v2401 = vpop.f32.mrb[0].mxu0
        %v2402 = vadd.f32 %v2065, %v2401
        %v2403 = vpop.f32.mrb[0].mxu0
        %2404 = vmatprep.mubr.bf16.mxu0 %v1447
        %2405 = vmatmul.mubr.bf16.gmra.mrb[0].mxu0 %v1446
        %v2406 = vpop.f32.mrb[0].mxu0
        %v2407 = vadd.f32 %v2070, %v2406
        %v2408 = vpop.f32.mrb[0].mxu0
        %v2409 = vpop.f32.mrb[0].mxu0
        %v2410 = vadd.f32 %v2073, %v2409
        %v2411 = vpop.f32.mrb[0].mxu0
        %2412 = vmatprep.mubr.bf16.mxu0 %v1450
        %2413 = vmatmul.mubr.bf16.gmra.mrb[0].mxu0 %v1449
        %v2414 = vpop.f32.mrb[0].mxu0
        %v2415 = vadd.f32 %v2078, %v2414
        %v2416 = vpop.f32.mrb[0].mxu0
        %v2417 = vpop.f32.mrb[0].mxu0
        %v2418 = vadd.f32 %v2081, %v2417
        %v2419 = vpop.f32.mrb[0].mxu0
        %2420 = vdwg.mxu0
        %2421 = vmatprep.subr.bf16.mxu0 0
        %2422 = vmatpush1.bf16.msra.mxu0 %v2196
        %2423 = vmatprep.subr.bf16.mxu0 0
        %2424 = vmatpush1.bf16.msra.mxu0 %v2197
        %2425 = vmatprep.subr.bf16.mxu0 0
        %2426 = vmatpush1.bf16.msra.mxu0 %v2198
        %2427 = vmatprep.subr.bf16.mxu0 0
        %2428 = vmatpush1.bf16.msra.mxu0 %v2199
        %2429 = vmatprep.subr.bf16.mxu0 0
        %2430 = vmatpush1.bf16.msra.mxu0 %v2200
        %2431 = vmatprep.subr.bf16.mxu0 0
        %2432 = vmatpush1.bf16.msra.mxu0 %v2201
        %2433 = vmatprep.subr.bf16.mxu0 0
        %2434 = vmatpush1.bf16.msra.mxu0 %v2202
        %2435 = vmatprep.subr.bf16.mxu0 0
        %2436 = vmatpush1.bf16.msra.mxu0 %v2203
        %2437 = vmatprep.subr.bf16.mxu0 0
        %2438 = vmatpush1.bf16.msra.mxu0 0
        %2439 = vmatprep.subr.bf16.mxu0 0
        %2440 = vmatpush1.bf16.msra.mxu0 0
        %2441 = vmatprep.subr.bf16.mxu0 0
        %2442 = vmatpush1.bf16.msra.mxu0 0
        %2443 = vmatprep.subr.bf16.mxu0 0
        %2444 = vmatpush1.bf16.msra.mxu0 0
        %2445 = vmatprep.subr.bf16.mxu0 0
        %2446 = vmatpush1.bf16.msra.mxu0 0
        %2447 = vmatprep.subr.bf16.mxu0 0
        %2448 = vmatpush1.bf16.msra.mxu0 0
        %2449 = vmatprep.subr.bf16.mxu0 0
        %2450 = vmatpush1.bf16.msra.mxu0 0
        %2451 = vmatprep.subr.bf16.mxu0 0
        %2452 = vmatpush1.bf16.msra.mxu0 0
        %2453 = vmatprep.mubr.bf16.mxu0 0
        %2454 = vmatmul.mubr.bf16.gmra.mrb[0].mxu0 %v1394
        %v2455 = vpop.f32.mrb[0].mxu0
        %v2456 = vadd.f32 %v2263, %v2455
        %v2457 = vpop.f32.mrb[0].mxu0
        %v2458 = vpop.f32.mrb[0].mxu0
        %v2459 = vadd.f32 %v2266, %v2458
        %v2460 = vpop.f32.mrb[0].mxu0
        %2461 = vmatprep.mubr.bf16.mxu0 0
        %2462 = vmatmul.mubr.bf16.gmra.mrb[0].mxu0 %v1397
        %v2463 = vpop.f32.mrb[0].mxu0
        %v2464 = vadd.f32 %v2271, %v2463
        %v2465 = vpop.f32.mrb[0].mxu0
        %v2466 = vpop.f32.mrb[0].mxu0
        %v2467 = vadd.f32 %v2274, %v2466
        %v2468 = vpop.f32.mrb[0].mxu0
        %2469 = vmatprep.mubr.bf16.mxu0 0
        %2470 = vmatmul.mubr.bf16.gmra.mrb[0].mxu0 %v1400
        %v2471 = vpop.f32.mrb[0].mxu0
        %v2472 = vadd.f32 %v2279, %v2471
        %v2473 = vpop.f32.mrb[0].mxu0
        %v2474 = vpop.f32.mrb[0].mxu0
        %v2475 = vadd.f32 %v2282, %v2474
        %v2476 = vpop.f32.mrb[0].mxu0
        %2477 = vmatprep.mubr.bf16.mxu0 0
        %2478 = vmatmul.mubr.bf16.gmra.mrb[0].mxu0 %v1403
        %v2479 = vpop.f32.mrb[0].mxu0
        %v2480 = vadd.f32 %v2287, %v2479
        %v2481 = vpop.f32.mrb[0].mxu0
        %v2482 = vpop.f32.mrb[0].mxu0
        %v2483 = vadd.f32 %v2290, %v2482
        %v2484 = vpop.f32.mrb[0].mxu0
        %2485 = vmatprep.mubr.bf16.mxu0 0
        %2486 = vmatmul.mubr.bf16.gmra.mrb[0].mxu0 %v1406
        %v2487 = vpop.f32.mrb[0].mxu0
        %v2488 = vadd.f32 %v2295, %v2487
        %v2489 = vpop.f32.mrb[0].mxu0
        %v2490 = vpop.f32.mrb[0].mxu0
        %v2491 = vadd.f32 %v2298, %v2490
        %v2492 = vpop.f32.mrb[0].mxu0
        %2493 = vmatprep.mubr.bf16.mxu0 0
        %2494 = vmatmul.mubr.bf16.gmra.mrb[0].mxu0 %v1409
        %v2495 = vpop.f32.mrb[0].mxu0
        %v2496 = vadd.f32 %v2303, %v2495
        %v2497 = vpop.f32.mrb[0].mxu0
        %v2498 = vpop.f32.mrb[0].mxu0
        %v2499 = vadd.f32 %v2306, %v2498
        %v2500 = vpop.f32.mrb[0].mxu0
        %2501 = vmatprep.mubr.bf16.mxu0 0
        %2502 = vmatmul.mubr.bf16.gmra.mrb[0].mxu0 %v1412
        %v2503 = vpop.f32.mrb[0].mxu0
        %v2504 = vadd.f32 %v2311, %v2503
        %v2505 = vpop.f32.mrb[0].mxu0
        %v2506 = vpop.f32.mrb[0].mxu0
        %v2507 = vadd.f32 %v2314, %v2506
        %v2508 = vpop.f32.mrb[0].mxu0
        %2509 = vmatprep.mubr.bf16.mxu0 0
        %2510 = vmatmul.mubr.bf16.gmra.mrb[0].mxu0 %v1415
        %v2511 = vpop.f32.mrb[0].mxu0
        %v2512 = vadd.f32 %v2319, %v2511
        %v2513 = vpop.f32.mrb[0].mxu0
        %v2514 = vpop.f32.mrb[0].mxu0
        %v2515 = vadd.f32 %v2322, %v2514
        %v2516 = vpop.f32.mrb[0].mxu0
        %2517 = vmatprep.mubr.bf16.mxu0 0
        %2518 = vmatmul.mubr.bf16.gmra.mrb[0].mxu0 %v1418
        %v2519 = vpop.f32.mrb[0].mxu0
        %v2520 = vadd.f32 %v2327, %v2519
        %v2521 = vpop.f32.mrb[0].mxu0
        %v2522 = vpop.f32.mrb[0].mxu0
        %v2523 = vadd.f32 %v2330, %v2522
        %v2524 = vpop.f32.mrb[0].mxu0
        %2525 = vmatprep.mubr.bf16.mxu0 0
        %2526 = vmatmul.mubr.bf16.gmra.mrb[0].mxu0 %v1421
        %v2527 = vpop.f32.mrb[0].mxu0
        %v2528 = vadd.f32 %v2335, %v2527
        %v2529 = vpop.f32.mrb[0].mxu0
        %v2530 = vpop.f32.mrb[0].mxu0
        %v2531 = vadd.f32 %v2338, %v2530
        %v2532 = vpop.f32.mrb[0].mxu0
        %2533 = vmatprep.mubr.bf16.mxu0 0
        %2534 = vmatmul.mubr.bf16.gmra.mrb[0].mxu0 %v1424
        %v2535 = vpop.f32.mrb[0].mxu0
        %v2536 = vadd.f32 %v2343, %v2535
        %v2537 = vpop.f32.mrb[0].mxu0
        %v2538 = vpop.f32.mrb[0].mxu0
        %v2539 = vadd.f32 %v2346, %v2538
        %v2540 = vpop.f32.mrb[0].mxu0
        %2541 = vmatprep.mubr.bf16.mxu0 0
        %2542 = vmatmul.mubr.bf16.gmra.mrb[0].mxu0 %v1427
        %v2543 = vpop.f32.mrb[0].mxu0
        %v2544 = vadd.f32 %v2351, %v2543
        %v2545 = vpop.f32.mrb[0].mxu0
        %v2546 = vpop.f32.mrb[0].mxu0
        %v2547 = vadd.f32 %v2354, %v2546
        %v2548 = vpop.f32.mrb[0].mxu0
        %2549 = vmatprep.mubr.bf16.mxu0 0
        %2550 = vmatmul.mubr.bf16.gmra.mrb[0].mxu0 %v1430
        %v2551 = vpop.f32.mrb[0].mxu0
        %v2552 = vadd.f32 %v2359, %v2551
        %v2553 = vpop.f32.mrb[0].mxu0
        %v2554 = vpop.f32.mrb[0].mxu0
        %v2555 = vadd.f32 %v2362, %v2554
        %v2556 = vpop.f32.mrb[0].mxu0
        %2557 = vmatprep.mubr.bf16.mxu0 0
        %2558 = vmatmul.mubr.bf16.gmra.mrb[0].mxu0 %v1433
        %v2559 = vpop.f32.mrb[0].mxu0
        %v2560 = vadd.f32 %v2367, %v2559
        %v2561 = vpop.f32.mrb[0].mxu0
        %v2562 = vpop.f32.mrb[0].mxu0
        %v2563 = vadd.f32 %v2370, %v2562
        %v2564 = vpop.f32.mrb[0].mxu0
        %2565 = vmatprep.mubr.bf16.mxu0 0
        %2566 = vmatmul.mubr.bf16.gmra.mrb[0].mxu0 %v1436
        %v2567 = vpop.f32.mrb[0].mxu0
        %v2568 = vadd.f32 %v2375, %v2567
        %v2569 = vpop.f32.mrb[0].mxu0
        %v2570 = vpop.f32.mrb[0].mxu0
        %v2571 = vadd.f32 %v2378, %v2570
        %v2572 = vpop.f32.mrb[0].mxu0
        %2573 = vmatprep.mubr.bf16.mxu0 0
        %2574 = vmatmul.mubr.bf16.gmra.mrb[0].mxu0 %v1439
        %v2575 = vpop.f32.mrb[0].mxu0
        %v2576 = vadd.f32 %v2383, %v2575
        %v2577 = vpop.f32.mrb[0].mxu0
        %v2578 = vpop.f32.mrb[0].mxu0
        %v2579 = vadd.f32 %v2386, %v2578
        %v2580 = vpop.f32.mrb[0].mxu0
        %2581 = vmatprep.mubr.bf16.mxu0 0
        %2582 = vmatmul.mubr.bf16.gmra.mrb[0].mxu0 %v1442
        %v2583 = vpop.f32.mrb[0].mxu0
        %v2584 = vadd.f32 %v2391, %v2583
        %v2585 = vpop.f32.mrb[0].mxu0
        %v2586 = vpop.f32.mrb[0].mxu0
        %v2587 = vadd.f32 %v2394, %v2586
        %v2588 = vpop.f32.mrb[0].mxu0
        %2589 = vmatprep.mubr.bf16.mxu0 0
        %2590 = vmatmul.mubr.bf16.gmra.mrb[0].mxu0 %v1445
        %v2591 = vpop.f32.mrb[0].mxu0
        %v2592 = vadd.f32 %v2399, %v2591
        %v2593 = vpop.f32.mrb[0].mxu0
        %v2594 = vpop.f32.mrb[0].mxu0
        %v2595 = vadd.f32 %v2402, %v2594
        %v2596 = vpop.f32.mrb[0].mxu0
        %2597 = vmatprep.mubr.bf16.mxu0 0
        %2598 = vmatmul.mubr.bf16.gmra.mrb[0].mxu0 %v1448
        %v2599 = vpop.f32.mrb[0].mxu0
        %v2600 = vadd.f32 %v2407, %v2599
        %v2601 = vpop.f32.mrb[0].mxu0
        %v2602 = vpop.f32.mrb[0].mxu0
        %v2603 = vadd.f32 %v2410, %v2602
        %v2604 = vpop.f32.mrb[0].mxu0
        %2605 = vmatprep.mubr.bf16.mxu0 0
        %2606 = vmatmul.mubr.bf16.gmra.mrb[0].mxu0 %v1451
        %v2607 = vpop.f32.mrb[0].mxu0
        %v2608 = vadd.f32 %v2415, %v2607
        %v2609 = vpop.f32.mrb[0].mxu0
        %v2610 = vpop.f32.mrb[0].mxu0
        %v2611 = vadd.f32 %v2418, %v2610
        %v2612 = vpop.f32.mrb[0].mxu0
        %2613 = vdwg.mxu0
        %v2614 = vld [vmem:[#allocation4 + $0x8] sm:$0xf]
        %v2615 = vld [vmem:[#allocation4 + $0x14] sm:$0xf]
        %v2616 = vld [vmem:[#allocation4 + $0x20] sm:$0xf]
        %v2617 = vld [vmem:[#allocation4 + $0x2c] sm:$0xf]
        %v2618 = vld [vmem:[#allocation4 + $0x38] sm:$0xf]
        %v2619 = vld [vmem:[#allocation4 + $0x44] sm:$0xf]
        %v2620 = vld [vmem:[#allocation4 + $0x50] sm:$0xf]
        %v2621 = vld [vmem:[#allocation4 + $0x5c] sm:$0xf]
        %v2622 = vld [vmem:[#allocation4 + $0x68] sm:$0xf]
        %v2623 = vld [vmem:[#allocation4 + $0x74] sm:$0xf]
        %v2624 = vld [vmem:[#allocation4 + $0x80] sm:$0xf]
        %v2625 = vld [vmem:[#allocation4 + $0x8c] sm:$0xf]
        %v2626 = vld [vmem:[#allocation4 + $0x98] sm:$0xf]
        %v2627 = vld [vmem:[#allocation4 + $0xa4] sm:$0xf]
        %v2628 = vld [vmem:[#allocation4 + $0xb0] sm:$0xf]
        %v2629 = vld [vmem:[#allocation4 + $0xbc] sm:$0xf]
        %v2630 = vld [vmem:[#allocation4 + $0xc8] sm:$0xf]
        %v2631 = vld [vmem:[#allocation4 + $0xd4] sm:$0xf]
        %v2632 = vld [vmem:[#allocation4 + $0xe0] sm:$0xf]
        %v2633 = vld [vmem:[#allocation4 + $0xec] sm:$0xf]
        %v2634 = vld [vmem:[#allocation4 + $0xf8] sm:$0xf]
        %v2635 = vld [vmem:[#allocation4 + $0x104] sm:$0xf]
        %v2636 = vld [vmem:[#allocation4 + $0x110] sm:$0xf]
        %v2637 = vld [vmem:[#allocation4 + $0x11c] sm:$0xf]
        %v2638 = vld [vmem:[#allocation4 + $0x128] sm:$0xf]
        %v2639 = vld [vmem:[#allocation4 + $0x134] sm:$0xf]
        %v2640 = vld [vmem:[#allocation4 + $0x140] sm:$0xf]
        %v2641 = vld [vmem:[#allocation4 + $0x14c] sm:$0xf]
        %v2642 = vld [vmem:[#allocation4 + $0x158] sm:$0xf]
        %v2643 = vld [vmem:[#allocation4 + $0x164] sm:$0xf]
        %v2644 = vld [vmem:[#allocation4 + $0x170] sm:$0xf]
        %v2645 = vld [vmem:[#allocation4 + $0x17c] sm:$0xf]
        %v2646 = vld [vmem:[#allocation4 + $0x188] sm:$0xf]
        %v2647 = vld [vmem:[#allocation4 + $0x194] sm:$0xf]
        %v2648 = vld [vmem:[#allocation4 + $0x1a0] sm:$0xf]
        %v2649 = vld [vmem:[#allocation4 + $0x1ac] sm:$0xf]
        %v2650 = vld [vmem:[#allocation4 + $0x1b8] sm:$0xf]
        %v2651 = vld [vmem:[#allocation4 + $0x1c4] sm:$0xf]
        %v2652 = vld [vmem:[#allocation4 + $0x1d0] sm:$0xf]
        %v2653 = vld [vmem:[#allocation4 + $0x1dc] sm:$0xf]
        %v2654 = vld [vmem:[#allocation4 + $0x1e8] sm:$0xf]
        %v2655 = vld [vmem:[#allocation4 + $0x1f4] sm:$0xf]
        %v2656 = vld [vmem:[#allocation4 + $0x200] sm:$0xf]
        %v2657 = vld [vmem:[#allocation4 + $0x20c] sm:$0xf]
        %v2658 = vld [vmem:[#allocation4 + $0x218] sm:$0xf]
        %v2659 = vld [vmem:[#allocation4 + $0x224] sm:$0xf]
        %v2660 = vld [vmem:[#allocation4 + $0x230] sm:$0xf]
        %v2661 = vld [vmem:[#allocation4 + $0x23c] sm:$0xf]
        %v2710 = vunpack.c.l.b16 %v2614
        %v2711 = vunpack.c.l.b16 %v2615
        %v2712 = vunpack.c.l.b16 %v2616
        %v2713 = vunpack.c.l.b16 %v2617
        %v2714 = vunpack.c.l.b16 %v2618
        %v2715 = vunpack.c.l.b16 %v2619
        %v2716 = vunpack.c.l.b16 %v2620
        %v2717 = vunpack.c.l.b16 %v2621
        %v2718 = vunpack.c.l.b16 %v2622
        %v2719 = vunpack.c.l.b16 %v2623
        %v2720 = vunpack.c.l.b16 %v2624
        %v2721 = vunpack.c.l.b16 %v2625
        %v2722 = vunpack.c.l.b16 %v2626
        %v2723 = vunpack.c.l.b16 %v2627
        %v2724 = vunpack.c.l.b16 %v2628
        %v2725 = vunpack.c.l.b16 %v2629
        %v2726 = vunpack.c.l.b16 %v2630
        %v2727 = vunpack.c.l.b16 %v2631
        %v2728 = vunpack.c.l.b16 %v2632
        %v2729 = vunpack.c.l.b16 %v2633
        %v2730 = vunpack.c.l.b16 %v2634
        %v2731 = vunpack.c.l.b16 %v2635
        %v2732 = vunpack.c.l.b16 %v2636
        %v2733 = vunpack.c.l.b16 %v2637
        %v2734 = vunpack.c.l.b16 %v2638
        %v2735 = vunpack.c.l.b16 %v2639
        %v2736 = vunpack.c.l.b16 %v2640
        %v2737 = vunpack.c.l.b16 %v2641
        %v2738 = vunpack.c.l.b16 %v2642
        %v2739 = vunpack.c.l.b16 %v2643
        %v2740 = vunpack.c.l.b16 %v2644
        %v2741 = vunpack.c.l.b16 %v2645
        %v2742 = vunpack.c.l.b16 %v2646
        %v2743 = vunpack.c.l.b16 %v2647
        %v2744 = vunpack.c.l.b16 %v2648
        %v2745 = vunpack.c.l.b16 %v2649
        %v2746 = vunpack.c.l.b16 %v2650
        %v2747 = vunpack.c.l.b16 %v2651
        %v2748 = vunpack.c.l.b16 %v2652
        %v2749 = vunpack.c.l.b16 %v2653
        %v2750 = vunpack.c.l.b16 %v2654
        %v2751 = vunpack.c.l.b16 %v2655
        %v2752 = vunpack.c.l.b16 %v2656
        %v2753 = vunpack.c.l.b16 %v2657
        %v2754 = vunpack.c.l.b16 %v2658
        %v2755 = vunpack.c.l.b16 %v2659
        %v2756 = vunpack.c.l.b16 %v2660
        %v2757 = vunpack.c.l.b16 %v2661
        %v2758 = vpack.c.b16 %v2711, %v2710
        %v2759 = vpack.c.b16 %v2713, %v2712
        %v2760 = vpack.c.b16 %v2715, %v2714
        %v2761 = vpack.c.b16 %v2717, %v2716
        %v2762 = vpack.c.b16 %v2719, %v2718
        %v2763 = vpack.c.b16 %v2721, %v2720
        %v2764 = vpack.c.b16 %v2723, %v2722
        %v2765 = vpack.c.b16 %v2725, %v2724
        %v2766 = vpack.c.b16 %v2727, %v2726
        %v2767 = vpack.c.b16 %v2729, %v2728
        %v2768 = vpack.c.b16 %v2731, %v2730
        %v2769 = vpack.c.b16 %v2733, %v2732
        %v2770 = vpack.c.b16 %v2735, %v2734
        %v2771 = vpack.c.b16 %v2737, %v2736
        %v2772 = vpack.c.b16 %v2739, %v2738
        %v2773 = vpack.c.b16 %v2741, %v2740
        %v2774 = vpack.c.b16 %v2743, %v2742
        %v2775 = vpack.c.b16 %v2745, %v2744
        %v2776 = vpack.c.b16 %v2747, %v2746
        %v2777 = vpack.c.b16 %v2749, %v2748
        %v2778 = vpack.c.b16 %v2751, %v2750
        %v2779 = vpack.c.b16 %v2753, %v2752
        %v2780 = vpack.c.b16 %v2755, %v2754
        %v2781 = vpack.c.b16 %v2757, %v2756
        %2806 = vmatprep.subr.bf16.mxu0 0
        %2807 = vmatpush1.bf16.msra.mxu0 %v2758
        %2808 = vmatprep.subr.bf16.mxu0 0
        %2809 = vmatpush1.bf16.msra.mxu0 %v2759
        %2810 = vmatprep.subr.bf16.mxu0 0
        %2811 = vmatpush1.bf16.msra.mxu0 %v2760
        %2812 = vmatprep.subr.bf16.mxu0 0
        %2813 = vmatpush1.bf16.msra.mxu0 %v2761
        %2814 = vmatprep.subr.bf16.mxu0 0
        %2815 = vmatpush1.bf16.msra.mxu0 %v2762
        %2816 = vmatprep.subr.bf16.mxu0 0
        %2817 = vmatpush1.bf16.msra.mxu0 %v2763
        %2818 = vmatprep.subr.bf16.mxu0 0
        %2819 = vmatpush1.bf16.msra.mxu0 %v2764
        %2820 = vmatprep.subr.bf16.mxu0 0
        %2821 = vmatpush1.bf16.msra.mxu0 %v2765
        %2822 = vmatprep.subr.bf16.mxu0 0
        %2823 = vmatpush1.bf16.msra.mxu0 %v2766
        %2824 = vmatprep.subr.bf16.mxu0 0
        %2825 = vmatpush1.bf16.msra.mxu0 %v2767
        %2826 = vmatprep.subr.bf16.mxu0 0
        %2827 = vmatpush1.bf16.msra.mxu0 %v2768
        %2828 = vmatprep.subr.bf16.mxu0 0
        %2829 = vmatpush1.bf16.msra.mxu0 %v2769
        %2830 = vmatprep.subr.bf16.mxu0 0
        %2831 = vmatpush1.bf16.msra.mxu0 %v2770
        %2832 = vmatprep.subr.bf16.mxu0 0
        %2833 = vmatpush1.bf16.msra.mxu0 %v2771
        %2834 = vmatprep.subr.bf16.mxu0 0
        %2835 = vmatpush1.bf16.msra.mxu0 %v2772
        %2836 = vmatprep.subr.bf16.mxu0 0
        %2837 = vmatpush1.bf16.msra.mxu0 %v2773
        %2838 = vmatprep.mubr.bf16.mxu0 %v1399
        %2839 = vmatmul.mubr.bf16.gmra.mrb[0].mxu0 %v1398
        %v2840 = vpop.f32.mrb[0].mxu0
        %v2841 = vadd.f32 0.0, %v2840
        %v2842 = vpop.f32.mrb[0].mxu0
        %v2843 = vpop.f32.mrb[0].mxu0
        %v2844 = vadd.f32 0.0, %v2843
        %v2845 = vpop.f32.mrb[0].mxu0
        %2846 = vmatprep.mubr.bf16.mxu0 %v1402
        %2847 = vmatmul.mubr.bf16.gmra.mrb[0].mxu0 %v1401
        %v2848 = vpop.f32.mrb[0].mxu0
        %v2849 = vadd.f32 0.0, %v2848
        %v2850 = vpop.f32.mrb[0].mxu0
        %v2851 = vpop.f32.mrb[0].mxu0
        %v2852 = vadd.f32 0.0, %v2851
        %v2853 = vpop.f32.mrb[0].mxu0
        %2854 = vmatprep.mubr.bf16.mxu0 %v1405
        %2855 = vmatmul.mubr.bf16.gmra.mrb[0].mxu0 %v1404
        %v2856 = vpop.f32.mrb[0].mxu0
        %v2857 = vadd.f32 0.0, %v2856
        %v2858 = vpop.f32.mrb[0].mxu0
        %v2859 = vpop.f32.mrb[0].mxu0
        %v2860 = vadd.f32 0.0, %v2859
        %v2861 = vpop.f32.mrb[0].mxu0
        %2862 = vmatprep.mubr.bf16.mxu0 %v1408
        %2863 = vmatmul.mubr.bf16.gmra.mrb[0].mxu0 %v1407
        %v2864 = vpop.f32.mrb[0].mxu0
        %v2865 = vadd.f32 0.0, %v2864
        %v2866 = vpop.f32.mrb[0].mxu0
        %v2867 = vpop.f32.mrb[0].mxu0
        %v2868 = vadd.f32 0.0, %v2867
        %v2869 = vpop.f32.mrb[0].mxu0
        %2870 = vmatprep.mubr.bf16.mxu0 %v1411
        %2871 = vmatmul.mubr.bf16.gmra.mrb[0].mxu0 %v1410
        %v2872 = vpop.f32.mrb[0].mxu0
        %v2873 = vadd.f32 0.0, %v2872
        %v2874 = vpop.f32.mrb[0].mxu0
        %v2875 = vpop.f32.mrb[0].mxu0
        %v2876 = vadd.f32 0.0, %v2875
        %v2877 = vpop.f32.mrb[0].mxu0
        %2878 = vmatprep.mubr.bf16.mxu0 %v1414
        %2879 = vmatmul.mubr.bf16.gmra.mrb[0].mxu0 %v1413
        %v2880 = vpop.f32.mrb[0].mxu0
        %v2881 = vadd.f32 0.0, %v2880
        %v2882 = vpop.f32.mrb[0].mxu0
        %v2883 = vpop.f32.mrb[0].mxu0
        %v2884 = vadd.f32 0.0, %v2883
        %v2885 = vpop.f32.mrb[0].mxu0
        %2886 = vmatprep.mubr.bf16.mxu0 %v1417
        %2887 = vmatmul.mubr.bf16.gmra.mrb[0].mxu0 %v1416
        %v2888 = vpop.f32.mrb[0].mxu0
        %v2889 = vadd.f32 0.0, %v2888
        %v2890 = vpop.f32.mrb[0].mxu0
        %v2891 = vpop.f32.mrb[0].mxu0
        %v2892 = vadd.f32 0.0, %v2891
        %v2893 = vpop.f32.mrb[0].mxu0
        %2894 = vmatprep.mubr.bf16.mxu0 %v1420
        %2895 = vmatmul.mubr.bf16.gmra.mrb[0].mxu0 %v1419
        %v2896 = vpop.f32.mrb[0].mxu0
        %v2897 = vadd.f32 0.0, %v2896
        %v2898 = vpop.f32.mrb[0].mxu0
        %v2899 = vpop.f32.mrb[0].mxu0
        %v2900 = vadd.f32 0.0, %v2899
        %v2901 = vpop.f32.mrb[0].mxu0
        %2902 = vmatprep.mubr.bf16.mxu0 %v1423
        %2903 = vmatmul.mubr.bf16.gmra.mrb[0].mxu0 %v1422
        %v2904 = vpop.f32.mrb[0].mxu0
        %v2905 = vadd.f32 0.0, %v2904
        %v2906 = vpop.f32.mrb[0].mxu0
        %v2907 = vpop.f32.mrb[0].mxu0
        %v2908 = vadd.f32 0.0, %v2907
        %v2909 = vpop.f32.mrb[0].mxu0
        %2910 = vmatprep.mubr.bf16.mxu0 %v1426
        %2911 = vmatmul.mubr.bf16.gmra.mrb[0].mxu0 %v1425
        %v2912 = vpop.f32.mrb[0].mxu0
        %v2913 = vadd.f32 0.0, %v2912
        %v2914 = vpop.f32.mrb[0].mxu0
        %v2915 = vpop.f32.mrb[0].mxu0
        %v2916 = vadd.f32 0.0, %v2915
        %v2917 = vpop.f32.mrb[0].mxu0
        %2918 = vmatprep.mubr.bf16.mxu0 %v1429
        %2919 = vmatmul.mubr.bf16.gmra.mrb[0].mxu0 %v1428
        %v2920 = vpop.f32.mrb[0].mxu0
        %v2921 = vadd.f32 0.0, %v2920
        %v2922 = vpop.f32.mrb[0].mxu0
        %v2923 = vpop.f32.mrb[0].mxu0
        %v2924 = vadd.f32 0.0, %v2923
        %v2925 = vpop.f32.mrb[0].mxu0
        %2926 = vmatprep.mubr.bf16.mxu0 %v1432
        %2927 = vmatmul.mubr.bf16.gmra.mrb[0].mxu0 %v1431
        %v2928 = vpop.f32.mrb[0].mxu0
        %v2929 = vadd.f32 0.0, %v2928
        %v2930 = vpop.f32.mrb[0].mxu0
        %v2931 = vpop.f32.mrb[0].mxu0
        %v2932 = vadd.f32 0.0, %v2931
        %v2933 = vpop.f32.mrb[0].mxu0
        %2934 = vmatprep.mubr.bf16.mxu0 %v1435
        %2935 = vmatmul.mubr.bf16.gmra.mrb[0].mxu0 %v1434
        %v2936 = vpop.f32.mrb[0].mxu0
        %v2937 = vadd.f32 0.0, %v2936
        %v2938 = vpop.f32.mrb[0].mxu0
        %v2939 = vpop.f32.mrb[0].mxu0
        %v2940 = vadd.f32 0.0, %v2939
        %v2941 = vpop.f32.mrb[0].mxu0
        %2942 = vmatprep.mubr.bf16.mxu0 %v1438
        %2943 = vmatmul.mubr.bf16.gmra.mrb[0].mxu0 %v1437
        %v2944 = vpop.f32.mrb[0].mxu0
        %v2945 = vadd.f32 0.0, %v2944
        %v2946 = vpop.f32.mrb[0].mxu0
        %v2947 = vpop.f32.mrb[0].mxu0
        %v2948 = vadd.f32 0.0, %v2947
        %v2949 = vpop.f32.mrb[0].mxu0
        %2950 = vmatprep.mubr.bf16.mxu0 %v1441
        %2951 = vmatmul.mubr.bf16.gmra.mrb[0].mxu0 %v1440
        %v2952 = vpop.f32.mrb[0].mxu0
        %v2953 = vadd.f32 0.0, %v2952
        %v2954 = vpop.f32.mrb[0].mxu0
        %v2955 = vpop.f32.mrb[0].mxu0
        %v2956 = vadd.f32 0.0, %v2955
        %v2957 = vpop.f32.mrb[0].mxu0
        %2958 = vmatprep.mubr.bf16.mxu0 %v1444
        %2959 = vmatmul.mubr.bf16.gmra.mrb[0].mxu0 %v1443
        %v2960 = vpop.f32.mrb[0].mxu0
        %v2961 = vadd.f32 0.0, %v2960
        %v2962 = vpop.f32.mrb[0].mxu0
        %v2963 = vpop.f32.mrb[0].mxu0
        %v2964 = vadd.f32 0.0, %v2963
        %v2965 = vpop.f32.mrb[0].mxu0
        %2966 = vmatprep.mubr.bf16.mxu0 %v1447
        %2967 = vmatmul.mubr.bf16.gmra.mrb[0].mxu0 %v1446
        %v2968 = vpop.f32.mrb[0].mxu0
        %v2969 = vadd.f32 0.0, %v2968
        %v2970 = vpop.f32.mrb[0].mxu0
        %v2971 = vpop.f32.mrb[0].mxu0
        %v2972 = vadd.f32 0.0, %v2971
        %v2973 = vpop.f32.mrb[0].mxu0
        %2974 = vmatprep.mubr.bf16.mxu0 %v1450
        %2975 = vmatmul.mubr.bf16.gmra.mrb[0].mxu0 %v1449
        %v2976 = vpop.f32.mrb[0].mxu0
        %v2977 = vadd.f32 0.0, %v2976
        %v2978 = vpop.f32.mrb[0].mxu0
        %v2979 = vpop.f32.mrb[0].mxu0
        %v2980 = vadd.f32 0.0, %v2979
        %v2981 = vpop.f32.mrb[0].mxu0
        %2982 = vmatprep.mubr.bf16.mxu0 %v1453
        %2983 = vmatmul.mubr.bf16.gmra.mrb[0].mxu0 %v1452
        %v2984 = vpop.f32.mrb[0].mxu0
        %v2985 = vadd.f32 0.0, %v2984
        %v2986 = vpop.f32.mrb[0].mxu0
        %v2987 = vpop.f32.mrb[0].mxu0
        %v2988 = vadd.f32 0.0, %v2987
        %v2989 = vpop.f32.mrb[0].mxu0
        %2990 = vmatprep.mubr.bf16.mxu0 %v1456
        %2991 = vmatmul.mubr.bf16.gmra.mrb[0].mxu0 %v1455
        %v2992 = vpop.f32.mrb[0].mxu0
        %v2993 = vadd.f32 0.0, %v2992
        %v2994 = vpop.f32.mrb[0].mxu0
        %v2995 = vpop.f32.mrb[0].mxu0
        %v2996 = vadd.f32 0.0, %v2995
        %v2997 = vpop.f32.mrb[0].mxu0
        %2998 = vdwg.mxu0
        %2999 = vmatprep.subr.bf16.mxu0 0
        %3000 = vmatpush1.bf16.msra.mxu0 %v2774
        %3001 = vmatprep.subr.bf16.mxu0 0
        %3002 = vmatpush1.bf16.msra.mxu0 %v2775
        %3003 = vmatprep.subr.bf16.mxu0 0
        %3004 = vmatpush1.bf16.msra.mxu0 %v2776
        %3005 = vmatprep.subr.bf16.mxu0 0
        %3006 = vmatpush1.bf16.msra.mxu0 %v2777
        %3007 = vmatprep.subr.bf16.mxu0 0
        %3008 = vmatpush1.bf16.msra.mxu0 %v2778
        %3009 = vmatprep.subr.bf16.mxu0 0
        %3010 = vmatpush1.bf16.msra.mxu0 %v2779
        %3011 = vmatprep.subr.bf16.mxu0 0
        %3012 = vmatpush1.bf16.msra.mxu0 %v2780
        %3013 = vmatprep.subr.bf16.mxu0 0
        %3014 = vmatpush1.bf16.msra.mxu0 %v2781
        %3015 = vmatprep.subr.bf16.mxu0 0
        %3016 = vmatpush1.bf16.msra.mxu0 0
        %3017 = vmatprep.subr.bf16.mxu0 0
        %3018 = vmatpush1.bf16.msra.mxu0 0
        %3019 = vmatprep.subr.bf16.mxu0 0
        %3020 = vmatpush1.bf16.msra.mxu0 0
        %3021 = vmatprep.subr.bf16.mxu0 0
        %3022 = vmatpush1.bf16.msra.mxu0 0
        %3023 = vmatprep.subr.bf16.mxu0 0
        %3024 = vmatpush1.bf16.msra.mxu0 0
        %3025 = vmatprep.subr.bf16.mxu0 0
        %3026 = vmatpush1.bf16.msra.mxu0 0
        %3027 = vmatprep.subr.bf16.mxu0 0
        %3028 = vmatpush1.bf16.msra.mxu0 0
        %3029 = vmatprep.subr.bf16.mxu0 0
        %3030 = vmatpush1.bf16.msra.mxu0 0
        %3031 = vmatprep.mubr.bf16.mxu0 0
        %3032 = vmatmul.mubr.bf16.gmra.mrb[0].mxu0 %v1400
        %v3033 = vpop.f32.mrb[0].mxu0
        %v3034 = vadd.f32 %v2841, %v3033
        %v3035 = vpop.f32.mrb[0].mxu0
        %v3036 = vpop.f32.mrb[0].mxu0
        %v3037 = vadd.f32 %v2844, %v3036
        %v3038 = vpop.f32.mrb[0].mxu0
        %3039 = vmatprep.mubr.bf16.mxu0 0
        %3040 = vmatmul.mubr.bf16.gmra.mrb[0].mxu0 %v1403
        %v3041 = vpop.f32.mrb[0].mxu0
        %v3042 = vadd.f32 %v2849, %v3041
        %v3043 = vpop.f32.mrb[0].mxu0
        %v3044 = vpop.f32.mrb[0].mxu0
        %v3045 = vadd.f32 %v2852, %v3044
        %v3046 = vpop.f32.mrb[0].mxu0
        %3047 = vmatprep.mubr.bf16.mxu0 0
        %3048 = vmatmul.mubr.bf16.gmra.mrb[0].mxu0 %v1406
        %v3049 = vpop.f32.mrb[0].mxu0
        %v3050 = vadd.f32 %v2857, %v3049
        %v3051 = vpop.f32.mrb[0].mxu0
        %v3052 = vpop.f32.mrb[0].mxu0
        %v3053 = vadd.f32 %v2860, %v3052
        %v3054 = vpop.f32.mrb[0].mxu0
        %3055 = vmatprep.mubr.bf16.mxu0 0
        %3056 = vmatmul.mubr.bf16.gmra.mrb[0].mxu0 %v1409
        %v3057 = vpop.f32.mrb[0].mxu0
        %v3058 = vadd.f32 %v2865, %v3057
        %v3059 = vpop.f32.mrb[0].mxu0
        %v3060 = vpop.f32.mrb[0].mxu0
        %v3061 = vadd.f32 %v2868, %v3060
        %v3062 = vpop.f32.mrb[0].mxu0
        %3063 = vmatprep.mubr.bf16.mxu0 0
        %3064 = vmatmul.mubr.bf16.gmra.mrb[0].mxu0 %v1412
        %v3065 = vpop.f32.mrb[0].mxu0
        %v3066 = vadd.f32 %v2873, %v3065
        %v3067 = vpop.f32.mrb[0].mxu0
        %v3068 = vpop.f32.mrb[0].mxu0
        %v3069 = vadd.f32 %v2876, %v3068
        %v3070 = vpop.f32.mrb[0].mxu0
        %3071 = vmatprep.mubr.bf16.mxu0 0
        %3072 = vmatmul.mubr.bf16.gmra.mrb[0].mxu0 %v1415
        %v3073 = vpop.f32.mrb[0].mxu0
        %v3074 = vadd.f32 %v2881, %v3073
        %v3075 = vpop.f32.mrb[0].mxu0
        %v3076 = vpop.f32.mrb[0].mxu0
        %v3077 = vadd.f32 %v2884, %v3076
        %v3078 = vpop.f32.mrb[0].mxu0
        %3079 = vmatprep.mubr.bf16.mxu0 0
        %3080 = vmatmul.mubr.bf16.gmra.mrb[0].mxu0 %v1418
        %v3081 = vpop.f32.mrb[0].mxu0
        %v3082 = vadd.f32 %v2889, %v3081
        %v3083 = vpop.f32.mrb[0].mxu0
        %v3084 = vpop.f32.mrb[0].mxu0
        %v3085 = vadd.f32 %v2892, %v3084
        %v3086 = vpop.f32.mrb[0].mxu0
        %3087 = vmatprep.mubr.bf16.mxu0 0
        %3088 = vmatmul.mubr.bf16.gmra.mrb[0].mxu0 %v1421
        %v3089 = vpop.f32.mrb[0].mxu0
        %v3090 = vadd.f32 %v2897, %v3089
        %v3091 = vpop.f32.mrb[0].mxu0
        %v3092 = vpop.f32.mrb[0].mxu0
        %v3093 = vadd.f32 %v2900, %v3092
        %v3094 = vpop.f32.mrb[0].mxu0
        %3095 = vmatprep.mubr.bf16.mxu0 0
        %3096 = vmatmul.mubr.bf16.gmra.mrb[0].mxu0 %v1424
        %v3097 = vpop.f32.mrb[0].mxu0
        %v3098 = vadd.f32 %v2905, %v3097
        %v3099 = vpop.f32.mrb[0].mxu0
        %v3100 = vpop.f32.mrb[0].mxu0
        %v3101 = vadd.f32 %v2908, %v3100
        %v3102 = vpop.f32.mrb[0].mxu0
        %3103 = vmatprep.mubr.bf16.mxu0 0
        %3104 = vmatmul.mubr.bf16.gmra.mrb[0].mxu0 %v1427
        %v3105 = vpop.f32.mrb[0].mxu0
        %v3106 = vadd.f32 %v2913, %v3105
        %v3107 = vpop.f32.mrb[0].mxu0
        %v3108 = vpop.f32.mrb[0].mxu0
        %v3109 = vadd.f32 %v2916, %v3108
        %v3110 = vpop.f32.mrb[0].mxu0
        %3111 = vmatprep.mubr.bf16.mxu0 0
        %3112 = vmatmul.mubr.bf16.gmra.mrb[0].mxu0 %v1430
        %v3113 = vpop.f32.mrb[0].mxu0
        %v3114 = vadd.f32 %v2921, %v3113
        %v3115 = vpop.f32.mrb[0].mxu0
        %v3116 = vpop.f32.mrb[0].mxu0
        %v3117 = vadd.f32 %v2924, %v3116
        %v3118 = vpop.f32.mrb[0].mxu0
        %3119 = vmatprep.mubr.bf16.mxu0 0
        %3120 = vmatmul.mubr.bf16.gmra.mrb[0].mxu0 %v1433
        %v3121 = vpop.f32.mrb[0].mxu0
        %v3122 = vadd.f32 %v2929, %v3121
        %v3123 = vpop.f32.mrb[0].mxu0
        %v3124 = vpop.f32.mrb[0].mxu0
        %v3125 = vadd.f32 %v2932, %v3124
        %v3126 = vpop.f32.mrb[0].mxu0
        %3127 = vmatprep.mubr.bf16.mxu0 0
        %3128 = vmatmul.mubr.bf16.gmra.mrb[0].mxu0 %v1436
        %v3129 = vpop.f32.mrb[0].mxu0
        %v3130 = vadd.f32 %v2937, %v3129
        %v3131 = vpop.f32.mrb[0].mxu0
        %v3132 = vpop.f32.mrb[0].mxu0
        %v3133 = vadd.f32 %v2940, %v3132
        %v3134 = vpop.f32.mrb[0].mxu0
        %3135 = vmatprep.mubr.bf16.mxu0 0
        %3136 = vmatmul.mubr.bf16.gmra.mrb[0].mxu0 %v1439
        %v3137 = vpop.f32.mrb[0].mxu0
        %v3138 = vadd.f32 %v2945, %v3137
        %v3139 = vpop.f32.mrb[0].mxu0
        %v3140 = vpop.f32.mrb[0].mxu0
        %v3141 = vadd.f32 %v2948, %v3140
        %v3142 = vpop.f32.mrb[0].mxu0
        %3143 = vmatprep.mubr.bf16.mxu0 0
        %3144 = vmatmul.mubr.bf16.gmra.mrb[0].mxu0 %v1442
        %v3145 = vpop.f32.mrb[0].mxu0
        %v3146 = vadd.f32 %v2953, %v3145
        %v3147 = vpop.f32.mrb[0].mxu0
        %v3148 = vpop.f32.mrb[0].mxu0
        %v3149 = vadd.f32 %v2956, %v3148
        %v3150 = vpop.f32.mrb[0].mxu0
        %3151 = vmatprep.mubr.bf16.mxu0 0
        %3152 = vmatmul.mubr.bf16.gmra.mrb[0].mxu0 %v1445
        %v3153 = vpop.f32.mrb[0].mxu0
        %v3154 = vadd.f32 %v2961, %v3153
        %v3155 = vpop.f32.mrb[0].mxu0
        %v3156 = vpop.f32.mrb[0].mxu0
        %v3157 = vadd.f32 %v2964, %v3156
        %v3158 = vpop.f32.mrb[0].mxu0
        %3159 = vmatprep.mubr.bf16.mxu0 0
        %3160 = vmatmul.mubr.bf16.gmra.mrb[0].mxu0 %v1448
        %v3161 = vpop.f32.mrb[0].mxu0
        %v3162 = vadd.f32 %v2969, %v3161
        %v3163 = vpop.f32.mrb[0].mxu0
        %v3164 = vpop.f32.mrb[0].mxu0
        %v3165 = vadd.f32 %v2972, %v3164
        %v3166 = vpop.f32.mrb[0].mxu0
        %3167 = vmatprep.mubr.bf16.mxu0 0
        %3168 = vmatmul.mubr.bf16.gmra.mrb[0].mxu0 %v1451
        %v3169 = vpop.f32.mrb[0].mxu0
        %v3170 = vadd.f32 %v2977, %v3169
        %v3171 = vpop.f32.mrb[0].mxu0
        %v3172 = vpop.f32.mrb[0].mxu0
        %v3173 = vadd.f32 %v2980, %v3172
        %v3174 = vpop.f32.mrb[0].mxu0
        %3175 = vmatprep.mubr.bf16.mxu0 0
        %3176 = vmatmul.mubr.bf16.gmra.mrb[0].mxu0 %v1454
        %v3177 = vpop.f32.mrb[0].mxu0
        %v3178 = vadd.f32 %v2985, %v3177
        %v3179 = vpop.f32.mrb[0].mxu0
        %v3180 = vpop.f32.mrb[0].mxu0
        %v3181 = vadd.f32 %v2988, %v3180
        %v3182 = vpop.f32.mrb[0].mxu0
        %3183 = vmatprep.mubr.bf16.mxu0 0
        %3184 = vmatmul.mubr.bf16.gmra.mrb[0].mxu0 %v1457
        %v3185 = vpop.f32.mrb[0].mxu0
        %v3186 = vadd.f32 %v2993, %v3185
        %v3187 = vpop.f32.mrb[0].mxu0
        %v3188 = vpop.f32.mrb[0].mxu0
        %v3189 = vadd.f32 %v2996, %v3188
        %v3190 = vpop.f32.mrb[0].mxu0
        %3191 = vdwg.mxu0
        %v3192 = vadd.f32 %v2456, %v3034
        %v3193 = vadd.f32 %v2459, %v3037
        %v3194 = vadd.f32 %v2464, %v3042
        %v3195 = vadd.f32 %v2467, %v3045
        %v3196 = vadd.f32 %v2472, %v3050
        %v3197 = vadd.f32 %v2475, %v3053
        %v3198 = vadd.f32 %v2480, %v3058
        %v3199 = vadd.f32 %v2483, %v3061
        %v3200 = vadd.f32 %v2488, %v3066
        %v3201 = vadd.f32 %v2491, %v3069
        %v3202 = vadd.f32 %v2496, %v3074
        %v3203 = vadd.f32 %v2499, %v3077
        %v3204 = vadd.f32 %v2504, %v3082
        %v3205 = vadd.f32 %v2507, %v3085
        %v3206 = vadd.f32 %v2512, %v3090
        %v3207 = vadd.f32 %v2515, %v3093
        %v3208 = vadd.f32 %v2520, %v3098
        %v3209 = vadd.f32 %v2523, %v3101
        %v3210 = vadd.f32 %v2528, %v3106
        %v3211 = vadd.f32 %v2531, %v3109
        %v3212 = vadd.f32 %v2536, %v3114
        %v3213 = vadd.f32 %v2539, %v3117
        %v3214 = vadd.f32 %v2544, %v3122
        %v3215 = vadd.f32 %v2547, %v3125
        %v3216 = vadd.f32 %v2552, %v3130
        %v3217 = vadd.f32 %v2555, %v3133
        %v3218 = vadd.f32 %v2560, %v3138
        %v3219 = vadd.f32 %v2563, %v3141
        %v3220 = vadd.f32 %v2568, %v3146
        %v3221 = vadd.f32 %v2571, %v3149
        %v3222 = vadd.f32 %v2576, %v3154
        %v3223 = vadd.f32 %v2579, %v3157
        %v3224 = vadd.f32 %v2584, %v3162
        %v3225 = vadd.f32 %v2587, %v3165
        %v3226 = vadd.f32 %v2592, %v3170
        %v3227 = vadd.f32 %v2595, %v3173
        %v3228 = vadd.f32 %v2600, %v3178
        %v3229 = vadd.f32 %v2603, %v3181
        %v3230 = vadd.f32 %v2608, %v3186
        %v3231 = vadd.f32 %v2611, %v3189
        %v3232 = vld [vmem:[%s2] sm:$0x1]
        %v3233 = vlaneseq
        %v3234 = vshrl.u32 %v3233, 7
        %v3235 = vsub.s32 0, %v3234
        %v3236 = vrot.slane %v3232, %v3235
        %v3237 = vmul.f32 %v3192, %v3236
        %v3238 = vmul.f32 %v3193, %v3236
        %v3239 = vmul.f32 %v3194, %v3236
        %v3240 = vmul.f32 %v3195, %v3236
        %v3241 = vmul.f32 %v3196, %v3236
        %v3242 = vmul.f32 %v3197, %v3236
        %v3243 = vmul.f32 %v3198, %v3236
        %v3244 = vmul.f32 %v3199, %v3236
        %v3245 = vmul.f32 %v3200, %v3236
        %v3246 = vmul.f32 %v3201, %v3236
        %v3247 = vmul.f32 %v3202, %v3236
        %v3248 = vmul.f32 %v3203, %v3236
        %v3249 = vmul.f32 %v3204, %v3236
        %v3250 = vmul.f32 %v3205, %v3236
        %v3251 = vmul.f32 %v3206, %v3236
        %v3252 = vmul.f32 %v3207, %v3236
        %v3253 = vmul.f32 %v3208, %v3236
        %v3254 = vmul.f32 %v3209, %v3236
        %v3255 = vmul.f32 %v3210, %v3236
        %v3256 = vmul.f32 %v3211, %v3236
        %v3257 = vmul.f32 %v3212, %v3236
        %v3258 = vmul.f32 %v3213, %v3236
        %v3259 = vmul.f32 %v3214, %v3236
        %v3260 = vmul.f32 %v3215, %v3236
        %v3261 = vmul.f32 %v3216, %v3236
        %v3262 = vmul.f32 %v3217, %v3236
        %v3263 = vmul.f32 %v3218, %v3236
        %v3264 = vmul.f32 %v3219, %v3236
        %v3265 = vmul.f32 %v3220, %v3236
        %v3266 = vmul.f32 %v3221, %v3236
        %v3267 = vmul.f32 %v3222, %v3236
        %v3268 = vmul.f32 %v3223, %v3236
        %v3269 = vmul.f32 %v3224, %v3236
        %v3270 = vmul.f32 %v3225, %v3236
        %v3271 = vmul.f32 %v3226, %v3236
        %v3272 = vmul.f32 %v3227, %v3236
        %v3273 = vmul.f32 %v3228, %v3236
        %v3274 = vmul.f32 %v3229, %v3236
        %v3275 = vmul.f32 %v3230, %v3236
        %v3276 = vmul.f32 %v3231, %v3236
        %v3277 = vld [vmem:[%s3] sm:$0x1]
        %v3278 = vlaneseq
        %v3279 = vshrl.u32 %v3278, 7
        %v3280 = vsub.s32 0, %v3279
        %v3281 = vrot.slane %v3277, %v3280
        %v3282 = vadd.f32 %v3237, %v3281
        %v3283 = vadd.f32 %v3238, %v3281
        %v3284 = vadd.f32 %v3239, %v3281
        %v3285 = vadd.f32 %v3240, %v3281
        %v3286 = vadd.f32 %v3241, %v3281
        %v3287 = vadd.f32 %v3242, %v3281
        %v3288 = vadd.f32 %v3243, %v3281
        %v3289 = vadd.f32 %v3244, %v3281
        %v3290 = vadd.f32 %v3245, %v3281
        %v3291 = vadd.f32 %v3246, %v3281
        %v3292 = vadd.f32 %v3247, %v3281
        %v3293 = vadd.f32 %v3248, %v3281
        %v3294 = vadd.f32 %v3249, %v3281
        %v3295 = vadd.f32 %v3250, %v3281
        %v3296 = vadd.f32 %v3251, %v3281
        %v3297 = vadd.f32 %v3252, %v3281
        %v3298 = vadd.f32 %v3253, %v3281
        %v3299 = vadd.f32 %v3254, %v3281
        %v3300 = vadd.f32 %v3255, %v3281
        %v3301 = vadd.f32 %v3256, %v3281
        %v3302 = vadd.f32 %v3257, %v3281
        %v3303 = vadd.f32 %v3258, %v3281
        %v3304 = vadd.f32 %v3259, %v3281
        %v3305 = vadd.f32 %v3260, %v3281
        %v3306 = vadd.f32 %v3261, %v3281
        %v3307 = vadd.f32 %v3262, %v3281
        %v3308 = vadd.f32 %v3263, %v3281
        %v3309 = vadd.f32 %v3264, %v3281
        %v3310 = vadd.f32 %v3265, %v3281
        %v3311 = vadd.f32 %v3266, %v3281
        %v3312 = vadd.f32 %v3267, %v3281
        %v3313 = vadd.f32 %v3268, %v3281
        %v3314 = vadd.f32 %v3269, %v3281
        %v3315 = vadd.f32 %v3270, %v3281
        %v3316 = vadd.f32 %v3271, %v3281
        %v3317 = vadd.f32 %v3272, %v3281
        %v3318 = vadd.f32 %v3273, %v3281
        %v3319 = vadd.f32 %v3274, %v3281
        %v3320 = vadd.f32 %v3275, %v3281
        %v3321 = vadd.f32 %v3276, %v3281
        %v3322 = vmax.f32 %v3282, 0.0
        %v3323 = vmax.f32 %v3283, 0.0
        %v3324 = vmax.f32 %v3284, 0.0
        %v3325 = vmax.f32 %v3285, 0.0
        %v3326 = vmax.f32 %v3286, 0.0
        %v3327 = vmax.f32 %v3287, 0.0
        %v3328 = vmax.f32 %v3288, 0.0
        %v3329 = vmax.f32 %v3289, 0.0
        %v3330 = vmax.f32 %v3290, 0.0
        %v3331 = vmax.f32 %v3291, 0.0
        %v3332 = vmax.f32 %v3292, 0.0
        %v3333 = vmax.f32 %v3293, 0.0
        %v3334 = vmax.f32 %v3294, 0.0
        %v3335 = vmax.f32 %v3295, 0.0
        %v3336 = vmax.f32 %v3296, 0.0
        %v3337 = vmax.f32 %v3297, 0.0
        %v3338 = vmax.f32 %v3298, 0.0
        %v3339 = vmax.f32 %v3299, 0.0
        %v3340 = vmax.f32 %v3300, 0.0
        %v3341 = vmax.f32 %v3301, 0.0
        %v3342 = vmax.f32 %v3302, 0.0
        %v3343 = vmax.f32 %v3303, 0.0
        %v3344 = vmax.f32 %v3304, 0.0
        %v3345 = vmax.f32 %v3305, 0.0
        %v3346 = vmax.f32 %v3306, 0.0
        %v3347 = vmax.f32 %v3307, 0.0
        %v3348 = vmax.f32 %v3308, 0.0
        %v3349 = vmax.f32 %v3309, 0.0
        %v3350 = vmax.f32 %v3310, 0.0
        %v3351 = vmax.f32 %v3311, 0.0
        %v3352 = vmax.f32 %v3312, 0.0
        %v3353 = vmax.f32 %v3313, 0.0
        %v3354 = vmax.f32 %v3314, 0.0
        %v3355 = vmax.f32 %v3315, 0.0
        %v3356 = vmax.f32 %v3316, 0.0
        %v3357 = vmax.f32 %v3317, 0.0
        %v3358 = vmax.f32 %v3318, 0.0
        %v3359 = vmax.f32 %v3319, 0.0
        %v3360 = vmax.f32 %v3320, 0.0
        %v3361 = vmax.f32 %v3321, 0.0
        %s3362 = smul.u32 %s28, 16
        %s3363 = sadd.s32 %s3362, 4294967294
        %v3364 = vstv %s3363
        %v3365 = vadd.s32 %v3364, 1
        %v3366 = vadd.s32 %v3364, 2
        %v3367 = vadd.s32 %v3364, 3
        %v3368 = vadd.s32 %v3364, 4
        %v3369 = vadd.s32 %v3364, 5
        %v3370 = vadd.s32 %v3364, 6
        %v3371 = vadd.s32 %v3364, 7
        %v3372 = vadd.s32 %v3364, 8
        %v3373 = vadd.s32 %v3364, 9
        %v3374 = vadd.s32 %v3364, 10
        %v3375 = vadd.s32 %v3364, 11
        %v3376 = vadd.s32 %v3364, 12
        %v3377 = vadd.s32 %v3364, 13
        %v3378 = vadd.s32 %v3364, 14
        %v3379 = vadd.s32 %v3364, 15
        %v3380 = vadd.s32 %v3364, 16
        %v3381 = vadd.s32 %v3364, 17
        %v3382 = vadd.s32 %v3364, 18
        %v3383 = vadd.s32 %v3364, 19
        %vm3384 = vcmp.ge.s32.totalorder %v3364, 0
        %vm3385 = vcmp.ge.s32.totalorder %v3365, 0
        %vm3386 = vcmp.ge.s32.totalorder %v3366, 0
        %vm3387 = vcmp.ge.s32.totalorder %v3367, 0
        %vm3388 = vcmp.ge.s32.totalorder %v3368, 0
        %vm3389 = vcmp.ge.s32.totalorder %v3369, 0
        %vm3390 = vcmp.ge.s32.totalorder %v3370, 0
        %vm3391 = vcmp.ge.s32.totalorder %v3371, 0
        %vm3392 = vcmp.ge.s32.totalorder %v3372, 0
        %vm3393 = vcmp.ge.s32.totalorder %v3373, 0
        %vm3394 = vcmp.ge.s32.totalorder %v3374, 0
        %vm3395 = vcmp.ge.s32.totalorder %v3375, 0
        %vm3396 = vcmp.ge.s32.totalorder %v3376, 0
        %vm3397 = vcmp.ge.s32.totalorder %v3377, 0
        %vm3398 = vcmp.ge.s32.totalorder %v3378, 0
        %vm3399 = vcmp.ge.s32.totalorder %v3379, 0
        %vm3400 = vcmp.ge.s32.totalorder %v3380, 0
        %vm3401 = vcmp.ge.s32.totalorder %v3381, 0
        %vm3402 = vcmp.ge.s32.totalorder %v3382, 0
        %vm3403 = vcmp.ge.s32.totalorder %v3383, 0
        %vm3404 = vcmp.lt.s32.totalorder %v3364, 16
        %vm3405 = vcmp.lt.s32.totalorder %v3365, 16
        %vm3406 = vcmp.lt.s32.totalorder %v3366, 16
        %vm3407 = vcmp.lt.s32.totalorder %v3367, 16
        %vm3408 = vcmp.lt.s32.totalorder %v3368, 16
        %vm3409 = vcmp.lt.s32.totalorder %v3369, 16
        %vm3410 = vcmp.lt.s32.totalorder %v3370, 16
        %vm3411 = vcmp.lt.s32.totalorder %v3371, 16
        %vm3412 = vcmp.lt.s32.totalorder %v3372, 16
        %vm3413 = vcmp.lt.s32.totalorder %v3373, 16
        %vm3414 = vcmp.lt.s32.totalorder %v3374, 16
        %vm3415 = vcmp.lt.s32.totalorder %v3375, 16
        %vm3416 = vcmp.lt.s32.totalorder %v3376, 16
        %vm3417 = vcmp.lt.s32.totalorder %v3377, 16
        %vm3418 = vcmp.lt.s32.totalorder %v3378, 16
        %vm3419 = vcmp.lt.s32.totalorder %v3379, 16
        %vm3420 = vcmp.lt.s32.totalorder %v3380, 16
        %vm3421 = vcmp.lt.s32.totalorder %v3381, 16
        %vm3422 = vcmp.lt.s32.totalorder %v3382, 16
        %vm3423 = vcmp.lt.s32.totalorder %v3383, 16
        %vm3424 = vmand %vm3384, %vm3404
        %vm3425 = vmand %vm3385, %vm3405
        %vm3426 = vmand %vm3386, %vm3406
        %vm3427 = vmand %vm3387, %vm3407
        %vm3428 = vmand %vm3388, %vm3408
        %vm3429 = vmand %vm3389, %vm3409
        %vm3430 = vmand %vm3390, %vm3410
        %vm3431 = vmand %vm3391, %vm3411
        %vm3432 = vmand %vm3392, %vm3412
        %vm3433 = vmand %vm3393, %vm3413
        %vm3434 = vmand %vm3394, %vm3414
        %vm3435 = vmand %vm3395, %vm3415
        %vm3436 = vmand %vm3396, %vm3416
        %vm3437 = vmand %vm3397, %vm3417
        %vm3438 = vmand %vm3398, %vm3418
        %vm3439 = vmand %vm3399, %vm3419
        %vm3440 = vmand %vm3400, %vm3420
        %vm3441 = vmand %vm3401, %vm3421
        %vm3442 = vmand %vm3402, %vm3422
        %vm3443 = vmand %vm3403, %vm3423
        %v3444 = vsel %vm3424, 1, 0
        %v3445 = vsel %vm3425, 1, 0
        %v3446 = vsel %vm3426, 1, 0
        %v3447 = vsel %vm3427, 1, 0
        %v3448 = vsel %vm3428, 1, 0
        %v3449 = vsel %vm3429, 1, 0
        %v3450 = vsel %vm3430, 1, 0
        %v3451 = vsel %vm3431, 1, 0
        %v3452 = vsel %vm3432, 1, 0
        %v3453 = vsel %vm3433, 1, 0
        %v3454 = vsel %vm3434, 1, 0
        %v3455 = vsel %vm3435, 1, 0
        %v3456 = vsel %vm3436, 1, 0
        %v3457 = vsel %vm3437, 1, 0
        %v3458 = vsel %vm3438, 1, 0
        %v3459 = vsel %vm3439, 1, 0
        %v3460 = vsel %vm3440, 1, 0
        %v3461 = vsel %vm3441, 1, 0
        %v3462 = vsel %vm3442, 1, 0
        %v3463 = vsel %vm3443, 1, 0
        %vm3464 = vcmp.eq.s32.totalorder %v3444, 1
        %vm3465 = vcmp.eq.s32.totalorder %v3445, 1
        %vm3466 = vcmp.eq.s32.totalorder %v3446, 1
        %vm3467 = vcmp.eq.s32.totalorder %v3447, 1
        %vm3468 = vcmp.eq.s32.totalorder %v3448, 1
        %vm3469 = vcmp.eq.s32.totalorder %v3449, 1
        %vm3470 = vcmp.eq.s32.totalorder %v3450, 1
        %vm3471 = vcmp.eq.s32.totalorder %v3451, 1
        %vm3472 = vcmp.eq.s32.totalorder %v3452, 1
        %vm3473 = vcmp.eq.s32.totalorder %v3453, 1
        %vm3474 = vcmp.eq.s32.totalorder %v3454, 1
        %vm3475 = vcmp.eq.s32.totalorder %v3455, 1
        %vm3476 = vcmp.eq.s32.totalorder %v3456, 1
        %vm3477 = vcmp.eq.s32.totalorder %v3457, 1
        %vm3478 = vcmp.eq.s32.totalorder %v3458, 1
        %vm3479 = vcmp.eq.s32.totalorder %v3459, 1
        %vm3480 = vcmp.eq.s32.totalorder %v3460, 1
        %vm3481 = vcmp.eq.s32.totalorder %v3461, 1
        %vm3482 = vcmp.eq.s32.totalorder %v3462, 1
        %vm3483 = vcmp.eq.s32.totalorder %v3463, 1
        %v3484 = vsel %vm3464, %v3322, 0.0
        %v3485 = vsel %vm3464, %v3323, 0.0
        %v3486 = vsel %vm3465, %v3324, 0.0
        %v3487 = vsel %vm3465, %v3325, 0.0
        %v3488 = vsel %vm3466, %v3326, 0.0
        %v3489 = vsel %vm3466, %v3327, 0.0
        %v3490 = vsel %vm3467, %v3328, 0.0
        %v3491 = vsel %vm3467, %v3329, 0.0
        %v3492 = vsel %vm3468, %v3330, 0.0
        %v3493 = vsel %vm3468, %v3331, 0.0
        %v3494 = vsel %vm3469, %v3332, 0.0
        %v3495 = vsel %vm3469, %v3333, 0.0
        %v3496 = vsel %vm3470, %v3334, 0.0
        %v3497 = vsel %vm3470, %v3335, 0.0
        %v3498 = vsel %vm3471, %v3336, 0.0
        %v3499 = vsel %vm3471, %v3337, 0.0
        %v3500 = vsel %vm3472, %v3338, 0.0
        %v3501 = vsel %vm3472, %v3339, 0.0
        %v3502 = vsel %vm3473, %v3340, 0.0
        %v3503 = vsel %vm3473, %v3341, 0.0
        %v3504 = vsel %vm3474, %v3342, 0.0
        %v3505 = vsel %vm3474, %v3343, 0.0
        %v3506 = vsel %vm3475, %v3344, 0.0
        %v3507 = vsel %vm3475, %v3345, 0.0
        %v3508 = vsel %vm3476, %v3346, 0.0
        %v3509 = vsel %vm3476, %v3347, 0.0
        %v3510 = vsel %vm3477, %v3348, 0.0
        %v3511 = vsel %vm3477, %v3349, 0.0
        %v3512 = vsel %vm3478, %v3350, 0.0
        %v3513 = vsel %vm3478, %v3351, 0.0
        %v3514 = vsel %vm3479, %v3352, 0.0
        %v3515 = vsel %vm3479, %v3353, 0.0
        %v3516 = vsel %vm3480, %v3354, 0.0
        %v3517 = vsel %vm3480, %v3355, 0.0
        %v3518 = vsel %vm3481, %v3356, 0.0
        %v3519 = vsel %vm3481, %v3357, 0.0
        %v3520 = vsel %vm3482, %v3358, 0.0
        %v3521 = vsel %vm3482, %v3359, 0.0
        %v3522 = vsel %vm3483, %v3360, 0.0
        %v3523 = vsel %vm3483, %v3361, 0.0
        %v3524 = vpack.c.bf16 %v3485, %v3484
        %v3525 = vpack.c.bf16 %v3487, %v3486
        %v3526 = vpack.c.bf16 %v3489, %v3488
        %v3527 = vpack.c.bf16 %v3491, %v3490
        %v3528 = vpack.c.bf16 %v3493, %v3492
        %v3529 = vpack.c.bf16 %v3495, %v3494
        %v3530 = vpack.c.bf16 %v3497, %v3496
        %v3531 = vpack.c.bf16 %v3499, %v3498
        %v3532 = vpack.c.bf16 %v3501, %v3500
        %v3533 = vpack.c.bf16 %v3503, %v3502
        %v3534 = vpack.c.bf16 %v3505, %v3504
        %v3535 = vpack.c.bf16 %v3507, %v3506
        %v3536 = vpack.c.bf16 %v3509, %v3508
        %v3537 = vpack.c.bf16 %v3511, %v3510
        %v3538 = vpack.c.bf16 %v3513, %v3512
        %v3539 = vpack.c.bf16 %v3515, %v3514
        %v3540 = vpack.c.bf16 %v3517, %v3516
        %v3541 = vpack.c.bf16 %v3519, %v3518
        %v3542 = vpack.c.bf16 %v3521, %v3520
        %v3543 = vpack.c.bf16 %v3523, %v3522
        %3544 = vst [vmem:[#allocation2 + $0x8] sm:$0xff] %v3524
        %3545 = vst [vmem:[#allocation2 + $0x20] sm:$0xff] %v3525
        %3546 = vst [vmem:[#allocation2 + $0x38] sm:$0xff] %v3526
        %3547 = vst [vmem:[#allocation2 + $0x50] sm:$0xff] %v3527
        %3548 = vst [vmem:[#allocation2 + $0x68] sm:$0xff] %v3528
        %3549 = vst [vmem:[#allocation2 + $0x80] sm:$0xff] %v3529
        %3550 = vst [vmem:[#allocation2 + $0x98] sm:$0xff] %v3530
        %3551 = vst [vmem:[#allocation2 + $0xb0] sm:$0xff] %v3531
        %3552 = vst [vmem:[#allocation2 + $0xc8] sm:$0xff] %v3532
        %3553 = vst [vmem:[#allocation2 + $0xe0] sm:$0xff] %v3533
        %3554 = vst [vmem:[#allocation2 + $0xf8] sm:$0xff] %v3534
        %3555 = vst [vmem:[#allocation2 + $0x110] sm:$0xff] %v3535
        %3556 = vst [vmem:[#allocation2 + $0x128] sm:$0xff] %v3536
        %3557 = vst [vmem:[#allocation2 + $0x140] sm:$0xff] %v3537
        %3558 = vst [vmem:[#allocation2 + $0x158] sm:$0xff] %v3538
        %3559 = vst [vmem:[#allocation2 + $0x170] sm:$0xff] %v3539
        %3560 = vst [vmem:[#allocation2 + $0x188] sm:$0xff] %v3540
        %3561 = vst [vmem:[#allocation2 + $0x1a0] sm:$0xff] %v3541
        %3562 = vst [vmem:[#allocation2 + $0x1b8] sm:$0xff] %v3542
        %3563 = vst [vmem:[#allocation2 + $0x1d0] sm:$0xff] %v3543
        %v3565 = vshrl.u32 %v3524, 16
        %v3567 = vrot.slane %v3565, 7
        %v3568 = vshll.u32 %v3524, 16
        %v3570 = vor.u32 %v3567, %v3568
        %v3572 = vshrl.u32 %v3525, 16
        %v3574 = vrot.slane %v3572, 7
        %v3575 = vshll.u32 %v3525, 16
        %v3577 = vor.u32 %v3574, %v3575
        %v3579 = vshrl.u32 %v3526, 16
        %v3581 = vrot.slane %v3579, 7
        %v3582 = vshll.u32 %v3526, 16
        %v3584 = vor.u32 %v3581, %v3582
        %v3586 = vshrl.u32 %v3527, 16
        %v3588 = vrot.slane %v3586, 7
        %v3589 = vshll.u32 %v3527, 16
        %v3591 = vor.u32 %v3588, %v3589
        %v3593 = vshrl.u32 %v3528, 16
        %v3595 = vrot.slane %v3593, 7
        %v3596 = vshll.u32 %v3528, 16
        %v3598 = vor.u32 %v3595, %v3596
        %v3600 = vshrl.u32 %v3529, 16
        %v3602 = vrot.slane %v3600, 7
        %v3603 = vshll.u32 %v3529, 16
        %v3605 = vor.u32 %v3602, %v3603
        %v3607 = vshrl.u32 %v3530, 16
        %v3609 = vrot.slane %v3607, 7
        %v3610 = vshll.u32 %v3530, 16
        %v3612 = vor.u32 %v3609, %v3610
        %v3614 = vshrl.u32 %v3531, 16
        %v3616 = vrot.slane %v3614, 7
        %v3617 = vshll.u32 %v3531, 16
        %v3619 = vor.u32 %v3616, %v3617
        %v3621 = vshrl.u32 %v3532, 16
        %v3623 = vrot.slane %v3621, 7
        %v3624 = vshll.u32 %v3532, 16
        %v3626 = vor.u32 %v3623, %v3624
        %v3628 = vshrl.u32 %v3533, 16
        %v3630 = vrot.slane %v3628, 7
        %v3631 = vshll.u32 %v3533, 16
        %v3633 = vor.u32 %v3630, %v3631
        %v3635 = vshrl.u32 %v3534, 16
        %v3637 = vrot.slane %v3635, 7
        %v3638 = vshll.u32 %v3534, 16
        %v3640 = vor.u32 %v3637, %v3638
        %v3642 = vshrl.u32 %v3535, 16
        %v3644 = vrot.slane %v3642, 7
        %v3645 = vshll.u32 %v3535, 16
        %v3647 = vor.u32 %v3644, %v3645
        %v3649 = vshrl.u32 %v3536, 16
        %v3651 = vrot.slane %v3649, 7
        %v3652 = vshll.u32 %v3536, 16
        %v3654 = vor.u32 %v3651, %v3652
        %v3656 = vshrl.u32 %v3537, 16
        %v3658 = vrot.slane %v3656, 7
        %v3659 = vshll.u32 %v3537, 16
        %v3661 = vor.u32 %v3658, %v3659
        %v3663 = vshrl.u32 %v3538, 16
        %v3665 = vrot.slane %v3663, 7
        %v3666 = vshll.u32 %v3538, 16
        %v3668 = vor.u32 %v3665, %v3666
        %v3670 = vshrl.u32 %v3539, 16
        %v3672 = vrot.slane %v3670, 7
        %v3673 = vshll.u32 %v3539, 16
        %v3675 = vor.u32 %v3672, %v3673
        %v3677 = vshrl.u32 %v3540, 16
        %v3679 = vrot.slane %v3677, 7
        %v3680 = vshll.u32 %v3540, 16
        %v3682 = vor.u32 %v3679, %v3680
        %v3684 = vshrl.u32 %v3541, 16
        %v3686 = vrot.slane %v3684, 7
        %v3687 = vshll.u32 %v3541, 16
        %v3689 = vor.u32 %v3686, %v3687
        %v3691 = vshrl.u32 %v3542, 16
        %v3693 = vrot.slane %v3691, 7
        %v3694 = vshll.u32 %v3542, 16
        %v3696 = vor.u32 %v3693, %v3694
        %v3698 = vshrl.u32 %v3543, 16
        %v3700 = vrot.slane %v3698, 7
        %v3701 = vshll.u32 %v3543, 16
        %v3703 = vor.u32 %v3700, %v3701
        %vm3724 = vcmask 1047552
        %vm3725 = vsmask.f32 7938
        %vm3726 = vmand %vm3724, %vm3725
        %v3727 = vld [vmem:[#allocation2] sm:$0xff]
        %v3728 = vsel %vm3726, %v3570, %v3727
        %3729 = vst [vmem:[#allocation2] sm:$0xff] %v3728
        %v3730 = vld [vmem:[#allocation2 + $0x18] sm:$0xff]
        %v3731 = vsel %vm3726, %v3577, %v3730
        %3732 = vst [vmem:[#allocation2 + $0x18] sm:$0xff] %v3731
        %v3733 = vld [vmem:[#allocation2 + $0x30] sm:$0xff]
        %v3734 = vsel %vm3726, %v3584, %v3733
        %3735 = vst [vmem:[#allocation2 + $0x30] sm:$0xff] %v3734
        %v3736 = vld [vmem:[#allocation2 + $0x48] sm:$0xff]
        %v3737 = vsel %vm3726, %v3591, %v3736
        %3738 = vst [vmem:[#allocation2 + $0x48] sm:$0xff] %v3737
        %v3739 = vld [vmem:[#allocation2 + $0x60] sm:$0xff]
        %v3740 = vsel %vm3726, %v3598, %v3739
        %3741 = vst [vmem:[#allocation2 + $0x60] sm:$0xff] %v3740
        %v3742 = vld [vmem:[#allocation2 + $0x78] sm:$0xff]
        %v3743 = vsel %vm3726, %v3605, %v3742
        %3744 = vst [vmem:[#allocation2 + $0x78] sm:$0xff] %v3743
        %v3745 = vld [vmem:[#allocation2 + $0x90] sm:$0xff]
        %v3746 = vsel %vm3726, %v3612, %v3745
        %3747 = vst [vmem:[#allocation2 + $0x90] sm:$0xff] %v3746
        %v3748 = vld [vmem:[#allocation2 + $0xa8] sm:$0xff]
        %v3749 = vsel %vm3726, %v3619, %v3748
        %3750 = vst [vmem:[#allocation2 + $0xa8] sm:$0xff] %v3749
        %v3751 = vld [vmem:[#allocation2 + $0xc0] sm:$0xff]
        %v3752 = vsel %vm3726, %v3626, %v3751
        %3753 = vst [vmem:[#allocation2 + $0xc0] sm:$0xff] %v3752
        %v3754 = vld [vmem:[#allocation2 + $0xd8] sm:$0xff]
        %v3755 = vsel %vm3726, %v3633, %v3754
        %3756 = vst [vmem:[#allocation2 + $0xd8] sm:$0xff] %v3755
        %v3757 = vld [vmem:[#allocation2 + $0xf0] sm:$0xff]
        %v3758 = vsel %vm3726, %v3640, %v3757
        %3759 = vst [vmem:[#allocation2 + $0xf0] sm:$0xff] %v3758
        %v3760 = vld [vmem:[#allocation2 + $0x108] sm:$0xff]
        %v3761 = vsel %vm3726, %v3647, %v3760
        %3762 = vst [vmem:[#allocation2 + $0x108] sm:$0xff] %v3761
        %v3763 = vld [vmem:[#allocation2 + $0x120] sm:$0xff]
        %v3764 = vsel %vm3726, %v3654, %v3763
        %3765 = vst [vmem:[#allocation2 + $0x120] sm:$0xff] %v3764
        %v3766 = vld [vmem:[#allocation2 + $0x138] sm:$0xff]
        %v3767 = vsel %vm3726, %v3661, %v3766
        %3768 = vst [vmem:[#allocation2 + $0x138] sm:$0xff] %v3767
        %v3769 = vld [vmem:[#allocation2 + $0x150] sm:$0xff]
        %v3770 = vsel %vm3726, %v3668, %v3769
        %3771 = vst [vmem:[#allocation2 + $0x150] sm:$0xff] %v3770
        %v3772 = vld [vmem:[#allocation2 + $0x168] sm:$0xff]
        %v3773 = vsel %vm3726, %v3675, %v3772
        %3774 = vst [vmem:[#allocation2 + $0x168] sm:$0xff] %v3773
        %v3775 = vld [vmem:[#allocation2 + $0x180] sm:$0xff]
        %v3776 = vsel %vm3726, %v3682, %v3775
        %3777 = vst [vmem:[#allocation2 + $0x180] sm:$0xff] %v3776
        %v3778 = vld [vmem:[#allocation2 + $0x198] sm:$0xff]
        %v3779 = vsel %vm3726, %v3689, %v3778
        %3780 = vst [vmem:[#allocation2 + $0x198] sm:$0xff] %v3779
        %v3781 = vld [vmem:[#allocation2 + $0x1b0] sm:$0xff]
        %v3782 = vsel %vm3726, %v3696, %v3781
        %3783 = vst [vmem:[#allocation2 + $0x1b0] sm:$0xff] %v3782
        %v3784 = vld [vmem:[#allocation2 + $0x1c8] sm:$0xff]
        %v3785 = vsel %vm3726, %v3703, %v3784
        %3786 = vst [vmem:[#allocation2 + $0x1c8] sm:$0xff] %v3785
        %vm3787 = vcmask 1040384
        %vm3788 = vsmask.f32 256
        %vm3789 = vmand %vm3787, %vm3788
        %v3790 = vld [vmem:[#allocation2] sm:$0x1]
        %v3791 = vsel %vm3789, 0, %v3790
        %3792 = vst [vmem:[#allocation2] sm:$0x1] %v3791
        %v3793 = vld [vmem:[#allocation2 + $0x18] sm:$0x1]
        %v3794 = vsel %vm3789, 0, %v3793
        %3795 = vst [vmem:[#allocation2 + $0x18] sm:$0x1] %v3794
        %v3796 = vld [vmem:[#allocation2 + $0x30] sm:$0x1]
        %v3797 = vsel %vm3789, 0, %v3796
        %3798 = vst [vmem:[#allocation2 + $0x30] sm:$0x1] %v3797
        %v3799 = vld [vmem:[#allocation2 + $0x48] sm:$0x1]
        %v3800 = vsel %vm3789, 0, %v3799
        %3801 = vst [vmem:[#allocation2 + $0x48] sm:$0x1] %v3800
        %v3802 = vld [vmem:[#allocation2 + $0x60] sm:$0x1]
        %v3803 = vsel %vm3789, 0, %v3802
        %3804 = vst [vmem:[#allocation2 + $0x60] sm:$0x1] %v3803
        %v3805 = vld [vmem:[#allocation2 + $0x78] sm:$0x1]
        %v3806 = vsel %vm3789, 0, %v3805
        %3807 = vst [vmem:[#allocation2 + $0x78] sm:$0x1] %v3806
        %v3808 = vld [vmem:[#allocation2 + $0x90] sm:$0x1]
        %v3809 = vsel %vm3789, 0, %v3808
        %3810 = vst [vmem:[#allocation2 + $0x90] sm:$0x1] %v3809
        %v3811 = vld [vmem:[#allocation2 + $0xa8] sm:$0x1]
        %v3812 = vsel %vm3789, 0, %v3811
        %3813 = vst [vmem:[#allocation2 + $0xa8] sm:$0x1] %v3812
        %v3814 = vld [vmem:[#allocation2 + $0xc0] sm:$0x1]
        %v3815 = vsel %vm3789, 0, %v3814
        %3816 = vst [vmem:[#allocation2 + $0xc0] sm:$0x1] %v3815
        %v3817 = vld [vmem:[#allocation2 + $0xd8] sm:$0x1]
        %v3818 = vsel %vm3789, 0, %v3817
        %3819 = vst [vmem:[#allocation2 + $0xd8] sm:$0x1] %v3818
        %v3820 = vld [vmem:[#allocation2 + $0xf0] sm:$0x1]
        %v3821 = vsel %vm3789, 0, %v3820
        %3822 = vst [vmem:[#allocation2 + $0xf0] sm:$0x1] %v3821
        %v3823 = vld [vmem:[#allocation2 + $0x108] sm:$0x1]
        %v3824 = vsel %vm3789, 0, %v3823
        %3825 = vst [vmem:[#allocation2 + $0x108] sm:$0x1] %v3824
        %v3826 = vld [vmem:[#allocation2 + $0x120] sm:$0x1]
        %v3827 = vsel %vm3789, 0, %v3826
        %3828 = vst [vmem:[#allocation2 + $0x120] sm:$0x1] %v3827
        %v3829 = vld [vmem:[#allocation2 + $0x138] sm:$0x1]
        %v3830 = vsel %vm3789, 0, %v3829
        %3831 = vst [vmem:[#allocation2 + $0x138] sm:$0x1] %v3830
        %v3832 = vld [vmem:[#allocation2 + $0x150] sm:$0x1]
        %v3833 = vsel %vm3789, 0, %v3832
        %3834 = vst [vmem:[#allocation2 + $0x150] sm:$0x1] %v3833
        %v3835 = vld [vmem:[#allocation2 + $0x168] sm:$0x1]
        %v3836 = vsel %vm3789, 0, %v3835
        %3837 = vst [vmem:[#allocation2 + $0x168] sm:$0x1] %v3836
        %v3838 = vld [vmem:[#allocation2 + $0x180] sm:$0x1]
        %v3839 = vsel %vm3789, 0, %v3838
        %3840 = vst [vmem:[#allocation2 + $0x180] sm:$0x1] %v3839
        %v3841 = vld [vmem:[#allocation2 + $0x198] sm:$0x1]
        %v3842 = vsel %vm3789, 0, %v3841
        %3843 = vst [vmem:[#allocation2 + $0x198] sm:$0x1] %v3842
        %v3844 = vld [vmem:[#allocation2 + $0x1b0] sm:$0x1]
        %v3845 = vsel %vm3789, 0, %v3844
        %3846 = vst [vmem:[#allocation2 + $0x1b0] sm:$0x1] %v3845
        %v3847 = vld [vmem:[#allocation2 + $0x1c8] sm:$0x1]
        %v3848 = vsel %vm3789, 0, %v3847
        %3849 = vst [vmem:[#allocation2 + $0x1c8] sm:$0x1] %v3848
        %v3850 = vrot.slane %v3568, 1
        %v3851 = vor.u32 %v3565, %v3850
        %v3852 = vrot.slane %v3575, 1
        %v3853 = vor.u32 %v3572, %v3852
        %v3854 = vrot.slane %v3582, 1
        %v3855 = vor.u32 %v3579, %v3854
        %v3856 = vrot.slane %v3589, 1
        %v3857 = vor.u32 %v3586, %v3856
        %v3858 = vrot.slane %v3596, 1
        %v3859 = vor.u32 %v3593, %v3858
        %v3860 = vrot.slane %v3603, 1
        %v3861 = vor.u32 %v3600, %v3860
        %v3862 = vrot.slane %v3610, 1
        %v3863 = vor.u32 %v3607, %v3862
        %v3864 = vrot.slane %v3617, 1
        %v3865 = vor.u32 %v3614, %v3864
        %v3866 = vrot.slane %v3624, 1
        %v3867 = vor.u32 %v3621, %v3866
        %v3868 = vrot.slane %v3631, 1
        %v3869 = vor.u32 %v3628, %v3868
        %v3870 = vrot.slane %v3638, 1
        %v3871 = vor.u32 %v3635, %v3870
        %v3872 = vrot.slane %v3645, 1
        %v3873 = vor.u32 %v3642, %v3872
        %v3874 = vrot.slane %v3652, 1
        %v3875 = vor.u32 %v3649, %v3874
        %v3876 = vrot.slane %v3659, 1
        %v3877 = vor.u32 %v3656, %v3876
        %v3878 = vrot.slane %v3666, 1
        %v3879 = vor.u32 %v3663, %v3878
        %v3880 = vrot.slane %v3673, 1
        %v3881 = vor.u32 %v3670, %v3880
        %v3882 = vrot.slane %v3680, 1
        %v3883 = vor.u32 %v3677, %v3882
        %v3884 = vrot.slane %v3687, 1
        %v3885 = vor.u32 %v3684, %v3884
        %v3886 = vrot.slane %v3694, 1
        %v3887 = vor.u32 %v3691, %v3886
        %v3888 = vrot.slane %v3701, 1
        %v3889 = vor.u32 %v3698, %v3888
        %vm3910 = vmand %vm3724, %vm730
        %v3911 = vld [vmem:[#allocation2 + $0x10] sm:$0xff]
        %v3912 = vsel %vm3910, %v3851, %v3911
        %3913 = vst [vmem:[#allocation2 + $0x10] sm:$0xff] %v3912
        %v3914 = vld [vmem:[#allocation2 + $0x28] sm:$0xff]
        %v3915 = vsel %vm3910, %v3853, %v3914
        %3916 = vst [vmem:[#allocation2 + $0x28] sm:$0xff] %v3915
        %v3917 = vld [vmem:[#allocation2 + $0x40] sm:$0xff]
        %v3918 = vsel %vm3910, %v3855, %v3917
        %3919 = vst [vmem:[#allocation2 + $0x40] sm:$0xff] %v3918
        %v3920 = vld [vmem:[#allocation2 + $0x58] sm:$0xff]
        %v3921 = vsel %vm3910, %v3857, %v3920
        %3922 = vst [vmem:[#allocation2 + $0x58] sm:$0xff] %v3921
        %v3923 = vld [vmem:[#allocation2 + $0x70] sm:$0xff]
        %v3924 = vsel %vm3910, %v3859, %v3923
        %3925 = vst [vmem:[#allocation2 + $0x70] sm:$0xff] %v3924
        %v3926 = vld [vmem:[#allocation2 + $0x88] sm:$0xff]
        %v3927 = vsel %vm3910, %v3861, %v3926
        %3928 = vst [vmem:[#allocation2 + $0x88] sm:$0xff] %v3927
        %v3929 = vld [vmem:[#allocation2 + $0xa0] sm:$0xff]
        %v3930 = vsel %vm3910, %v3863, %v3929
        %3931 = vst [vmem:[#allocation2 + $0xa0] sm:$0xff] %v3930
        %v3932 = vld [vmem:[#allocation2 + $0xb8] sm:$0xff]
        %v3933 = vsel %vm3910, %v3865, %v3932
        %3934 = vst [vmem:[#allocation2 + $0xb8] sm:$0xff] %v3933
        %v3935 = vld [vmem:[#allocation2 + $0xd0] sm:$0xff]
        %v3936 = vsel %vm3910, %v3867, %v3935
        %3937 = vst [vmem:[#allocation2 + $0xd0] sm:$0xff] %v3936
        %v3938 = vld [vmem:[#allocation2 + $0xe8] sm:$0xff]
        %v3939 = vsel %vm3910, %v3869, %v3938
        %3940 = vst [vmem:[#allocation2 + $0xe8] sm:$0xff] %v3939
        %v3941 = vld [vmem:[#allocation2 + $0x100] sm:$0xff]
        %v3942 = vsel %vm3910, %v3871, %v3941
        %3943 = vst [vmem:[#allocation2 + $0x100] sm:$0xff] %v3942
        %v3944 = vld [vmem:[#allocation2 + $0x118] sm:$0xff]
        %v3945 = vsel %vm3910, %v3873, %v3944
        %3946 = vst [vmem:[#allocation2 + $0x118] sm:$0xff] %v3945
        %v3947 = vld [vmem:[#allocation2 + $0x130] sm:$0xff]
        %v3948 = vsel %vm3910, %v3875, %v3947
        %3949 = vst [vmem:[#allocation2 + $0x130] sm:$0xff] %v3948
        %v3950 = vld [vmem:[#allocation2 + $0x148] sm:$0xff]
        %v3951 = vsel %vm3910, %v3877, %v3950
        %3952 = vst [vmem:[#allocation2 + $0x148] sm:$0xff] %v3951
        %v3953 = vld [vmem:[#allocation2 + $0x160] sm:$0xff]
        %v3954 = vsel %vm3910, %v3879, %v3953
        %3955 = vst [vmem:[#allocation2 + $0x160] sm:$0xff] %v3954
        %v3956 = vld [vmem:[#allocation2 + $0x178] sm:$0xff]
        %v3957 = vsel %vm3910, %v3881, %v3956
        %3958 = vst [vmem:[#allocation2 + $0x178] sm:$0xff] %v3957
        %v3959 = vld [vmem:[#allocation2 + $0x190] sm:$0xff]
        %v3960 = vsel %vm3910, %v3883, %v3959
        %3961 = vst [vmem:[#allocation2 + $0x190] sm:$0xff] %v3960
        %v3962 = vld [vmem:[#allocation2 + $0x1a8] sm:$0xff]
        %v3963 = vsel %vm3910, %v3885, %v3962
        %3964 = vst [vmem:[#allocation2 + $0x1a8] sm:$0xff] %v3963
        %v3965 = vld [vmem:[#allocation2 + $0x1c0] sm:$0xff]
        %v3966 = vsel %vm3910, %v3887, %v3965
        %3967 = vst [vmem:[#allocation2 + $0x1c0] sm:$0xff] %v3966
        %v3968 = vld [vmem:[#allocation2 + $0x1d8] sm:$0xff]
        %v3969 = vsel %vm3910, %v3889, %v3968
        %3970 = vst [vmem:[#allocation2 + $0x1d8] sm:$0xff] %v3969
        %vm3971 = vcmask 1047559
        %vm3972 = vsmask.f32 7966
        %vm3973 = vmand %vm3971, %vm3972
        %v3974 = vld [vmem:[#allocation2 + $0x10] sm:$0x80]
        %v3975 = vsel %vm3973, 0, %v3974
        %3976 = vst [vmem:[#allocation2 + $0x10] sm:$0x80] %v3975
        %v3977 = vld [vmem:[#allocation2 + $0x28] sm:$0x80]
        %v3978 = vsel %vm3973, 0, %v3977
        %3979 = vst [vmem:[#allocation2 + $0x28] sm:$0x80] %v3978
        %v3980 = vld [vmem:[#allocation2 + $0x40] sm:$0x80]
        %v3981 = vsel %vm3973, 0, %v3980
        %3982 = vst [vmem:[#allocation2 + $0x40] sm:$0x80] %v3981
        %v3983 = vld [vmem:[#allocation2 + $0x58] sm:$0x80]
        %v3984 = vsel %vm3973, 0, %v3983
        %3985 = vst [vmem:[#allocation2 + $0x58] sm:$0x80] %v3984
        %v3986 = vld [vmem:[#allocation2 + $0x70] sm:$0x80]
        %v3987 = vsel %vm3973, 0, %v3986
        %3988 = vst [vmem:[#allocation2 + $0x70] sm:$0x80] %v3987
        %v3989 = vld [vmem:[#allocation2 + $0x88] sm:$0x80]
        %v3990 = vsel %vm3973, 0, %v3989
        %3991 = vst [vmem:[#allocation2 + $0x88] sm:$0x80] %v3990
        %v3992 = vld [vmem:[#allocation2 + $0xa0] sm:$0x80]
        %v3993 = vsel %vm3973, 0, %v3992
        %3994 = vst [vmem:[#allocation2 + $0xa0] sm:$0x80] %v3993
        %v3995 = vld [vmem:[#allocation2 + $0xb8] sm:$0x80]
        %v3996 = vsel %vm3973, 0, %v3995
        %3997 = vst [vmem:[#allocation2 + $0xb8] sm:$0x80] %v3996
        %v3998 = vld [vmem:[#allocation2 + $0xd0] sm:$0x80]
        %v3999 = vsel %vm3973, 0, %v3998
        %4000 = vst [vmem:[#allocation2 + $0xd0] sm:$0x80] %v3999
        %v4001 = vld [vmem:[#allocation2 + $0xe8] sm:$0x80]
        %v4002 = vsel %vm3973, 0, %v4001
        %4003 = vst [vmem:[#allocation2 + $0xe8] sm:$0x80] %v4002
        %v4004 = vld [vmem:[#allocation2 + $0x100] sm:$0x80]
        %v4005 = vsel %vm3973, 0, %v4004
        %4006 = vst [vmem:[#allocation2 + $0x100] sm:$0x80] %v4005
        %v4007 = vld [vmem:[#allocation2 + $0x118] sm:$0x80]
        %v4008 = vsel %vm3973, 0, %v4007
        %4009 = vst [vmem:[#allocation2 + $0x118] sm:$0x80] %v4008
        %v4010 = vld [vmem:[#allocation2 + $0x130] sm:$0x80]
        %v4011 = vsel %vm3973, 0, %v4010
        %4012 = vst [vmem:[#allocation2 + $0x130] sm:$0x80] %v4011
        %v4013 = vld [vmem:[#allocation2 + $0x148] sm:$0x80]
        %v4014 = vsel %vm3973, 0, %v4013
        %4015 = vst [vmem:[#allocation2 + $0x148] sm:$0x80] %v4014
        %v4016 = vld [vmem:[#allocation2 + $0x160] sm:$0x80]
        %v4017 = vsel %vm3973, 0, %v4016
        %4018 = vst [vmem:[#allocation2 + $0x160] sm:$0x80] %v4017
        %v4019 = vld [vmem:[#allocation2 + $0x178] sm:$0x80]
        %v4020 = vsel %vm3973, 0, %v4019
        %4021 = vst [vmem:[#allocation2 + $0x178] sm:$0x80] %v4020
        %v4022 = vld [vmem:[#allocation2 + $0x190] sm:$0x80]
        %v4023 = vsel %vm3973, 0, %v4022
        %4024 = vst [vmem:[#allocation2 + $0x190] sm:$0x80] %v4023
        %v4025 = vld [vmem:[#allocation2 + $0x1a8] sm:$0x80]
        %v4026 = vsel %vm3973, 0, %v4025
        %4027 = vst [vmem:[#allocation2 + $0x1a8] sm:$0x80] %v4026
        %v4028 = vld [vmem:[#allocation2 + $0x1c0] sm:$0x80]
        %v4029 = vsel %vm3973, 0, %v4028
        %4030 = vst [vmem:[#allocation2 + $0x1c0] sm:$0x80] %v4029
        %v4031 = vld [vmem:[#allocation2 + $0x1d8] sm:$0x80]
        %v4032 = vsel %vm3973, 0, %v4031
        %4033 = vst [vmem:[#allocation2 + $0x1d8] sm:$0x80] %v4032
        %v4034 = vld [vmem:[#allocation2] sm:$0xff]
        %v4035 = vld [vmem:[#allocation2 + $0x8] sm:$0xff]
        %v4036 = vld [vmem:[#allocation2 + $0x10] sm:$0xff]
        %v4037 = vld [vmem:[#allocation2 + $0x18] sm:$0xff]
        %v4038 = vld [vmem:[#allocation2 + $0x20] sm:$0xff]
        %v4039 = vld [vmem:[#allocation2 + $0x28] sm:$0xff]
        %v4040 = vld [vmem:[#allocation2 + $0x30] sm:$0xff]
        %v4041 = vld [vmem:[#allocation2 + $0x38] sm:$0xff]
        %v4042 = vld [vmem:[#allocation2 + $0x40] sm:$0xff]
        %v4043 = vld [vmem:[#allocation2 + $0x48] sm:$0xff]
        %v4044 = vld [vmem:[#allocation2 + $0x50] sm:$0xff]
        %v4045 = vld [vmem:[#allocation2 + $0x58] sm:$0xff]
        %v4046 = vld [vmem:[#allocation2 + $0x60] sm:$0xff]
        %v4047 = vld [vmem:[#allocation2 + $0x68] sm:$0xff]
        %v4048 = vld [vmem:[#allocation2 + $0x70] sm:$0xff]
        %v4049 = vld [vmem:[#allocation2 + $0x78] sm:$0xff]
        %v4050 = vld [vmem:[#allocation2 + $0x80] sm:$0xff]
        %v4051 = vld [vmem:[#allocation2 + $0x88] sm:$0xff]
        %v4052 = vld [vmem:[#allocation2 + $0x90] sm:$0xff]
        %v4053 = vld [vmem:[#allocation2 + $0x98] sm:$0xff]
        %v4054 = vld [vmem:[#allocation2 + $0xa0] sm:$0xff]
        %v4055 = vld [vmem:[#allocation2 + $0xa8] sm:$0xff]
        %v4056 = vld [vmem:[#allocation2 + $0xb0] sm:$0xff]
        %v4057 = vld [vmem:[#allocation2 + $0xb8] sm:$0xff]
        %v4058 = vld [vmem:[#allocation2 + $0xc0] sm:$0xff]
        %v4059 = vld [vmem:[#allocation2 + $0xc8] sm:$0xff]
        %v4060 = vld [vmem:[#allocation2 + $0xd0] sm:$0xff]
        %v4061 = vld [vmem:[#allocation2 + $0xd8] sm:$0xff]
        %v4062 = vld [vmem:[#allocation2 + $0xe0] sm:$0xff]
        %v4063 = vld [vmem:[#allocation2 + $0xe8] sm:$0xff]
        %v4064 = vld [vmem:[#allocation2 + $0xf0] sm:$0xff]
        %v4065 = vld [vmem:[#allocation2 + $0xf8] sm:$0xff]
        %v4066 = vld [vmem:[#allocation2 + $0x100] sm:$0xff]
        %v4067 = vld [vmem:[#allocation2 + $0x108] sm:$0xff]
        %v4068 = vld [vmem:[#allocation2 + $0x110] sm:$0xff]
        %v4069 = vld [vmem:[#allocation2 + $0x118] sm:$0xff]
        %v4070 = vld [vmem:[#allocation2 + $0x120] sm:$0xff]
        %v4071 = vld [vmem:[#allocation2 + $0x128] sm:$0xff]
        %v4072 = vld [vmem:[#allocation2 + $0x130] sm:$0xff]
        %v4073 = vld [vmem:[#allocation2 + $0x138] sm:$0xff]
        %v4074 = vld [vmem:[#allocation2 + $0x140] sm:$0xff]
        %v4075 = vld [vmem:[#allocation2 + $0x148] sm:$0xff]
        %v4076 = vld [vmem:[#allocation2 + $0x150] sm:$0xff]
        %v4077 = vld [vmem:[#allocation2 + $0x158] sm:$0xff]
        %v4078 = vld [vmem:[#allocation2 + $0x160] sm:$0xff]
        %v4079 = vld [vmem:[#allocation2 + $0x168] sm:$0xff]
        %v4080 = vld [vmem:[#allocation2 + $0x170] sm:$0xff]
        %v4081 = vld [vmem:[#allocation2 + $0x178] sm:$0xff]
        %v4082 = vld [vmem:[#allocation2 + $0x180] sm:$0xff]
        %v4083 = vld [vmem:[#allocation2 + $0x188] sm:$0xff]
        %v4084 = vld [vmem:[#allocation2 + $0x190] sm:$0xff]
        %v4085 = vld [vmem:[#allocation2 + $0x198] sm:$0xff]
        %v4086 = vld [vmem:[#allocation2 + $0x1a0] sm:$0xff]
        %v4087 = vld [vmem:[#allocation2 + $0x1a8] sm:$0xff]
        %v4088 = vld [vmem:[#allocation2 + $0x1b0] sm:$0xff]
        %v4089 = vld [vmem:[#allocation2 + $0x1b8] sm:$0xff]
        %v4090 = vld [vmem:[#allocation2 + $0x1c0] sm:$0xff]
        %v4091 = vld [vmem:[#allocation2 + $0x1c8] sm:$0xff]
        %v4092 = vld [vmem:[#allocation2 + $0x1d0] sm:$0xff]
        %v4093 = vld [vmem:[#allocation2 + $0x1d8] sm:$0xff]
        %s4094 = scalar_lea.vmem [#allocation4], 576
        %v4095 = vld [vmem:[%s4094] sm:$0xf]
        %v4096 = vld [vmem:[%s4094 + $0xc] sm:$0xf]
        %v4097 = vld [vmem:[%s4094 + $0x18] sm:$0xf]
        %v4098 = vld [vmem:[%s4094 + $0x24] sm:$0xf]
        %v4099 = vld [vmem:[%s4094 + $0x30] sm:$0xf]
        %v4100 = vld [vmem:[%s4094 + $0x3c] sm:$0xf]
        %v4101 = vld [vmem:[%s4094 + $0x48] sm:$0xf]
        %v4102 = vld [vmem:[%s4094 + $0x54] sm:$0xf]
        %v4103 = vld [vmem:[%s4094 + $0x60] sm:$0xf]
        %v4104 = vld [vmem:[%s4094 + $0x6c] sm:$0xf]
        %v4105 = vld [vmem:[%s4094 + $0x78] sm:$0xf]
        %v4106 = vld [vmem:[%s4094 + $0x84] sm:$0xf]
        %v4107 = vld [vmem:[%s4094 + $0x90] sm:$0xf]
        %v4108 = vld [vmem:[%s4094 + $0x9c] sm:$0xf]
        %v4109 = vld [vmem:[%s4094 + $0xa8] sm:$0xf]
        %v4110 = vld [vmem:[%s4094 + $0xb4] sm:$0xf]
        %v4111 = vld [vmem:[%s4094 + $0xc0] sm:$0xf]
        %v4112 = vld [vmem:[%s4094 + $0xcc] sm:$0xf]
        %v4113 = vld [vmem:[%s4094 + $0xd8] sm:$0xf]
        %v4114 = vld [vmem:[%s4094 + $0xe4] sm:$0xf]
        %v4115 = vld [vmem:[%s4094 + $0xf0] sm:$0xf]
        %v4116 = vld [vmem:[%s4094 + $0xfc] sm:$0xf]
        %v4117 = vld [vmem:[%s4094 + $0x108] sm:$0xf]
        %v4118 = vld [vmem:[%s4094 + $0x114] sm:$0xf]
        %v4119 = vld [vmem:[%s4094 + $0x120] sm:$0xf]
        %v4120 = vld [vmem:[%s4094 + $0x12c] sm:$0xf]
        %v4121 = vld [vmem:[%s4094 + $0x138] sm:$0xf]
        %v4122 = vld [vmem:[%s4094 + $0x144] sm:$0xf]
        %v4123 = vld [vmem:[%s4094 + $0x150] sm:$0xf]
        %v4124 = vld [vmem:[%s4094 + $0x15c] sm:$0xf]
        %v4125 = vld [vmem:[%s4094 + $0x168] sm:$0xf]
        %v4126 = vld [vmem:[%s4094 + $0x174] sm:$0xf]
        %v4127 = vld [vmem:[%s4094 + $0x180] sm:$0xf]
        %v4128 = vld [vmem:[%s4094 + $0x18c] sm:$0xf]
        %v4129 = vld [vmem:[%s4094 + $0x198] sm:$0xf]
        %v4130 = vld [vmem:[%s4094 + $0x1a4] sm:$0xf]
        %v4131 = vld [vmem:[%s4094 + $0x1b0] sm:$0xf]
        %v4132 = vld [vmem:[%s4094 + $0x1bc] sm:$0xf]
        %v4133 = vld [vmem:[%s4094 + $0x1c8] sm:$0xf]
        %v4134 = vld [vmem:[%s4094 + $0x1d4] sm:$0xf]
        %v4135 = vld [vmem:[%s4094 + $0x1e0] sm:$0xf]
        %v4136 = vld [vmem:[%s4094 + $0x1ec] sm:$0xf]
        %v4137 = vld [vmem:[%s4094 + $0x1f8] sm:$0xf]
        %v4138 = vld [vmem:[%s4094 + $0x204] sm:$0xf]
        %v4139 = vld [vmem:[%s4094 + $0x210] sm:$0xf]
        %v4140 = vld [vmem:[%s4094 + $0x21c] sm:$0xf]
        %v4141 = vld [vmem:[%s4094 + $0x228] sm:$0xf]
        %v4142 = vld [vmem:[%s4094 + $0x234] sm:$0xf]
        %v4143 = vld [vmem:[%s4094 + $0x4] sm:$0xf]
        %v4144 = vld [vmem:[%s4094 + $0x10] sm:$0xf]
        %v4145 = vld [vmem:[%s4094 + $0x1c] sm:$0xf]
        %v4146 = vld [vmem:[%s4094 + $0x28] sm:$0xf]
        %v4147 = vld [vmem:[%s4094 + $0x34] sm:$0xf]
        %v4148 = vld [vmem:[%s4094 + $0x40] sm:$0xf]
        %v4149 = vld [vmem:[%s4094 + $0x4c] sm:$0xf]
        %v4150 = vld [vmem:[%s4094 + $0x58] sm:$0xf]
        %v4151 = vld [vmem:[%s4094 + $0x64] sm:$0xf]
        %v4152 = vld [vmem:[%s4094 + $0x70] sm:$0xf]
        %v4153 = vld [vmem:[%s4094 + $0x7c] sm:$0xf]
        %v4154 = vld [vmem:[%s4094 + $0x88] sm:$0xf]
        %v4155 = vld [vmem:[%s4094 + $0x94] sm:$0xf]
        %v4156 = vld [vmem:[%s4094 + $0xa0] sm:$0xf]
        %v4157 = vld [vmem:[%s4094 + $0xac] sm:$0xf]
        %v4158 = vld [vmem:[%s4094 + $0xb8] sm:$0xf]
        %v4159 = vld [vmem:[%s4094 + $0xc4] sm:$0xf]
        %v4160 = vld [vmem:[%s4094 + $0xd0] sm:$0xf]
        %v4161 = vld [vmem:[%s4094 + $0xdc] sm:$0xf]
        %v4162 = vld [vmem:[%s4094 + $0xe8] sm:$0xf]
        %v4163 = vld [vmem:[%s4094 + $0xf4] sm:$0xf]
        %v4164 = vld [vmem:[%s4094 + $0x100] sm:$0xf]
        %v4165 = vld [vmem:[%s4094 + $0x10c] sm:$0xf]
        %v4166 = vld [vmem:[%s4094 + $0x118] sm:$0xf]
        %v4167 = vld [vmem:[%s4094 + $0x124] sm:$0xf]
        %v4168 = vld [vmem:[%s4094 + $0x130] sm:$0xf]
        %v4169 = vld [vmem:[%s4094 + $0x13c] sm:$0xf]
        %v4170 = vld [vmem:[%s4094 + $0x148] sm:$0xf]
        %v4171 = vld [vmem:[%s4094 + $0x154] sm:$0xf]
        %v4172 = vld [vmem:[%s4094 + $0x160] sm:$0xf]
        %v4173 = vld [vmem:[%s4094 + $0x16c] sm:$0xf]
        %v4174 = vld [vmem:[%s4094 + $0x178] sm:$0xf]
        %v4175 = vld [vmem:[%s4094 + $0x184] sm:$0xf]
        %v4176 = vld [vmem:[%s4094 + $0x190] sm:$0xf]
        %v4177 = vld [vmem:[%s4094 + $0x19c] sm:$0xf]
        %v4178 = vld [vmem:[%s4094 + $0x1a8] sm:$0xf]
        %v4179 = vld [vmem:[%s4094 + $0x1b4] sm:$0xf]
        %v4180 = vld [vmem:[%s4094 + $0x1c0] sm:$0xf]
        %v4181 = vld [vmem:[%s4094 + $0x1cc] sm:$0xf]
        %v4182 = vld [vmem:[%s4094 + $0x1d8] sm:$0xf]
        %v4183 = vld [vmem:[%s4094 + $0x1e4] sm:$0xf]
        %v4184 = vld [vmem:[%s4094 + $0x1f0] sm:$0xf]
        %v4185 = vld [vmem:[%s4094 + $0x1fc] sm:$0xf]
        %v4186 = vld [vmem:[%s4094 + $0x208] sm:$0xf]
        %v4187 = vld [vmem:[%s4094 + $0x214] sm:$0xf]
        %v4188 = vld [vmem:[%s4094 + $0x220] sm:$0xf]
        %v4189 = vld [vmem:[%s4094 + $0x22c] sm:$0xf]
        %v4190 = vld [vmem:[%s4094 + $0x238] sm:$0xf]
        %v4239 = vunpack.c.l.b16 %v4143
        %v4240 = vunpack.c.l.b16 %v4144
        %v4241 = vunpack.c.l.b16 %v4145
        %v4242 = vunpack.c.l.b16 %v4146
        %v4243 = vunpack.c.l.b16 %v4147
        %v4244 = vunpack.c.l.b16 %v4148
        %v4245 = vunpack.c.l.b16 %v4149
        %v4246 = vunpack.c.l.b16 %v4150
        %v4247 = vunpack.c.l.b16 %v4151
        %v4248 = vunpack.c.l.b16 %v4152
        %v4249 = vunpack.c.l.b16 %v4153
        %v4250 = vunpack.c.l.b16 %v4154
        %v4251 = vunpack.c.l.b16 %v4155
        %v4252 = vunpack.c.l.b16 %v4156
        %v4253 = vunpack.c.l.b16 %v4157
        %v4254 = vunpack.c.l.b16 %v4158
        %v4255 = vunpack.c.l.b16 %v4159
        %v4256 = vunpack.c.l.b16 %v4160
        %v4257 = vunpack.c.l.b16 %v4161
        %v4258 = vunpack.c.l.b16 %v4162
        %v4259 = vunpack.c.l.b16 %v4163
        %v4260 = vunpack.c.l.b16 %v4164
        %v4261 = vunpack.c.l.b16 %v4165
        %v4262 = vunpack.c.l.b16 %v4166
        %v4263 = vunpack.c.l.b16 %v4167
        %v4264 = vunpack.c.l.b16 %v4168
        %v4265 = vunpack.c.l.b16 %v4169
        %v4266 = vunpack.c.l.b16 %v4170
        %v4267 = vunpack.c.l.b16 %v4171
        %v4268 = vunpack.c.l.b16 %v4172
        %v4269 = vunpack.c.l.b16 %v4173
        %v4270 = vunpack.c.l.b16 %v4174
        %v4271 = vunpack.c.l.b16 %v4175
        %v4272 = vunpack.c.l.b16 %v4176
        %v4273 = vunpack.c.l.b16 %v4177
        %v4274 = vunpack.c.l.b16 %v4178
        %v4275 = vunpack.c.l.b16 %v4179
        %v4276 = vunpack.c.l.b16 %v4180
        %v4277 = vunpack.c.l.b16 %v4181
        %v4278 = vunpack.c.l.b16 %v4182
        %v4279 = vunpack.c.l.b16 %v4183
        %v4280 = vunpack.c.l.b16 %v4184
        %v4281 = vunpack.c.l.b16 %v4185
        %v4282 = vunpack.c.l.b16 %v4186
        %v4283 = vunpack.c.l.b16 %v4187
        %v4284 = vunpack.c.l.b16 %v4188
        %v4285 = vunpack.c.l.b16 %v4189
        %v4286 = vunpack.c.l.b16 %v4190
        %v4287 = vpack.c.b16 %v4240, %v4239
        %v4288 = vpack.c.b16 %v4242, %v4241
        %v4289 = vpack.c.b16 %v4244, %v4243
        %v4290 = vpack.c.b16 %v4246, %v4245
        %v4291 = vpack.c.b16 %v4248, %v4247
        %v4292 = vpack.c.b16 %v4250, %v4249
        %v4293 = vpack.c.b16 %v4252, %v4251
        %v4294 = vpack.c.b16 %v4254, %v4253
        %v4295 = vpack.c.b16 %v4256, %v4255
        %v4296 = vpack.c.b16 %v4258, %v4257
        %v4297 = vpack.c.b16 %v4260, %v4259
        %v4298 = vpack.c.b16 %v4262, %v4261
        %v4299 = vpack.c.b16 %v4264, %v4263
        %v4300 = vpack.c.b16 %v4266, %v4265
        %v4301 = vpack.c.b16 %v4268, %v4267
        %v4302 = vpack.c.b16 %v4270, %v4269
        %v4303 = vpack.c.b16 %v4272, %v4271
        %v4304 = vpack.c.b16 %v4274, %v4273
        %v4305 = vpack.c.b16 %v4276, %v4275
        %v4306 = vpack.c.b16 %v4278, %v4277
        %v4307 = vpack.c.b16 %v4280, %v4279
        %v4308 = vpack.c.b16 %v4282, %v4281
        %v4309 = vpack.c.b16 %v4284, %v4283
        %v4310 = vpack.c.b16 %v4286, %v4285
        %4335 = vmatprep.subr.bf16.mxu0 0
        %4336 = vmatpush1.bf16.msra.mxu0 %v4287
        %4337 = vmatprep.subr.bf16.mxu0 0
        %4338 = vmatpush1.bf16.msra.mxu0 %v4288
        %4339 = vmatprep.subr.bf16.mxu0 0
        %4340 = vmatpush1.bf16.msra.mxu0 %v4289
        %4341 = vmatprep.subr.bf16.mxu0 0
        %4342 = vmatpush1.bf16.msra.mxu0 %v4290
        %4343 = vmatprep.subr.bf16.mxu0 0
        %4344 = vmatpush1.bf16.msra.mxu0 %v4291
        %4345 = vmatprep.subr.bf16.mxu0 0
        %4346 = vmatpush1.bf16.msra.mxu0 %v4292
        %4347 = vmatprep.subr.bf16.mxu0 0
        %4348 = vmatpush1.bf16.msra.mxu0 %v4293
        %4349 = vmatprep.subr.bf16.mxu0 0
        %4350 = vmatpush1.bf16.msra.mxu0 %v4294
        %4351 = vmatprep.subr.bf16.mxu0 0
        %4352 = vmatpush1.bf16.msra.mxu0 %v4295
        %4353 = vmatprep.subr.bf16.mxu0 0
        %4354 = vmatpush1.bf16.msra.mxu0 %v4296
        %4355 = vmatprep.subr.bf16.mxu0 0
        %4356 = vmatpush1.bf16.msra.mxu0 %v4297
        %4357 = vmatprep.subr.bf16.mxu0 0
        %4358 = vmatpush1.bf16.msra.mxu0 %v4298
        %4359 = vmatprep.subr.bf16.mxu0 0
        %4360 = vmatpush1.bf16.msra.mxu0 %v4299
        %4361 = vmatprep.subr.bf16.mxu0 0
        %4362 = vmatpush1.bf16.msra.mxu0 %v4300
        %4363 = vmatprep.subr.bf16.mxu0 0
        %4364 = vmatpush1.bf16.msra.mxu0 %v4301
        %4365 = vmatprep.subr.bf16.mxu0 0
        %4366 = vmatpush1.bf16.msra.mxu0 %v4302
        %4367 = vmatprep.mubr.bf16.mxu0 %v4038
        %4368 = vmatmul.mubr.bf16.gmra.mrb[0].mxu0 %v4037
        %v4369 = vpop.f32.mrb[0].mxu0
        %v4370 = vadd.f32 0.0, %v4369
        %v4371 = vpop.f32.mrb[0].mxu0
        %v4372 = vpop.f32.mrb[0].mxu0
        %v4373 = vadd.f32 0.0, %v4372
        %v4374 = vpop.f32.mrb[0].mxu0
        %4375 = vmatprep.mubr.bf16.mxu0 %v4041
        %4376 = vmatmul.mubr.bf16.gmra.mrb[0].mxu0 %v4040
        %v4377 = vpop.f32.mrb[0].mxu0
        %v4378 = vadd.f32 0.0, %v4377
        %v4379 = vpop.f32.mrb[0].mxu0
        %v4380 = vpop.f32.mrb[0].mxu0
        %v4381 = vadd.f32 0.0, %v4380
        %v4382 = vpop.f32.mrb[0].mxu0
        %4383 = vmatprep.mubr.bf16.mxu0 %v4044
        %4384 = vmatmul.mubr.bf16.gmra.mrb[0].mxu0 %v4043
        %v4385 = vpop.f32.mrb[0].mxu0
        %v4386 = vadd.f32 0.0, %v4385
        %v4387 = vpop.f32.mrb[0].mxu0
        %v4388 = vpop.f32.mrb[0].mxu0
        %v4389 = vadd.f32 0.0, %v4388
        %v4390 = vpop.f32.mrb[0].mxu0
        %4391 = vmatprep.mubr.bf16.mxu0 %v4047
        %4392 = vmatmul.mubr.bf16.gmra.mrb[0].mxu0 %v4046
        %v4393 = vpop.f32.mrb[0].mxu0
        %v4394 = vadd.f32 0.0, %v4393
        %v4395 = vpop.f32.mrb[0].mxu0
        %v4396 = vpop.f32.mrb[0].mxu0
        %v4397 = vadd.f32 0.0, %v4396
        %v4398 = vpop.f32.mrb[0].mxu0
        %4399 = vmatprep.mubr.bf16.mxu0 %v4050
        %4400 = vmatmul.mubr.bf16.gmra.mrb[0].mxu0 %v4049
        %v4401 = vpop.f32.mrb[0].mxu0
        %v4402 = vadd.f32 0.0, %v4401
        %v4403 = vpop.f32.mrb[0].mxu0
        %v4404 = vpop.f32.mrb[0].mxu0
        %v4405 = vadd.f32 0.0, %v4404
        %v4406 = vpop.f32.mrb[0].mxu0
        %4407 = vmatprep.mubr.bf16.mxu0 %v4053
        %4408 = vmatmul.mubr.bf16.gmra.mrb[0].mxu0 %v4052
        %v4409 = vpop.f32.mrb[0].mxu0
        %v4410 = vadd.f32 0.0, %v4409
        %v4411 = vpop.f32.mrb[0].mxu0
        %v4412 = vpop.f32.mrb[0].mxu0
        %v4413 = vadd.f32 0.0, %v4412
        %v4414 = vpop.f32.mrb[0].mxu0
        %4415 = vmatprep.mubr.bf16.mxu0 %v4056
        %4416 = vmatmul.mubr.bf16.gmra.mrb[0].mxu0 %v4055
        %v4417 = vpop.f32.mrb[0].mxu0
        %v4418 = vadd.f32 0.0, %v4417
        %v4419 = vpop.f32.mrb[0].mxu0
        %v4420 = vpop.f32.mrb[0].mxu0
        %v4421 = vadd.f32 0.0, %v4420
        %v4422 = vpop.f32.mrb[0].mxu0
        %4423 = vmatprep.mubr.bf16.mxu0 %v4059
        %4424 = vmatmul.mubr.bf16.gmra.mrb[0].mxu0 %v4058
        %v4425 = vpop.f32.mrb[0].mxu0
        %v4426 = vadd.f32 0.0, %v4425
        %v4427 = vpop.f32.mrb[0].mxu0
        %v4428 = vpop.f32.mrb[0].mxu0
        %v4429 = vadd.f32 0.0, %v4428
        %v4430 = vpop.f32.mrb[0].mxu0
        %4431 = vmatprep.mubr.bf16.mxu0 %v4062
        %4432 = vmatmul.mubr.bf16.gmra.mrb[0].mxu0 %v4061
        %v4433 = vpop.f32.mrb[0].mxu0
        %v4434 = vadd.f32 0.0, %v4433
        %v4435 = vpop.f32.mrb[0].mxu0
        %v4436 = vpop.f32.mrb[0].mxu0
        %v4437 = vadd.f32 0.0, %v4436
        %v4438 = vpop.f32.mrb[0].mxu0
        %4439 = vmatprep.mubr.bf16.mxu0 %v4065
        %4440 = vmatmul.mubr.bf16.gmra.mrb[0].mxu0 %v4064
        %v4441 = vpop.f32.mrb[0].mxu0
        %v4442 = vadd.f32 0.0, %v4441
        %v4443 = vpop.f32.mrb[0].mxu0
        %v4444 = vpop.f32.mrb[0].mxu0
        %v4445 = vadd.f32 0.0, %v4444
        %v4446 = vpop.f32.mrb[0].mxu0
        %4447 = vmatprep.mubr.bf16.mxu0 %v4068
        %4448 = vmatmul.mubr.bf16.gmra.mrb[0].mxu0 %v4067
        %v4449 = vpop.f32.mrb[0].mxu0
        %v4450 = vadd.f32 0.0, %v4449
        %v4451 = vpop.f32.mrb[0].mxu0
        %v4452 = vpop.f32.mrb[0].mxu0
        %v4453 = vadd.f32 0.0, %v4452
        %v4454 = vpop.f32.mrb[0].mxu0
        %4455 = vmatprep.mubr.bf16.mxu0 %v4071
        %4456 = vmatmul.mubr.bf16.gmra.mrb[0].mxu0 %v4070
        %v4457 = vpop.f32.mrb[0].mxu0
        %v4458 = vadd.f32 0.0, %v4457
        %v4459 = vpop.f32.mrb[0].mxu0
        %v4460 = vpop.f32.mrb[0].mxu0
        %v4461 = vadd.f32 0.0, %v4460
        %v4462 = vpop.f32.mrb[0].mxu0
        %4463 = vmatprep.mubr.bf16.mxu0 %v4074
        %4464 = vmatmul.mubr.bf16.gmra.mrb[0].mxu0 %v4073
        %v4465 = vpop.f32.mrb[0].mxu0
        %v4466 = vadd.f32 0.0, %v4465
        %v4467 = vpop.f32.mrb[0].mxu0
        %v4468 = vpop.f32.mrb[0].mxu0
        %v4469 = vadd.f32 0.0, %v4468
        %v4470 = vpop.f32.mrb[0].mxu0
        %4471 = vmatprep.mubr.bf16.mxu0 %v4077
        %4472 = vmatmul.mubr.bf16.gmra.mrb[0].mxu0 %v4076
        %v4473 = vpop.f32.mrb[0].mxu0
        %v4474 = vadd.f32 0.0, %v4473
        %v4475 = vpop.f32.mrb[0].mxu0
        %v4476 = vpop.f32.mrb[0].mxu0
        %v4477 = vadd.f32 0.0, %v4476
        %v4478 = vpop.f32.mrb[0].mxu0
        %4479 = vmatprep.mubr.bf16.mxu0 %v4080
        %4480 = vmatmul.mubr.bf16.gmra.mrb[0].mxu0 %v4079
        %v4481 = vpop.f32.mrb[0].mxu0
        %v4482 = vadd.f32 0.0, %v4481
        %v4483 = vpop.f32.mrb[0].mxu0
        %v4484 = vpop.f32.mrb[0].mxu0
        %v4485 = vadd.f32 0.0, %v4484
        %v4486 = vpop.f32.mrb[0].mxu0
        %4487 = vmatprep.mubr.bf16.mxu0 %v4083
        %4488 = vmatmul.mubr.bf16.gmra.mrb[0].mxu0 %v4082
        %v4489 = vpop.f32.mrb[0].mxu0
        %v4490 = vadd.f32 0.0, %v4489
        %v4491 = vpop.f32.mrb[0].mxu0
        %v4492 = vpop.f32.mrb[0].mxu0
        %v4493 = vadd.f32 0.0, %v4492
        %v4494 = vpop.f32.mrb[0].mxu0
        %4495 = vmatprep.mubr.bf16.mxu0 %v4086
        %4496 = vmatmul.mubr.bf16.gmra.mrb[0].mxu0 %v4085
        %v4497 = vpop.f32.mrb[0].mxu0
        %v4498 = vadd.f32 0.0, %v4497
        %v4499 = vpop.f32.mrb[0].mxu0
        %v4500 = vpop.f32.mrb[0].mxu0
        %v4501 = vadd.f32 0.0, %v4500
        %v4502 = vpop.f32.mrb[0].mxu0
        %4503 = vmatprep.mubr.bf16.mxu0 %v4089
        %4504 = vmatmul.mubr.bf16.gmra.mrb[0].mxu0 %v4088
        %v4505 = vpop.f32.mrb[0].mxu0
        %v4506 = vadd.f32 0.0, %v4505
        %v4507 = vpop.f32.mrb[0].mxu0
        %v4508 = vpop.f32.mrb[0].mxu0
        %v4509 = vadd.f32 0.0, %v4508
        %v4510 = vpop.f32.mrb[0].mxu0
        %4511 = vdwg.mxu0
        %4512 = vmatprep.subr.bf16.mxu0 0
        %4513 = vmatpush1.bf16.msra.mxu0 %v4303
        %4514 = vmatprep.subr.bf16.mxu0 0
        %4515 = vmatpush1.bf16.msra.mxu0 %v4304
        %4516 = vmatprep.subr.bf16.mxu0 0
        %4517 = vmatpush1.bf16.msra.mxu0 %v4305
        %4518 = vmatprep.subr.bf16.mxu0 0
        %4519 = vmatpush1.bf16.msra.mxu0 %v4306
        %4520 = vmatprep.subr.bf16.mxu0 0
        %4521 = vmatpush1.bf16.msra.mxu0 %v4307
        %4522 = vmatprep.subr.bf16.mxu0 0
        %4523 = vmatpush1.bf16.msra.mxu0 %v4308
        %4524 = vmatprep.subr.bf16.mxu0 0
        %4525 = vmatpush1.bf16.msra.mxu0 %v4309
        %4526 = vmatprep.subr.bf16.mxu0 0
        %4527 = vmatpush1.bf16.msra.mxu0 %v4310
        %4528 = vmatprep.subr.bf16.mxu0 0
        %4529 = vmatpush1.bf16.msra.mxu0 0
        %4530 = vmatprep.subr.bf16.mxu0 0
        %4531 = vmatpush1.bf16.msra.mxu0 0
        %4532 = vmatprep.subr.bf16.mxu0 0
        %4533 = vmatpush1.bf16.msra.mxu0 0
        %4534 = vmatprep.subr.bf16.mxu0 0
        %4535 = vmatpush1.bf16.msra.mxu0 0
        %4536 = vmatprep.subr.bf16.mxu0 0
        %4537 = vmatpush1.bf16.msra.mxu0 0
        %4538 = vmatprep.subr.bf16.mxu0 0
        %4539 = vmatpush1.bf16.msra.mxu0 0
        %4540 = vmatprep.subr.bf16.mxu0 0
        %4541 = vmatpush1.bf16.msra.mxu0 0
        %4542 = vmatprep.subr.bf16.mxu0 0
        %4543 = vmatpush1.bf16.msra.mxu0 0
        %4544 = vmatprep.mubr.bf16.mxu0 0
        %4545 = vmatmul.mubr.bf16.gmra.mrb[0].mxu0 %v4039
        %v4546 = vpop.f32.mrb[0].mxu0
        %v4547 = vadd.f32 %v4370, %v4546
        %v4548 = vpop.f32.mrb[0].mxu0
        %v4549 = vpop.f32.mrb[0].mxu0
        %v4550 = vadd.f32 %v4373, %v4549
        %v4551 = vpop.f32.mrb[0].mxu0
        %4552 = vmatprep.mubr.bf16.mxu0 0
        %4553 = vmatmul.mubr.bf16.gmra.mrb[0].mxu0 %v4042
        %v4554 = vpop.f32.mrb[0].mxu0
        %v4555 = vadd.f32 %v4378, %v4554
        %v4556 = vpop.f32.mrb[0].mxu0
        %v4557 = vpop.f32.mrb[0].mxu0
        %v4558 = vadd.f32 %v4381, %v4557
        %v4559 = vpop.f32.mrb[0].mxu0
        %4560 = vmatprep.mubr.bf16.mxu0 0
        %4561 = vmatmul.mubr.bf16.gmra.mrb[0].mxu0 %v4045
        %v4562 = vpop.f32.mrb[0].mxu0
        %v4563 = vadd.f32 %v4386, %v4562
        %v4564 = vpop.f32.mrb[0].mxu0
        %v4565 = vpop.f32.mrb[0].mxu0
        %v4566 = vadd.f32 %v4389, %v4565
        %v4567 = vpop.f32.mrb[0].mxu0
        %4568 = vmatprep.mubr.bf16.mxu0 0
        %4569 = vmatmul.mubr.bf16.gmra.mrb[0].mxu0 %v4048
        %v4570 = vpop.f32.mrb[0].mxu0
        %v4571 = vadd.f32 %v4394, %v4570
        %v4572 = vpop.f32.mrb[0].mxu0
        %v4573 = vpop.f32.mrb[0].mxu0
        %v4574 = vadd.f32 %v4397, %v4573
        %v4575 = vpop.f32.mrb[0].mxu0
        %4576 = vmatprep.mubr.bf16.mxu0 0
        %4577 = vmatmul.mubr.bf16.gmra.mrb[0].mxu0 %v4051
        %v4578 = vpop.f32.mrb[0].mxu0
        %v4579 = vadd.f32 %v4402, %v4578
        %v4580 = vpop.f32.mrb[0].mxu0
        %v4581 = vpop.f32.mrb[0].mxu0
        %v4582 = vadd.f32 %v4405, %v4581
        %v4583 = vpop.f32.mrb[0].mxu0
        %4584 = vmatprep.mubr.bf16.mxu0 0
        %4585 = vmatmul.mubr.bf16.gmra.mrb[0].mxu0 %v4054
        %v4586 = vpop.f32.mrb[0].mxu0
        %v4587 = vadd.f32 %v4410, %v4586
        %v4588 = vpop.f32.mrb[0].mxu0
        %v4589 = vpop.f32.mrb[0].mxu0
        %v4590 = vadd.f32 %v4413, %v4589
        %v4591 = vpop.f32.mrb[0].mxu0
        %4592 = vmatprep.mubr.bf16.mxu0 0
        %4593 = vmatmul.mubr.bf16.gmra.mrb[0].mxu0 %v4057
        %v4594 = vpop.f32.mrb[0].mxu0
        %v4595 = vadd.f32 %v4418, %v4594
        %v4596 = vpop.f32.mrb[0].mxu0
        %v4597 = vpop.f32.mrb[0].mxu0
        %v4598 = vadd.f32 %v4421, %v4597
        %v4599 = vpop.f32.mrb[0].mxu0
        %4600 = vmatprep.mubr.bf16.mxu0 0
        %4601 = vmatmul.mubr.bf16.gmra.mrb[0].mxu0 %v4060
        %v4602 = vpop.f32.mrb[0].mxu0
        %v4603 = vadd.f32 %v4426, %v4602
        %v4604 = vpop.f32.mrb[0].mxu0
        %v4605 = vpop.f32.mrb[0].mxu0
        %v4606 = vadd.f32 %v4429, %v4605
        %v4607 = vpop.f32.mrb[0].mxu0
        %4608 = vmatprep.mubr.bf16.mxu0 0
        %4609 = vmatmul.mubr.bf16.gmra.mrb[0].mxu0 %v4063
        %v4610 = vpop.f32.mrb[0].mxu0
        %v4611 = vadd.f32 %v4434, %v4610
        %v4612 = vpop.f32.mrb[0].mxu0
        %v4613 = vpop.f32.mrb[0].mxu0
        %v4614 = vadd.f32 %v4437, %v4613
        %v4615 = vpop.f32.mrb[0].mxu0
        %4616 = vmatprep.mubr.bf16.mxu0 0
        %4617 = vmatmul.mubr.bf16.gmra.mrb[0].mxu0 %v4066
        %v4618 = vpop.f32.mrb[0].mxu0
        %v4619 = vadd.f32 %v4442, %v4618
        %v4620 = vpop.f32.mrb[0].mxu0
        %v4621 = vpop.f32.mrb[0].mxu0
        %v4622 = vadd.f32 %v4445, %v4621
        %v4623 = vpop.f32.mrb[0].mxu0
        %4624 = vmatprep.mubr.bf16.mxu0 0
        %4625 = vmatmul.mubr.bf16.gmra.mrb[0].mxu0 %v4069
        %v4626 = vpop.f32.mrb[0].mxu0
        %v4627 = vadd.f32 %v4450, %v4626
        %v4628 = vpop.f32.mrb[0].mxu0
        %v4629 = vpop.f32.mrb[0].mxu0
        %v4630 = vadd.f32 %v4453, %v4629
        %v4631 = vpop.f32.mrb[0].mxu0
        %4632 = vmatprep.mubr.bf16.mxu0 0
        %4633 = vmatmul.mubr.bf16.gmra.mrb[0].mxu0 %v4072
        %v4634 = vpop.f32.mrb[0].mxu0
        %v4635 = vadd.f32 %v4458, %v4634
        %v4636 = vpop.f32.mrb[0].mxu0
        %v4637 = vpop.f32.mrb[0].mxu0
        %v4638 = vadd.f32 %v4461, %v4637
        %v4639 = vpop.f32.mrb[0].mxu0
        %4640 = vmatprep.mubr.bf16.mxu0 0
        %4641 = vmatmul.mubr.bf16.gmra.mrb[0].mxu0 %v4075
        %v4642 = vpop.f32.mrb[0].mxu0
        %v4643 = vadd.f32 %v4466, %v4642
        %v4644 = vpop.f32.mrb[0].mxu0
        %v4645 = vpop.f32.mrb[0].mxu0
        %v4646 = vadd.f32 %v4469, %v4645
        %v4647 = vpop.f32.mrb[0].mxu0
        %4648 = vmatprep.mubr.bf16.mxu0 0
        %4649 = vmatmul.mubr.bf16.gmra.mrb[0].mxu0 %v4078
        %v4650 = vpop.f32.mrb[0].mxu0
        %v4651 = vadd.f32 %v4474, %v4650
        %v4652 = vpop.f32.mrb[0].mxu0
        %v4653 = vpop.f32.mrb[0].mxu0
        %v4654 = vadd.f32 %v4477, %v4653
        %v4655 = vpop.f32.mrb[0].mxu0
        %4656 = vmatprep.mubr.bf16.mxu0 0
        %4657 = vmatmul.mubr.bf16.gmra.mrb[0].mxu0 %v4081
        %v4658 = vpop.f32.mrb[0].mxu0
        %v4659 = vadd.f32 %v4482, %v4658
        %v4660 = vpop.f32.mrb[0].mxu0
        %v4661 = vpop.f32.mrb[0].mxu0
        %v4662 = vadd.f32 %v4485, %v4661
        %v4663 = vpop.f32.mrb[0].mxu0
        %4664 = vmatprep.mubr.bf16.mxu0 0
        %4665 = vmatmul.mubr.bf16.gmra.mrb[0].mxu0 %v4084
        %v4666 = vpop.f32.mrb[0].mxu0
        %v4667 = vadd.f32 %v4490, %v4666
        %v4668 = vpop.f32.mrb[0].mxu0
        %v4669 = vpop.f32.mrb[0].mxu0
        %v4670 = vadd.f32 %v4493, %v4669
        %v4671 = vpop.f32.mrb[0].mxu0
        %4672 = vmatprep.mubr.bf16.mxu0 0
        %4673 = vmatmul.mubr.bf16.gmra.mrb[0].mxu0 %v4087
        %v4674 = vpop.f32.mrb[0].mxu0
        %v4675 = vadd.f32 %v4498, %v4674
        %v4676 = vpop.f32.mrb[0].mxu0
        %v4677 = vpop.f32.mrb[0].mxu0
        %v4678 = vadd.f32 %v4501, %v4677
        %v4679 = vpop.f32.mrb[0].mxu0
        %4680 = vmatprep.mubr.bf16.mxu0 0
        %4681 = vmatmul.mubr.bf16.gmra.mrb[0].mxu0 %v4090
        %v4682 = vpop.f32.mrb[0].mxu0
        %v4683 = vadd.f32 %v4506, %v4682
        %v4684 = vpop.f32.mrb[0].mxu0
        %v4685 = vpop.f32.mrb[0].mxu0
        %v4686 = vadd.f32 %v4509, %v4685
        %v4687 = vpop.f32.mrb[0].mxu0
        %4688 = vdwg.mxu0
        %v4737 = vunpack.c.l.b16 %v4095
        %v4738 = vunpack.c.l.b16 %v4096
        %v4739 = vunpack.c.l.b16 %v4097
        %v4740 = vunpack.c.l.b16 %v4098
        %v4741 = vunpack.c.l.b16 %v4099
        %v4742 = vunpack.c.l.b16 %v4100
        %v4743 = vunpack.c.l.b16 %v4101
        %v4744 = vunpack.c.l.b16 %v4102
        %v4745 = vunpack.c.l.b16 %v4103
        %v4746 = vunpack.c.l.b16 %v4104
        %v4747 = vunpack.c.l.b16 %v4105
        %v4748 = vunpack.c.l.b16 %v4106
        %v4749 = vunpack.c.l.b16 %v4107
        %v4750 = vunpack.c.l.b16 %v4108
        %v4751 = vunpack.c.l.b16 %v4109
        %v4752 = vunpack.c.l.b16 %v4110
        %v4753 = vunpack.c.l.b16 %v4111
        %v4754 = vunpack.c.l.b16 %v4112
        %v4755 = vunpack.c.l.b16 %v4113
        %v4756 = vunpack.c.l.b16 %v4114
        %v4757 = vunpack.c.l.b16 %v4115
        %v4758 = vunpack.c.l.b16 %v4116
        %v4759 = vunpack.c.l.b16 %v4117
        %v4760 = vunpack.c.l.b16 %v4118
        %v4761 = vunpack.c.l.b16 %v4119
        %v4762 = vunpack.c.l.b16 %v4120
        %v4763 = vunpack.c.l.b16 %v4121
        %v4764 = vunpack.c.l.b16 %v4122
        %v4765 = vunpack.c.l.b16 %v4123
        %v4766 = vunpack.c.l.b16 %v4124
        %v4767 = vunpack.c.l.b16 %v4125
        %v4768 = vunpack.c.l.b16 %v4126
        %v4769 = vunpack.c.l.b16 %v4127
        %v4770 = vunpack.c.l.b16 %v4128
        %v4771 = vunpack.c.l.b16 %v4129
        %v4772 = vunpack.c.l.b16 %v4130
        %v4773 = vunpack.c.l.b16 %v4131
        %v4774 = vunpack.c.l.b16 %v4132
        %v4775 = vunpack.c.l.b16 %v4133
        %v4776 = vunpack.c.l.b16 %v4134
        %v4777 = vunpack.c.l.b16 %v4135
        %v4778 = vunpack.c.l.b16 %v4136
        %v4779 = vunpack.c.l.b16 %v4137
        %v4780 = vunpack.c.l.b16 %v4138
        %v4781 = vunpack.c.l.b16 %v4139
        %v4782 = vunpack.c.l.b16 %v4140
        %v4783 = vunpack.c.l.b16 %v4141
        %v4784 = vunpack.c.l.b16 %v4142
        %v4785 = vpack.c.b16 %v4738, %v4737
        %v4786 = vpack.c.b16 %v4740, %v4739
        %v4787 = vpack.c.b16 %v4742, %v4741
        %v4788 = vpack.c.b16 %v4744, %v4743
        %v4789 = vpack.c.b16 %v4746, %v4745
        %v4790 = vpack.c.b16 %v4748, %v4747
        %v4791 = vpack.c.b16 %v4750, %v4749
        %v4792 = vpack.c.b16 %v4752, %v4751
        %v4793 = vpack.c.b16 %v4754, %v4753
        %v4794 = vpack.c.b16 %v4756, %v4755
        %v4795 = vpack.c.b16 %v4758, %v4757
        %v4796 = vpack.c.b16 %v4760, %v4759
        %v4797 = vpack.c.b16 %v4762, %v4761
        %v4798 = vpack.c.b16 %v4764, %v4763
        %v4799 = vpack.c.b16 %v4766, %v4765
        %v4800 = vpack.c.b16 %v4768, %v4767
        %v4801 = vpack.c.b16 %v4770, %v4769
        %v4802 = vpack.c.b16 %v4772, %v4771
        %v4803 = vpack.c.b16 %v4774, %v4773
        %v4804 = vpack.c.b16 %v4776, %v4775
        %v4805 = vpack.c.b16 %v4778, %v4777
        %v4806 = vpack.c.b16 %v4780, %v4779
        %v4807 = vpack.c.b16 %v4782, %v4781
        %v4808 = vpack.c.b16 %v4784, %v4783
        %4833 = vmatprep.subr.bf16.mxu0 0
        %4834 = vmatpush1.bf16.msra.mxu0 %v4785
        %4835 = vmatprep.subr.bf16.mxu0 0
        %4836 = vmatpush1.bf16.msra.mxu0 %v4786
        %4837 = vmatprep.subr.bf16.mxu0 0
        %4838 = vmatpush1.bf16.msra.mxu0 %v4787
        %4839 = vmatprep.subr.bf16.mxu0 0
        %4840 = vmatpush1.bf16.msra.mxu0 %v4788
        %4841 = vmatprep.subr.bf16.mxu0 0
        %4842 = vmatpush1.bf16.msra.mxu0 %v4789
        %4843 = vmatprep.subr.bf16.mxu0 0
        %4844 = vmatpush1.bf16.msra.mxu0 %v4790
        %4845 = vmatprep.subr.bf16.mxu0 0
        %4846 = vmatpush1.bf16.msra.mxu0 %v4791
        %4847 = vmatprep.subr.bf16.mxu0 0
        %4848 = vmatpush1.bf16.msra.mxu0 %v4792
        %4849 = vmatprep.subr.bf16.mxu0 0
        %4850 = vmatpush1.bf16.msra.mxu0 %v4793
        %4851 = vmatprep.subr.bf16.mxu0 0
        %4852 = vmatpush1.bf16.msra.mxu0 %v4794
        %4853 = vmatprep.subr.bf16.mxu0 0
        %4854 = vmatpush1.bf16.msra.mxu0 %v4795
        %4855 = vmatprep.subr.bf16.mxu0 0
        %4856 = vmatpush1.bf16.msra.mxu0 %v4796
        %4857 = vmatprep.subr.bf16.mxu0 0
        %4858 = vmatpush1.bf16.msra.mxu0 %v4797
        %4859 = vmatprep.subr.bf16.mxu0 0
        %4860 = vmatpush1.bf16.msra.mxu0 %v4798
        %4861 = vmatprep.subr.bf16.mxu0 0
        %4862 = vmatpush1.bf16.msra.mxu0 %v4799
        %4863 = vmatprep.subr.bf16.mxu0 0
        %4864 = vmatpush1.bf16.msra.mxu0 %v4800
        %4865 = vmatprep.mubr.bf16.mxu0 %v4035
        %4866 = vmatmul.mubr.bf16.gmra.mrb[0].mxu0 %v4034
        %v4867 = vpop.f32.mrb[0].mxu0
        %v4868 = vadd.f32 %v4547, %v4867
        %v4869 = vpop.f32.mrb[0].mxu0
        %v4870 = vpop.f32.mrb[0].mxu0
        %v4871 = vadd.f32 %v4550, %v4870
        %v4872 = vpop.f32.mrb[0].mxu0
        %4873 = vmatprep.mubr.bf16.mxu0 %v4038
        %4874 = vmatmul.mubr.bf16.gmra.mrb[0].mxu0 %v4037
        %v4875 = vpop.f32.mrb[0].mxu0
        %v4876 = vadd.f32 %v4555, %v4875
        %v4877 = vpop.f32.mrb[0].mxu0
        %v4878 = vpop.f32.mrb[0].mxu0
        %v4879 = vadd.f32 %v4558, %v4878
        %v4880 = vpop.f32.mrb[0].mxu0
        %4881 = vmatprep.mubr.bf16.mxu0 %v4041
        %4882 = vmatmul.mubr.bf16.gmra.mrb[0].mxu0 %v4040
        %v4883 = vpop.f32.mrb[0].mxu0
        %v4884 = vadd.f32 %v4563, %v4883
        %v4885 = vpop.f32.mrb[0].mxu0
        %v4886 = vpop.f32.mrb[0].mxu0
        %v4887 = vadd.f32 %v4566, %v4886
        %v4888 = vpop.f32.mrb[0].mxu0
        %4889 = vmatprep.mubr.bf16.mxu0 %v4044
        %4890 = vmatmul.mubr.bf16.gmra.mrb[0].mxu0 %v4043
        %v4891 = vpop.f32.mrb[0].mxu0
        %v4892 = vadd.f32 %v4571, %v4891
        %v4893 = vpop.f32.mrb[0].mxu0
        %v4894 = vpop.f32.mrb[0].mxu0
        %v4895 = vadd.f32 %v4574, %v4894
        %v4896 = vpop.f32.mrb[0].mxu0
        %4897 = vmatprep.mubr.bf16.mxu0 %v4047
        %4898 = vmatmul.mubr.bf16.gmra.mrb[0].mxu0 %v4046
        %v4899 = vpop.f32.mrb[0].mxu0
        %v4900 = vadd.f32 %v4579, %v4899
        %v4901 = vpop.f32.mrb[0].mxu0
        %v4902 = vpop.f32.mrb[0].mxu0
        %v4903 = vadd.f32 %v4582, %v4902
        %v4904 = vpop.f32.mrb[0].mxu0
        %4905 = vmatprep.mubr.bf16.mxu0 %v4050
        %4906 = vmatmul.mubr.bf16.gmra.mrb[0].mxu0 %v4049
        %v4907 = vpop.f32.mrb[0].mxu0
        %v4908 = vadd.f32 %v4587, %v4907
        %v4909 = vpop.f32.mrb[0].mxu0
        %v4910 = vpop.f32.mrb[0].mxu0
        %v4911 = vadd.f32 %v4590, %v4910
        %v4912 = vpop.f32.mrb[0].mxu0
        %4913 = vmatprep.mubr.bf16.mxu0 %v4053
        %4914 = vmatmul.mubr.bf16.gmra.mrb[0].mxu0 %v4052
        %v4915 = vpop.f32.mrb[0].mxu0
        %v4916 = vadd.f32 %v4595, %v4915
        %v4917 = vpop.f32.mrb[0].mxu0
        %v4918 = vpop.f32.mrb[0].mxu0
        %v4919 = vadd.f32 %v4598, %v4918
        %v4920 = vpop.f32.mrb[0].mxu0
        %4921 = vmatprep.mubr.bf16.mxu0 %v4056
        %4922 = vmatmul.mubr.bf16.gmra.mrb[0].mxu0 %v4055
        %v4923 = vpop.f32.mrb[0].mxu0
        %v4924 = vadd.f32 %v4603, %v4923
        %v4925 = vpop.f32.mrb[0].mxu0
        %v4926 = vpop.f32.mrb[0].mxu0
        %v4927 = vadd.f32 %v4606, %v4926
        %v4928 = vpop.f32.mrb[0].mxu0
        %4929 = vmatprep.mubr.bf16.mxu0 %v4059
        %4930 = vmatmul.mubr.bf16.gmra.mrb[0].mxu0 %v4058
        %v4931 = vpop.f32.mrb[0].mxu0
        %v4932 = vadd.f32 %v4611, %v4931
        %v4933 = vpop.f32.mrb[0].mxu0
        %v4934 = vpop.f32.mrb[0].mxu0
        %v4935 = vadd.f32 %v4614, %v4934
        %v4936 = vpop.f32.mrb[0].mxu0
        %4937 = vmatprep.mubr.bf16.mxu0 %v4062
        %4938 = vmatmul.mubr.bf16.gmra.mrb[0].mxu0 %v4061
        %v4939 = vpop.f32.mrb[0].mxu0
        %v4940 = vadd.f32 %v4619, %v4939
        %v4941 = vpop.f32.mrb[0].mxu0
        %v4942 = vpop.f32.mrb[0].mxu0
        %v4943 = vadd.f32 %v4622, %v4942
        %v4944 = vpop.f32.mrb[0].mxu0
        %4945 = vmatprep.mubr.bf16.mxu0 %v4065
        %4946 = vmatmul.mubr.bf16.gmra.mrb[0].mxu0 %v4064
        %v4947 = vpop.f32.mrb[0].mxu0
        %v4948 = vadd.f32 %v4627, %v4947
        %v4949 = vpop.f32.mrb[0].mxu0
        %v4950 = vpop.f32.mrb[0].mxu0
        %v4951 = vadd.f32 %v4630, %v4950
        %v4952 = vpop.f32.mrb[0].mxu0
        %4953 = vmatprep.mubr.bf16.mxu0 %v4068
        %4954 = vmatmul.mubr.bf16.gmra.mrb[0].mxu0 %v4067
        %v4955 = vpop.f32.mrb[0].mxu0
        %v4956 = vadd.f32 %v4635, %v4955
        %v4957 = vpop.f32.mrb[0].mxu0
        %v4958 = vpop.f32.mrb[0].mxu0
        %v4959 = vadd.f32 %v4638, %v4958
        %v4960 = vpop.f32.mrb[0].mxu0
        %4961 = vmatprep.mubr.bf16.mxu0 %v4071
        %4962 = vmatmul.mubr.bf16.gmra.mrb[0].mxu0 %v4070
        %v4963 = vpop.f32.mrb[0].mxu0
        %v4964 = vadd.f32 %v4643, %v4963
        %v4965 = vpop.f32.mrb[0].mxu0
        %v4966 = vpop.f32.mrb[0].mxu0
        %v4967 = vadd.f32 %v4646, %v4966
        %v4968 = vpop.f32.mrb[0].mxu0
        %4969 = vmatprep.mubr.bf16.mxu0 %v4074
        %4970 = vmatmul.mubr.bf16.gmra.mrb[0].mxu0 %v4073
        %v4971 = vpop.f32.mrb[0].mxu0
        %v4972 = vadd.f32 %v4651, %v4971
        %v4973 = vpop.f32.mrb[0].mxu0
        %v4974 = vpop.f32.mrb[0].mxu0
        %v4975 = vadd.f32 %v4654, %v4974
        %v4976 = vpop.f32.mrb[0].mxu0
        %4977 = vmatprep.mubr.bf16.mxu0 %v4077
        %4978 = vmatmul.mubr.bf16.gmra.mrb[0].mxu0 %v4076
        %v4979 = vpop.f32.mrb[0].mxu0
        %v4980 = vadd.f32 %v4659, %v4979
        %v4981 = vpop.f32.mrb[0].mxu0
        %v4982 = vpop.f32.mrb[0].mxu0
        %v4983 = vadd.f32 %v4662, %v4982
        %v4984 = vpop.f32.mrb[0].mxu0
        %4985 = vmatprep.mubr.bf16.mxu0 %v4080
        %4986 = vmatmul.mubr.bf16.gmra.mrb[0].mxu0 %v4079
        %v4987 = vpop.f32.mrb[0].mxu0
        %v4988 = vadd.f32 %v4667, %v4987
        %v4989 = vpop.f32.mrb[0].mxu0
        %v4990 = vpop.f32.mrb[0].mxu0
        %v4991 = vadd.f32 %v4670, %v4990
        %v4992 = vpop.f32.mrb[0].mxu0
        %4993 = vmatprep.mubr.bf16.mxu0 %v4083
        %4994 = vmatmul.mubr.bf16.gmra.mrb[0].mxu0 %v4082
        %v4995 = vpop.f32.mrb[0].mxu0
        %v4996 = vadd.f32 %v4675, %v4995
        %v4997 = vpop.f32.mrb[0].mxu0
        %v4998 = vpop.f32.mrb[0].mxu0
        %v4999 = vadd.f32 %v4678, %v4998
        %v5000 = vpop.f32.mrb[0].mxu0
        %5001 = vmatprep.mubr.bf16.mxu0 %v4086
        %5002 = vmatmul.mubr.bf16.gmra.mrb[0].mxu0 %v4085
        %v5003 = vpop.f32.mrb[0].mxu0
        %v5004 = vadd.f32 %v4683, %v5003
        %v5005 = vpop.f32.mrb[0].mxu0
        %v5006 = vpop.f32.mrb[0].mxu0
        %v5007 = vadd.f32 %v4686, %v5006
        %v5008 = vpop.f32.mrb[0].mxu0
        %5009 = vdwg.mxu0
        %5010 = vmatprep.subr.bf16.mxu0 0
        %5011 = vmatpush1.bf16.msra.mxu0 %v4801
        %5012 = vmatprep.subr.bf16.mxu0 0
        %5013 = vmatpush1.bf16.msra.mxu0 %v4802
        %5014 = vmatprep.subr.bf16.mxu0 0
        %5015 = vmatpush1.bf16.msra.mxu0 %v4803
        %5016 = vmatprep.subr.bf16.mxu0 0
        %5017 = vmatpush1.bf16.msra.mxu0 %v4804
        %5018 = vmatprep.subr.bf16.mxu0 0
        %5019 = vmatpush1.bf16.msra.mxu0 %v4805
        %5020 = vmatprep.subr.bf16.mxu0 0
        %5021 = vmatpush1.bf16.msra.mxu0 %v4806
        %5022 = vmatprep.subr.bf16.mxu0 0
        %5023 = vmatpush1.bf16.msra.mxu0 %v4807
        %5024 = vmatprep.subr.bf16.mxu0 0
        %5025 = vmatpush1.bf16.msra.mxu0 %v4808
        %5026 = vmatprep.subr.bf16.mxu0 0
        %5027 = vmatpush1.bf16.msra.mxu0 0
        %5028 = vmatprep.subr.bf16.mxu0 0
        %5029 = vmatpush1.bf16.msra.mxu0 0
        %5030 = vmatprep.subr.bf16.mxu0 0
        %5031 = vmatpush1.bf16.msra.mxu0 0
        %5032 = vmatprep.subr.bf16.mxu0 0
        %5033 = vmatpush1.bf16.msra.mxu0 0
        %5034 = vmatprep.subr.bf16.mxu0 0
        %5035 = vmatpush1.bf16.msra.mxu0 0
        %5036 = vmatprep.subr.bf16.mxu0 0
        %5037 = vmatpush1.bf16.msra.mxu0 0
        %5038 = vmatprep.subr.bf16.mxu0 0
        %5039 = vmatpush1.bf16.msra.mxu0 0
        %5040 = vmatprep.subr.bf16.mxu0 0
        %5041 = vmatpush1.bf16.msra.mxu0 0
        %5042 = vmatprep.mubr.bf16.mxu0 0
        %5043 = vmatmul.mubr.bf16.gmra.mrb[0].mxu0 %v4036
        %v5044 = vpop.f32.mrb[0].mxu0
        %v5045 = vadd.f32 %v4868, %v5044
        %v5046 = vpop.f32.mrb[0].mxu0
        %v5047 = vpop.f32.mrb[0].mxu0
        %v5048 = vadd.f32 %v4871, %v5047
        %v5049 = vpop.f32.mrb[0].mxu0
        %5050 = vmatprep.mubr.bf16.mxu0 0
        %5051 = vmatmul.mubr.bf16.gmra.mrb[0].mxu0 %v4039
        %v5052 = vpop.f32.mrb[0].mxu0
        %v5053 = vadd.f32 %v4876, %v5052
        %v5054 = vpop.f32.mrb[0].mxu0
        %v5055 = vpop.f32.mrb[0].mxu0
        %v5056 = vadd.f32 %v4879, %v5055
        %v5057 = vpop.f32.mrb[0].mxu0
        %5058 = vmatprep.mubr.bf16.mxu0 0
        %5059 = vmatmul.mubr.bf16.gmra.mrb[0].mxu0 %v4042
        %v5060 = vpop.f32.mrb[0].mxu0
        %v5061 = vadd.f32 %v4884, %v5060
        %v5062 = vpop.f32.mrb[0].mxu0
        %v5063 = vpop.f32.mrb[0].mxu0
        %v5064 = vadd.f32 %v4887, %v5063
        %v5065 = vpop.f32.mrb[0].mxu0
        %5066 = vmatprep.mubr.bf16.mxu0 0
        %5067 = vmatmul.mubr.bf16.gmra.mrb[0].mxu0 %v4045
        %v5068 = vpop.f32.mrb[0].mxu0
        %v5069 = vadd.f32 %v4892, %v5068
        %v5070 = vpop.f32.mrb[0].mxu0
        %v5071 = vpop.f32.mrb[0].mxu0
        %v5072 = vadd.f32 %v4895, %v5071
        %v5073 = vpop.f32.mrb[0].mxu0
        %5074 = vmatprep.mubr.bf16.mxu0 0
        %5075 = vmatmul.mubr.bf16.gmra.mrb[0].mxu0 %v4048
        %v5076 = vpop.f32.mrb[0].mxu0
        %v5077 = vadd.f32 %v4900, %v5076
        %v5078 = vpop.f32.mrb[0].mxu0
        %v5079 = vpop.f32.mrb[0].mxu0
        %v5080 = vadd.f32 %v4903, %v5079
        %v5081 = vpop.f32.mrb[0].mxu0
        %5082 = vmatprep.mubr.bf16.mxu0 0
        %5083 = vmatmul.mubr.bf16.gmra.mrb[0].mxu0 %v4051
        %v5084 = vpop.f32.mrb[0].mxu0
        %v5085 = vadd.f32 %v4908, %v5084
        %v5086 = vpop.f32.mrb[0].mxu0
        %v5087 = vpop.f32.mrb[0].mxu0
        %v5088 = vadd.f32 %v4911, %v5087
        %v5089 = vpop.f32.mrb[0].mxu0
        %5090 = vmatprep.mubr.bf16.mxu0 0
        %5091 = vmatmul.mubr.bf16.gmra.mrb[0].mxu0 %v4054
        %v5092 = vpop.f32.mrb[0].mxu0
        %v5093 = vadd.f32 %v4916, %v5092
        %v5094 = vpop.f32.mrb[0].mxu0
        %v5095 = vpop.f32.mrb[0].mxu0
        %v5096 = vadd.f32 %v4919, %v5095
        %v5097 = vpop.f32.mrb[0].mxu0
        %5098 = vmatprep.mubr.bf16.mxu0 0
        %5099 = vmatmul.mubr.bf16.gmra.mrb[0].mxu0 %v4057
        %v5100 = vpop.f32.mrb[0].mxu0
        %v5101 = vadd.f32 %v4924, %v5100
        %v5102 = vpop.f32.mrb[0].mxu0
        %v5103 = vpop.f32.mrb[0].mxu0
        %v5104 = vadd.f32 %v4927, %v5103
        %v5105 = vpop.f32.mrb[0].mxu0
        %5106 = vmatprep.mubr.bf16.mxu0 0
        %5107 = vmatmul.mubr.bf16.gmra.mrb[0].mxu0 %v4060
        %v5108 = vpop.f32.mrb[0].mxu0
        %v5109 = vadd.f32 %v4932, %v5108
        %v5110 = vpop.f32.mrb[0].mxu0
        %v5111 = vpop.f32.mrb[0].mxu0
        %v5112 = vadd.f32 %v4935, %v5111
        %v5113 = vpop.f32.mrb[0].mxu0
        %5114 = vmatprep.mubr.bf16.mxu0 0
        %5115 = vmatmul.mubr.bf16.gmra.mrb[0].mxu0 %v4063
        %v5116 = vpop.f32.mrb[0].mxu0
        %v5117 = vadd.f32 %v4940, %v5116
        %v5118 = vpop.f32.mrb[0].mxu0
        %v5119 = vpop.f32.mrb[0].mxu0
        %v5120 = vadd.f32 %v4943, %v5119
        %v5121 = vpop.f32.mrb[0].mxu0
        %5122 = vmatprep.mubr.bf16.mxu0 0
        %5123 = vmatmul.mubr.bf16.gmra.mrb[0].mxu0 %v4066
        %v5124 = vpop.f32.mrb[0].mxu0
        %v5125 = vadd.f32 %v4948, %v5124
        %v5126 = vpop.f32.mrb[0].mxu0
        %v5127 = vpop.f32.mrb[0].mxu0
        %v5128 = vadd.f32 %v4951, %v5127
        %v5129 = vpop.f32.mrb[0].mxu0
        %5130 = vmatprep.mubr.bf16.mxu0 0
        %5131 = vmatmul.mubr.bf16.gmra.mrb[0].mxu0 %v4069
        %v5132 = vpop.f32.mrb[0].mxu0
        %v5133 = vadd.f32 %v4956, %v5132
        %v5134 = vpop.f32.mrb[0].mxu0
        %v5135 = vpop.f32.mrb[0].mxu0
        %v5136 = vadd.f32 %v4959, %v5135
        %v5137 = vpop.f32.mrb[0].mxu0
        %5138 = vmatprep.mubr.bf16.mxu0 0
        %5139 = vmatmul.mubr.bf16.gmra.mrb[0].mxu0 %v4072
        %v5140 = vpop.f32.mrb[0].mxu0
        %v5141 = vadd.f32 %v4964, %v5140
        %v5142 = vpop.f32.mrb[0].mxu0
        %v5143 = vpop.f32.mrb[0].mxu0
        %v5144 = vadd.f32 %v4967, %v5143
        %v5145 = vpop.f32.mrb[0].mxu0
        %5146 = vmatprep.mubr.bf16.mxu0 0
        %5147 = vmatmul.mubr.bf16.gmra.mrb[0].mxu0 %v4075
        %v5148 = vpop.f32.mrb[0].mxu0
        %v5149 = vadd.f32 %v4972, %v5148
        %v5150 = vpop.f32.mrb[0].mxu0
        %v5151 = vpop.f32.mrb[0].mxu0
        %v5152 = vadd.f32 %v4975, %v5151
        %v5153 = vpop.f32.mrb[0].mxu0
        %5154 = vmatprep.mubr.bf16.mxu0 0
        %5155 = vmatmul.mubr.bf16.gmra.mrb[0].mxu0 %v4078
        %v5156 = vpop.f32.mrb[0].mxu0
        %v5157 = vadd.f32 %v4980, %v5156
        %v5158 = vpop.f32.mrb[0].mxu0
        %v5159 = vpop.f32.mrb[0].mxu0
        %v5160 = vadd.f32 %v4983, %v5159
        %v5161 = vpop.f32.mrb[0].mxu0
        %5162 = vmatprep.mubr.bf16.mxu0 0
        %5163 = vmatmul.mubr.bf16.gmra.mrb[0].mxu0 %v4081
        %v5164 = vpop.f32.mrb[0].mxu0
        %v5165 = vadd.f32 %v4988, %v5164
        %v5166 = vpop.f32.mrb[0].mxu0
        %v5167 = vpop.f32.mrb[0].mxu0
        %v5168 = vadd.f32 %v4991, %v5167
        %v5169 = vpop.f32.mrb[0].mxu0
        %5170 = vmatprep.mubr.bf16.mxu0 0
        %5171 = vmatmul.mubr.bf16.gmra.mrb[0].mxu0 %v4084
        %v5172 = vpop.f32.mrb[0].mxu0
        %v5173 = vadd.f32 %v4996, %v5172
        %v5174 = vpop.f32.mrb[0].mxu0
        %v5175 = vpop.f32.mrb[0].mxu0
        %v5176 = vadd.f32 %v4999, %v5175
        %v5177 = vpop.f32.mrb[0].mxu0
        %5178 = vmatprep.mubr.bf16.mxu0 0
        %5179 = vmatmul.mubr.bf16.gmra.mrb[0].mxu0 %v4087
        %v5180 = vpop.f32.mrb[0].mxu0
        %v5181 = vadd.f32 %v5004, %v5180
        %v5182 = vpop.f32.mrb[0].mxu0
        %v5183 = vpop.f32.mrb[0].mxu0
        %v5184 = vadd.f32 %v5007, %v5183
        %v5185 = vpop.f32.mrb[0].mxu0
        %5186 = vdwg.mxu0
        %v5187 = vld [vmem:[%s4094 + $0x8] sm:$0xf]
        %v5188 = vld [vmem:[%s4094 + $0x14] sm:$0xf]
        %v5189 = vld [vmem:[%s4094 + $0x20] sm:$0xf]
        %v5190 = vld [vmem:[%s4094 + $0x2c] sm:$0xf]
        %v5191 = vld [vmem:[%s4094 + $0x38] sm:$0xf]
        %v5192 = vld [vmem:[%s4094 + $0x44] sm:$0xf]
        %v5193 = vld [vmem:[%s4094 + $0x50] sm:$0xf]
        %v5194 = vld [vmem:[%s4094 + $0x5c] sm:$0xf]
        %v5195 = vld [vmem:[%s4094 + $0x68] sm:$0xf]
        %v5196 = vld [vmem:[%s4094 + $0x74] sm:$0xf]
        %v5197 = vld [vmem:[%s4094 + $0x80] sm:$0xf]
        %v5198 = vld [vmem:[%s4094 + $0x8c] sm:$0xf]
        %v5199 = vld [vmem:[%s4094 + $0x98] sm:$0xf]
        %v5200 = vld [vmem:[%s4094 + $0xa4] sm:$0xf]
        %v5201 = vld [vmem:[%s4094 + $0xb0] sm:$0xf]
        %v5202 = vld [vmem:[%s4094 + $0xbc] sm:$0xf]
        %v5203 = vld [vmem:[%s4094 + $0xc8] sm:$0xf]
        %v5204 = vld [vmem:[%s4094 + $0xd4] sm:$0xf]
        %v5205 = vld [vmem:[%s4094 + $0xe0] sm:$0xf]
        %v5206 = vld [vmem:[%s4094 + $0xec] sm:$0xf]
        %v5207 = vld [vmem:[%s4094 + $0xf8] sm:$0xf]
        %v5208 = vld [vmem:[%s4094 + $0x104] sm:$0xf]
        %v5209 = vld [vmem:[%s4094 + $0x110] sm:$0xf]
        %v5210 = vld [vmem:[%s4094 + $0x11c] sm:$0xf]
        %v5211 = vld [vmem:[%s4094 + $0x128] sm:$0xf]
        %v5212 = vld [vmem:[%s4094 + $0x134] sm:$0xf]
        %v5213 = vld [vmem:[%s4094 + $0x140] sm:$0xf]
        %v5214 = vld [vmem:[%s4094 + $0x14c] sm:$0xf]
        %v5215 = vld [vmem:[%s4094 + $0x158] sm:$0xf]
        %v5216 = vld [vmem:[%s4094 + $0x164] sm:$0xf]
        %v5217 = vld [vmem:[%s4094 + $0x170] sm:$0xf]
        %v5218 = vld [vmem:[%s4094 + $0x17c] sm:$0xf]
        %v5219 = vld [vmem:[%s4094 + $0x188] sm:$0xf]
        %v5220 = vld [vmem:[%s4094 + $0x194] sm:$0xf]
        %v5221 = vld [vmem:[%s4094 + $0x1a0] sm:$0xf]
        %v5222 = vld [vmem:[%s4094 + $0x1ac] sm:$0xf]
        %v5223 = vld [vmem:[%s4094 + $0x1b8] sm:$0xf]
        %v5224 = vld [vmem:[%s4094 + $0x1c4] sm:$0xf]
        %v5225 = vld [vmem:[%s4094 + $0x1d0] sm:$0xf]
        %v5226 = vld [vmem:[%s4094 + $0x1dc] sm:$0xf]
        %v5227 = vld [vmem:[%s4094 + $0x1e8] sm:$0xf]
        %v5228 = vld [vmem:[%s4094 + $0x1f4] sm:$0xf]
        %v5229 = vld [vmem:[%s4094 + $0x200] sm:$0xf]
        %v5230 = vld [vmem:[%s4094 + $0x20c] sm:$0xf]
        %v5231 = vld [vmem:[%s4094 + $0x218] sm:$0xf]
        %v5232 = vld [vmem:[%s4094 + $0x224] sm:$0xf]
        %v5233 = vld [vmem:[%s4094 + $0x230] sm:$0xf]
        %v5234 = vld [vmem:[%s4094 + $0x23c] sm:$0xf]
        %v5283 = vunpack.c.l.b16 %v5187
        %v5284 = vunpack.c.l.b16 %v5188
        %v5285 = vunpack.c.l.b16 %v5189
        %v5286 = vunpack.c.l.b16 %v5190
        %v5287 = vunpack.c.l.b16 %v5191
        %v5288 = vunpack.c.l.b16 %v5192
        %v5289 = vunpack.c.l.b16 %v5193
        %v5290 = vunpack.c.l.b16 %v5194
        %v5291 = vunpack.c.l.b16 %v5195
        %v5292 = vunpack.c.l.b16 %v5196
        %v5293 = vunpack.c.l.b16 %v5197
        %v5294 = vunpack.c.l.b16 %v5198
        %v5295 = vunpack.c.l.b16 %v5199
        %v5296 = vunpack.c.l.b16 %v5200
        %v5297 = vunpack.c.l.b16 %v5201
        %v5298 = vunpack.c.l.b16 %v5202
        %v5299 = vunpack.c.l.b16 %v5203
        %v5300 = vunpack.c.l.b16 %v5204
        %v5301 = vunpack.c.l.b16 %v5205
        %v5302 = vunpack.c.l.b16 %v5206
        %v5303 = vunpack.c.l.b16 %v5207
        %v5304 = vunpack.c.l.b16 %v5208
        %v5305 = vunpack.c.l.b16 %v5209
        %v5306 = vunpack.c.l.b16 %v5210
        %v5307 = vunpack.c.l.b16 %v5211
        %v5308 = vunpack.c.l.b16 %v5212
        %v5309 = vunpack.c.l.b16 %v5213
        %v5310 = vunpack.c.l.b16 %v5214
        %v5311 = vunpack.c.l.b16 %v5215
        %v5312 = vunpack.c.l.b16 %v5216
        %v5313 = vunpack.c.l.b16 %v5217
        %v5314 = vunpack.c.l.b16 %v5218
        %v5315 = vunpack.c.l.b16 %v5219
        %v5316 = vunpack.c.l.b16 %v5220
        %v5317 = vunpack.c.l.b16 %v5221
        %v5318 = vunpack.c.l.b16 %v5222
        %v5319 = vunpack.c.l.b16 %v5223
        %v5320 = vunpack.c.l.b16 %v5224
        %v5321 = vunpack.c.l.b16 %v5225
        %v5322 = vunpack.c.l.b16 %v5226
        %v5323 = vunpack.c.l.b16 %v5227
        %v5324 = vunpack.c.l.b16 %v5228
        %v5325 = vunpack.c.l.b16 %v5229
        %v5326 = vunpack.c.l.b16 %v5230
        %v5327 = vunpack.c.l.b16 %v5231
        %v5328 = vunpack.c.l.b16 %v5232
        %v5329 = vunpack.c.l.b16 %v5233
        %v5330 = vunpack.c.l.b16 %v5234
        %v5331 = vpack.c.b16 %v5284, %v5283
        %v5332 = vpack.c.b16 %v5286, %v5285
        %v5333 = vpack.c.b16 %v5288, %v5287
        %v5334 = vpack.c.b16 %v5290, %v5289
        %v5335 = vpack.c.b16 %v5292, %v5291
        %v5336 = vpack.c.b16 %v5294, %v5293
        %v5337 = vpack.c.b16 %v5296, %v5295
        %v5338 = vpack.c.b16 %v5298, %v5297
        %v5339 = vpack.c.b16 %v5300, %v5299
        %v5340 = vpack.c.b16 %v5302, %v5301
        %v5341 = vpack.c.b16 %v5304, %v5303
        %v5342 = vpack.c.b16 %v5306, %v5305
        %v5343 = vpack.c.b16 %v5308, %v5307
        %v5344 = vpack.c.b16 %v5310, %v5309
        %v5345 = vpack.c.b16 %v5312, %v5311
        %v5346 = vpack.c.b16 %v5314, %v5313
        %v5347 = vpack.c.b16 %v5316, %v5315
        %v5348 = vpack.c.b16 %v5318, %v5317
        %v5349 = vpack.c.b16 %v5320, %v5319
        %v5350 = vpack.c.b16 %v5322, %v5321
        %v5351 = vpack.c.b16 %v5324, %v5323
        %v5352 = vpack.c.b16 %v5326, %v5325
        %v5353 = vpack.c.b16 %v5328, %v5327
        %v5354 = vpack.c.b16 %v5330, %v5329
        %5379 = vmatprep.subr.bf16.mxu0 0
        %5380 = vmatpush1.bf16.msra.mxu0 %v5331
        %5381 = vmatprep.subr.bf16.mxu0 0
        %5382 = vmatpush1.bf16.msra.mxu0 %v5332
        %5383 = vmatprep.subr.bf16.mxu0 0
        %5384 = vmatpush1.bf16.msra.mxu0 %v5333
        %5385 = vmatprep.subr.bf16.mxu0 0
        %5386 = vmatpush1.bf16.msra.mxu0 %v5334
        %5387 = vmatprep.subr.bf16.mxu0 0
        %5388 = vmatpush1.bf16.msra.mxu0 %v5335
        %5389 = vmatprep.subr.bf16.mxu0 0
        %5390 = vmatpush1.bf16.msra.mxu0 %v5336
        %5391 = vmatprep.subr.bf16.mxu0 0
        %5392 = vmatpush1.bf16.msra.mxu0 %v5337
        %5393 = vmatprep.subr.bf16.mxu0 0
        %5394 = vmatpush1.bf16.msra.mxu0 %v5338
        %5395 = vmatprep.subr.bf16.mxu0 0
        %5396 = vmatpush1.bf16.msra.mxu0 %v5339
        %5397 = vmatprep.subr.bf16.mxu0 0
        %5398 = vmatpush1.bf16.msra.mxu0 %v5340
        %5399 = vmatprep.subr.bf16.mxu0 0
        %5400 = vmatpush1.bf16.msra.mxu0 %v5341
        %5401 = vmatprep.subr.bf16.mxu0 0
        %5402 = vmatpush1.bf16.msra.mxu0 %v5342
        %5403 = vmatprep.subr.bf16.mxu0 0
        %5404 = vmatpush1.bf16.msra.mxu0 %v5343
        %5405 = vmatprep.subr.bf16.mxu0 0
        %5406 = vmatpush1.bf16.msra.mxu0 %v5344
        %5407 = vmatprep.subr.bf16.mxu0 0
        %5408 = vmatpush1.bf16.msra.mxu0 %v5345
        %5409 = vmatprep.subr.bf16.mxu0 0
        %5410 = vmatpush1.bf16.msra.mxu0 %v5346
        %5411 = vmatprep.mubr.bf16.mxu0 %v4041
        %5412 = vmatmul.mubr.bf16.gmra.mrb[0].mxu0 %v4040
        %v5413 = vpop.f32.mrb[0].mxu0
        %v5414 = vadd.f32 0.0, %v5413
        %v5415 = vpop.f32.mrb[0].mxu0
        %v5416 = vpop.f32.mrb[0].mxu0
        %v5417 = vadd.f32 0.0, %v5416
        %v5418 = vpop.f32.mrb[0].mxu0
        %5419 = vmatprep.mubr.bf16.mxu0 %v4044
        %5420 = vmatmul.mubr.bf16.gmra.mrb[0].mxu0 %v4043
        %v5421 = vpop.f32.mrb[0].mxu0
        %v5422 = vadd.f32 0.0, %v5421
        %v5423 = vpop.f32.mrb[0].mxu0
        %v5424 = vpop.f32.mrb[0].mxu0
        %v5425 = vadd.f32 0.0, %v5424
        %v5426 = vpop.f32.mrb[0].mxu0
        %5427 = vmatprep.mubr.bf16.mxu0 %v4047
        %5428 = vmatmul.mubr.bf16.gmra.mrb[0].mxu0 %v4046
        %v5429 = vpop.f32.mrb[0].mxu0
        %v5430 = vadd.f32 0.0, %v5429
        %v5431 = vpop.f32.mrb[0].mxu0
        %v5432 = vpop.f32.mrb[0].mxu0
        %v5433 = vadd.f32 0.0, %v5432
        %v5434 = vpop.f32.mrb[0].mxu0
        %5435 = vmatprep.mubr.bf16.mxu0 %v4050
        %5436 = vmatmul.mubr.bf16.gmra.mrb[0].mxu0 %v4049
        %v5437 = vpop.f32.mrb[0].mxu0
        %v5438 = vadd.f32 0.0, %v5437
        %v5439 = vpop.f32.mrb[0].mxu0
        %v5440 = vpop.f32.mrb[0].mxu0
        %v5441 = vadd.f32 0.0, %v5440
        %v5442 = vpop.f32.mrb[0].mxu0
        %5443 = vmatprep.mubr.bf16.mxu0 %v4053
        %5444 = vmatmul.mubr.bf16.gmra.mrb[0].mxu0 %v4052
        %v5445 = vpop.f32.mrb[0].mxu0
        %v5446 = vadd.f32 0.0, %v5445
        %v5447 = vpop.f32.mrb[0].mxu0
        %v5448 = vpop.f32.mrb[0].mxu0
        %v5449 = vadd.f32 0.0, %v5448
        %v5450 = vpop.f32.mrb[0].mxu0
        %5451 = vmatprep.mubr.bf16.mxu0 %v4056
        %5452 = vmatmul.mubr.bf16.gmra.mrb[0].mxu0 %v4055
        %v5453 = vpop.f32.mrb[0].mxu0
        %v5454 = vadd.f32 0.0, %v5453
        %v5455 = vpop.f32.mrb[0].mxu0
        %v5456 = vpop.f32.mrb[0].mxu0
        %v5457 = vadd.f32 0.0, %v5456
        %v5458 = vpop.f32.mrb[0].mxu0
        %5459 = vmatprep.mubr.bf16.mxu0 %v4059
        %5460 = vmatmul.mubr.bf16.gmra.mrb[0].mxu0 %v4058
        %v5461 = vpop.f32.mrb[0].mxu0
        %v5462 = vadd.f32 0.0, %v5461
        %v5463 = vpop.f32.mrb[0].mxu0
        %v5464 = vpop.f32.mrb[0].mxu0
        %v5465 = vadd.f32 0.0, %v5464
        %v5466 = vpop.f32.mrb[0].mxu0
        %5467 = vmatprep.mubr.bf16.mxu0 %v4062
        %5468 = vmatmul.mubr.bf16.gmra.mrb[0].mxu0 %v4061
        %v5469 = vpop.f32.mrb[0].mxu0
        %v5470 = vadd.f32 0.0, %v5469
        %v5471 = vpop.f32.mrb[0].mxu0
        %v5472 = vpop.f32.mrb[0].mxu0
        %v5473 = vadd.f32 0.0, %v5472
        %v5474 = vpop.f32.mrb[0].mxu0
        %5475 = vmatprep.mubr.bf16.mxu0 %v4065
        %5476 = vmatmul.mubr.bf16.gmra.mrb[0].mxu0 %v4064
        %v5477 = vpop.f32.mrb[0].mxu0
        %v5478 = vadd.f32 0.0, %v5477
        %v5479 = vpop.f32.mrb[0].mxu0
        %v5480 = vpop.f32.mrb[0].mxu0
        %v5481 = vadd.f32 0.0, %v5480
        %v5482 = vpop.f32.mrb[0].mxu0
        %5483 = vmatprep.mubr.bf16.mxu0 %v4068
        %5484 = vmatmul.mubr.bf16.gmra.mrb[0].mxu0 %v4067
        %v5485 = vpop.f32.mrb[0].mxu0
        %v5486 = vadd.f32 0.0, %v5485
        %v5487 = vpop.f32.mrb[0].mxu0
        %v5488 = vpop.f32.mrb[0].mxu0
        %v5489 = vadd.f32 0.0, %v5488
        %v5490 = vpop.f32.mrb[0].mxu0
        %5491 = vmatprep.mubr.bf16.mxu0 %v4071
        %5492 = vmatmul.mubr.bf16.gmra.mrb[0].mxu0 %v4070
        %v5493 = vpop.f32.mrb[0].mxu0
        %v5494 = vadd.f32 0.0, %v5493
        %v5495 = vpop.f32.mrb[0].mxu0
        %v5496 = vpop.f32.mrb[0].mxu0
        %v5497 = vadd.f32 0.0, %v5496
        %v5498 = vpop.f32.mrb[0].mxu0
        %5499 = vmatprep.mubr.bf16.mxu0 %v4074
        %5500 = vmatmul.mubr.bf16.gmra.mrb[0].mxu0 %v4073
        %v5501 = vpop.f32.mrb[0].mxu0
        %v5502 = vadd.f32 0.0, %v5501
        %v5503 = vpop.f32.mrb[0].mxu0
        %v5504 = vpop.f32.mrb[0].mxu0
        %v5505 = vadd.f32 0.0, %v5504
        %v5506 = vpop.f32.mrb[0].mxu0
        %5507 = vmatprep.mubr.bf16.mxu0 %v4077
        %5508 = vmatmul.mubr.bf16.gmra.mrb[0].mxu0 %v4076
        %v5509 = vpop.f32.mrb[0].mxu0
        %v5510 = vadd.f32 0.0, %v5509
        %v5511 = vpop.f32.mrb[0].mxu0
        %v5512 = vpop.f32.mrb[0].mxu0
        %v5513 = vadd.f32 0.0, %v5512
        %v5514 = vpop.f32.mrb[0].mxu0
        %5515 = vmatprep.mubr.bf16.mxu0 %v4080
        %5516 = vmatmul.mubr.bf16.gmra.mrb[0].mxu0 %v4079
        %v5517 = vpop.f32.mrb[0].mxu0
        %v5518 = vadd.f32 0.0, %v5517
        %v5519 = vpop.f32.mrb[0].mxu0
        %v5520 = vpop.f32.mrb[0].mxu0
        %v5521 = vadd.f32 0.0, %v5520
        %v5522 = vpop.f32.mrb[0].mxu0
        %5523 = vmatprep.mubr.bf16.mxu0 %v4083
        %5524 = vmatmul.mubr.bf16.gmra.mrb[0].mxu0 %v4082
        %v5525 = vpop.f32.mrb[0].mxu0
        %v5526 = vadd.f32 0.0, %v5525
        %v5527 = vpop.f32.mrb[0].mxu0
        %v5528 = vpop.f32.mrb[0].mxu0
        %v5529 = vadd.f32 0.0, %v5528
        %v5530 = vpop.f32.mrb[0].mxu0
        %5531 = vmatprep.mubr.bf16.mxu0 %v4086
        %5532 = vmatmul.mubr.bf16.gmra.mrb[0].mxu0 %v4085
        %v5533 = vpop.f32.mrb[0].mxu0
        %v5534 = vadd.f32 0.0, %v5533
        %v5535 = vpop.f32.mrb[0].mxu0
        %v5536 = vpop.f32.mrb[0].mxu0
        %v5537 = vadd.f32 0.0, %v5536
        %v5538 = vpop.f32.mrb[0].mxu0
        %5539 = vmatprep.mubr.bf16.mxu0 %v4089
        %5540 = vmatmul.mubr.bf16.gmra.mrb[0].mxu0 %v4088
        %v5541 = vpop.f32.mrb[0].mxu0
        %v5542 = vadd.f32 0.0, %v5541
        %v5543 = vpop.f32.mrb[0].mxu0
        %v5544 = vpop.f32.mrb[0].mxu0
        %v5545 = vadd.f32 0.0, %v5544
        %v5546 = vpop.f32.mrb[0].mxu0
        %5547 = vmatprep.mubr.bf16.mxu0 %v4092
        %5548 = vmatmul.mubr.bf16.gmra.mrb[0].mxu0 %v4091
        %v5549 = vpop.f32.mrb[0].mxu0
        %v5550 = vadd.f32 0.0, %v5549
        %v5551 = vpop.f32.mrb[0].mxu0
        %v5552 = vpop.f32.mrb[0].mxu0
        %v5553 = vadd.f32 0.0, %v5552
        %v5554 = vpop.f32.mrb[0].mxu0
        %5555 = vdwg.mxu0
        %5556 = vmatprep.subr.bf16.mxu0 0
        %5557 = vmatpush1.bf16.msra.mxu0 %v5347
        %5558 = vmatprep.subr.bf16.mxu0 0
        %5559 = vmatpush1.bf16.msra.mxu0 %v5348
        %5560 = vmatprep.subr.bf16.mxu0 0
        %5561 = vmatpush1.bf16.msra.mxu0 %v5349
        %5562 = vmatprep.subr.bf16.mxu0 0
        %5563 = vmatpush1.bf16.msra.mxu0 %v5350
        %5564 = vmatprep.subr.bf16.mxu0 0
        %5565 = vmatpush1.bf16.msra.mxu0 %v5351
        %5566 = vmatprep.subr.bf16.mxu0 0
        %5567 = vmatpush1.bf16.msra.mxu0 %v5352
        %5568 = vmatprep.subr.bf16.mxu0 0
        %5569 = vmatpush1.bf16.msra.mxu0 %v5353
        %5570 = vmatprep.subr.bf16.mxu0 0
        %5571 = vmatpush1.bf16.msra.mxu0 %v5354
        %5572 = vmatprep.subr.bf16.mxu0 0
        %5573 = vmatpush1.bf16.msra.mxu0 0
        %5574 = vmatprep.subr.bf16.mxu0 0
        %5575 = vmatpush1.bf16.msra.mxu0 0
        %5576 = vmatprep.subr.bf16.mxu0 0
        %5577 = vmatpush1.bf16.msra.mxu0 0
        %5578 = vmatprep.subr.bf16.mxu0 0
        %5579 = vmatpush1.bf16.msra.mxu0 0
        %5580 = vmatprep.subr.bf16.mxu0 0
        %5581 = vmatpush1.bf16.msra.mxu0 0
        %5582 = vmatprep.subr.bf16.mxu0 0
        %5583 = vmatpush1.bf16.msra.mxu0 0
        %5584 = vmatprep.subr.bf16.mxu0 0
        %5585 = vmatpush1.bf16.msra.mxu0 0
        %5586 = vmatprep.subr.bf16.mxu0 0
        %5587 = vmatpush1.bf16.msra.mxu0 0
        %5588 = vmatprep.mubr.bf16.mxu0 0
        %5589 = vmatmul.mubr.bf16.gmra.mrb[0].mxu0 %v4042
        %v5590 = vpop.f32.mrb[0].mxu0
        %v5591 = vadd.f32 %v5414, %v5590
        %v5592 = vpop.f32.mrb[0].mxu0
        %v5593 = vpop.f32.mrb[0].mxu0
        %v5594 = vadd.f32 %v5417, %v5593
        %v5595 = vpop.f32.mrb[0].mxu0
        %5596 = vmatprep.mubr.bf16.mxu0 0
        %5597 = vmatmul.mubr.bf16.gmra.mrb[0].mxu0 %v4045
        %v5598 = vpop.f32.mrb[0].mxu0
        %v5599 = vadd.f32 %v5422, %v5598
        %v5600 = vpop.f32.mrb[0].mxu0
        %v5601 = vpop.f32.mrb[0].mxu0
        %v5602 = vadd.f32 %v5425, %v5601
        %v5603 = vpop.f32.mrb[0].mxu0
        %5604 = vmatprep.mubr.bf16.mxu0 0
        %5605 = vmatmul.mubr.bf16.gmra.mrb[0].mxu0 %v4048
        %v5606 = vpop.f32.mrb[0].mxu0
        %v5607 = vadd.f32 %v5430, %v5606
        %v5608 = vpop.f32.mrb[0].mxu0
        %v5609 = vpop.f32.mrb[0].mxu0
        %v5610 = vadd.f32 %v5433, %v5609
        %v5611 = vpop.f32.mrb[0].mxu0
        %5612 = vmatprep.mubr.bf16.mxu0 0
        %5613 = vmatmul.mubr.bf16.gmra.mrb[0].mxu0 %v4051
        %v5614 = vpop.f32.mrb[0].mxu0
        %v5615 = vadd.f32 %v5438, %v5614
        %v5616 = vpop.f32.mrb[0].mxu0
        %v5617 = vpop.f32.mrb[0].mxu0
        %v5618 = vadd.f32 %v5441, %v5617
        %v5619 = vpop.f32.mrb[0].mxu0
        %5620 = vmatprep.mubr.bf16.mxu0 0
        %5621 = vmatmul.mubr.bf16.gmra.mrb[0].mxu0 %v4054
        %v5622 = vpop.f32.mrb[0].mxu0
        %v5623 = vadd.f32 %v5446, %v5622
        %v5624 = vpop.f32.mrb[0].mxu0
        %v5625 = vpop.f32.mrb[0].mxu0
        %v5626 = vadd.f32 %v5449, %v5625
        %v5627 = vpop.f32.mrb[0].mxu0
        %5628 = vmatprep.mubr.bf16.mxu0 0
        %5629 = vmatmul.mubr.bf16.gmra.mrb[0].mxu0 %v4057
        %v5630 = vpop.f32.mrb[0].mxu0
        %v5631 = vadd.f32 %v5454, %v5630
        %v5632 = vpop.f32.mrb[0].mxu0
        %v5633 = vpop.f32.mrb[0].mxu0
        %v5634 = vadd.f32 %v5457, %v5633
        %v5635 = vpop.f32.mrb[0].mxu0
        %5636 = vmatprep.mubr.bf16.mxu0 0
        %5637 = vmatmul.mubr.bf16.gmra.mrb[0].mxu0 %v4060
        %v5638 = vpop.f32.mrb[0].mxu0
        %v5639 = vadd.f32 %v5462, %v5638
        %v5640 = vpop.f32.mrb[0].mxu0
        %v5641 = vpop.f32.mrb[0].mxu0
        %v5642 = vadd.f32 %v5465, %v5641
        %v5643 = vpop.f32.mrb[0].mxu0
        %5644 = vmatprep.mubr.bf16.mxu0 0
        %5645 = vmatmul.mubr.bf16.gmra.mrb[0].mxu0 %v4063
        %v5646 = vpop.f32.mrb[0].mxu0
        %v5647 = vadd.f32 %v5470, %v5646
        %v5648 = vpop.f32.mrb[0].mxu0
        %v5649 = vpop.f32.mrb[0].mxu0
        %v5650 = vadd.f32 %v5473, %v5649
        %v5651 = vpop.f32.mrb[0].mxu0
        %5652 = vmatprep.mubr.bf16.mxu0 0
        %5653 = vmatmul.mubr.bf16.gmra.mrb[0].mxu0 %v4066
        %v5654 = vpop.f32.mrb[0].mxu0
        %v5655 = vadd.f32 %v5478, %v5654
        %v5656 = vpop.f32.mrb[0].mxu0
        %v5657 = vpop.f32.mrb[0].mxu0
        %v5658 = vadd.f32 %v5481, %v5657
        %v5659 = vpop.f32.mrb[0].mxu0
        %5660 = vmatprep.mubr.bf16.mxu0 0
        %5661 = vmatmul.mubr.bf16.gmra.mrb[0].mxu0 %v4069
        %v5662 = vpop.f32.mrb[0].mxu0
        %v5663 = vadd.f32 %v5486, %v5662
        %v5664 = vpop.f32.mrb[0].mxu0
        %v5665 = vpop.f32.mrb[0].mxu0
        %v5666 = vadd.f32 %v5489, %v5665
        %v5667 = vpop.f32.mrb[0].mxu0
        %5668 = vmatprep.mubr.bf16.mxu0 0
        %5669 = vmatmul.mubr.bf16.gmra.mrb[0].mxu0 %v4072
        %v5670 = vpop.f32.mrb[0].mxu0
        %v5671 = vadd.f32 %v5494, %v5670
        %v5672 = vpop.f32.mrb[0].mxu0
        %v5673 = vpop.f32.mrb[0].mxu0
        %v5674 = vadd.f32 %v5497, %v5673
        %v5675 = vpop.f32.mrb[0].mxu0
        %5676 = vmatprep.mubr.bf16.mxu0 0
        %5677 = vmatmul.mubr.bf16.gmra.mrb[0].mxu0 %v4075
        %v5678 = vpop.f32.mrb[0].mxu0
        %v5679 = vadd.f32 %v5502, %v5678
        %v5680 = vpop.f32.mrb[0].mxu0
        %v5681 = vpop.f32.mrb[0].mxu0
        %v5682 = vadd.f32 %v5505, %v5681
        %v5683 = vpop.f32.mrb[0].mxu0
        %5684 = vmatprep.mubr.bf16.mxu0 0
        %5685 = vmatmul.mubr.bf16.gmra.mrb[0].mxu0 %v4078
        %v5686 = vpop.f32.mrb[0].mxu0
        %v5687 = vadd.f32 %v5510, %v5686
        %v5688 = vpop.f32.mrb[0].mxu0
        %v5689 = vpop.f32.mrb[0].mxu0
        %v5690 = vadd.f32 %v5513, %v5689
        %v5691 = vpop.f32.mrb[0].mxu0
        %5692 = vmatprep.mubr.bf16.mxu0 0
        %5693 = vmatmul.mubr.bf16.gmra.mrb[0].mxu0 %v4081
        %v5694 = vpop.f32.mrb[0].mxu0
        %v5695 = vadd.f32 %v5518, %v5694
        %v5696 = vpop.f32.mrb[0].mxu0
        %v5697 = vpop.f32.mrb[0].mxu0
        %v5698 = vadd.f32 %v5521, %v5697
        %v5699 = vpop.f32.mrb[0].mxu0
        %5700 = vmatprep.mubr.bf16.mxu0 0
        %5701 = vmatmul.mubr.bf16.gmra.mrb[0].mxu0 %v4084
        %v5702 = vpop.f32.mrb[0].mxu0
        %v5703 = vadd.f32 %v5526, %v5702
        %v5704 = vpop.f32.mrb[0].mxu0
        %v5705 = vpop.f32.mrb[0].mxu0
        %v5706 = vadd.f32 %v5529, %v5705
        %v5707 = vpop.f32.mrb[0].mxu0
        %5708 = vmatprep.mubr.bf16.mxu0 0
        %5709 = vmatmul.mubr.bf16.gmra.mrb[0].mxu0 %v4087
        %v5710 = vpop.f32.mrb[0].mxu0
        %v5711 = vadd.f32 %v5534, %v5710
        %v5712 = vpop.f32.mrb[0].mxu0
        %v5713 = vpop.f32.mrb[0].mxu0
        %v5714 = vadd.f32 %v5537, %v5713
        %v5715 = vpop.f32.mrb[0].mxu0
        %5716 = vmatprep.mubr.bf16.mxu0 0
        %5717 = vmatmul.mubr.bf16.gmra.mrb[0].mxu0 %v4090
        %v5718 = vpop.f32.mrb[0].mxu0
        %v5719 = vadd.f32 %v5542, %v5718
        %v5720 = vpop.f32.mrb[0].mxu0
        %v5721 = vpop.f32.mrb[0].mxu0
        %v5722 = vadd.f32 %v5545, %v5721
        %v5723 = vpop.f32.mrb[0].mxu0
        %5724 = vmatprep.mubr.bf16.mxu0 0
        %5725 = vmatmul.mubr.bf16.gmra.mrb[0].mxu0 %v4093
        %v5726 = vpop.f32.mrb[0].mxu0
        %v5727 = vadd.f32 %v5550, %v5726
        %v5728 = vpop.f32.mrb[0].mxu0
        %v5729 = vpop.f32.mrb[0].mxu0
        %v5730 = vadd.f32 %v5553, %v5729
        %v5731 = vpop.f32.mrb[0].mxu0
        %5732 = vdwg.mxu0
        %v5733 = vadd.f32 %v5045, %v5591
        %v5734 = vadd.f32 %v5048, %v5594
        %v5735 = vadd.f32 %v5053, %v5599
        %v5736 = vadd.f32 %v5056, %v5602
        %v5737 = vadd.f32 %v5061, %v5607
        %v5738 = vadd.f32 %v5064, %v5610
        %v5739 = vadd.f32 %v5069, %v5615
        %v5740 = vadd.f32 %v5072, %v5618
        %v5741 = vadd.f32 %v5077, %v5623
        %v5742 = vadd.f32 %v5080, %v5626
        %v5743 = vadd.f32 %v5085, %v5631
        %v5744 = vadd.f32 %v5088, %v5634
        %v5745 = vadd.f32 %v5093, %v5639
        %v5746 = vadd.f32 %v5096, %v5642
        %v5747 = vadd.f32 %v5101, %v5647
        %v5748 = vadd.f32 %v5104, %v5650
        %v5749 = vadd.f32 %v5109, %v5655
        %v5750 = vadd.f32 %v5112, %v5658
        %v5751 = vadd.f32 %v5117, %v5663
        %v5752 = vadd.f32 %v5120, %v5666
        %v5753 = vadd.f32 %v5125, %v5671
        %v5754 = vadd.f32 %v5128, %v5674
        %v5755 = vadd.f32 %v5133, %v5679
        %v5756 = vadd.f32 %v5136, %v5682
        %v5757 = vadd.f32 %v5141, %v5687
        %v5758 = vadd.f32 %v5144, %v5690
        %v5759 = vadd.f32 %v5149, %v5695
        %v5760 = vadd.f32 %v5152, %v5698
        %v5761 = vadd.f32 %v5157, %v5703
        %v5762 = vadd.f32 %v5160, %v5706
        %v5763 = vadd.f32 %v5165, %v5711
        %v5764 = vadd.f32 %v5168, %v5714
        %v5765 = vadd.f32 %v5173, %v5719
        %v5766 = vadd.f32 %v5176, %v5722
        %v5767 = vadd.f32 %v5181, %v5727
        %v5768 = vadd.f32 %v5184, %v5730
        %v5769 = vld [vmem:[%s2 + $0x1] sm:$0x1]
        %v5770 = vlaneseq
        %v5771 = vshrl.u32 %v5770, 7
        %v5772 = vsub.s32 0, %v5771
        %v5773 = vrot.slane %v5769, %v5772
        %v5774 = vmul.f32 %v5733, %v5773
        %v5775 = vmul.f32 %v5734, %v5773
        %v5776 = vmul.f32 %v5735, %v5773
        %v5777 = vmul.f32 %v5736, %v5773
        %v5778 = vmul.f32 %v5737, %v5773
        %v5779 = vmul.f32 %v5738, %v5773
        %v5780 = vmul.f32 %v5739, %v5773
        %v5781 = vmul.f32 %v5740, %v5773
        %v5782 = vmul.f32 %v5741, %v5773
        %v5783 = vmul.f32 %v5742, %v5773
        %v5784 = vmul.f32 %v5743, %v5773
        %v5785 = vmul.f32 %v5744, %v5773
        %v5786 = vmul.f32 %v5745, %v5773
        %v5787 = vmul.f32 %v5746, %v5773
        %v5788 = vmul.f32 %v5747, %v5773
        %v5789 = vmul.f32 %v5748, %v5773
        %v5790 = vmul.f32 %v5749, %v5773
        %v5791 = vmul.f32 %v5750, %v5773
        %v5792 = vmul.f32 %v5751, %v5773
        %v5793 = vmul.f32 %v5752, %v5773
        %v5794 = vmul.f32 %v5753, %v5773
        %v5795 = vmul.f32 %v5754, %v5773
        %v5796 = vmul.f32 %v5755, %v5773
        %v5797 = vmul.f32 %v5756, %v5773
        %v5798 = vmul.f32 %v5757, %v5773
        %v5799 = vmul.f32 %v5758, %v5773
        %v5800 = vmul.f32 %v5759, %v5773
        %v5801 = vmul.f32 %v5760, %v5773
        %v5802 = vmul.f32 %v5761, %v5773
        %v5803 = vmul.f32 %v5762, %v5773
        %v5804 = vmul.f32 %v5763, %v5773
        %v5805 = vmul.f32 %v5764, %v5773
        %v5806 = vmul.f32 %v5765, %v5773
        %v5807 = vmul.f32 %v5766, %v5773
        %v5808 = vmul.f32 %v5767, %v5773
        %v5809 = vmul.f32 %v5768, %v5773
        %v5810 = vld [vmem:[%s3 + $0x1] sm:$0x1]
        %v5811 = vlaneseq
        %v5812 = vshrl.u32 %v5811, 7
        %v5813 = vsub.s32 0, %v5812
        %v5814 = vrot.slane %v5810, %v5813
        %v5815 = vadd.f32 %v5774, %v5814
        %v5816 = vadd.f32 %v5775, %v5814
        %v5817 = vadd.f32 %v5776, %v5814
        %v5818 = vadd.f32 %v5777, %v5814
        %v5819 = vadd.f32 %v5778, %v5814
        %v5820 = vadd.f32 %v5779, %v5814
        %v5821 = vadd.f32 %v5780, %v5814
        %v5822 = vadd.f32 %v5781, %v5814
        %v5823 = vadd.f32 %v5782, %v5814
        %v5824 = vadd.f32 %v5783, %v5814
        %v5825 = vadd.f32 %v5784, %v5814
        %v5826 = vadd.f32 %v5785, %v5814
        %v5827 = vadd.f32 %v5786, %v5814
        %v5828 = vadd.f32 %v5787, %v5814
        %v5829 = vadd.f32 %v5788, %v5814
        %v5830 = vadd.f32 %v5789, %v5814
        %v5831 = vadd.f32 %v5790, %v5814
        %v5832 = vadd.f32 %v5791, %v5814
        %v5833 = vadd.f32 %v5792, %v5814
        %v5834 = vadd.f32 %v5793, %v5814
        %v5835 = vadd.f32 %v5794, %v5814
        %v5836 = vadd.f32 %v5795, %v5814
        %v5837 = vadd.f32 %v5796, %v5814
        %v5838 = vadd.f32 %v5797, %v5814
        %v5839 = vadd.f32 %v5798, %v5814
        %v5840 = vadd.f32 %v5799, %v5814
        %v5841 = vadd.f32 %v5800, %v5814
        %v5842 = vadd.f32 %v5801, %v5814
        %v5843 = vadd.f32 %v5802, %v5814
        %v5844 = vadd.f32 %v5803, %v5814
        %v5845 = vadd.f32 %v5804, %v5814
        %v5846 = vadd.f32 %v5805, %v5814
        %v5847 = vadd.f32 %v5806, %v5814
        %v5848 = vadd.f32 %v5807, %v5814
        %v5849 = vadd.f32 %v5808, %v5814
        %v5850 = vadd.f32 %v5809, %v5814
        %v5851 = vmax.f32 %v5815, 0.0
        %v5852 = vmax.f32 %v5816, 0.0
        %v5853 = vmax.f32 %v5817, 0.0
        %v5854 = vmax.f32 %v5818, 0.0
        %v5855 = vmax.f32 %v5819, 0.0
        %v5856 = vmax.f32 %v5820, 0.0
        %v5857 = vmax.f32 %v5821, 0.0
        %v5858 = vmax.f32 %v5822, 0.0
        %v5859 = vmax.f32 %v5823, 0.0
        %v5860 = vmax.f32 %v5824, 0.0
        %v5861 = vmax.f32 %v5825, 0.0
        %v5862 = vmax.f32 %v5826, 0.0
        %v5863 = vmax.f32 %v5827, 0.0
        %v5864 = vmax.f32 %v5828, 0.0
        %v5865 = vmax.f32 %v5829, 0.0
        %v5866 = vmax.f32 %v5830, 0.0
        %v5867 = vmax.f32 %v5831, 0.0
        %v5868 = vmax.f32 %v5832, 0.0
        %v5869 = vmax.f32 %v5833, 0.0
        %v5870 = vmax.f32 %v5834, 0.0
        %v5871 = vmax.f32 %v5835, 0.0
        %v5872 = vmax.f32 %v5836, 0.0
        %v5873 = vmax.f32 %v5837, 0.0
        %v5874 = vmax.f32 %v5838, 0.0
        %v5875 = vmax.f32 %v5839, 0.0
        %v5876 = vmax.f32 %v5840, 0.0
        %v5877 = vmax.f32 %v5841, 0.0
        %v5878 = vmax.f32 %v5842, 0.0
        %v5879 = vmax.f32 %v5843, 0.0
        %v5880 = vmax.f32 %v5844, 0.0
        %v5881 = vmax.f32 %v5845, 0.0
        %v5882 = vmax.f32 %v5846, 0.0
        %v5883 = vmax.f32 %v5847, 0.0
        %v5884 = vmax.f32 %v5848, 0.0
        %v5885 = vmax.f32 %v5849, 0.0
        %v5886 = vmax.f32 %v5850, 0.0
        %s5887 = sadd.s32 %s3362, 4294967295
        %v5888 = vstv %s5887
        %v5889 = vadd.s32 %v5888, 1
        %v5890 = vadd.s32 %v5888, 2
        %v5891 = vadd.s32 %v5888, 3
        %v5892 = vadd.s32 %v5888, 4
        %v5893 = vadd.s32 %v5888, 5
        %v5894 = vadd.s32 %v5888, 6
        %v5895 = vadd.s32 %v5888, 7
        %v5896 = vadd.s32 %v5888, 8
        %v5897 = vadd.s32 %v5888, 9
        %v5898 = vadd.s32 %v5888, 10
        %v5899 = vadd.s32 %v5888, 11
        %v5900 = vadd.s32 %v5888, 12
        %v5901 = vadd.s32 %v5888, 13
        %v5902 = vadd.s32 %v5888, 14
        %v5903 = vadd.s32 %v5888, 15
        %v5904 = vadd.s32 %v5888, 16
        %v5905 = vadd.s32 %v5888, 17
        %vm5906 = vcmp.ge.s32.totalorder %v5888, 0
        %vm5907 = vcmp.ge.s32.totalorder %v5889, 0
        %vm5908 = vcmp.ge.s32.totalorder %v5890, 0
        %vm5909 = vcmp.ge.s32.totalorder %v5891, 0
        %vm5910 = vcmp.ge.s32.totalorder %v5892, 0
        %vm5911 = vcmp.ge.s32.totalorder %v5893, 0
        %vm5912 = vcmp.ge.s32.totalorder %v5894, 0
        %vm5913 = vcmp.ge.s32.totalorder %v5895, 0
        %vm5914 = vcmp.ge.s32.totalorder %v5896, 0
        %vm5915 = vcmp.ge.s32.totalorder %v5897, 0
        %vm5916 = vcmp.ge.s32.totalorder %v5898, 0
        %vm5917 = vcmp.ge.s32.totalorder %v5899, 0
        %vm5918 = vcmp.ge.s32.totalorder %v5900, 0
        %vm5919 = vcmp.ge.s32.totalorder %v5901, 0
        %vm5920 = vcmp.ge.s32.totalorder %v5902, 0
        %vm5921 = vcmp.ge.s32.totalorder %v5903, 0
        %vm5922 = vcmp.ge.s32.totalorder %v5904, 0
        %vm5923 = vcmp.ge.s32.totalorder %v5905, 0
        %vm5924 = vcmp.lt.s32.totalorder %v5888, 16
        %vm5925 = vcmp.lt.s32.totalorder %v5889, 16
        %vm5926 = vcmp.lt.s32.totalorder %v5890, 16
        %vm5927 = vcmp.lt.s32.totalorder %v5891, 16
        %vm5928 = vcmp.lt.s32.totalorder %v5892, 16
        %vm5929 = vcmp.lt.s32.totalorder %v5893, 16
        %vm5930 = vcmp.lt.s32.totalorder %v5894, 16
        %vm5931 = vcmp.lt.s32.totalorder %v5895, 16
        %vm5932 = vcmp.lt.s32.totalorder %v5896, 16
        %vm5933 = vcmp.lt.s32.totalorder %v5897, 16
        %vm5934 = vcmp.lt.s32.totalorder %v5898, 16
        %vm5935 = vcmp.lt.s32.totalorder %v5899, 16
        %vm5936 = vcmp.lt.s32.totalorder %v5900, 16
        %vm5937 = vcmp.lt.s32.totalorder %v5901, 16
        %vm5938 = vcmp.lt.s32.totalorder %v5902, 16
        %vm5939 = vcmp.lt.s32.totalorder %v5903, 16
        %vm5940 = vcmp.lt.s32.totalorder %v5904, 16
        %vm5941 = vcmp.lt.s32.totalorder %v5905, 16
        %vm5942 = vmand %vm5906, %vm5924
        %vm5943 = vmand %vm5907, %vm5925
        %vm5944 = vmand %vm5908, %vm5926
        %vm5945 = vmand %vm5909, %vm5927
        %vm5946 = vmand %vm5910, %vm5928
        %vm5947 = vmand %vm5911, %vm5929
        %vm5948 = vmand %vm5912, %vm5930
        %vm5949 = vmand %vm5913, %vm5931
        %vm5950 = vmand %vm5914, %vm5932
        %vm5951 = vmand %vm5915, %vm5933
        %vm5952 = vmand %vm5916, %vm5934
        %vm5953 = vmand %vm5917, %vm5935
        %vm5954 = vmand %vm5918, %vm5936
        %vm5955 = vmand %vm5919, %vm5937
        %vm5956 = vmand %vm5920, %vm5938
        %vm5957 = vmand %vm5921, %vm5939
        %vm5958 = vmand %vm5922, %vm5940
        %vm5959 = vmand %vm5923, %vm5941
        %v5960 = vsel %vm5942, 1, 0
        %v5961 = vsel %vm5943, 1, 0
        %v5962 = vsel %vm5944, 1, 0
        %v5963 = vsel %vm5945, 1, 0
        %v5964 = vsel %vm5946, 1, 0
        %v5965 = vsel %vm5947, 1, 0
        %v5966 = vsel %vm5948, 1, 0
        %v5967 = vsel %vm5949, 1, 0
        %v5968 = vsel %vm5950, 1, 0
        %v5969 = vsel %vm5951, 1, 0
        %v5970 = vsel %vm5952, 1, 0
        %v5971 = vsel %vm5953, 1, 0
        %v5972 = vsel %vm5954, 1, 0
        %v5973 = vsel %vm5955, 1, 0
        %v5974 = vsel %vm5956, 1, 0
        %v5975 = vsel %vm5957, 1, 0
        %v5976 = vsel %vm5958, 1, 0
        %v5977 = vsel %vm5959, 1, 0
        %vm5978 = vcmp.eq.s32.totalorder %v5960, 1
        %vm5979 = vcmp.eq.s32.totalorder %v5961, 1
        %vm5980 = vcmp.eq.s32.totalorder %v5962, 1
        %vm5981 = vcmp.eq.s32.totalorder %v5963, 1
        %vm5982 = vcmp.eq.s32.totalorder %v5964, 1
        %vm5983 = vcmp.eq.s32.totalorder %v5965, 1
        %vm5984 = vcmp.eq.s32.totalorder %v5966, 1
        %vm5985 = vcmp.eq.s32.totalorder %v5967, 1
        %vm5986 = vcmp.eq.s32.totalorder %v5968, 1
        %vm5987 = vcmp.eq.s32.totalorder %v5969, 1
        %vm5988 = vcmp.eq.s32.totalorder %v5970, 1
        %vm5989 = vcmp.eq.s32.totalorder %v5971, 1
        %vm5990 = vcmp.eq.s32.totalorder %v5972, 1
        %vm5991 = vcmp.eq.s32.totalorder %v5973, 1
        %vm5992 = vcmp.eq.s32.totalorder %v5974, 1
        %vm5993 = vcmp.eq.s32.totalorder %v5975, 1
        %vm5994 = vcmp.eq.s32.totalorder %v5976, 1
        %vm5995 = vcmp.eq.s32.totalorder %v5977, 1
        %v5996 = vsel %vm5978, %v5851, 0.0
        %v5997 = vsel %vm5978, %v5852, 0.0
        %v5998 = vsel %vm5979, %v5853, 0.0
        %v5999 = vsel %vm5979, %v5854, 0.0
        %v6000 = vsel %vm5980, %v5855, 0.0
        %v6001 = vsel %vm5980, %v5856, 0.0
        %v6002 = vsel %vm5981, %v5857, 0.0
        %v6003 = vsel %vm5981, %v5858, 0.0
        %v6004 = vsel %vm5982, %v5859, 0.0
        %v6005 = vsel %vm5982, %v5860, 0.0
        %v6006 = vsel %vm5983, %v5861, 0.0
        %v6007 = vsel %vm5983, %v5862, 0.0
        %v6008 = vsel %vm5984, %v5863, 0.0
        %v6009 = vsel %vm5984, %v5864, 0.0
        %v6010 = vsel %vm5985, %v5865, 0.0
        %v6011 = vsel %vm5985, %v5866, 0.0
        %v6012 = vsel %vm5986, %v5867, 0.0
        %v6013 = vsel %vm5986, %v5868, 0.0
        %v6014 = vsel %vm5987, %v5869, 0.0
        %v6015 = vsel %vm5987, %v5870, 0.0
        %v6016 = vsel %vm5988, %v5871, 0.0
        %v6017 = vsel %vm5988, %v5872, 0.0
        %v6018 = vsel %vm5989, %v5873, 0.0
        %v6019 = vsel %vm5989, %v5874, 0.0
        %v6020 = vsel %vm5990, %v5875, 0.0
        %v6021 = vsel %vm5990, %v5876, 0.0
        %v6022 = vsel %vm5991, %v5877, 0.0
        %v6023 = vsel %vm5991, %v5878, 0.0
        %v6024 = vsel %vm5992, %v5879, 0.0
        %v6025 = vsel %vm5992, %v5880, 0.0
        %v6026 = vsel %vm5993, %v5881, 0.0
        %v6027 = vsel %vm5993, %v5882, 0.0
        %v6028 = vsel %vm5994, %v5883, 0.0
        %v6029 = vsel %vm5994, %v5884, 0.0
        %v6030 = vsel %vm5995, %v5885, 0.0
        %v6031 = vsel %vm5995, %v5886, 0.0
        %v6032 = vpack.c.bf16 %v5997, %v5996
        %v6033 = vpack.c.bf16 %v5999, %v5998
        %v6034 = vpack.c.bf16 %v6001, %v6000
        %v6035 = vpack.c.bf16 %v6003, %v6002
        %v6036 = vpack.c.bf16 %v6005, %v6004
        %v6037 = vpack.c.bf16 %v6007, %v6006
        %v6038 = vpack.c.bf16 %v6009, %v6008
        %v6039 = vpack.c.bf16 %v6011, %v6010
        %v6040 = vpack.c.bf16 %v6013, %v6012
        %v6041 = vpack.c.bf16 %v6015, %v6014
        %v6042 = vpack.c.bf16 %v6017, %v6016
        %v6043 = vpack.c.bf16 %v6019, %v6018
        %v6044 = vpack.c.bf16 %v6021, %v6020
        %v6045 = vpack.c.bf16 %v6023, %v6022
        %v6046 = vpack.c.bf16 %v6025, %v6024
        %v6047 = vpack.c.bf16 %v6027, %v6026
        %v6048 = vpack.c.bf16 %v6029, %v6028
        %v6049 = vpack.c.bf16 %v6031, %v6030
        %6050 = vst [vmem:[#allocation2 + $0x8] sm:$0xff] %v6032
        %6051 = vst [vmem:[#allocation2 + $0x20] sm:$0xff] %v6033
        %6052 = vst [vmem:[#allocation2 + $0x38] sm:$0xff] %v6034
        %6053 = vst [vmem:[#allocation2 + $0x50] sm:$0xff] %v6035
        %6054 = vst [vmem:[#allocation2 + $0x68] sm:$0xff] %v6036
        %6055 = vst [vmem:[#allocation2 + $0x80] sm:$0xff] %v6037
        %6056 = vst [vmem:[#allocation2 + $0x98] sm:$0xff] %v6038
        %6057 = vst [vmem:[#allocation2 + $0xb0] sm:$0xff] %v6039
        %6058 = vst [vmem:[#allocation2 + $0xc8] sm:$0xff] %v6040
        %6059 = vst [vmem:[#allocation2 + $0xe0] sm:$0xff] %v6041
        %6060 = vst [vmem:[#allocation2 + $0xf8] sm:$0xff] %v6042
        %6061 = vst [vmem:[#allocation2 + $0x110] sm:$0xff] %v6043
        %6062 = vst [vmem:[#allocation2 + $0x128] sm:$0xff] %v6044
        %6063 = vst [vmem:[#allocation2 + $0x140] sm:$0xff] %v6045
        %6064 = vst [vmem:[#allocation2 + $0x158] sm:$0xff] %v6046
        %6065 = vst [vmem:[#allocation2 + $0x170] sm:$0xff] %v6047
        %6066 = vst [vmem:[#allocation2 + $0x188] sm:$0xff] %v6048
        %6067 = vst [vmem:[#allocation2 + $0x1a0] sm:$0xff] %v6049
        %v6069 = vshrl.u32 %v6032, 16
        %v6071 = vrot.slane %v6069, 7
        %v6072 = vshll.u32 %v6032, 16
        %v6074 = vor.u32 %v6071, %v6072
        %v6076 = vshrl.u32 %v6033, 16
        %v6078 = vrot.slane %v6076, 7
        %v6079 = vshll.u32 %v6033, 16
        %v6081 = vor.u32 %v6078, %v6079
        %v6083 = vshrl.u32 %v6034, 16
        %v6085 = vrot.slane %v6083, 7
        %v6086 = vshll.u32 %v6034, 16
        %v6088 = vor.u32 %v6085, %v6086
        %v6090 = vshrl.u32 %v6035, 16
        %v6092 = vrot.slane %v6090, 7
        %v6093 = vshll.u32 %v6035, 16
        %v6095 = vor.u32 %v6092, %v6093
        %v6097 = vshrl.u32 %v6036, 16
        %v6099 = vrot.slane %v6097, 7
        %v6100 = vshll.u32 %v6036, 16
        %v6102 = vor.u32 %v6099, %v6100
        %v6104 = vshrl.u32 %v6037, 16
        %v6106 = vrot.slane %v6104, 7
        %v6107 = vshll.u32 %v6037, 16
        %v6109 = vor.u32 %v6106, %v6107
        %v6111 = vshrl.u32 %v6038, 16
        %v6113 = vrot.slane %v6111, 7
        %v6114 = vshll.u32 %v6038, 16
        %v6116 = vor.u32 %v6113, %v6114
        %v6118 = vshrl.u32 %v6039, 16
        %v6120 = vrot.slane %v6118, 7
        %v6121 = vshll.u32 %v6039, 16
        %v6123 = vor.u32 %v6120, %v6121
        %v6125 = vshrl.u32 %v6040, 16
        %v6127 = vrot.slane %v6125, 7
        %v6128 = vshll.u32 %v6040, 16
        %v6130 = vor.u32 %v6127, %v6128
        %v6132 = vshrl.u32 %v6041, 16
        %v6134 = vrot.slane %v6132, 7
        %v6135 = vshll.u32 %v6041, 16
        %v6137 = vor.u32 %v6134, %v6135
        %v6139 = vshrl.u32 %v6042, 16
        %v6141 = vrot.slane %v6139, 7
        %v6142 = vshll.u32 %v6042, 16
        %v6144 = vor.u32 %v6141, %v6142
        %v6146 = vshrl.u32 %v6043, 16
        %v6148 = vrot.slane %v6146, 7
        %v6149 = vshll.u32 %v6043, 16
        %v6151 = vor.u32 %v6148, %v6149
        %v6153 = vshrl.u32 %v6044, 16
        %v6155 = vrot.slane %v6153, 7
        %v6156 = vshll.u32 %v6044, 16
        %v6158 = vor.u32 %v6155, %v6156
        %v6160 = vshrl.u32 %v6045, 16
        %v6162 = vrot.slane %v6160, 7
        %v6163 = vshll.u32 %v6045, 16
        %v6165 = vor.u32 %v6162, %v6163
        %v6167 = vshrl.u32 %v6046, 16
        %v6169 = vrot.slane %v6167, 7
        %v6170 = vshll.u32 %v6046, 16
        %v6172 = vor.u32 %v6169, %v6170
        %v6174 = vshrl.u32 %v6047, 16
        %v6176 = vrot.slane %v6174, 7
        %v6177 = vshll.u32 %v6047, 16
        %v6179 = vor.u32 %v6176, %v6177
        %v6181 = vshrl.u32 %v6048, 16
        %v6183 = vrot.slane %v6181, 7
        %v6184 = vshll.u32 %v6048, 16
        %v6186 = vor.u32 %v6183, %v6184
        %v6188 = vshrl.u32 %v6049, 16
        %v6190 = vrot.slane %v6188, 7
        %v6191 = vshll.u32 %v6049, 16
        %v6193 = vor.u32 %v6190, %v6191
        %v6212 = vld [vmem:[#allocation2] sm:$0xff]
        %v6213 = vsel %vm3726, %v6074, %v6212
        %6214 = vst [vmem:[#allocation2] sm:$0xff] %v6213
        %v6215 = vld [vmem:[#allocation2 + $0x18] sm:$0xff]
        %v6216 = vsel %vm3726, %v6081, %v6215
        %6217 = vst [vmem:[#allocation2 + $0x18] sm:$0xff] %v6216
        %v6218 = vld [vmem:[#allocation2 + $0x30] sm:$0xff]
        %v6219 = vsel %vm3726, %v6088, %v6218
        %6220 = vst [vmem:[#allocation2 + $0x30] sm:$0xff] %v6219
        %v6221 = vld [vmem:[#allocation2 + $0x48] sm:$0xff]
        %v6222 = vsel %vm3726, %v6095, %v6221
        %6223 = vst [vmem:[#allocation2 + $0x48] sm:$0xff] %v6222
        %v6224 = vld [vmem:[#allocation2 + $0x60] sm:$0xff]
        %v6225 = vsel %vm3726, %v6102, %v6224
        %6226 = vst [vmem:[#allocation2 + $0x60] sm:$0xff] %v6225
        %v6227 = vld [vmem:[#allocation2 + $0x78] sm:$0xff]
        %v6228 = vsel %vm3726, %v6109, %v6227
        %6229 = vst [vmem:[#allocation2 + $0x78] sm:$0xff] %v6228
        %v6230 = vld [vmem:[#allocation2 + $0x90] sm:$0xff]
        %v6231 = vsel %vm3726, %v6116, %v6230
        %6232 = vst [vmem:[#allocation2 + $0x90] sm:$0xff] %v6231
        %v6233 = vld [vmem:[#allocation2 + $0xa8] sm:$0xff]
        %v6234 = vsel %vm3726, %v6123, %v6233
        %6235 = vst [vmem:[#allocation2 + $0xa8] sm:$0xff] %v6234
        %v6236 = vld [vmem:[#allocation2 + $0xc0] sm:$0xff]
        %v6237 = vsel %vm3726, %v6130, %v6236
        %6238 = vst [vmem:[#allocation2 + $0xc0] sm:$0xff] %v6237
        %v6239 = vld [vmem:[#allocation2 + $0xd8] sm:$0xff]
        %v6240 = vsel %vm3726, %v6137, %v6239
        %6241 = vst [vmem:[#allocation2 + $0xd8] sm:$0xff] %v6240
        %v6242 = vld [vmem:[#allocation2 + $0xf0] sm:$0xff]
        %v6243 = vsel %vm3726, %v6144, %v6242
        %6244 = vst [vmem:[#allocation2 + $0xf0] sm:$0xff] %v6243
        %v6245 = vld [vmem:[#allocation2 + $0x108] sm:$0xff]
        %v6246 = vsel %vm3726, %v6151, %v6245
        %6247 = vst [vmem:[#allocation2 + $0x108] sm:$0xff] %v6246
        %v6248 = vld [vmem:[#allocation2 + $0x120] sm:$0xff]
        %v6249 = vsel %vm3726, %v6158, %v6248
        %6250 = vst [vmem:[#allocation2 + $0x120] sm:$0xff] %v6249
        %v6251 = vld [vmem:[#allocation2 + $0x138] sm:$0xff]
        %v6252 = vsel %vm3726, %v6165, %v6251
        %6253 = vst [vmem:[#allocation2 + $0x138] sm:$0xff] %v6252
        %v6254 = vld [vmem:[#allocation2 + $0x150] sm:$0xff]
        %v6255 = vsel %vm3726, %v6172, %v6254
        %6256 = vst [vmem:[#allocation2 + $0x150] sm:$0xff] %v6255
        %v6257 = vld [vmem:[#allocation2 + $0x168] sm:$0xff]
        %v6258 = vsel %vm3726, %v6179, %v6257
        %6259 = vst [vmem:[#allocation2 + $0x168] sm:$0xff] %v6258
        %v6260 = vld [vmem:[#allocation2 + $0x180] sm:$0xff]
        %v6261 = vsel %vm3726, %v6186, %v6260
        %6262 = vst [vmem:[#allocation2 + $0x180] sm:$0xff] %v6261
        %v6263 = vld [vmem:[#allocation2 + $0x198] sm:$0xff]
        %v6264 = vsel %vm3726, %v6193, %v6263
        %6265 = vst [vmem:[#allocation2 + $0x198] sm:$0xff] %v6264
        %v6266 = vld [vmem:[#allocation2] sm:$0x1]
        %v6267 = vsel %vm3789, 0, %v6266
        %6268 = vst [vmem:[#allocation2] sm:$0x1] %v6267
        %v6269 = vld [vmem:[#allocation2 + $0x18] sm:$0x1]
        %v6270 = vsel %vm3789, 0, %v6269
        %6271 = vst [vmem:[#allocation2 + $0x18] sm:$0x1] %v6270
        %v6272 = vld [vmem:[#allocation2 + $0x30] sm:$0x1]
        %v6273 = vsel %vm3789, 0, %v6272
        %6274 = vst [vmem:[#allocation2 + $0x30] sm:$0x1] %v6273
        %v6275 = vld [vmem:[#allocation2 + $0x48] sm:$0x1]
        %v6276 = vsel %vm3789, 0, %v6275
        %6277 = vst [vmem:[#allocation2 + $0x48] sm:$0x1] %v6276
        %v6278 = vld [vmem:[#allocation2 + $0x60] sm:$0x1]
        %v6279 = vsel %vm3789, 0, %v6278
        %6280 = vst [vmem:[#allocation2 + $0x60] sm:$0x1] %v6279
        %v6281 = vld [vmem:[#allocation2 + $0x78] sm:$0x1]
        %v6282 = vsel %vm3789, 0, %v6281
        %6283 = vst [vmem:[#allocation2 + $0x78] sm:$0x1] %v6282
        %v6284 = vld [vmem:[#allocation2 + $0x90] sm:$0x1]
        %v6285 = vsel %vm3789, 0, %v6284
        %6286 = vst [vmem:[#allocation2 + $0x90] sm:$0x1] %v6285
        %v6287 = vld [vmem:[#allocation2 + $0xa8] sm:$0x1]
        %v6288 = vsel %vm3789, 0, %v6287
        %6289 = vst [vmem:[#allocation2 + $0xa8] sm:$0x1] %v6288
        %v6290 = vld [vmem:[#allocation2 + $0xc0] sm:$0x1]
        %v6291 = vsel %vm3789, 0, %v6290
        %6292 = vst [vmem:[#allocation2 + $0xc0] sm:$0x1] %v6291
        %v6293 = vld [vmem:[#allocation2 + $0xd8] sm:$0x1]
        %v6294 = vsel %vm3789, 0, %v6293
        %6295 = vst [vmem:[#allocation2 + $0xd8] sm:$0x1] %v6294
        %v6296 = vld [vmem:[#allocation2 + $0xf0] sm:$0x1]
        %v6297 = vsel %vm3789, 0, %v6296
        %6298 = vst [vmem:[#allocation2 + $0xf0] sm:$0x1] %v6297
        %v6299 = vld [vmem:[#allocation2 + $0x108] sm:$0x1]
        %v6300 = vsel %vm3789, 0, %v6299
        %6301 = vst [vmem:[#allocation2 + $0x108] sm:$0x1] %v6300
        %v6302 = vld [vmem:[#allocation2 + $0x120] sm:$0x1]
        %v6303 = vsel %vm3789, 0, %v6302
        %6304 = vst [vmem:[#allocation2 + $0x120] sm:$0x1] %v6303
        %v6305 = vld [vmem:[#allocation2 + $0x138] sm:$0x1]
        %v6306 = vsel %vm3789, 0, %v6305
        %6307 = vst [vmem:[#allocation2 + $0x138] sm:$0x1] %v6306
        %v6308 = vld [vmem:[#allocation2 + $0x150] sm:$0x1]
        %v6309 = vsel %vm3789, 0, %v6308
        %6310 = vst [vmem:[#allocation2 + $0x150] sm:$0x1] %v6309
        %v6311 = vld [vmem:[#allocation2 + $0x168] sm:$0x1]
        %v6312 = vsel %vm3789, 0, %v6311
        %6313 = vst [vmem:[#allocation2 + $0x168] sm:$0x1] %v6312
        %v6314 = vld [vmem:[#allocation2 + $0x180] sm:$0x1]
        %v6315 = vsel %vm3789, 0, %v6314
        %6316 = vst [vmem:[#allocation2 + $0x180] sm:$0x1] %v6315
        %v6317 = vld [vmem:[#allocation2 + $0x198] sm:$0x1]
        %v6318 = vsel %vm3789, 0, %v6317
        %6319 = vst [vmem:[#allocation2 + $0x198] sm:$0x1] %v6318
        %v6320 = vrot.slane %v6072, 1
        %v6321 = vor.u32 %v6069, %v6320
        %v6322 = vrot.slane %v6079, 1
        %v6323 = vor.u32 %v6076, %v6322
        %v6324 = vrot.slane %v6086, 1
        %v6325 = vor.u32 %v6083, %v6324
        %v6326 = vrot.slane %v6093, 1
        %v6327 = vor.u32 %v6090, %v6326
        %v6328 = vrot.slane %v6100, 1
        %v6329 = vor.u32 %v6097, %v6328
        %v6330 = vrot.slane %v6107, 1
        %v6331 = vor.u32 %v6104, %v6330
        %v6332 = vrot.slane %v6114, 1
        %v6333 = vor.u32 %v6111, %v6332
        %v6334 = vrot.slane %v6121, 1
        %v6335 = vor.u32 %v6118, %v6334
        %v6336 = vrot.slane %v6128, 1
        %v6337 = vor.u32 %v6125, %v6336
        %v6338 = vrot.slane %v6135, 1
        %v6339 = vor.u32 %v6132, %v6338
        %v6340 = vrot.slane %v6142, 1
        %v6341 = vor.u32 %v6139, %v6340
        %v6342 = vrot.slane %v6149, 1
        %v6343 = vor.u32 %v6146, %v6342
        %v6344 = vrot.slane %v6156, 1
        %v6345 = vor.u32 %v6153, %v6344
        %v6346 = vrot.slane %v6163, 1
        %v6347 = vor.u32 %v6160, %v6346
        %v6348 = vrot.slane %v6170, 1
        %v6349 = vor.u32 %v6167, %v6348
        %v6350 = vrot.slane %v6177, 1
        %v6351 = vor.u32 %v6174, %v6350
        %v6352 = vrot.slane %v6184, 1
        %v6353 = vor.u32 %v6181, %v6352
        %v6354 = vrot.slane %v6191, 1
        %v6355 = vor.u32 %v6188, %v6354
        %v6374 = vld [vmem:[#allocation2 + $0x10] sm:$0xff]
        %v6375 = vsel %vm3910, %v6321, %v6374
        %6376 = vst [vmem:[#allocation2 + $0x10] sm:$0xff] %v6375
        %v6377 = vld [vmem:[#allocation2 + $0x28] sm:$0xff]
        %v6378 = vsel %vm3910, %v6323, %v6377
        %6379 = vst [vmem:[#allocation2 + $0x28] sm:$0xff] %v6378
        %v6380 = vld [vmem:[#allocation2 + $0x40] sm:$0xff]
        %v6381 = vsel %vm3910, %v6325, %v6380
        %6382 = vst [vmem:[#allocation2 + $0x40] sm:$0xff] %v6381
        %v6383 = vld [vmem:[#allocation2 + $0x58] sm:$0xff]
        %v6384 = vsel %vm3910, %v6327, %v6383
        %6385 = vst [vmem:[#allocation2 + $0x58] sm:$0xff] %v6384
        %v6386 = vld [vmem:[#allocation2 + $0x70] sm:$0xff]
        %v6387 = vsel %vm3910, %v6329, %v6386
        %6388 = vst [vmem:[#allocation2 + $0x70] sm:$0xff] %v6387
        %v6389 = vld [vmem:[#allocation2 + $0x88] sm:$0xff]
        %v6390 = vsel %vm3910, %v6331, %v6389
        %6391 = vst [vmem:[#allocation2 + $0x88] sm:$0xff] %v6390
        %v6392 = vld [vmem:[#allocation2 + $0xa0] sm:$0xff]
        %v6393 = vsel %vm3910, %v6333, %v6392
        %6394 = vst [vmem:[#allocation2 + $0xa0] sm:$0xff] %v6393
        %v6395 = vld [vmem:[#allocation2 + $0xb8] sm:$0xff]
        %v6396 = vsel %vm3910, %v6335, %v6395
        %6397 = vst [vmem:[#allocation2 + $0xb8] sm:$0xff] %v6396
        %v6398 = vld [vmem:[#allocation2 + $0xd0] sm:$0xff]
        %v6399 = vsel %vm3910, %v6337, %v6398
        %6400 = vst [vmem:[#allocation2 + $0xd0] sm:$0xff] %v6399
        %v6401 = vld [vmem:[#allocation2 + $0xe8] sm:$0xff]
        %v6402 = vsel %vm3910, %v6339, %v6401
        %6403 = vst [vmem:[#allocation2 + $0xe8] sm:$0xff] %v6402
        %v6404 = vld [vmem:[#allocation2 + $0x100] sm:$0xff]
        %v6405 = vsel %vm3910, %v6341, %v6404
        %6406 = vst [vmem:[#allocation2 + $0x100] sm:$0xff] %v6405
        %v6407 = vld [vmem:[#allocation2 + $0x118] sm:$0xff]
        %v6408 = vsel %vm3910, %v6343, %v6407
        %6409 = vst [vmem:[#allocation2 + $0x118] sm:$0xff] %v6408
        %v6410 = vld [vmem:[#allocation2 + $0x130] sm:$0xff]
        %v6411 = vsel %vm3910, %v6345, %v6410
        %6412 = vst [vmem:[#allocation2 + $0x130] sm:$0xff] %v6411
        %v6413 = vld [vmem:[#allocation2 + $0x148] sm:$0xff]
        %v6414 = vsel %vm3910, %v6347, %v6413
        %6415 = vst [vmem:[#allocation2 + $0x148] sm:$0xff] %v6414
        %v6416 = vld [vmem:[#allocation2 + $0x160] sm:$0xff]
        %v6417 = vsel %vm3910, %v6349, %v6416
        %6418 = vst [vmem:[#allocation2 + $0x160] sm:$0xff] %v6417
        %v6419 = vld [vmem:[#allocation2 + $0x178] sm:$0xff]
        %v6420 = vsel %vm3910, %v6351, %v6419
        %6421 = vst [vmem:[#allocation2 + $0x178] sm:$0xff] %v6420
        %v6422 = vld [vmem:[#allocation2 + $0x190] sm:$0xff]
        %v6423 = vsel %vm3910, %v6353, %v6422
        %6424 = vst [vmem:[#allocation2 + $0x190] sm:$0xff] %v6423
        %v6425 = vld [vmem:[#allocation2 + $0x1a8] sm:$0xff]
        %v6426 = vsel %vm3910, %v6355, %v6425
        %6427 = vst [vmem:[#allocation2 + $0x1a8] sm:$0xff] %v6426
        %v6428 = vld [vmem:[#allocation2 + $0x10] sm:$0x80]
        %v6429 = vsel %vm3973, 0, %v6428
        %6430 = vst [vmem:[#allocation2 + $0x10] sm:$0x80] %v6429
        %v6431 = vld [vmem:[#allocation2 + $0x28] sm:$0x80]
        %v6432 = vsel %vm3973, 0, %v6431
        %6433 = vst [vmem:[#allocation2 + $0x28] sm:$0x80] %v6432
        %v6434 = vld [vmem:[#allocation2 + $0x40] sm:$0x80]
        %v6435 = vsel %vm3973, 0, %v6434
        %6436 = vst [vmem:[#allocation2 + $0x40] sm:$0x80] %v6435
        %v6437 = vld [vmem:[#allocation2 + $0x58] sm:$0x80]
        %v6438 = vsel %vm3973, 0, %v6437
        %6439 = vst [vmem:[#allocation2 + $0x58] sm:$0x80] %v6438
        %v6440 = vld [vmem:[#allocation2 + $0x70] sm:$0x80]
        %v6441 = vsel %vm3973, 0, %v6440
        %6442 = vst [vmem:[#allocation2 + $0x70] sm:$0x80] %v6441
        %v6443 = vld [vmem:[#allocation2 + $0x88] sm:$0x80]
        %v6444 = vsel %vm3973, 0, %v6443
        %6445 = vst [vmem:[#allocation2 + $0x88] sm:$0x80] %v6444
        %v6446 = vld [vmem:[#allocation2 + $0xa0] sm:$0x80]
        %v6447 = vsel %vm3973, 0, %v6446
        %6448 = vst [vmem:[#allocation2 + $0xa0] sm:$0x80] %v6447
        %v6449 = vld [vmem:[#allocation2 + $0xb8] sm:$0x80]
        %v6450 = vsel %vm3973, 0, %v6449
        %6451 = vst [vmem:[#allocation2 + $0xb8] sm:$0x80] %v6450
        %v6452 = vld [vmem:[#allocation2 + $0xd0] sm:$0x80]
        %v6453 = vsel %vm3973, 0, %v6452
        %6454 = vst [vmem:[#allocation2 + $0xd0] sm:$0x80] %v6453
        %v6455 = vld [vmem:[#allocation2 + $0xe8] sm:$0x80]
        %v6456 = vsel %vm3973, 0, %v6455
        %6457 = vst [vmem:[#allocation2 + $0xe8] sm:$0x80] %v6456
        %v6458 = vld [vmem:[#allocation2 + $0x100] sm:$0x80]
        %v6459 = vsel %vm3973, 0, %v6458
        %6460 = vst [vmem:[#allocation2 + $0x100] sm:$0x80] %v6459
        %v6461 = vld [vmem:[#allocation2 + $0x118] sm:$0x80]
        %v6462 = vsel %vm3973, 0, %v6461
        %6463 = vst [vmem:[#allocation2 + $0x118] sm:$0x80] %v6462
        %v6464 = vld [vmem:[#allocation2 + $0x130] sm:$0x80]
        %v6465 = vsel %vm3973, 0, %v6464
        %6466 = vst [vmem:[#allocation2 + $0x130] sm:$0x80] %v6465
        %v6467 = vld [vmem:[#allocation2 + $0x148] sm:$0x80]
        %v6468 = vsel %vm3973, 0, %v6467
        %6469 = vst [vmem:[#allocation2 + $0x148] sm:$0x80] %v6468
        %v6470 = vld [vmem:[#allocation2 + $0x160] sm:$0x80]
        %v6471 = vsel %vm3973, 0, %v6470
        %6472 = vst [vmem:[#allocation2 + $0x160] sm:$0x80] %v6471
        %v6473 = vld [vmem:[#allocation2 + $0x178] sm:$0x80]
        %v6474 = vsel %vm3973, 0, %v6473
        %6475 = vst [vmem:[#allocation2 + $0x178] sm:$0x80] %v6474
        %v6476 = vld [vmem:[#allocation2 + $0x190] sm:$0x80]
        %v6477 = vsel %vm3973, 0, %v6476
        %6478 = vst [vmem:[#allocation2 + $0x190] sm:$0x80] %v6477
        %v6479 = vld [vmem:[#allocation2 + $0x1a8] sm:$0x80]
        %v6480 = vsel %vm3973, 0, %v6479
        %6481 = vst [vmem:[#allocation2 + $0x1a8] sm:$0x80] %v6480
        %v6482 = vld [vmem:[#allocation2] sm:$0xff]
        %v6483 = vld [vmem:[#allocation2 + $0x8] sm:$0xff]
        %v6484 = vld [vmem:[#allocation2 + $0x10] sm:$0xff]
        %v6485 = vld [vmem:[#allocation2 + $0x18] sm:$0xff]
        %v6486 = vld [vmem:[#allocation2 + $0x20] sm:$0xff]
        %v6487 = vld [vmem:[#allocation2 + $0x28] sm:$0xff]
        %v6488 = vld [vmem:[#allocation2 + $0x30] sm:$0xff]
        %v6489 = vld [vmem:[#allocation2 + $0x38] sm:$0xff]
        %v6490 = vld [vmem:[#allocation2 + $0x40] sm:$0xff]
        %v6491 = vld [vmem:[#allocation2 + $0x48] sm:$0xff]
        %v6492 = vld [vmem:[#allocation2 + $0x50] sm:$0xff]
        %v6493 = vld [vmem:[#allocation2 + $0x58] sm:$0xff]
        %v6494 = vld [vmem:[#allocation2 + $0x60] sm:$0xff]
        %v6495 = vld [vmem:[#allocation2 + $0x68] sm:$0xff]
        %v6496 = vld [vmem:[#allocation2 + $0x70] sm:$0xff]
        %v6497 = vld [vmem:[#allocation2 + $0x78] sm:$0xff]
        %v6498 = vld [vmem:[#allocation2 + $0x80] sm:$0xff]
        %v6499 = vld [vmem:[#allocation2 + $0x88] sm:$0xff]
        %v6500 = vld [vmem:[#allocation2 + $0x90] sm:$0xff]
        %v6501 = vld [vmem:[#allocation2 + $0x98] sm:$0xff]
        %v6502 = vld [vmem:[#allocation2 + $0xa0] sm:$0xff]
        %v6503 = vld [vmem:[#allocation2 + $0xa8] sm:$0xff]
        %v6504 = vld [vmem:[#allocation2 + $0xb0] sm:$0xff]
        %v6505 = vld [vmem:[#allocation2 + $0xb8] sm:$0xff]
        %v6506 = vld [vmem:[#allocation2 + $0xc0] sm:$0xff]
        %v6507 = vld [vmem:[#allocation2 + $0xc8] sm:$0xff]
        %v6508 = vld [vmem:[#allocation2 + $0xd0] sm:$0xff]
        %v6509 = vld [vmem:[#allocation2 + $0xd8] sm:$0xff]
        %v6510 = vld [vmem:[#allocation2 + $0xe0] sm:$0xff]
        %v6511 = vld [vmem:[#allocation2 + $0xe8] sm:$0xff]
        %v6512 = vld [vmem:[#allocation2 + $0xf0] sm:$0xff]
        %v6513 = vld [vmem:[#allocation2 + $0xf8] sm:$0xff]
        %v6514 = vld [vmem:[#allocation2 + $0x100] sm:$0xff]
        %v6515 = vld [vmem:[#allocation2 + $0x108] sm:$0xff]
        %v6516 = vld [vmem:[#allocation2 + $0x110] sm:$0xff]
        %v6517 = vld [vmem:[#allocation2 + $0x118] sm:$0xff]
        %v6518 = vld [vmem:[#allocation2 + $0x120] sm:$0xff]
        %v6519 = vld [vmem:[#allocation2 + $0x128] sm:$0xff]
        %v6520 = vld [vmem:[#allocation2 + $0x130] sm:$0xff]
        %v6521 = vld [vmem:[#allocation2 + $0x138] sm:$0xff]
        %v6522 = vld [vmem:[#allocation2 + $0x140] sm:$0xff]
        %v6523 = vld [vmem:[#allocation2 + $0x148] sm:$0xff]
        %v6524 = vld [vmem:[#allocation2 + $0x150] sm:$0xff]
        %v6525 = vld [vmem:[#allocation2 + $0x158] sm:$0xff]
        %v6526 = vld [vmem:[#allocation2 + $0x160] sm:$0xff]
        %v6527 = vld [vmem:[#allocation2 + $0x168] sm:$0xff]
        %v6528 = vld [vmem:[#allocation2 + $0x170] sm:$0xff]
        %v6529 = vld [vmem:[#allocation2 + $0x178] sm:$0xff]
        %v6530 = vld [vmem:[#allocation2 + $0x180] sm:$0xff]
        %v6531 = vld [vmem:[#allocation2 + $0x188] sm:$0xff]
        %v6532 = vld [vmem:[#allocation2 + $0x190] sm:$0xff]
        %v6533 = vld [vmem:[#allocation2 + $0x198] sm:$0xff]
        %v6534 = vld [vmem:[#allocation2 + $0x1a0] sm:$0xff]
        %v6535 = vld [vmem:[#allocation2 + $0x1a8] sm:$0xff]
        %s6536 = scalar_lea.vmem [#allocation4], 1152
        %v6537 = vld [vmem:[%s6536] sm:$0xf]
        %v6538 = vld [vmem:[%s6536 + $0xc] sm:$0xf]
        %v6539 = vld [vmem:[%s6536 + $0x18] sm:$0xf]
        %v6540 = vld [vmem:[%s6536 + $0x24] sm:$0xf]
        %v6541 = vld [vmem:[%s6536 + $0x30] sm:$0xf]
        %v6542 = vld [vmem:[%s6536 + $0x3c] sm:$0xf]
        %v6543 = vld [vmem:[%s6536 + $0x48] sm:$0xf]
        %v6544 = vld [vmem:[%s6536 + $0x54] sm:$0xf]
        %v6545 = vld [vmem:[%s6536 + $0x60] sm:$0xf]
        %v6546 = vld [vmem:[%s6536 + $0x6c] sm:$0xf]
        %v6547 = vld [vmem:[%s6536 + $0x78] sm:$0xf]
        %v6548 = vld [vmem:[%s6536 + $0x84] sm:$0xf]
        %v6549 = vld [vmem:[%s6536 + $0x90] sm:$0xf]
        %v6550 = vld [vmem:[%s6536 + $0x9c] sm:$0xf]
        %v6551 = vld [vmem:[%s6536 + $0xa8] sm:$0xf]
        %v6552 = vld [vmem:[%s6536 + $0xb4] sm:$0xf]
        %v6553 = vld [vmem:[%s6536 + $0xc0] sm:$0xf]
        %v6554 = vld [vmem:[%s6536 + $0xcc] sm:$0xf]
        %v6555 = vld [vmem:[%s6536 + $0xd8] sm:$0xf]
        %v6556 = vld [vmem:[%s6536 + $0xe4] sm:$0xf]
        %v6557 = vld [vmem:[%s6536 + $0xf0] sm:$0xf]
        %v6558 = vld [vmem:[%s6536 + $0xfc] sm:$0xf]
        %v6559 = vld [vmem:[%s6536 + $0x108] sm:$0xf]
        %v6560 = vld [vmem:[%s6536 + $0x114] sm:$0xf]
        %v6561 = vld [vmem:[%s6536 + $0x120] sm:$0xf]
        %v6562 = vld [vmem:[%s6536 + $0x12c] sm:$0xf]
        %v6563 = vld [vmem:[%s6536 + $0x138] sm:$0xf]
        %v6564 = vld [vmem:[%s6536 + $0x144] sm:$0xf]
        %v6565 = vld [vmem:[%s6536 + $0x150] sm:$0xf]
        %v6566 = vld [vmem:[%s6536 + $0x15c] sm:$0xf]
        %v6567 = vld [vmem:[%s6536 + $0x168] sm:$0xf]
        %v6568 = vld [vmem:[%s6536 + $0x174] sm:$0xf]
        %v6569 = vld [vmem:[%s6536 + $0x180] sm:$0xf]
        %v6570 = vld [vmem:[%s6536 + $0x18c] sm:$0xf]
        %v6571 = vld [vmem:[%s6536 + $0x198] sm:$0xf]
        %v6572 = vld [vmem:[%s6536 + $0x1a4] sm:$0xf]
        %v6573 = vld [vmem:[%s6536 + $0x1b0] sm:$0xf]
        %v6574 = vld [vmem:[%s6536 + $0x1bc] sm:$0xf]
        %v6575 = vld [vmem:[%s6536 + $0x1c8] sm:$0xf]
        %v6576 = vld [vmem:[%s6536 + $0x1d4] sm:$0xf]
        %v6577 = vld [vmem:[%s6536 + $0x1e0] sm:$0xf]
        %v6578 = vld [vmem:[%s6536 + $0x1ec] sm:$0xf]
        %v6579 = vld [vmem:[%s6536 + $0x1f8] sm:$0xf]
        %v6580 = vld [vmem:[%s6536 + $0x204] sm:$0xf]
        %v6581 = vld [vmem:[%s6536 + $0x210] sm:$0xf]
        %v6582 = vld [vmem:[%s6536 + $0x21c] sm:$0xf]
        %v6583 = vld [vmem:[%s6536 + $0x228] sm:$0xf]
        %v6584 = vld [vmem:[%s6536 + $0x234] sm:$0xf]
        %v6585 = vld [vmem:[%s6536 + $0x4] sm:$0xf]
        %v6586 = vld [vmem:[%s6536 + $0x10] sm:$0xf]
        %v6587 = vld [vmem:[%s6536 + $0x1c] sm:$0xf]
        %v6588 = vld [vmem:[%s6536 + $0x28] sm:$0xf]
        %v6589 = vld [vmem:[%s6536 + $0x34] sm:$0xf]
        %v6590 = vld [vmem:[%s6536 + $0x40] sm:$0xf]
        %v6591 = vld [vmem:[%s6536 + $0x4c] sm:$0xf]
        %v6592 = vld [vmem:[%s6536 + $0x58] sm:$0xf]
        %v6593 = vld [vmem:[%s6536 + $0x64] sm:$0xf]
        %v6594 = vld [vmem:[%s6536 + $0x70] sm:$0xf]
        %v6595 = vld [vmem:[%s6536 + $0x7c] sm:$0xf]
        %v6596 = vld [vmem:[%s6536 + $0x88] sm:$0xf]
        %v6597 = vld [vmem:[%s6536 + $0x94] sm:$0xf]
        %v6598 = vld [vmem:[%s6536 + $0xa0] sm:$0xf]
        %v6599 = vld [vmem:[%s6536 + $0xac] sm:$0xf]
        %v6600 = vld [vmem:[%s6536 + $0xb8] sm:$0xf]
        %v6601 = vld [vmem:[%s6536 + $0xc4] sm:$0xf]
        %v6602 = vld [vmem:[%s6536 + $0xd0] sm:$0xf]
        %v6603 = vld [vmem:[%s6536 + $0xdc] sm:$0xf]
        %v6604 = vld [vmem:[%s6536 + $0xe8] sm:$0xf]
        %v6605 = vld [vmem:[%s6536 + $0xf4] sm:$0xf]
        %v6606 = vld [vmem:[%s6536 + $0x100] sm:$0xf]
        %v6607 = vld [vmem:[%s6536 + $0x10c] sm:$0xf]
        %v6608 = vld [vmem:[%s6536 + $0x118] sm:$0xf]
        %v6609 = vld [vmem:[%s6536 + $0x124] sm:$0xf]
        %v6610 = vld [vmem:[%s6536 + $0x130] sm:$0xf]
        %v6611 = vld [vmem:[%s6536 + $0x13c] sm:$0xf]
        %v6612 = vld [vmem:[%s6536 + $0x148] sm:$0xf]
        %v6613 = vld [vmem:[%s6536 + $0x154] sm:$0xf]
        %v6614 = vld [vmem:[%s6536 + $0x160] sm:$0xf]
        %v6615 = vld [vmem:[%s6536 + $0x16c] sm:$0xf]
        %v6616 = vld [vmem:[%s6536 + $0x178] sm:$0xf]
        %v6617 = vld [vmem:[%s6536 + $0x184] sm:$0xf]
        %v6618 = vld [vmem:[%s6536 + $0x190] sm:$0xf]
        %v6619 = vld [vmem:[%s6536 + $0x19c] sm:$0xf]
        %v6620 = vld [vmem:[%s6536 + $0x1a8] sm:$0xf]
        %v6621 = vld [vmem:[%s6536 + $0x1b4] sm:$0xf]
        %v6622 = vld [vmem:[%s6536 + $0x1c0] sm:$0xf]
        %v6623 = vld [vmem:[%s6536 + $0x1cc] sm:$0xf]
        %v6624 = vld [vmem:[%s6536 + $0x1d8] sm:$0xf]
        %v6625 = vld [vmem:[%s6536 + $0x1e4] sm:$0xf]
        %v6626 = vld [vmem:[%s6536 + $0x1f0] sm:$0xf]
        %v6627 = vld [vmem:[%s6536 + $0x1fc] sm:$0xf]
        %v6628 = vld [vmem:[%s6536 + $0x208] sm:$0xf]
        %v6629 = vld [vmem:[%s6536 + $0x214] sm:$0xf]
        %v6630 = vld [vmem:[%s6536 + $0x220] sm:$0xf]
        %v6631 = vld [vmem:[%s6536 + $0x22c] sm:$0xf]
        %v6632 = vld [vmem:[%s6536 + $0x238] sm:$0xf]
        %v6681 = vunpack.c.l.b16 %v6585
        %v6682 = vunpack.c.l.b16 %v6586
        %v6683 = vunpack.c.l.b16 %v6587
        %v6684 = vunpack.c.l.b16 %v6588
        %v6685 = vunpack.c.l.b16 %v6589
        %v6686 = vunpack.c.l.b16 %v6590
        %v6687 = vunpack.c.l.b16 %v6591
        %v6688 = vunpack.c.l.b16 %v6592
        %v6689 = vunpack.c.l.b16 %v6593
        %v6690 = vunpack.c.l.b16 %v6594
        %v6691 = vunpack.c.l.b16 %v6595
        %v6692 = vunpack.c.l.b16 %v6596
        %v6693 = vunpack.c.l.b16 %v6597
        %v6694 = vunpack.c.l.b16 %v6598
        %v6695 = vunpack.c.l.b16 %v6599
        %v6696 = vunpack.c.l.b16 %v6600
        %v6697 = vunpack.c.l.b16 %v6601
        %v6698 = vunpack.c.l.b16 %v6602
        %v6699 = vunpack.c.l.b16 %v6603
        %v6700 = vunpack.c.l.b16 %v6604
        %v6701 = vunpack.c.l.b16 %v6605
        %v6702 = vunpack.c.l.b16 %v6606
        %v6703 = vunpack.c.l.b16 %v6607
        %v6704 = vunpack.c.l.b16 %v6608
        %v6705 = vunpack.c.l.b16 %v6609
        %v6706 = vunpack.c.l.b16 %v6610
        %v6707 = vunpack.c.l.b16 %v6611
        %v6708 = vunpack.c.l.b16 %v6612
        %v6709 = vunpack.c.l.b16 %v6613
        %v6710 = vunpack.c.l.b16 %v6614
        %v6711 = vunpack.c.l.b16 %v6615
        %v6712 = vunpack.c.l.b16 %v6616
        %v6713 = vunpack.c.l.b16 %v6617
        %v6714 = vunpack.c.l.b16 %v6618
        %v6715 = vunpack.c.l.b16 %v6619
        %v6716 = vunpack.c.l.b16 %v6620
        %v6717 = vunpack.c.l.b16 %v6621
        %v6718 = vunpack.c.l.b16 %v6622
        %v6719 = vunpack.c.l.b16 %v6623
        %v6720 = vunpack.c.l.b16 %v6624
        %v6721 = vunpack.c.l.b16 %v6625
        %v6722 = vunpack.c.l.b16 %v6626
        %v6723 = vunpack.c.l.b16 %v6627
        %v6724 = vunpack.c.l.b16 %v6628
        %v6725 = vunpack.c.l.b16 %v6629
        %v6726 = vunpack.c.l.b16 %v6630
        %v6727 = vunpack.c.l.b16 %v6631
        %v6728 = vunpack.c.l.b16 %v6632
        %v6729 = vpack.c.b16 %v6682, %v6681
        %v6730 = vpack.c.b16 %v6684, %v6683
        %v6731 = vpack.c.b16 %v6686, %v6685
        %v6732 = vpack.c.b16 %v6688, %v6687
        %v6733 = vpack.c.b16 %v6690, %v6689
        %v6734 = vpack.c.b16 %v6692, %v6691
        %v6735 = vpack.c.b16 %v6694, %v6693
        %v6736 = vpack.c.b16 %v6696, %v6695
        %v6737 = vpack.c.b16 %v6698, %v6697
        %v6738 = vpack.c.b16 %v6700, %v6699
        %v6739 = vpack.c.b16 %v6702, %v6701
        %v6740 = vpack.c.b16 %v6704, %v6703
        %v6741 = vpack.c.b16 %v6706, %v6705
        %v6742 = vpack.c.b16 %v6708, %v6707
        %v6743 = vpack.c.b16 %v6710, %v6709
        %v6744 = vpack.c.b16 %v6712, %v6711
        %v6745 = vpack.c.b16 %v6714, %v6713
        %v6746 = vpack.c.b16 %v6716, %v6715
        %v6747 = vpack.c.b16 %v6718, %v6717
        %v6748 = vpack.c.b16 %v6720, %v6719
        %v6749 = vpack.c.b16 %v6722, %v6721
        %v6750 = vpack.c.b16 %v6724, %v6723
        %v6751 = vpack.c.b16 %v6726, %v6725
        %v6752 = vpack.c.b16 %v6728, %v6727
        %6777 = vmatprep.subr.bf16.mxu0 0
        %6778 = vmatpush1.bf16.msra.mxu0 %v6729
        %6779 = vmatprep.subr.bf16.mxu0 0
        %6780 = vmatpush1.bf16.msra.mxu0 %v6730
        %6781 = vmatprep.subr.bf16.mxu0 0
        %6782 = vmatpush1.bf16.msra.mxu0 %v6731
        %6783 = vmatprep.subr.bf16.mxu0 0
        %6784 = vmatpush1.bf16.msra.mxu0 %v6732
        %6785 = vmatprep.subr.bf16.mxu0 0
        %6786 = vmatpush1.bf16.msra.mxu0 %v6733
        %6787 = vmatprep.subr.bf16.mxu0 0
        %6788 = vmatpush1.bf16.msra.mxu0 %v6734
        %6789 = vmatprep.subr.bf16.mxu0 0
        %6790 = vmatpush1.bf16.msra.mxu0 %v6735
        %6791 = vmatprep.subr.bf16.mxu0 0
        %6792 = vmatpush1.bf16.msra.mxu0 %v6736
        %6793 = vmatprep.subr.bf16.mxu0 0
        %6794 = vmatpush1.bf16.msra.mxu0 %v6737
        %6795 = vmatprep.subr.bf16.mxu0 0
        %6796 = vmatpush1.bf16.msra.mxu0 %v6738
        %6797 = vmatprep.subr.bf16.mxu0 0
        %6798 = vmatpush1.bf16.msra.mxu0 %v6739
        %6799 = vmatprep.subr.bf16.mxu0 0
        %6800 = vmatpush1.bf16.msra.mxu0 %v6740
        %6801 = vmatprep.subr.bf16.mxu0 0
        %6802 = vmatpush1.bf16.msra.mxu0 %v6741
        %6803 = vmatprep.subr.bf16.mxu0 0
        %6804 = vmatpush1.bf16.msra.mxu0 %v6742
        %6805 = vmatprep.subr.bf16.mxu0 0
        %6806 = vmatpush1.bf16.msra.mxu0 %v6743
        %6807 = vmatprep.subr.bf16.mxu0 0
        %6808 = vmatpush1.bf16.msra.mxu0 %v6744
        %6809 = vmatprep.mubr.bf16.mxu0 %v6486
        %6810 = vmatmul.mubr.bf16.gmra.mrb[0].mxu0 %v6485
        %v6811 = vpop.f32.mrb[0].mxu0
        %v6812 = vadd.f32 0.0, %v6811
        %v6813 = vpop.f32.mrb[0].mxu0
        %v6814 = vpop.f32.mrb[0].mxu0
        %v6815 = vadd.f32 0.0, %v6814
        %v6816 = vpop.f32.mrb[0].mxu0
        %6817 = vmatprep.mubr.bf16.mxu0 %v6489
        %6818 = vmatmul.mubr.bf16.gmra.mrb[0].mxu0 %v6488
        %v6819 = vpop.f32.mrb[0].mxu0
        %v6820 = vadd.f32 0.0, %v6819
        %v6821 = vpop.f32.mrb[0].mxu0
        %v6822 = vpop.f32.mrb[0].mxu0
        %v6823 = vadd.f32 0.0, %v6822
        %v6824 = vpop.f32.mrb[0].mxu0
        %6825 = vmatprep.mubr.bf16.mxu0 %v6492
        %6826 = vmatmul.mubr.bf16.gmra.mrb[0].mxu0 %v6491
        %v6827 = vpop.f32.mrb[0].mxu0
        %v6828 = vadd.f32 0.0, %v6827
        %v6829 = vpop.f32.mrb[0].mxu0
        %v6830 = vpop.f32.mrb[0].mxu0
        %v6831 = vadd.f32 0.0, %v6830
        %v6832 = vpop.f32.mrb[0].mxu0
        %6833 = vmatprep.mubr.bf16.mxu0 %v6495
        %6834 = vmatmul.mubr.bf16.gmra.mrb[0].mxu0 %v6494
        %v6835 = vpop.f32.mrb[0].mxu0
        %v6836 = vadd.f32 0.0, %v6835
        %v6837 = vpop.f32.mrb[0].mxu0
        %v6838 = vpop.f32.mrb[0].mxu0
        %v6839 = vadd.f32 0.0, %v6838
        %v6840 = vpop.f32.mrb[0].mxu0
        %6841 = vmatprep.mubr.bf16.mxu0 %v6498
        %6842 = vmatmul.mubr.bf16.gmra.mrb[0].mxu0 %v6497
        %v6843 = vpop.f32.mrb[0].mxu0
        %v6844 = vadd.f32 0.0, %v6843
        %v6845 = vpop.f32.mrb[0].mxu0
        %v6846 = vpop.f32.mrb[0].mxu0
        %v6847 = vadd.f32 0.0, %v6846
        %v6848 = vpop.f32.mrb[0].mxu0
        %6849 = vmatprep.mubr.bf16.mxu0 %v6501
        %6850 = vmatmul.mubr.bf16.gmra.mrb[0].mxu0 %v6500
        %v6851 = vpop.f32.mrb[0].mxu0
        %v6852 = vadd.f32 0.0, %v6851
        %v6853 = vpop.f32.mrb[0].mxu0
        %v6854 = vpop.f32.mrb[0].mxu0
        %v6855 = vadd.f32 0.0, %v6854
        %v6856 = vpop.f32.mrb[0].mxu0
        %6857 = vmatprep.mubr.bf16.mxu0 %v6504
        %6858 = vmatmul.mubr.bf16.gmra.mrb[0].mxu0 %v6503
        %v6859 = vpop.f32.mrb[0].mxu0
        %v6860 = vadd.f32 0.0, %v6859
        %v6861 = vpop.f32.mrb[0].mxu0
        %v6862 = vpop.f32.mrb[0].mxu0
        %v6863 = vadd.f32 0.0, %v6862
        %v6864 = vpop.f32.mrb[0].mxu0
        %6865 = vmatprep.mubr.bf16.mxu0 %v6507
        %6866 = vmatmul.mubr.bf16.gmra.mrb[0].mxu0 %v6506
        %v6867 = vpop.f32.mrb[0].mxu0
        %v6868 = vadd.f32 0.0, %v6867
        %v6869 = vpop.f32.mrb[0].mxu0
        %v6870 = vpop.f32.mrb[0].mxu0
        %v6871 = vadd.f32 0.0, %v6870
        %v6872 = vpop.f32.mrb[0].mxu0
        %6873 = vmatprep.mubr.bf16.mxu0 %v6510
        %6874 = vmatmul.mubr.bf16.gmra.mrb[0].mxu0 %v6509
        %v6875 = vpop.f32.mrb[0].mxu0
        %v6876 = vadd.f32 0.0, %v6875
        %v6877 = vpop.f32.mrb[0].mxu0
        %v6878 = vpop.f32.mrb[0].mxu0
        %v6879 = vadd.f32 0.0, %v6878
        %v6880 = vpop.f32.mrb[0].mxu0
        %6881 = vmatprep.mubr.bf16.mxu0 %v6513
        %6882 = vmatmul.mubr.bf16.gmra.mrb[0].mxu0 %v6512
        %v6883 = vpop.f32.mrb[0].mxu0
        %v6884 = vadd.f32 0.0, %v6883
        %v6885 = vpop.f32.mrb[0].mxu0
        %v6886 = vpop.f32.mrb[0].mxu0
        %v6887 = vadd.f32 0.0, %v6886
        %v6888 = vpop.f32.mrb[0].mxu0
        %6889 = vmatprep.mubr.bf16.mxu0 %v6516
        %6890 = vmatmul.mubr.bf16.gmra.mrb[0].mxu0 %v6515
        %v6891 = vpop.f32.mrb[0].mxu0
        %v6892 = vadd.f32 0.0, %v6891
        %v6893 = vpop.f32.mrb[0].mxu0
        %v6894 = vpop.f32.mrb[0].mxu0
        %v6895 = vadd.f32 0.0, %v6894
        %v6896 = vpop.f32.mrb[0].mxu0
        %6897 = vmatprep.mubr.bf16.mxu0 %v6519
        %6898 = vmatmul.mubr.bf16.gmra.mrb[0].mxu0 %v6518
        %v6899 = vpop.f32.mrb[0].mxu0
        %v6900 = vadd.f32 0.0, %v6899
        %v6901 = vpop.f32.mrb[0].mxu0
        %v6902 = vpop.f32.mrb[0].mxu0
        %v6903 = vadd.f32 0.0, %v6902
        %v6904 = vpop.f32.mrb[0].mxu0
        %6905 = vmatprep.mubr.bf16.mxu0 %v6522
        %6906 = vmatmul.mubr.bf16.gmra.mrb[0].mxu0 %v6521
        %v6907 = vpop.f32.mrb[0].mxu0
        %v6908 = vadd.f32 0.0, %v6907
        %v6909 = vpop.f32.mrb[0].mxu0
        %v6910 = vpop.f32.mrb[0].mxu0
        %v6911 = vadd.f32 0.0, %v6910
        %v6912 = vpop.f32.mrb[0].mxu0
        %6913 = vmatprep.mubr.bf16.mxu0 %v6525
        %6914 = vmatmul.mubr.bf16.gmra.mrb[0].mxu0 %v6524
        %v6915 = vpop.f32.mrb[0].mxu0
        %v6916 = vadd.f32 0.0, %v6915
        %v6917 = vpop.f32.mrb[0].mxu0
        %v6918 = vpop.f32.mrb[0].mxu0
        %v6919 = vadd.f32 0.0, %v6918
        %v6920 = vpop.f32.mrb[0].mxu0
        %6921 = vmatprep.mubr.bf16.mxu0 %v6528
        %6922 = vmatmul.mubr.bf16.gmra.mrb[0].mxu0 %v6527
        %v6923 = vpop.f32.mrb[0].mxu0
        %v6924 = vadd.f32 0.0, %v6923
        %v6925 = vpop.f32.mrb[0].mxu0
        %v6926 = vpop.f32.mrb[0].mxu0
        %v6927 = vadd.f32 0.0, %v6926
        %v6928 = vpop.f32.mrb[0].mxu0
        %6929 = vmatprep.mubr.bf16.mxu0 %v6531
        %6930 = vmatmul.mubr.bf16.gmra.mrb[0].mxu0 %v6530
        %v6931 = vpop.f32.mrb[0].mxu0
        %v6932 = vadd.f32 0.0, %v6931
        %v6933 = vpop.f32.mrb[0].mxu0
        %v6934 = vpop.f32.mrb[0].mxu0
        %v6935 = vadd.f32 0.0, %v6934
        %v6936 = vpop.f32.mrb[0].mxu0
        %6937 = vdwg.mxu0
        %6938 = vmatprep.subr.bf16.mxu0 0
        %6939 = vmatpush1.bf16.msra.mxu0 %v6745
        %6940 = vmatprep.subr.bf16.mxu0 0
        %6941 = vmatpush1.bf16.msra.mxu0 %v6746
        %6942 = vmatprep.subr.bf16.mxu0 0
        %6943 = vmatpush1.bf16.msra.mxu0 %v6747
        %6944 = vmatprep.subr.bf16.mxu0 0
        %6945 = vmatpush1.bf16.msra.mxu0 %v6748
        %6946 = vmatprep.subr.bf16.mxu0 0
        %6947 = vmatpush1.bf16.msra.mxu0 %v6749
        %6948 = vmatprep.subr.bf16.mxu0 0
        %6949 = vmatpush1.bf16.msra.mxu0 %v6750
        %6950 = vmatprep.subr.bf16.mxu0 0
        %6951 = vmatpush1.bf16.msra.mxu0 %v6751
        %6952 = vmatprep.subr.bf16.mxu0 0
        %6953 = vmatpush1.bf16.msra.mxu0 %v6752
        %6954 = vmatprep.subr.bf16.mxu0 0
        %6955 = vmatpush1.bf16.msra.mxu0 0
        %6956 = vmatprep.subr.bf16.mxu0 0
        %6957 = vmatpush1.bf16.msra.mxu0 0
        %6958 = vmatprep.subr.bf16.mxu0 0
        %6959 = vmatpush1.bf16.msra.mxu0 0
        %6960 = vmatprep.subr.bf16.mxu0 0
        %6961 = vmatpush1.bf16.msra.mxu0 0
        %6962 = vmatprep.subr.bf16.mxu0 0
        %6963 = vmatpush1.bf16.msra.mxu0 0
        %6964 = vmatprep.subr.bf16.mxu0 0
        %6965 = vmatpush1.bf16.msra.mxu0 0
        %6966 = vmatprep.subr.bf16.mxu0 0
        %6967 = vmatpush1.bf16.msra.mxu0 0
        %6968 = vmatprep.subr.bf16.mxu0 0
        %6969 = vmatpush1.bf16.msra.mxu0 0
        %6970 = vmatprep.mubr.bf16.mxu0 0
        %6971 = vmatmul.mubr.bf16.gmra.mrb[0].mxu0 %v6487
        %v6972 = vpop.f32.mrb[0].mxu0
        %v6973 = vadd.f32 %v6812, %v6972
        %v6974 = vpop.f32.mrb[0].mxu0
        %v6975 = vpop.f32.mrb[0].mxu0
        %v6976 = vadd.f32 %v6815, %v6975
        %v6977 = vpop.f32.mrb[0].mxu0
        %6978 = vmatprep.mubr.bf16.mxu0 0
        %6979 = vmatmul.mubr.bf16.gmra.mrb[0].mxu0 %v6490
        %v6980 = vpop.f32.mrb[0].mxu0
        %v6981 = vadd.f32 %v6820, %v6980
        %v6982 = vpop.f32.mrb[0].mxu0
        %v6983 = vpop.f32.mrb[0].mxu0
        %v6984 = vadd.f32 %v6823, %v6983
        %v6985 = vpop.f32.mrb[0].mxu0
        %6986 = vmatprep.mubr.bf16.mxu0 0
        %6987 = vmatmul.mubr.bf16.gmra.mrb[0].mxu0 %v6493
        %v6988 = vpop.f32.mrb[0].mxu0
        %v6989 = vadd.f32 %v6828, %v6988
        %v6990 = vpop.f32.mrb[0].mxu0
        %v6991 = vpop.f32.mrb[0].mxu0
        %v6992 = vadd.f32 %v6831, %v6991
        %v6993 = vpop.f32.mrb[0].mxu0
        %6994 = vmatprep.mubr.bf16.mxu0 0
        %6995 = vmatmul.mubr.bf16.gmra.mrb[0].mxu0 %v6496
        %v6996 = vpop.f32.mrb[0].mxu0
        %v6997 = vadd.f32 %v6836, %v6996
        %v6998 = vpop.f32.mrb[0].mxu0
        %v6999 = vpop.f32.mrb[0].mxu0
        %v7000 = vadd.f32 %v6839, %v6999
        %v7001 = vpop.f32.mrb[0].mxu0
        %7002 = vmatprep.mubr.bf16.mxu0 0
        %7003 = vmatmul.mubr.bf16.gmra.mrb[0].mxu0 %v6499
        %v7004 = vpop.f32.mrb[0].mxu0
        %v7005 = vadd.f32 %v6844, %v7004
        %v7006 = vpop.f32.mrb[0].mxu0
        %v7007 = vpop.f32.mrb[0].mxu0
        %v7008 = vadd.f32 %v6847, %v7007
        %v7009 = vpop.f32.mrb[0].mxu0
        %7010 = vmatprep.mubr.bf16.mxu0 0
        %7011 = vmatmul.mubr.bf16.gmra.mrb[0].mxu0 %v6502
        %v7012 = vpop.f32.mrb[0].mxu0
        %v7013 = vadd.f32 %v6852, %v7012
        %v7014 = vpop.f32.mrb[0].mxu0
        %v7015 = vpop.f32.mrb[0].mxu0
        %v7016 = vadd.f32 %v6855, %v7015
        %v7017 = vpop.f32.mrb[0].mxu0
        %7018 = vmatprep.mubr.bf16.mxu0 0
        %7019 = vmatmul.mubr.bf16.gmra.mrb[0].mxu0 %v6505
        %v7020 = vpop.f32.mrb[0].mxu0
        %v7021 = vadd.f32 %v6860, %v7020
        %v7022 = vpop.f32.mrb[0].mxu0
        %v7023 = vpop.f32.mrb[0].mxu0
        %v7024 = vadd.f32 %v6863, %v7023
        %v7025 = vpop.f32.mrb[0].mxu0
        %7026 = vmatprep.mubr.bf16.mxu0 0
        %7027 = vmatmul.mubr.bf16.gmra.mrb[0].mxu0 %v6508
        %v7028 = vpop.f32.mrb[0].mxu0
        %v7029 = vadd.f32 %v6868, %v7028
        %v7030 = vpop.f32.mrb[0].mxu0
        %v7031 = vpop.f32.mrb[0].mxu0
        %v7032 = vadd.f32 %v6871, %v7031
        %v7033 = vpop.f32.mrb[0].mxu0
        %7034 = vmatprep.mubr.bf16.mxu0 0
        %7035 = vmatmul.mubr.bf16.gmra.mrb[0].mxu0 %v6511
        %v7036 = vpop.f32.mrb[0].mxu0
        %v7037 = vadd.f32 %v6876, %v7036
        %v7038 = vpop.f32.mrb[0].mxu0
        %v7039 = vpop.f32.mrb[0].mxu0
        %v7040 = vadd.f32 %v6879, %v7039
        %v7041 = vpop.f32.mrb[0].mxu0
        %7042 = vmatprep.mubr.bf16.mxu0 0
        %7043 = vmatmul.mubr.bf16.gmra.mrb[0].mxu0 %v6514
        %v7044 = vpop.f32.mrb[0].mxu0
        %v7045 = vadd.f32 %v6884, %v7044
        %v7046 = vpop.f32.mrb[0].mxu0
        %v7047 = vpop.f32.mrb[0].mxu0
        %v7048 = vadd.f32 %v6887, %v7047
        %v7049 = vpop.f32.mrb[0].mxu0
        %7050 = vmatprep.mubr.bf16.mxu0 0
        %7051 = vmatmul.mubr.bf16.gmra.mrb[0].mxu0 %v6517
        %v7052 = vpop.f32.mrb[0].mxu0
        %v7053 = vadd.f32 %v6892, %v7052
        %v7054 = vpop.f32.mrb[0].mxu0
        %v7055 = vpop.f32.mrb[0].mxu0
        %v7056 = vadd.f32 %v6895, %v7055
        %v7057 = vpop.f32.mrb[0].mxu0
        %7058 = vmatprep.mubr.bf16.mxu0 0
        %7059 = vmatmul.mubr.bf16.gmra.mrb[0].mxu0 %v6520
        %v7060 = vpop.f32.mrb[0].mxu0
        %v7061 = vadd.f32 %v6900, %v7060
        %v7062 = vpop.f32.mrb[0].mxu0
        %v7063 = vpop.f32.mrb[0].mxu0
        %v7064 = vadd.f32 %v6903, %v7063
        %v7065 = vpop.f32.mrb[0].mxu0
        %7066 = vmatprep.mubr.bf16.mxu0 0
        %7067 = vmatmul.mubr.bf16.gmra.mrb[0].mxu0 %v6523
        %v7068 = vpop.f32.mrb[0].mxu0
        %v7069 = vadd.f32 %v6908, %v7068
        %v7070 = vpop.f32.mrb[0].mxu0
        %v7071 = vpop.f32.mrb[0].mxu0
        %v7072 = vadd.f32 %v6911, %v7071
        %v7073 = vpop.f32.mrb[0].mxu0
        %7074 = vmatprep.mubr.bf16.mxu0 0
        %7075 = vmatmul.mubr.bf16.gmra.mrb[0].mxu0 %v6526
        %v7076 = vpop.f32.mrb[0].mxu0
        %v7077 = vadd.f32 %v6916, %v7076
        %v7078 = vpop.f32.mrb[0].mxu0
        %v7079 = vpop.f32.mrb[0].mxu0
        %v7080 = vadd.f32 %v6919, %v7079
        %v7081 = vpop.f32.mrb[0].mxu0
        %7082 = vmatprep.mubr.bf16.mxu0 0
        %7083 = vmatmul.mubr.bf16.gmra.mrb[0].mxu0 %v6529
        %v7084 = vpop.f32.mrb[0].mxu0
        %v7085 = vadd.f32 %v6924, %v7084
        %v7086 = vpop.f32.mrb[0].mxu0
        %v7087 = vpop.f32.mrb[0].mxu0
        %v7088 = vadd.f32 %v6927, %v7087
        %v7089 = vpop.f32.mrb[0].mxu0
        %7090 = vmatprep.mubr.bf16.mxu0 0
        %7091 = vmatmul.mubr.bf16.gmra.mrb[0].mxu0 %v6532
        %v7092 = vpop.f32.mrb[0].mxu0
        %v7093 = vadd.f32 %v6932, %v7092
        %v7094 = vpop.f32.mrb[0].mxu0
        %v7095 = vpop.f32.mrb[0].mxu0
        %v7096 = vadd.f32 %v6935, %v7095
        %v7097 = vpop.f32.mrb[0].mxu0
        %7098 = vdwg.mxu0
        %v7147 = vunpack.c.l.b16 %v6537
        %v7148 = vunpack.c.l.b16 %v6538
        %v7149 = vunpack.c.l.b16 %v6539
        %v7150 = vunpack.c.l.b16 %v6540
        %v7151 = vunpack.c.l.b16 %v6541
        %v7152 = vunpack.c.l.b16 %v6542
        %v7153 = vunpack.c.l.b16 %v6543
        %v7154 = vunpack.c.l.b16 %v6544
        %v7155 = vunpack.c.l.b16 %v6545
        %v7156 = vunpack.c.l.b16 %v6546
        %v7157 = vunpack.c.l.b16 %v6547
        %v7158 = vunpack.c.l.b16 %v6548
        %v7159 = vunpack.c.l.b16 %v6549
        %v7160 = vunpack.c.l.b16 %v6550
        %v7161 = vunpack.c.l.b16 %v6551
        %v7162 = vunpack.c.l.b16 %v6552
        %v7163 = vunpack.c.l.b16 %v6553
        %v7164 = vunpack.c.l.b16 %v6554
        %v7165 = vunpack.c.l.b16 %v6555
        %v7166 = vunpack.c.l.b16 %v6556
        %v7167 = vunpack.c.l.b16 %v6557
        %v7168 = vunpack.c.l.b16 %v6558
        %v7169 = vunpack.c.l.b16 %v6559
        %v7170 = vunpack.c.l.b16 %v6560
        %v7171 = vunpack.c.l.b16 %v6561
        %v7172 = vunpack.c.l.b16 %v6562
        %v7173 = vunpack.c.l.b16 %v6563
        %v7174 = vunpack.c.l.b16 %v6564
        %v7175 = vunpack.c.l.b16 %v6565
        %v7176 = vunpack.c.l.b16 %v6566
        %v7177 = vunpack.c.l.b16 %v6567
        %v7178 = vunpack.c.l.b16 %v6568
        %v7179 = vunpack.c.l.b16 %v6569
        %v7180 = vunpack.c.l.b16 %v6570
        %v7181 = vunpack.c.l.b16 %v6571
        %v7182 = vunpack.c.l.b16 %v6572
        %v7183 = vunpack.c.l.b16 %v6573
        %v7184 = vunpack.c.l.b16 %v6574
        %v7185 = vunpack.c.l.b16 %v6575
        %v7186 = vunpack.c.l.b16 %v6576
        %v7187 = vunpack.c.l.b16 %v6577
        %v7188 = vunpack.c.l.b16 %v6578
        %v7189 = vunpack.c.l.b16 %v6579
        %v7190 = vunpack.c.l.b16 %v6580
        %v7191 = vunpack.c.l.b16 %v6581
        %v7192 = vunpack.c.l.b16 %v6582
        %v7193 = vunpack.c.l.b16 %v6583
        %v7194 = vunpack.c.l.b16 %v6584
        %v7195 = vpack.c.b16 %v7148, %v7147
        %v7196 = vpack.c.b16 %v7150, %v7149
        %v7197 = vpack.c.b16 %v7152, %v7151
        %v7198 = vpack.c.b16 %v7154, %v7153
        %v7199 = vpack.c.b16 %v7156, %v7155
        %v7200 = vpack.c.b16 %v7158, %v7157
        %v7201 = vpack.c.b16 %v7160, %v7159
        %v7202 = vpack.c.b16 %v7162, %v7161
        %v7203 = vpack.c.b16 %v7164, %v7163
        %v7204 = vpack.c.b16 %v7166, %v7165
        %v7205 = vpack.c.b16 %v7168, %v7167
        %v7206 = vpack.c.b16 %v7170, %v7169
        %v7207 = vpack.c.b16 %v7172, %v7171
        %v7208 = vpack.c.b16 %v7174, %v7173
        %v7209 = vpack.c.b16 %v7176, %v7175
        %v7210 = vpack.c.b16 %v7178, %v7177
        %v7211 = vpack.c.b16 %v7180, %v7179
        %v7212 = vpack.c.b16 %v7182, %v7181
        %v7213 = vpack.c.b16 %v7184, %v7183
        %v7214 = vpack.c.b16 %v7186, %v7185
        %v7215 = vpack.c.b16 %v7188, %v7187
        %v7216 = vpack.c.b16 %v7190, %v7189
        %v7217 = vpack.c.b16 %v7192, %v7191
        %v7218 = vpack.c.b16 %v7194, %v7193
        %7243 = vmatprep.subr.bf16.mxu0 0
        %7244 = vmatpush1.bf16.msra.mxu0 %v7195
        %7245 = vmatprep.subr.bf16.mxu0 0
        %7246 = vmatpush1.bf16.msra.mxu0 %v7196
        %7247 = vmatprep.subr.bf16.mxu0 0
        %7248 = vmatpush1.bf16.msra.mxu0 %v7197
        %7249 = vmatprep.subr.bf16.mxu0 0
        %7250 = vmatpush1.bf16.msra.mxu0 %v7198
        %7251 = vmatprep.subr.bf16.mxu0 0
        %7252 = vmatpush1.bf16.msra.mxu0 %v7199
        %7253 = vmatprep.subr.bf16.mxu0 0
        %7254 = vmatpush1.bf16.msra.mxu0 %v7200
        %7255 = vmatprep.subr.bf16.mxu0 0
        %7256 = vmatpush1.bf16.msra.mxu0 %v7201
        %7257 = vmatprep.subr.bf16.mxu0 0
        %7258 = vmatpush1.bf16.msra.mxu0 %v7202
        %7259 = vmatprep.subr.bf16.mxu0 0
        %7260 = vmatpush1.bf16.msra.mxu0 %v7203
        %7261 = vmatprep.subr.bf16.mxu0 0
        %7262 = vmatpush1.bf16.msra.mxu0 %v7204
        %7263 = vmatprep.subr.bf16.mxu0 0
        %7264 = vmatpush1.bf16.msra.mxu0 %v7205
        %7265 = vmatprep.subr.bf16.mxu0 0
        %7266 = vmatpush1.bf16.msra.mxu0 %v7206
        %7267 = vmatprep.subr.bf16.mxu0 0
        %7268 = vmatpush1.bf16.msra.mxu0 %v7207
        %7269 = vmatprep.subr.bf16.mxu0 0
        %7270 = vmatpush1.bf16.msra.mxu0 %v7208
        %7271 = vmatprep.subr.bf16.mxu0 0
        %7272 = vmatpush1.bf16.msra.mxu0 %v7209
        %7273 = vmatprep.subr.bf16.mxu0 0
        %7274 = vmatpush1.bf16.msra.mxu0 %v7210
        %7275 = vmatprep.mubr.bf16.mxu0 %v6483
        %7276 = vmatmul.mubr.bf16.gmra.mrb[0].mxu0 %v6482
        %v7277 = vpop.f32.mrb[0].mxu0
        %v7278 = vadd.f32 %v6973, %v7277
        %v7279 = vpop.f32.mrb[0].mxu0
        %v7280 = vpop.f32.mrb[0].mxu0
        %v7281 = vadd.f32 %v6976, %v7280
        %v7282 = vpop.f32.mrb[0].mxu0
        %7283 = vmatprep.mubr.bf16.mxu0 %v6486
        %7284 = vmatmul.mubr.bf16.gmra.mrb[0].mxu0 %v6485
        %v7285 = vpop.f32.mrb[0].mxu0
        %v7286 = vadd.f32 %v6981, %v7285
        %v7287 = vpop.f32.mrb[0].mxu0
        %v7288 = vpop.f32.mrb[0].mxu0
        %v7289 = vadd.f32 %v6984, %v7288
        %v7290 = vpop.f32.mrb[0].mxu0
        %7291 = vmatprep.mubr.bf16.mxu0 %v6489
        %7292 = vmatmul.mubr.bf16.gmra.mrb[0].mxu0 %v6488
        %v7293 = vpop.f32.mrb[0].mxu0
        %v7294 = vadd.f32 %v6989, %v7293
        %v7295 = vpop.f32.mrb[0].mxu0
        %v7296 = vpop.f32.mrb[0].mxu0
        %v7297 = vadd.f32 %v6992, %v7296
        %v7298 = vpop.f32.mrb[0].mxu0
        %7299 = vmatprep.mubr.bf16.mxu0 %v6492
        %7300 = vmatmul.mubr.bf16.gmra.mrb[0].mxu0 %v6491
        %v7301 = vpop.f32.mrb[0].mxu0
        %v7302 = vadd.f32 %v6997, %v7301
        %v7303 = vpop.f32.mrb[0].mxu0
        %v7304 = vpop.f32.mrb[0].mxu0
        %v7305 = vadd.f32 %v7000, %v7304
        %v7306 = vpop.f32.mrb[0].mxu0
        %7307 = vmatprep.mubr.bf16.mxu0 %v6495
        %7308 = vmatmul.mubr.bf16.gmra.mrb[0].mxu0 %v6494
        %v7309 = vpop.f32.mrb[0].mxu0
        %v7310 = vadd.f32 %v7005, %v7309
        %v7311 = vpop.f32.mrb[0].mxu0
        %v7312 = vpop.f32.mrb[0].mxu0
        %v7313 = vadd.f32 %v7008, %v7312
        %v7314 = vpop.f32.mrb[0].mxu0
        %7315 = vmatprep.mubr.bf16.mxu0 %v6498
        %7316 = vmatmul.mubr.bf16.gmra.mrb[0].mxu0 %v6497
        %v7317 = vpop.f32.mrb[0].mxu0
        %v7318 = vadd.f32 %v7013, %v7317
        %v7319 = vpop.f32.mrb[0].mxu0
        %v7320 = vpop.f32.mrb[0].mxu0
        %v7321 = vadd.f32 %v7016, %v7320
        %v7322 = vpop.f32.mrb[0].mxu0
        %7323 = vmatprep.mubr.bf16.mxu0 %v6501
        %7324 = vmatmul.mubr.bf16.gmra.mrb[0].mxu0 %v6500
        %v7325 = vpop.f32.mrb[0].mxu0
        %v7326 = vadd.f32 %v7021, %v7325
        %v7327 = vpop.f32.mrb[0].mxu0
        %v7328 = vpop.f32.mrb[0].mxu0
        %v7329 = vadd.f32 %v7024, %v7328
        %v7330 = vpop.f32.mrb[0].mxu0
        %7331 = vmatprep.mubr.bf16.mxu0 %v6504
        %7332 = vmatmul.mubr.bf16.gmra.mrb[0].mxu0 %v6503
        %v7333 = vpop.f32.mrb[0].mxu0
        %v7334 = vadd.f32 %v7029, %v7333
        %v7335 = vpop.f32.mrb[0].mxu0
        %v7336 = vpop.f32.mrb[0].mxu0
        %v7337 = vadd.f32 %v7032, %v7336
        %v7338 = vpop.f32.mrb[0].mxu0
        %7339 = vmatprep.mubr.bf16.mxu0 %v6507
        %7340 = vmatmul.mubr.bf16.gmra.mrb[0].mxu0 %v6506
        %v7341 = vpop.f32.mrb[0].mxu0
        %v7342 = vadd.f32 %v7037, %v7341
        %v7343 = vpop.f32.mrb[0].mxu0
        %v7344 = vpop.f32.mrb[0].mxu0
        %v7345 = vadd.f32 %v7040, %v7344
        %v7346 = vpop.f32.mrb[0].mxu0
        %7347 = vmatprep.mubr.bf16.mxu0 %v6510
        %7348 = vmatmul.mubr.bf16.gmra.mrb[0].mxu0 %v6509
        %v7349 = vpop.f32.mrb[0].mxu0
        %v7350 = vadd.f32 %v7045, %v7349
        %v7351 = vpop.f32.mrb[0].mxu0
        %v7352 = vpop.f32.mrb[0].mxu0
        %v7353 = vadd.f32 %v7048, %v7352
        %v7354 = vpop.f32.mrb[0].mxu0
        %7355 = vmatprep.mubr.bf16.mxu0 %v6513
        %7356 = vmatmul.mubr.bf16.gmra.mrb[0].mxu0 %v6512
        %v7357 = vpop.f32.mrb[0].mxu0
        %v7358 = vadd.f32 %v7053, %v7357
        %v7359 = vpop.f32.mrb[0].mxu0
        %v7360 = vpop.f32.mrb[0].mxu0
        %v7361 = vadd.f32 %v7056, %v7360
        %v7362 = vpop.f32.mrb[0].mxu0
        %7363 = vmatprep.mubr.bf16.mxu0 %v6516
        %7364 = vmatmul.mubr.bf16.gmra.mrb[0].mxu0 %v6515
        %v7365 = vpop.f32.mrb[0].mxu0
        %v7366 = vadd.f32 %v7061, %v7365
        %v7367 = vpop.f32.mrb[0].mxu0
        %v7368 = vpop.f32.mrb[0].mxu0
        %v7369 = vadd.f32 %v7064, %v7368
        %v7370 = vpop.f32.mrb[0].mxu0
        %7371 = vmatprep.mubr.bf16.mxu0 %v6519
        %7372 = vmatmul.mubr.bf16.gmra.mrb[0].mxu0 %v6518
        %v7373 = vpop.f32.mrb[0].mxu0
        %v7374 = vadd.f32 %v7069, %v7373
        %v7375 = vpop.f32.mrb[0].mxu0
        %v7376 = vpop.f32.mrb[0].mxu0
        %v7377 = vadd.f32 %v7072, %v7376
        %v7378 = vpop.f32.mrb[0].mxu0
        %7379 = vmatprep.mubr.bf16.mxu0 %v6522
        %7380 = vmatmul.mubr.bf16.gmra.mrb[0].mxu0 %v6521
        %v7381 = vpop.f32.mrb[0].mxu0
        %v7382 = vadd.f32 %v7077, %v7381
        %v7383 = vpop.f32.mrb[0].mxu0
        %v7384 = vpop.f32.mrb[0].mxu0
        %v7385 = vadd.f32 %v7080, %v7384
        %v7386 = vpop.f32.mrb[0].mxu0
        %7387 = vmatprep.mubr.bf16.mxu0 %v6525
        %7388 = vmatmul.mubr.bf16.gmra.mrb[0].mxu0 %v6524
        %v7389 = vpop.f32.mrb[0].mxu0
        %v7390 = vadd.f32 %v7085, %v7389
        %v7391 = vpop.f32.mrb[0].mxu0
        %v7392 = vpop.f32.mrb[0].mxu0
        %v7393 = vadd.f32 %v7088, %v7392
        %v7394 = vpop.f32.mrb[0].mxu0
        %7395 = vmatprep.mubr.bf16.mxu0 %v6528
        %7396 = vmatmul.mubr.bf16.gmra.mrb[0].mxu0 %v6527
        %v7397 = vpop.f32.mrb[0].mxu0
        %v7398 = vadd.f32 %v7093, %v7397
        %v7399 = vpop.f32.mrb[0].mxu0
        %v7400 = vpop.f32.mrb[0].mxu0
        %v7401 = vadd.f32 %v7096, %v7400
        %v7402 = vpop.f32.mrb[0].mxu0
        %7403 = vdwg.mxu0
        %7404 = vmatprep.subr.bf16.mxu0 0
        %7405 = vmatpush1.bf16.msra.mxu0 %v7211
        %7406 = vmatprep.subr.bf16.mxu0 0
        %7407 = vmatpush1.bf16.msra.mxu0 %v7212
        %7408 = vmatprep.subr.bf16.mxu0 0
        %7409 = vmatpush1.bf16.msra.mxu0 %v7213
        %7410 = vmatprep.subr.bf16.mxu0 0
        %7411 = vmatpush1.bf16.msra.mxu0 %v7214
        %7412 = vmatprep.subr.bf16.mxu0 0
        %7413 = vmatpush1.bf16.msra.mxu0 %v7215
        %7414 = vmatprep.subr.bf16.mxu0 0
        %7415 = vmatpush1.bf16.msra.mxu0 %v7216
        %7416 = vmatprep.subr.bf16.mxu0 0
        %7417 = vmatpush1.bf16.msra.mxu0 %v7217
        %7418 = vmatprep.subr.bf16.mxu0 0
        %7419 = vmatpush1.bf16.msra.mxu0 %v7218
        %7420 = vmatprep.subr.bf16.mxu0 0
        %7421 = vmatpush1.bf16.msra.mxu0 0
        %7422 = vmatprep.subr.bf16.mxu0 0
        %7423 = vmatpush1.bf16.msra.mxu0 0
        %7424 = vmatprep.subr.bf16.mxu0 0
        %7425 = vmatpush1.bf16.msra.mxu0 0
        %7426 = vmatprep.subr.bf16.mxu0 0
        %7427 = vmatpush1.bf16.msra.mxu0 0
        %7428 = vmatprep.subr.bf16.mxu0 0
        %7429 = vmatpush1.bf16.msra.mxu0 0
        %7430 = vmatprep.subr.bf16.mxu0 0
        %7431 = vmatpush1.bf16.msra.mxu0 0
        %7432 = vmatprep.subr.bf16.mxu0 0
        %7433 = vmatpush1.bf16.msra.mxu0 0
        %7434 = vmatprep.subr.bf16.mxu0 0
        %7435 = vmatpush1.bf16.msra.mxu0 0
        %7436 = vmatprep.mubr.bf16.mxu0 0
        %7437 = vmatmul.mubr.bf16.gmra.mrb[0].mxu0 %v6484
        %v7438 = vpop.f32.mrb[0].mxu0
        %v7439 = vadd.f32 %v7278, %v7438
        %v7440 = vpop.f32.mrb[0].mxu0
        %v7441 = vpop.f32.mrb[0].mxu0
        %v7442 = vadd.f32 %v7281, %v7441
        %v7443 = vpop.f32.mrb[0].mxu0
        %7444 = vmatprep.mubr.bf16.mxu0 0
        %7445 = vmatmul.mubr.bf16.gmra.mrb[0].mxu0 %v6487
        %v7446 = vpop.f32.mrb[0].mxu0
        %v7447 = vadd.f32 %v7286, %v7446
        %v7448 = vpop.f32.mrb[0].mxu0
        %v7449 = vpop.f32.mrb[0].mxu0
        %v7450 = vadd.f32 %v7289, %v7449
        %v7451 = vpop.f32.mrb[0].mxu0
        %7452 = vmatprep.mubr.bf16.mxu0 0
        %7453 = vmatmul.mubr.bf16.gmra.mrb[0].mxu0 %v6490
        %v7454 = vpop.f32.mrb[0].mxu0
        %v7455 = vadd.f32 %v7294, %v7454
        %v7456 = vpop.f32.mrb[0].mxu0
        %v7457 = vpop.f32.mrb[0].mxu0
        %v7458 = vadd.f32 %v7297, %v7457
        %v7459 = vpop.f32.mrb[0].mxu0
        %7460 = vmatprep.mubr.bf16.mxu0 0
        %7461 = vmatmul.mubr.bf16.gmra.mrb[0].mxu0 %v6493
        %v7462 = vpop.f32.mrb[0].mxu0
        %v7463 = vadd.f32 %v7302, %v7462
        %v7464 = vpop.f32.mrb[0].mxu0
        %v7465 = vpop.f32.mrb[0].mxu0
        %v7466 = vadd.f32 %v7305, %v7465
        %v7467 = vpop.f32.mrb[0].mxu0
        %7468 = vmatprep.mubr.bf16.mxu0 0
        %7469 = vmatmul.mubr.bf16.gmra.mrb[0].mxu0 %v6496
        %v7470 = vpop.f32.mrb[0].mxu0
        %v7471 = vadd.f32 %v7310, %v7470
        %v7472 = vpop.f32.mrb[0].mxu0
        %v7473 = vpop.f32.mrb[0].mxu0
        %v7474 = vadd.f32 %v7313, %v7473
        %v7475 = vpop.f32.mrb[0].mxu0
        %7476 = vmatprep.mubr.bf16.mxu0 0
        %7477 = vmatmul.mubr.bf16.gmra.mrb[0].mxu0 %v6499
        %v7478 = vpop.f32.mrb[0].mxu0
        %v7479 = vadd.f32 %v7318, %v7478
        %v7480 = vpop.f32.mrb[0].mxu0
        %v7481 = vpop.f32.mrb[0].mxu0
        %v7482 = vadd.f32 %v7321, %v7481
        %v7483 = vpop.f32.mrb[0].mxu0
        %7484 = vmatprep.mubr.bf16.mxu0 0
        %7485 = vmatmul.mubr.bf16.gmra.mrb[0].mxu0 %v6502
        %v7486 = vpop.f32.mrb[0].mxu0
        %v7487 = vadd.f32 %v7326, %v7486
        %v7488 = vpop.f32.mrb[0].mxu0
        %v7489 = vpop.f32.mrb[0].mxu0
        %v7490 = vadd.f32 %v7329, %v7489
        %v7491 = vpop.f32.mrb[0].mxu0
        %7492 = vmatprep.mubr.bf16.mxu0 0
        %7493 = vmatmul.mubr.bf16.gmra.mrb[0].mxu0 %v6505
        %v7494 = vpop.f32.mrb[0].mxu0
        %v7495 = vadd.f32 %v7334, %v7494
        %v7496 = vpop.f32.mrb[0].mxu0
        %v7497 = vpop.f32.mrb[0].mxu0
        %v7498 = vadd.f32 %v7337, %v7497
        %v7499 = vpop.f32.mrb[0].mxu0
        %7500 = vmatprep.mubr.bf16.mxu0 0
        %7501 = vmatmul.mubr.bf16.gmra.mrb[0].mxu0 %v6508
        %v7502 = vpop.f32.mrb[0].mxu0
        %v7503 = vadd.f32 %v7342, %v7502
        %v7504 = vpop.f32.mrb[0].mxu0
        %v7505 = vpop.f32.mrb[0].mxu0
        %v7506 = vadd.f32 %v7345, %v7505
        %v7507 = vpop.f32.mrb[0].mxu0
        %7508 = vmatprep.mubr.bf16.mxu0 0
        %7509 = vmatmul.mubr.bf16.gmra.mrb[0].mxu0 %v6511
        %v7510 = vpop.f32.mrb[0].mxu0
        %v7511 = vadd.f32 %v7350, %v7510
        %v7512 = vpop.f32.mrb[0].mxu0
        %v7513 = vpop.f32.mrb[0].mxu0
        %v7514 = vadd.f32 %v7353, %v7513
        %v7515 = vpop.f32.mrb[0].mxu0
        %7516 = vmatprep.mubr.bf16.mxu0 0
        %7517 = vmatmul.mubr.bf16.gmra.mrb[0].mxu0 %v6514
        %v7518 = vpop.f32.mrb[0].mxu0
        %v7519 = vadd.f32 %v7358, %v7518
        %v7520 = vpop.f32.mrb[0].mxu0
        %v7521 = vpop.f32.mrb[0].mxu0
        %v7522 = vadd.f32 %v7361, %v7521
        %v7523 = vpop.f32.mrb[0].mxu0
        %7524 = vmatprep.mubr.bf16.mxu0 0
        %7525 = vmatmul.mubr.bf16.gmra.mrb[0].mxu0 %v6517
        %v7526 = vpop.f32.mrb[0].mxu0
        %v7527 = vadd.f32 %v7366, %v7526
        %v7528 = vpop.f32.mrb[0].mxu0
        %v7529 = vpop.f32.mrb[0].mxu0
        %v7530 = vadd.f32 %v7369, %v7529
        %v7531 = vpop.f32.mrb[0].mxu0
        %7532 = vmatprep.mubr.bf16.mxu0 0
        %7533 = vmatmul.mubr.bf16.gmra.mrb[0].mxu0 %v6520
        %v7534 = vpop.f32.mrb[0].mxu0
        %v7535 = vadd.f32 %v7374, %v7534
        %v7536 = vpop.f32.mrb[0].mxu0
        %v7537 = vpop.f32.mrb[0].mxu0
        %v7538 = vadd.f32 %v7377, %v7537
        %v7539 = vpop.f32.mrb[0].mxu0
        %7540 = vmatprep.mubr.bf16.mxu0 0
        %7541 = vmatmul.mubr.bf16.gmra.mrb[0].mxu0 %v6523
        %v7542 = vpop.f32.mrb[0].mxu0
        %v7543 = vadd.f32 %v7382, %v7542
        %v7544 = vpop.f32.mrb[0].mxu0
        %v7545 = vpop.f32.mrb[0].mxu0
        %v7546 = vadd.f32 %v7385, %v7545
        %v7547 = vpop.f32.mrb[0].mxu0
        %7548 = vmatprep.mubr.bf16.mxu0 0
        %7549 = vmatmul.mubr.bf16.gmra.mrb[0].mxu0 %v6526
        %v7550 = vpop.f32.mrb[0].mxu0
        %v7551 = vadd.f32 %v7390, %v7550
        %v7552 = vpop.f32.mrb[0].mxu0
        %v7553 = vpop.f32.mrb[0].mxu0
        %v7554 = vadd.f32 %v7393, %v7553
        %v7555 = vpop.f32.mrb[0].mxu0
        %7556 = vmatprep.mubr.bf16.mxu0 0
        %7557 = vmatmul.mubr.bf16.gmra.mrb[0].mxu0 %v6529
        %v7558 = vpop.f32.mrb[0].mxu0
        %v7559 = vadd.f32 %v7398, %v7558
        %v7560 = vpop.f32.mrb[0].mxu0
        %v7561 = vpop.f32.mrb[0].mxu0
        %v7562 = vadd.f32 %v7401, %v7561
        %v7563 = vpop.f32.mrb[0].mxu0
        %7564 = vdwg.mxu0
        %v7565 = vld [vmem:[%s6536 + $0x8] sm:$0xf]
        %v7566 = vld [vmem:[%s6536 + $0x14] sm:$0xf]
        %v7567 = vld [vmem:[%s6536 + $0x20] sm:$0xf]
        %v7568 = vld [vmem:[%s6536 + $0x2c] sm:$0xf]
        %v7569 = vld [vmem:[%s6536 + $0x38] sm:$0xf]
        %v7570 = vld [vmem:[%s6536 + $0x44] sm:$0xf]
        %v7571 = vld [vmem:[%s6536 + $0x50] sm:$0xf]
        %v7572 = vld [vmem:[%s6536 + $0x5c] sm:$0xf]
        %v7573 = vld [vmem:[%s6536 + $0x68] sm:$0xf]
        %v7574 = vld [vmem:[%s6536 + $0x74] sm:$0xf]
        %v7575 = vld [vmem:[%s6536 + $0x80] sm:$0xf]
        %v7576 = vld [vmem:[%s6536 + $0x8c] sm:$0xf]
        %v7577 = vld [vmem:[%s6536 + $0x98] sm:$0xf]
        %v7578 = vld [vmem:[%s6536 + $0xa4] sm:$0xf]
        %v7579 = vld [vmem:[%s6536 + $0xb0] sm:$0xf]
        %v7580 = vld [vmem:[%s6536 + $0xbc] sm:$0xf]
        %v7581 = vld [vmem:[%s6536 + $0xc8] sm:$0xf]
        %v7582 = vld [vmem:[%s6536 + $0xd4] sm:$0xf]
        %v7583 = vld [vmem:[%s6536 + $0xe0] sm:$0xf]
        %v7584 = vld [vmem:[%s6536 + $0xec] sm:$0xf]
        %v7585 = vld [vmem:[%s6536 + $0xf8] sm:$0xf]
        %v7586 = vld [vmem:[%s6536 + $0x104] sm:$0xf]
        %v7587 = vld [vmem:[%s6536 + $0x110] sm:$0xf]
        %v7588 = vld [vmem:[%s6536 + $0x11c] sm:$0xf]
        %v7589 = vld [vmem:[%s6536 + $0x128] sm:$0xf]
        %v7590 = vld [vmem:[%s6536 + $0x134] sm:$0xf]
        %v7591 = vld [vmem:[%s6536 + $0x140] sm:$0xf]
        %v7592 = vld [vmem:[%s6536 + $0x14c] sm:$0xf]
        %v7593 = vld [vmem:[%s6536 + $0x158] sm:$0xf]
        %v7594 = vld [vmem:[%s6536 + $0x164] sm:$0xf]
        %v7595 = vld [vmem:[%s6536 + $0x170] sm:$0xf]
        %v7596 = vld [vmem:[%s6536 + $0x17c] sm:$0xf]
        %v7597 = vld [vmem:[%s6536 + $0x188] sm:$0xf]
        %v7598 = vld [vmem:[%s6536 + $0x194] sm:$0xf]
        %v7599 = vld [vmem:[%s6536 + $0x1a0] sm:$0xf]
        %v7600 = vld [vmem:[%s6536 + $0x1ac] sm:$0xf]
        %v7601 = vld [vmem:[%s6536 + $0x1b8] sm:$0xf]
        %v7602 = vld [vmem:[%s6536 + $0x1c4] sm:$0xf]
        %v7603 = vld [vmem:[%s6536 + $0x1d0] sm:$0xf]
        %v7604 = vld [vmem:[%s6536 + $0x1dc] sm:$0xf]
        %v7605 = vld [vmem:[%s6536 + $0x1e8] sm:$0xf]
        %v7606 = vld [vmem:[%s6536 + $0x1f4] sm:$0xf]
        %v7607 = vld [vmem:[%s6536 + $0x200] sm:$0xf]
        %v7608 = vld [vmem:[%s6536 + $0x20c] sm:$0xf]
        %v7609 = vld [vmem:[%s6536 + $0x218] sm:$0xf]
        %v7610 = vld [vmem:[%s6536 + $0x224] sm:$0xf]
        %v7611 = vld [vmem:[%s6536 + $0x230] sm:$0xf]
        %v7612 = vld [vmem:[%s6536 + $0x23c] sm:$0xf]
        %v7661 = vunpack.c.l.b16 %v7565
        %v7662 = vunpack.c.l.b16 %v7566
        %v7663 = vunpack.c.l.b16 %v7567
        %v7664 = vunpack.c.l.b16 %v7568
        %v7665 = vunpack.c.l.b16 %v7569
        %v7666 = vunpack.c.l.b16 %v7570
        %v7667 = vunpack.c.l.b16 %v7571
        %v7668 = vunpack.c.l.b16 %v7572
        %v7669 = vunpack.c.l.b16 %v7573
        %v7670 = vunpack.c.l.b16 %v7574
        %v7671 = vunpack.c.l.b16 %v7575
        %v7672 = vunpack.c.l.b16 %v7576
        %v7673 = vunpack.c.l.b16 %v7577
        %v7674 = vunpack.c.l.b16 %v7578
        %v7675 = vunpack.c.l.b16 %v7579
        %v7676 = vunpack.c.l.b16 %v7580
        %v7677 = vunpack.c.l.b16 %v7581
        %v7678 = vunpack.c.l.b16 %v7582
        %v7679 = vunpack.c.l.b16 %v7583
        %v7680 = vunpack.c.l.b16 %v7584
        %v7681 = vunpack.c.l.b16 %v7585
        %v7682 = vunpack.c.l.b16 %v7586
        %v7683 = vunpack.c.l.b16 %v7587
        %v7684 = vunpack.c.l.b16 %v7588
        %v7685 = vunpack.c.l.b16 %v7589
        %v7686 = vunpack.c.l.b16 %v7590
        %v7687 = vunpack.c.l.b16 %v7591
        %v7688 = vunpack.c.l.b16 %v7592
        %v7689 = vunpack.c.l.b16 %v7593
        %v7690 = vunpack.c.l.b16 %v7594
        %v7691 = vunpack.c.l.b16 %v7595
        %v7692 = vunpack.c.l.b16 %v7596
        %v7693 = vunpack.c.l.b16 %v7597
        %v7694 = vunpack.c.l.b16 %v7598
        %v7695 = vunpack.c.l.b16 %v7599
        %v7696 = vunpack.c.l.b16 %v7600
        %v7697 = vunpack.c.l.b16 %v7601
        %v7698 = vunpack.c.l.b16 %v7602
        %v7699 = vunpack.c.l.b16 %v7603
        %v7700 = vunpack.c.l.b16 %v7604
        %v7701 = vunpack.c.l.b16 %v7605
        %v7702 = vunpack.c.l.b16 %v7606
        %v7703 = vunpack.c.l.b16 %v7607
        %v7704 = vunpack.c.l.b16 %v7608
        %v7705 = vunpack.c.l.b16 %v7609
        %v7706 = vunpack.c.l.b16 %v7610
        %v7707 = vunpack.c.l.b16 %v7611
        %v7708 = vunpack.c.l.b16 %v7612
        %v7709 = vpack.c.b16 %v7662, %v7661
        %v7710 = vpack.c.b16 %v7664, %v7663
        %v7711 = vpack.c.b16 %v7666, %v7665
        %v7712 = vpack.c.b16 %v7668, %v7667
        %v7713 = vpack.c.b16 %v7670, %v7669
        %v7714 = vpack.c.b16 %v7672, %v7671
        %v7715 = vpack.c.b16 %v7674, %v7673
        %v7716 = vpack.c.b16 %v7676, %v7675
        %v7717 = vpack.c.b16 %v7678, %v7677
        %v7718 = vpack.c.b16 %v7680, %v7679
        %v7719 = vpack.c.b16 %v7682, %v7681
        %v7720 = vpack.c.b16 %v7684, %v7683
        %v7721 = vpack.c.b16 %v7686, %v7685
        %v7722 = vpack.c.b16 %v7688, %v7687
        %v7723 = vpack.c.b16 %v7690, %v7689
        %v7724 = vpack.c.b16 %v7692, %v7691
        %v7725 = vpack.c.b16 %v7694, %v7693
        %v7726 = vpack.c.b16 %v7696, %v7695
        %v7727 = vpack.c.b16 %v7698, %v7697
        %v7728 = vpack.c.b16 %v7700, %v7699
        %v7729 = vpack.c.b16 %v7702, %v7701
        %v7730 = vpack.c.b16 %v7704, %v7703
        %v7731 = vpack.c.b16 %v7706, %v7705
        %v7732 = vpack.c.b16 %v7708, %v7707
        %7757 = vmatprep.subr.bf16.mxu0 0
        %7758 = vmatpush1.bf16.msra.mxu0 %v7709
        %7759 = vmatprep.subr.bf16.mxu0 0
        %7760 = vmatpush1.bf16.msra.mxu0 %v7710
        %7761 = vmatprep.subr.bf16.mxu0 0
        %7762 = vmatpush1.bf16.msra.mxu0 %v7711
        %7763 = vmatprep.subr.bf16.mxu0 0
        %7764 = vmatpush1.bf16.msra.mxu0 %v7712
        %7765 = vmatprep.subr.bf16.mxu0 0
        %7766 = vmatpush1.bf16.msra.mxu0 %v7713
        %7767 = vmatprep.subr.bf16.mxu0 0
        %7768 = vmatpush1.bf16.msra.mxu0 %v7714
        %7769 = vmatprep.subr.bf16.mxu0 0
        %7770 = vmatpush1.bf16.msra.mxu0 %v7715
        %7771 = vmatprep.subr.bf16.mxu0 0
        %7772 = vmatpush1.bf16.msra.mxu0 %v7716
        %7773 = vmatprep.subr.bf16.mxu0 0
        %7774 = vmatpush1.bf16.msra.mxu0 %v7717
        %7775 = vmatprep.subr.bf16.mxu0 0
        %7776 = vmatpush1.bf16.msra.mxu0 %v7718
        %7777 = vmatprep.subr.bf16.mxu0 0
        %7778 = vmatpush1.bf16.msra.mxu0 %v7719
        %7779 = vmatprep.subr.bf16.mxu0 0
        %7780 = vmatpush1.bf16.msra.mxu0 %v7720
        %7781 = vmatprep.subr.bf16.mxu0 0
        %7782 = vmatpush1.bf16.msra.mxu0 %v7721
        %7783 = vmatprep.subr.bf16.mxu0 0
        %7784 = vmatpush1.bf16.msra.mxu0 %v7722
        %7785 = vmatprep.subr.bf16.mxu0 0
        %7786 = vmatpush1.bf16.msra.mxu0 %v7723
        %7787 = vmatprep.subr.bf16.mxu0 0
        %7788 = vmatpush1.bf16.msra.mxu0 %v7724
        %7789 = vmatprep.mubr.bf16.mxu0 %v6489
        %7790 = vmatmul.mubr.bf16.gmra.mrb[0].mxu0 %v6488
        %v7791 = vpop.f32.mrb[0].mxu0
        %v7792 = vadd.f32 0.0, %v7791
        %v7793 = vpop.f32.mrb[0].mxu0
        %v7794 = vpop.f32.mrb[0].mxu0
        %v7795 = vadd.f32 0.0, %v7794
        %v7796 = vpop.f32.mrb[0].mxu0
        %7797 = vmatprep.mubr.bf16.mxu0 %v6492
        %7798 = vmatmul.mubr.bf16.gmra.mrb[0].mxu0 %v6491
        %v7799 = vpop.f32.mrb[0].mxu0
        %v7800 = vadd.f32 0.0, %v7799
        %v7801 = vpop.f32.mrb[0].mxu0
        %v7802 = vpop.f32.mrb[0].mxu0
        %v7803 = vadd.f32 0.0, %v7802
        %v7804 = vpop.f32.mrb[0].mxu0
        %7805 = vmatprep.mubr.bf16.mxu0 %v6495
        %7806 = vmatmul.mubr.bf16.gmra.mrb[0].mxu0 %v6494
        %v7807 = vpop.f32.mrb[0].mxu0
        %v7808 = vadd.f32 0.0, %v7807
        %v7809 = vpop.f32.mrb[0].mxu0
        %v7810 = vpop.f32.mrb[0].mxu0
        %v7811 = vadd.f32 0.0, %v7810
        %v7812 = vpop.f32.mrb[0].mxu0
        %7813 = vmatprep.mubr.bf16.mxu0 %v6498
        %7814 = vmatmul.mubr.bf16.gmra.mrb[0].mxu0 %v6497
        %v7815 = vpop.f32.mrb[0].mxu0
        %v7816 = vadd.f32 0.0, %v7815
        %v7817 = vpop.f32.mrb[0].mxu0
        %v7818 = vpop.f32.mrb[0].mxu0
        %v7819 = vadd.f32 0.0, %v7818
        %v7820 = vpop.f32.mrb[0].mxu0
        %7821 = vmatprep.mubr.bf16.mxu0 %v6501
        %7822 = vmatmul.mubr.bf16.gmra.mrb[0].mxu0 %v6500
        %v7823 = vpop.f32.mrb[0].mxu0
        %v7824 = vadd.f32 0.0, %v7823
        %v7825 = vpop.f32.mrb[0].mxu0
        %v7826 = vpop.f32.mrb[0].mxu0
        %v7827 = vadd.f32 0.0, %v7826
        %v7828 = vpop.f32.mrb[0].mxu0
        %7829 = vmatprep.mubr.bf16.mxu0 %v6504
        %7830 = vmatmul.mubr.bf16.gmra.mrb[0].mxu0 %v6503
        %v7831 = vpop.f32.mrb[0].mxu0
        %v7832 = vadd.f32 0.0, %v7831
        %v7833 = vpop.f32.mrb[0].mxu0
        %v7834 = vpop.f32.mrb[0].mxu0
        %v7835 = vadd.f32 0.0, %v7834
        %v7836 = vpop.f32.mrb[0].mxu0
        %7837 = vmatprep.mubr.bf16.mxu0 %v6507
        %7838 = vmatmul.mubr.bf16.gmra.mrb[0].mxu0 %v6506
        %v7839 = vpop.f32.mrb[0].mxu0
        %v7840 = vadd.f32 0.0, %v7839
        %v7841 = vpop.f32.mrb[0].mxu0
        %v7842 = vpop.f32.mrb[0].mxu0
        %v7843 = vadd.f32 0.0, %v7842
        %v7844 = vpop.f32.mrb[0].mxu0
        %7845 = vmatprep.mubr.bf16.mxu0 %v6510
        %7846 = vmatmul.mubr.bf16.gmra.mrb[0].mxu0 %v6509
        %v7847 = vpop.f32.mrb[0].mxu0
        %v7848 = vadd.f32 0.0, %v7847
        %v7849 = vpop.f32.mrb[0].mxu0
        %v7850 = vpop.f32.mrb[0].mxu0
        %v7851 = vadd.f32 0.0, %v7850
        %v7852 = vpop.f32.mrb[0].mxu0
        %7853 = vmatprep.mubr.bf16.mxu0 %v6513
        %7854 = vmatmul.mubr.bf16.gmra.mrb[0].mxu0 %v6512
        %v7855 = vpop.f32.mrb[0].mxu0
        %v7856 = vadd.f32 0.0, %v7855
        %v7857 = vpop.f32.mrb[0].mxu0
        %v7858 = vpop.f32.mrb[0].mxu0
        %v7859 = vadd.f32 0.0, %v7858
        %v7860 = vpop.f32.mrb[0].mxu0
        %7861 = vmatprep.mubr.bf16.mxu0 %v6516
        %7862 = vmatmul.mubr.bf16.gmra.mrb[0].mxu0 %v6515
        %v7863 = vpop.f32.mrb[0].mxu0
        %v7864 = vadd.f32 0.0, %v7863
        %v7865 = vpop.f32.mrb[0].mxu0
        %v7866 = vpop.f32.mrb[0].mxu0
        %v7867 = vadd.f32 0.0, %v7866
        %v7868 = vpop.f32.mrb[0].mxu0
        %7869 = vmatprep.mubr.bf16.mxu0 %v6519
        %7870 = vmatmul.mubr.bf16.gmra.mrb[0].mxu0 %v6518
        %v7871 = vpop.f32.mrb[0].mxu0
        %v7872 = vadd.f32 0.0, %v7871
        %v7873 = vpop.f32.mrb[0].mxu0
        %v7874 = vpop.f32.mrb[0].mxu0
        %v7875 = vadd.f32 0.0, %v7874
        %v7876 = vpop.f32.mrb[0].mxu0
        %7877 = vmatprep.mubr.bf16.mxu0 %v6522
        %7878 = vmatmul.mubr.bf16.gmra.mrb[0].mxu0 %v6521
        %v7879 = vpop.f32.mrb[0].mxu0
        %v7880 = vadd.f32 0.0, %v7879
        %v7881 = vpop.f32.mrb[0].mxu0
        %v7882 = vpop.f32.mrb[0].mxu0
        %v7883 = vadd.f32 0.0, %v7882
        %v7884 = vpop.f32.mrb[0].mxu0
        %7885 = vmatprep.mubr.bf16.mxu0 %v6525
        %7886 = vmatmul.mubr.bf16.gmra.mrb[0].mxu0 %v6524
        %v7887 = vpop.f32.mrb[0].mxu0
        %v7888 = vadd.f32 0.0, %v7887
        %v7889 = vpop.f32.mrb[0].mxu0
        %v7890 = vpop.f32.mrb[0].mxu0
        %v7891 = vadd.f32 0.0, %v7890
        %v7892 = vpop.f32.mrb[0].mxu0
        %7893 = vmatprep.mubr.bf16.mxu0 %v6528
        %7894 = vmatmul.mubr.bf16.gmra.mrb[0].mxu0 %v6527
        %v7895 = vpop.f32.mrb[0].mxu0
        %v7896 = vadd.f32 0.0, %v7895
        %v7897 = vpop.f32.mrb[0].mxu0
        %v7898 = vpop.f32.mrb[0].mxu0
        %v7899 = vadd.f32 0.0, %v7898
        %v7900 = vpop.f32.mrb[0].mxu0
        %7901 = vmatprep.mubr.bf16.mxu0 %v6531
        %7902 = vmatmul.mubr.bf16.gmra.mrb[0].mxu0 %v6530
        %v7903 = vpop.f32.mrb[0].mxu0
        %v7904 = vadd.f32 0.0, %v7903
        %v7905 = vpop.f32.mrb[0].mxu0
        %v7906 = vpop.f32.mrb[0].mxu0
        %v7907 = vadd.f32 0.0, %v7906
        %v7908 = vpop.f32.mrb[0].mxu0
        %7909 = vmatprep.mubr.bf16.mxu0 %v6534
        %7910 = vmatmul.mubr.bf16.gmra.mrb[0].mxu0 %v6533
        %v7911 = vpop.f32.mrb[0].mxu0
        %v7912 = vadd.f32 0.0, %v7911
        %v7913 = vpop.f32.mrb[0].mxu0
        %v7914 = vpop.f32.mrb[0].mxu0
        %v7915 = vadd.f32 0.0, %v7914
        %v7916 = vpop.f32.mrb[0].mxu0
        %7917 = vdwg.mxu0
        %7918 = vmatprep.subr.bf16.mxu0 0
        %7919 = vmatpush1.bf16.msra.mxu0 %v7725
        %7920 = vmatprep.subr.bf16.mxu0 0
        %7921 = vmatpush1.bf16.msra.mxu0 %v7726
        %7922 = vmatprep.subr.bf16.mxu0 0
        %7923 = vmatpush1.bf16.msra.mxu0 %v7727
        %7924 = vmatprep.subr.bf16.mxu0 0
        %7925 = vmatpush1.bf16.msra.mxu0 %v7728
        %7926 = vmatprep.subr.bf16.mxu0 0
        %7927 = vmatpush1.bf16.msra.mxu0 %v7729
        %7928 = vmatprep.subr.bf16.mxu0 0
        %7929 = vmatpush1.bf16.msra.mxu0 %v7730
        %7930 = vmatprep.subr.bf16.mxu0 0
        %7931 = vmatpush1.bf16.msra.mxu0 %v7731
        %7932 = vmatprep.subr.bf16.mxu0 0
        %7933 = vmatpush1.bf16.msra.mxu0 %v7732
        %7934 = vmatprep.subr.bf16.mxu0 0
        %7935 = vmatpush1.bf16.msra.mxu0 0
        %7936 = vmatprep.subr.bf16.mxu0 0
        %7937 = vmatpush1.bf16.msra.mxu0 0
        %7938 = vmatprep.subr.bf16.mxu0 0
        %7939 = vmatpush1.bf16.msra.mxu0 0
        %7940 = vmatprep.subr.bf16.mxu0 0
        %7941 = vmatpush1.bf16.msra.mxu0 0
        %7942 = vmatprep.subr.bf16.mxu0 0
        %7943 = vmatpush1.bf16.msra.mxu0 0
        %7944 = vmatprep.subr.bf16.mxu0 0
        %7945 = vmatpush1.bf16.msra.mxu0 0
        %7946 = vmatprep.subr.bf16.mxu0 0
        %7947 = vmatpush1.bf16.msra.mxu0 0
        %7948 = vmatprep.subr.bf16.mxu0 0
        %7949 = vmatpush1.bf16.msra.mxu0 0
        %7950 = vmatprep.mubr.bf16.mxu0 0
        %7951 = vmatmul.mubr.bf16.gmra.mrb[0].mxu0 %v6490
        %v7952 = vpop.f32.mrb[0].mxu0
        %v7953 = vadd.f32 %v7792, %v7952
        %v7954 = vpop.f32.mrb[0].mxu0
        %v7955 = vpop.f32.mrb[0].mxu0
        %v7956 = vadd.f32 %v7795, %v7955
        %v7957 = vpop.f32.mrb[0].mxu0
        %7958 = vmatprep.mubr.bf16.mxu0 0
        %7959 = vmatmul.mubr.bf16.gmra.mrb[0].mxu0 %v6493
        %v7960 = vpop.f32.mrb[0].mxu0
        %v7961 = vadd.f32 %v7800, %v7960
        %v7962 = vpop.f32.mrb[0].mxu0
        %v7963 = vpop.f32.mrb[0].mxu0
        %v7964 = vadd.f32 %v7803, %v7963
        %v7965 = vpop.f32.mrb[0].mxu0
        %7966 = vmatprep.mubr.bf16.mxu0 0
        %7967 = vmatmul.mubr.bf16.gmra.mrb[0].mxu0 %v6496
        %v7968 = vpop.f32.mrb[0].mxu0
        %v7969 = vadd.f32 %v7808, %v7968
        %v7970 = vpop.f32.mrb[0].mxu0
        %v7971 = vpop.f32.mrb[0].mxu0
        %v7972 = vadd.f32 %v7811, %v7971
        %v7973 = vpop.f32.mrb[0].mxu0
        %7974 = vmatprep.mubr.bf16.mxu0 0
        %7975 = vmatmul.mubr.bf16.gmra.mrb[0].mxu0 %v6499
        %v7976 = vpop.f32.mrb[0].mxu0
        %v7977 = vadd.f32 %v7816, %v7976
        %v7978 = vpop.f32.mrb[0].mxu0
        %v7979 = vpop.f32.mrb[0].mxu0
        %v7980 = vadd.f32 %v7819, %v7979
        %v7981 = vpop.f32.mrb[0].mxu0
        %7982 = vmatprep.mubr.bf16.mxu0 0
        %7983 = vmatmul.mubr.bf16.gmra.mrb[0].mxu0 %v6502
        %v7984 = vpop.f32.mrb[0].mxu0
        %v7985 = vadd.f32 %v7824, %v7984
        %v7986 = vpop.f32.mrb[0].mxu0
        %v7987 = vpop.f32.mrb[0].mxu0
        %v7988 = vadd.f32 %v7827, %v7987
        %v7989 = vpop.f32.mrb[0].mxu0
        %7990 = vmatprep.mubr.bf16.mxu0 0
        %7991 = vmatmul.mubr.bf16.gmra.mrb[0].mxu0 %v6505
        %v7992 = vpop.f32.mrb[0].mxu0
        %v7993 = vadd.f32 %v7832, %v7992
        %v7994 = vpop.f32.mrb[0].mxu0
        %v7995 = vpop.f32.mrb[0].mxu0
        %v7996 = vadd.f32 %v7835, %v7995
        %v7997 = vpop.f32.mrb[0].mxu0
        %7998 = vmatprep.mubr.bf16.mxu0 0
        %7999 = vmatmul.mubr.bf16.gmra.mrb[0].mxu0 %v6508
        %v8000 = vpop.f32.mrb[0].mxu0
        %v8001 = vadd.f32 %v7840, %v8000
        %v8002 = vpop.f32.mrb[0].mxu0
        %v8003 = vpop.f32.mrb[0].mxu0
        %v8004 = vadd.f32 %v7843, %v8003
        %v8005 = vpop.f32.mrb[0].mxu0
        %8006 = vmatprep.mubr.bf16.mxu0 0
        %8007 = vmatmul.mubr.bf16.gmra.mrb[0].mxu0 %v6511
        %v8008 = vpop.f32.mrb[0].mxu0
        %v8009 = vadd.f32 %v7848, %v8008
        %v8010 = vpop.f32.mrb[0].mxu0
        %v8011 = vpop.f32.mrb[0].mxu0
        %v8012 = vadd.f32 %v7851, %v8011
        %v8013 = vpop.f32.mrb[0].mxu0
        %8014 = vmatprep.mubr.bf16.mxu0 0
        %8015 = vmatmul.mubr.bf16.gmra.mrb[0].mxu0 %v6514
        %v8016 = vpop.f32.mrb[0].mxu0
        %v8017 = vadd.f32 %v7856, %v8016
        %v8018 = vpop.f32.mrb[0].mxu0
        %v8019 = vpop.f32.mrb[0].mxu0
        %v8020 = vadd.f32 %v7859, %v8019
        %v8021 = vpop.f32.mrb[0].mxu0
        %8022 = vmatprep.mubr.bf16.mxu0 0
        %8023 = vmatmul.mubr.bf16.gmra.mrb[0].mxu0 %v6517
        %v8024 = vpop.f32.mrb[0].mxu0
        %v8025 = vadd.f32 %v7864, %v8024
        %v8026 = vpop.f32.mrb[0].mxu0
        %v8027 = vpop.f32.mrb[0].mxu0
        %v8028 = vadd.f32 %v7867, %v8027
        %v8029 = vpop.f32.mrb[0].mxu0
        %8030 = vmatprep.mubr.bf16.mxu0 0
        %8031 = vmatmul.mubr.bf16.gmra.mrb[0].mxu0 %v6520
        %v8032 = vpop.f32.mrb[0].mxu0
        %v8033 = vadd.f32 %v7872, %v8032
        %v8034 = vpop.f32.mrb[0].mxu0
        %v8035 = vpop.f32.mrb[0].mxu0
        %v8036 = vadd.f32 %v7875, %v8035
        %v8037 = vpop.f32.mrb[0].mxu0
        %8038 = vmatprep.mubr.bf16.mxu0 0
        %8039 = vmatmul.mubr.bf16.gmra.mrb[0].mxu0 %v6523
        %v8040 = vpop.f32.mrb[0].mxu0
        %v8041 = vadd.f32 %v7880, %v8040
        %v8042 = vpop.f32.mrb[0].mxu0
        %v8043 = vpop.f32.mrb[0].mxu0
        %v8044 = vadd.f32 %v7883, %v8043
        %v8045 = vpop.f32.mrb[0].mxu0
        %8046 = vmatprep.mubr.bf16.mxu0 0
        %8047 = vmatmul.mubr.bf16.gmra.mrb[0].mxu0 %v6526
        %v8048 = vpop.f32.mrb[0].mxu0
        %v8049 = vadd.f32 %v7888, %v8048
        %v8050 = vpop.f32.mrb[0].mxu0
        %v8051 = vpop.f32.mrb[0].mxu0
        %v8052 = vadd.f32 %v7891, %v8051
        %v8053 = vpop.f32.mrb[0].mxu0
        %8054 = vmatprep.mubr.bf16.mxu0 0
        %8055 = vmatmul.mubr.bf16.gmra.mrb[0].mxu0 %v6529
        %v8056 = vpop.f32.mrb[0].mxu0
        %v8057 = vadd.f32 %v7896, %v8056
        %v8058 = vpop.f32.mrb[0].mxu0
        %v8059 = vpop.f32.mrb[0].mxu0
        %v8060 = vadd.f32 %v7899, %v8059
        %v8061 = vpop.f32.mrb[0].mxu0
        %8062 = vmatprep.mubr.bf16.mxu0 0
        %8063 = vmatmul.mubr.bf16.gmra.mrb[0].mxu0 %v6532
        %v8064 = vpop.f32.mrb[0].mxu0
        %v8065 = vadd.f32 %v7904, %v8064
        %v8066 = vpop.f32.mrb[0].mxu0
        %v8067 = vpop.f32.mrb[0].mxu0
        %v8068 = vadd.f32 %v7907, %v8067
        %v8069 = vpop.f32.mrb[0].mxu0
        %8070 = vmatprep.mubr.bf16.mxu0 0
        %8071 = vmatmul.mubr.bf16.gmra.mrb[0].mxu0 %v6535
        %v8072 = vpop.f32.mrb[0].mxu0
        %v8073 = vadd.f32 %v7912, %v8072
        %v8074 = vpop.f32.mrb[0].mxu0
        %v8075 = vpop.f32.mrb[0].mxu0
        %v8076 = vadd.f32 %v7915, %v8075
        %v8077 = vpop.f32.mrb[0].mxu0
        %8078 = vdwg.mxu0
        %v8079 = vadd.f32 %v7439, %v7953
        %v8080 = vadd.f32 %v7442, %v7956
        %v8081 = vadd.f32 %v7447, %v7961
        %v8082 = vadd.f32 %v7450, %v7964
        %v8083 = vadd.f32 %v7455, %v7969
        %v8084 = vadd.f32 %v7458, %v7972
        %v8085 = vadd.f32 %v7463, %v7977
        %v8086 = vadd.f32 %v7466, %v7980
        %v8087 = vadd.f32 %v7471, %v7985
        %v8088 = vadd.f32 %v7474, %v7988
        %v8089 = vadd.f32 %v7479, %v7993
        %v8090 = vadd.f32 %v7482, %v7996
        %v8091 = vadd.f32 %v7487, %v8001
        %v8092 = vadd.f32 %v7490, %v8004
        %v8093 = vadd.f32 %v7495, %v8009
        %v8094 = vadd.f32 %v7498, %v8012
        %v8095 = vadd.f32 %v7503, %v8017
        %v8096 = vadd.f32 %v7506, %v8020
        %v8097 = vadd.f32 %v7511, %v8025
        %v8098 = vadd.f32 %v7514, %v8028
        %v8099 = vadd.f32 %v7519, %v8033
        %v8100 = vadd.f32 %v7522, %v8036
        %v8101 = vadd.f32 %v7527, %v8041
        %v8102 = vadd.f32 %v7530, %v8044
        %v8103 = vadd.f32 %v7535, %v8049
        %v8104 = vadd.f32 %v7538, %v8052
        %v8105 = vadd.f32 %v7543, %v8057
        %v8106 = vadd.f32 %v7546, %v8060
        %v8107 = vadd.f32 %v7551, %v8065
        %v8108 = vadd.f32 %v7554, %v8068
        %v8109 = vadd.f32 %v7559, %v8073
        %v8110 = vadd.f32 %v7562, %v8076
        %v8111 = vld [vmem:[%s2 + $0x2] sm:$0x1]
        %v8112 = vlaneseq
        %v8113 = vshrl.u32 %v8112, 7
        %v8114 = vsub.s32 0, %v8113
        %v8115 = vrot.slane %v8111, %v8114
        %v8116 = vmul.f32 %v8079, %v8115
        %v8117 = vmul.f32 %v8080, %v8115
        %v8118 = vmul.f32 %v8081, %v8115
        %v8119 = vmul.f32 %v8082, %v8115
        %v8120 = vmul.f32 %v8083, %v8115
        %v8121 = vmul.f32 %v8084, %v8115
        %v8122 = vmul.f32 %v8085, %v8115
        %v8123 = vmul.f32 %v8086, %v8115
        %v8124 = vmul.f32 %v8087, %v8115
        %v8125 = vmul.f32 %v8088, %v8115
        %v8126 = vmul.f32 %v8089, %v8115
        %v8127 = vmul.f32 %v8090, %v8115
        %v8128 = vmul.f32 %v8091, %v8115
        %v8129 = vmul.f32 %v8092, %v8115
        %v8130 = vmul.f32 %v8093, %v8115
        %v8131 = vmul.f32 %v8094, %v8115
        %v8132 = vmul.f32 %v8095, %v8115
        %v8133 = vmul.f32 %v8096, %v8115
        %v8134 = vmul.f32 %v8097, %v8115
        %v8135 = vmul.f32 %v8098, %v8115
        %v8136 = vmul.f32 %v8099, %v8115
        %v8137 = vmul.f32 %v8100, %v8115
        %v8138 = vmul.f32 %v8101, %v8115
        %v8139 = vmul.f32 %v8102, %v8115
        %v8140 = vmul.f32 %v8103, %v8115
        %v8141 = vmul.f32 %v8104, %v8115
        %v8142 = vmul.f32 %v8105, %v8115
        %v8143 = vmul.f32 %v8106, %v8115
        %v8144 = vmul.f32 %v8107, %v8115
        %v8145 = vmul.f32 %v8108, %v8115
        %v8146 = vmul.f32 %v8109, %v8115
        %v8147 = vmul.f32 %v8110, %v8115
        %v8148 = vld [vmem:[%s3 + $0x2] sm:$0x1]
        %v8149 = vlaneseq
        %v8150 = vshrl.u32 %v8149, 7
        %v8151 = vsub.s32 0, %v8150
        %v8152 = vrot.slane %v8148, %v8151
        %v8153 = vadd.f32 %v8116, %v8152
        %v8154 = vadd.f32 %v8117, %v8152
        %v8155 = vadd.f32 %v8118, %v8152
        %v8156 = vadd.f32 %v8119, %v8152
        %v8157 = vadd.f32 %v8120, %v8152
        %v8158 = vadd.f32 %v8121, %v8152
        %v8159 = vadd.f32 %v8122, %v8152
        %v8160 = vadd.f32 %v8123, %v8152
        %v8161 = vadd.f32 %v8124, %v8152
        %v8162 = vadd.f32 %v8125, %v8152
        %v8163 = vadd.f32 %v8126, %v8152
        %v8164 = vadd.f32 %v8127, %v8152
        %v8165 = vadd.f32 %v8128, %v8152
        %v8166 = vadd.f32 %v8129, %v8152
        %v8167 = vadd.f32 %v8130, %v8152
        %v8168 = vadd.f32 %v8131, %v8152
        %v8169 = vadd.f32 %v8132, %v8152
        %v8170 = vadd.f32 %v8133, %v8152
        %v8171 = vadd.f32 %v8134, %v8152
        %v8172 = vadd.f32 %v8135, %v8152
        %v8173 = vadd.f32 %v8136, %v8152
        %v8174 = vadd.f32 %v8137, %v8152
        %v8175 = vadd.f32 %v8138, %v8152
        %v8176 = vadd.f32 %v8139, %v8152
        %v8177 = vadd.f32 %v8140, %v8152
        %v8178 = vadd.f32 %v8141, %v8152
        %v8179 = vadd.f32 %v8142, %v8152
        %v8180 = vadd.f32 %v8143, %v8152
        %v8181 = vadd.f32 %v8144, %v8152
        %v8182 = vadd.f32 %v8145, %v8152
        %v8183 = vadd.f32 %v8146, %v8152
        %v8184 = vadd.f32 %v8147, %v8152
        %v8185 = vmax.f32 %v8153, 0.0
        %v8186 = vmax.f32 %v8154, 0.0
        %v8187 = vmax.f32 %v8155, 0.0
        %v8188 = vmax.f32 %v8156, 0.0
        %v8189 = vmax.f32 %v8157, 0.0
        %v8190 = vmax.f32 %v8158, 0.0
        %v8191 = vmax.f32 %v8159, 0.0
        %v8192 = vmax.f32 %v8160, 0.0
        %v8193 = vmax.f32 %v8161, 0.0
        %v8194 = vmax.f32 %v8162, 0.0
        %v8195 = vmax.f32 %v8163, 0.0
        %v8196 = vmax.f32 %v8164, 0.0
        %v8197 = vmax.f32 %v8165, 0.0
        %v8198 = vmax.f32 %v8166, 0.0
        %v8199 = vmax.f32 %v8167, 0.0
        %v8200 = vmax.f32 %v8168, 0.0
        %v8201 = vmax.f32 %v8169, 0.0
        %v8202 = vmax.f32 %v8170, 0.0
        %v8203 = vmax.f32 %v8171, 0.0
        %v8204 = vmax.f32 %v8172, 0.0
        %v8205 = vmax.f32 %v8173, 0.0
        %v8206 = vmax.f32 %v8174, 0.0
        %v8207 = vmax.f32 %v8175, 0.0
        %v8208 = vmax.f32 %v8176, 0.0
        %v8209 = vmax.f32 %v8177, 0.0
        %v8210 = vmax.f32 %v8178, 0.0
        %v8211 = vmax.f32 %v8179, 0.0
        %v8212 = vmax.f32 %v8180, 0.0
        %v8213 = vmax.f32 %v8181, 0.0
        %v8214 = vmax.f32 %v8182, 0.0
        %v8215 = vmax.f32 %v8183, 0.0
        %v8216 = vmax.f32 %v8184, 0.0
        %v8217 = vld [vmem:[%s4] sm:$0x1]
        %v8219 = vlaneseq
        %v8220 = vshrl.u32 %v8219, 7
        %v8221 = vsub.s32 0, %v8220
        %v8222 = vrot.slane %v8217, %v8221
        %v8224 = vmul.f32 %v8185, %v8222
        %v8225 = vmul.f32 %v8186, %v8222
        %v8226 = vmul.f32 %v8187, %v8222
        %v8227 = vmul.f32 %v8188, %v8222
        %v8228 = vmul.f32 %v8189, %v8222
        %v8229 = vmul.f32 %v8190, %v8222
        %v8230 = vmul.f32 %v8191, %v8222
        %v8231 = vmul.f32 %v8192, %v8222
        %v8232 = vmul.f32 %v8193, %v8222
        %v8233 = vmul.f32 %v8194, %v8222
        %v8234 = vmul.f32 %v8195, %v8222
        %v8235 = vmul.f32 %v8196, %v8222
        %v8236 = vmul.f32 %v8197, %v8222
        %v8237 = vmul.f32 %v8198, %v8222
        %v8238 = vmul.f32 %v8199, %v8222
        %v8239 = vmul.f32 %v8200, %v8222
        %v8240 = vmul.f32 %v8201, %v8222
        %v8241 = vmul.f32 %v8202, %v8222
        %v8242 = vmul.f32 %v8203, %v8222
        %v8243 = vmul.f32 %v8204, %v8222
        %v8244 = vmul.f32 %v8205, %v8222
        %v8245 = vmul.f32 %v8206, %v8222
        %v8246 = vmul.f32 %v8207, %v8222
        %v8247 = vmul.f32 %v8208, %v8222
        %v8248 = vmul.f32 %v8209, %v8222
        %v8249 = vmul.f32 %v8210, %v8222
        %v8250 = vmul.f32 %v8211, %v8222
        %v8251 = vmul.f32 %v8212, %v8222
        %v8252 = vmul.f32 %v8213, %v8222
        %v8253 = vmul.f32 %v8214, %v8222
        %v8254 = vmul.f32 %v8215, %v8222
        %v8255 = vmul.f32 %v8216, %v8222
        %8256 = vadd.xlane.f32.xlu0 %v8224
        %v8257 = vpop.xlane.xlu0 %8256
        %8258 = vadd.xlane.f32.xlu0 %v8225
        %v8259 = vpop.xlane.xlu0 %8258
        %8260 = vadd.xlane.f32.xlu0 %v8226
        %v8261 = vpop.xlane.xlu0 %8260
        %8262 = vadd.xlane.f32.xlu0 %v8227
        %v8263 = vpop.xlane.xlu0 %8262
        %8264 = vadd.xlane.f32.xlu0 %v8228
        %v8265 = vpop.xlane.xlu0 %8264
        %8266 = vadd.xlane.f32.xlu0 %v8229
        %v8267 = vpop.xlane.xlu0 %8266
        %8268 = vadd.xlane.f32.xlu0 %v8230
        %v8269 = vpop.xlane.xlu0 %8268
        %8270 = vadd.xlane.f32.xlu0 %v8231
        %v8271 = vpop.xlane.xlu0 %8270
        %8272 = vadd.xlane.f32.xlu0 %v8232
        %v8273 = vpop.xlane.xlu0 %8272
        %8274 = vadd.xlane.f32.xlu0 %v8233
        %v8275 = vpop.xlane.xlu0 %8274
        %8276 = vadd.xlane.f32.xlu0 %v8234
        %v8277 = vpop.xlane.xlu0 %8276
        %8278 = vadd.xlane.f32.xlu0 %v8235
        %v8279 = vpop.xlane.xlu0 %8278
        %8280 = vadd.xlane.f32.xlu0 %v8236
        %v8281 = vpop.xlane.xlu0 %8280
        %8282 = vadd.xlane.f32.xlu0 %v8237
        %v8283 = vpop.xlane.xlu0 %8282
        %8284 = vadd.xlane.f32.xlu0 %v8238
        %v8285 = vpop.xlane.xlu0 %8284
        %8286 = vadd.xlane.f32.xlu0 %v8239
        %v8287 = vpop.xlane.xlu0 %8286
        %8288 = vadd.xlane.f32.xlu0 %v8240
        %v8289 = vpop.xlane.xlu0 %8288
        %8290 = vadd.xlane.f32.xlu0 %v8241
        %v8291 = vpop.xlane.xlu0 %8290
        %8292 = vadd.xlane.f32.xlu0 %v8242
        %v8293 = vpop.xlane.xlu0 %8292
        %8294 = vadd.xlane.f32.xlu0 %v8243
        %v8295 = vpop.xlane.xlu0 %8294
        %8296 = vadd.xlane.f32.xlu0 %v8244
        %v8297 = vpop.xlane.xlu0 %8296
        %8298 = vadd.xlane.f32.xlu0 %v8245
        %v8299 = vpop.xlane.xlu0 %8298
        %8300 = vadd.xlane.f32.xlu0 %v8246
        %v8301 = vpop.xlane.xlu0 %8300
        %8302 = vadd.xlane.f32.xlu0 %v8247
        %v8303 = vpop.xlane.xlu0 %8302
        %8304 = vadd.xlane.f32.xlu0 %v8248
        %v8305 = vpop.xlane.xlu0 %8304
        %8306 = vadd.xlane.f32.xlu0 %v8249
        %v8307 = vpop.xlane.xlu0 %8306
        %8308 = vadd.xlane.f32.xlu0 %v8250
        %v8309 = vpop.xlane.xlu0 %8308
        %8310 = vadd.xlane.f32.xlu0 %v8251
        %v8311 = vpop.xlane.xlu0 %8310
        %8312 = vadd.xlane.f32.xlu0 %v8252
        %v8313 = vpop.xlane.xlu0 %8312
        %8314 = vadd.xlane.f32.xlu0 %v8253
        %v8315 = vpop.xlane.xlu0 %8314
        %8316 = vadd.xlane.f32.xlu0 %v8254
        %v8317 = vpop.xlane.xlu0 %8316
        %8318 = vadd.xlane.f32.xlu0 %v8255
        %v8319 = vpop.xlane.xlu0 %8318
        %v8320 = vld [vmem:[#allocation3] sm:$0x1]
        %s8321 = vtos %v8320
        %v8322 = vstv %s8321
        %v8323 = vadd.f32 %v8257, %v8322
        %v8324 = vadd.f32 %v8259, %v8322
        %v8325 = vadd.f32 %v8261, %v8322
        %v8326 = vadd.f32 %v8263, %v8322
        %v8327 = vadd.f32 %v8265, %v8322
        %v8328 = vadd.f32 %v8267, %v8322
        %v8329 = vadd.f32 %v8269, %v8322
        %v8330 = vadd.f32 %v8271, %v8322
        %v8331 = vadd.f32 %v8273, %v8322
        %v8332 = vadd.f32 %v8275, %v8322
        %v8333 = vadd.f32 %v8277, %v8322
        %v8334 = vadd.f32 %v8279, %v8322
        %v8335 = vadd.f32 %v8281, %v8322
        %v8336 = vadd.f32 %v8283, %v8322
        %v8337 = vadd.f32 %v8285, %v8322
        %v8338 = vadd.f32 %v8287, %v8322
        %v8339 = vadd.f32 %v8289, %v8322
        %v8340 = vadd.f32 %v8291, %v8322
        %v8341 = vadd.f32 %v8293, %v8322
        %v8342 = vadd.f32 %v8295, %v8322
        %v8343 = vadd.f32 %v8297, %v8322
        %v8344 = vadd.f32 %v8299, %v8322
        %v8345 = vadd.f32 %v8301, %v8322
        %v8346 = vadd.f32 %v8303, %v8322
        %v8347 = vadd.f32 %v8305, %v8322
        %v8348 = vadd.f32 %v8307, %v8322
        %v8349 = vadd.f32 %v8309, %v8322
        %v8350 = vadd.f32 %v8311, %v8322
        %v8351 = vadd.f32 %v8313, %v8322
        %v8352 = vadd.f32 %v8315, %v8322
        %v8353 = vadd.f32 %v8317, %v8322
        %v8354 = vadd.f32 %v8319, %v8322
        %v8387 = vlaneseq
        %v8388 = vand.u32 %v8387, 127
        %v8389 = vlaneseq
        %v8390 = vshrl.u32 %v8389, 7
        %v8391 = vsub.s32 %v8388, %v8390
        %v8392 = vrot.slane %v8323, %v8391
        %v8393 = vadd.s32 %v8388, 4294967288
        %v8394 = vlaneseq
        %v8395 = vshrl.u32 %v8394, 7
        %v8396 = vsub.s32 %v8393, %v8395
        %v8397 = vrot.slane %v8324, %v8396
        %vm8398 = vcmask 130112
        %v8399 = vsel %vm8398, %v8397, %v8392
        %v8400 = vlaneseq
        %v8401 = vshrl.u32 %v8400, 7
        %v8402 = vsub.s32 %v8388, %v8401
        %v8403 = vrot.slane %v8325, %v8402
        %v8404 = vlaneseq
        %v8405 = vshrl.u32 %v8404, 7
        %v8406 = vsub.s32 %v8393, %v8405
        %v8407 = vrot.slane %v8326, %v8406
        %v8408 = vsel %vm8398, %v8407, %v8403
        %v8409 = vlaneseq
        %v8410 = vshrl.u32 %v8409, 7
        %v8411 = vsub.s32 %v8388, %v8410
        %v8412 = vrot.slane %v8327, %v8411
        %v8413 = vlaneseq
        %v8414 = vshrl.u32 %v8413, 7
        %v8415 = vsub.s32 %v8393, %v8414
        %v8416 = vrot.slane %v8328, %v8415
        %v8417 = vsel %vm8398, %v8416, %v8412
        %v8418 = vlaneseq
        %v8419 = vshrl.u32 %v8418, 7
        %v8420 = vsub.s32 %v8388, %v8419
        %v8421 = vrot.slane %v8329, %v8420
        %v8422 = vlaneseq
        %v8423 = vshrl.u32 %v8422, 7
        %v8424 = vsub.s32 %v8393, %v8423
        %v8425 = vrot.slane %v8330, %v8424
        %v8426 = vsel %vm8398, %v8425, %v8421
        %v8427 = vlaneseq
        %v8428 = vshrl.u32 %v8427, 7
        %v8429 = vsub.s32 %v8388, %v8428
        %v8430 = vrot.slane %v8331, %v8429
        %v8431 = vlaneseq
        %v8432 = vshrl.u32 %v8431, 7
        %v8433 = vsub.s32 %v8393, %v8432
        %v8434 = vrot.slane %v8332, %v8433
        %v8435 = vsel %vm8398, %v8434, %v8430
        %v8436 = vlaneseq
        %v8437 = vshrl.u32 %v8436, 7
        %v8438 = vsub.s32 %v8388, %v8437
        %v8439 = vrot.slane %v8333, %v8438
        %v8440 = vlaneseq
        %v8441 = vshrl.u32 %v8440, 7
        %v8442 = vsub.s32 %v8393, %v8441
        %v8443 = vrot.slane %v8334, %v8442
        %v8444 = vsel %vm8398, %v8443, %v8439
        %v8445 = vlaneseq
        %v8446 = vshrl.u32 %v8445, 7
        %v8447 = vsub.s32 %v8388, %v8446
        %v8448 = vrot.slane %v8335, %v8447
        %v8449 = vlaneseq
        %v8450 = vshrl.u32 %v8449, 7
        %v8451 = vsub.s32 %v8393, %v8450
        %v8452 = vrot.slane %v8336, %v8451
        %v8453 = vsel %vm8398, %v8452, %v8448
        %v8454 = vlaneseq
        %v8455 = vshrl.u32 %v8454, 7
        %v8456 = vsub.s32 %v8388, %v8455
        %v8457 = vrot.slane %v8337, %v8456
        %v8458 = vlaneseq
        %v8459 = vshrl.u32 %v8458, 7
        %v8460 = vsub.s32 %v8393, %v8459
        %v8461 = vrot.slane %v8338, %v8460
        %v8462 = vsel %vm8398, %v8461, %v8457
        %v8463 = vlaneseq
        %v8464 = vshrl.u32 %v8463, 7
        %v8465 = vsub.s32 %v8388, %v8464
        %v8466 = vrot.slane %v8339, %v8465
        %v8467 = vlaneseq
        %v8468 = vshrl.u32 %v8467, 7
        %v8469 = vsub.s32 %v8393, %v8468
        %v8470 = vrot.slane %v8340, %v8469
        %v8471 = vsel %vm8398, %v8470, %v8466
        %v8472 = vlaneseq
        %v8473 = vshrl.u32 %v8472, 7
        %v8474 = vsub.s32 %v8388, %v8473
        %v8475 = vrot.slane %v8341, %v8474
        %v8476 = vlaneseq
        %v8477 = vshrl.u32 %v8476, 7
        %v8478 = vsub.s32 %v8393, %v8477
        %v8479 = vrot.slane %v8342, %v8478
        %v8480 = vsel %vm8398, %v8479, %v8475
        %v8481 = vlaneseq
        %v8482 = vshrl.u32 %v8481, 7
        %v8483 = vsub.s32 %v8388, %v8482
        %v8484 = vrot.slane %v8343, %v8483
        %v8485 = vlaneseq
        %v8486 = vshrl.u32 %v8485, 7
        %v8487 = vsub.s32 %v8393, %v8486
        %v8488 = vrot.slane %v8344, %v8487
        %v8489 = vsel %vm8398, %v8488, %v8484
        %v8490 = vlaneseq
        %v8491 = vshrl.u32 %v8490, 7
        %v8492 = vsub.s32 %v8388, %v8491
        %v8493 = vrot.slane %v8345, %v8492
        %v8494 = vlaneseq
        %v8495 = vshrl.u32 %v8494, 7
        %v8496 = vsub.s32 %v8393, %v8495
        %v8497 = vrot.slane %v8346, %v8496
        %v8498 = vsel %vm8398, %v8497, %v8493
        %v8499 = vlaneseq
        %v8500 = vshrl.u32 %v8499, 7
        %v8501 = vsub.s32 %v8388, %v8500
        %v8502 = vrot.slane %v8347, %v8501
        %v8503 = vlaneseq
        %v8504 = vshrl.u32 %v8503, 7
        %v8505 = vsub.s32 %v8393, %v8504
        %v8506 = vrot.slane %v8348, %v8505
        %v8507 = vsel %vm8398, %v8506, %v8502
        %v8508 = vlaneseq
        %v8509 = vshrl.u32 %v8508, 7
        %v8510 = vsub.s32 %v8388, %v8509
        %v8511 = vrot.slane %v8349, %v8510
        %v8512 = vlaneseq
        %v8513 = vshrl.u32 %v8512, 7
        %v8514 = vsub.s32 %v8393, %v8513
        %v8515 = vrot.slane %v8350, %v8514
        %v8516 = vsel %vm8398, %v8515, %v8511
        %v8517 = vlaneseq
        %v8518 = vshrl.u32 %v8517, 7
        %v8519 = vsub.s32 %v8388, %v8518
        %v8520 = vrot.slane %v8351, %v8519
        %v8521 = vlaneseq
        %v8522 = vshrl.u32 %v8521, 7
        %v8523 = vsub.s32 %v8393, %v8522
        %v8524 = vrot.slane %v8352, %v8523
        %v8525 = vsel %vm8398, %v8524, %v8520
        %v8526 = vlaneseq
        %v8527 = vshrl.u32 %v8526, 7
        %v8528 = vsub.s32 %v8388, %v8527
        %v8529 = vrot.slane %v8353, %v8528
        %v8530 = vlaneseq
        %v8531 = vshrl.u32 %v8530, 7
        %v8532 = vsub.s32 %v8393, %v8531
        %v8533 = vrot.slane %v8354, %v8532
        %v8534 = vsel %vm8398, %v8533, %v8529
        %vm8535 = vcmask 1041409
        %v8536 = vsel %vm8535, %v8408, %v8399
        %vm8537 = vcmask 1042434
        %v8538 = vsel %vm8537, %v8417, %v8536
        %vm8539 = vcmask 1043459
        %v8540 = vsel %vm8539, %v8426, %v8538
        %vm8541 = vcmask 1044484
        %v8542 = vsel %vm8541, %v8435, %v8540
        %vm8543 = vcmask 1045509
        %v8544 = vsel %vm8543, %v8444, %v8542
        %vm8545 = vcmask 1046534
        %v8546 = vsel %vm8545, %v8453, %v8544
        %vm8547 = vcmask 1047559
        %v8548 = vsel %vm8547, %v8462, %v8546
        %v8549 = vsel %vm8535, %v8480, %v8471
        %v8550 = vsel %vm8537, %v8489, %v8549
        %v8551 = vsel %vm8539, %v8498, %v8550
        %v8552 = vsel %vm8541, %v8507, %v8551
        %v8553 = vsel %vm8543, %v8516, %v8552
        %v8554 = vsel %vm8545, %v8525, %v8553
        %v8555 = vsel %vm8547, %v8534, %v8554
        %vm8558 = vcmask 130048
        %8559 = vst.msk [vmem:[%s280] sm:$0xff] %vm8558, %v8548
        %8560 = vst.msk [vmem:[%s280 + $0x8] sm:$0xff] %vm8558, %v8555
        %s8561 = sand.u32 %s178, 1
        %s8562 = scalar_lea.sflag [#allocation6], %s8561
        %s8563 = sand.u32 %s178, 1
        %s8564 = smul.addr %s8563, 16
        %s8565 = scalar_lea.vmem [#allocation7], %s8564
        // Predicated region
        $region49: #{tpu_custom_call.1} parent=43 // pred_check
          %p8566 = pneg %p188
        $region50: #{tpu_custom_call.1} parent=43 // pred_check_branch
          %8568 = sbr.rel (%p8566) target = $region52
        $region51: #{tpu_custom_call.1} parent=43 // pred_region
          %s8569 = smul.u32 2, %s28
          %s8571 = ssub.s32 256, 256
          %8572 = vsyncadd %s8562, %s8571
          %s8573 = smul.addr %s27, 2
          %s8574 = sadd.s32 %s8569, %s8573
          %s8575 = smul.addr %s8574, 128
          %s8576 = scalar_lea.hbm %s6, %s8575
          %s8577 = sshll.u32 %s8565, 4
          %s8578 = int_to_ptr.vmem [resolvable:$true] %s8577
          %8583 = dma.vmem_to_hbm [thread:$0]  %s8578, 256, %s8576, %s8562, 128, 128, 8
        $region52: #{tpu_custom_call.1} parent=43 // pred_fallthru
          _
      $region44: #{tpu_custom_call.1} parent=5 // pred_fallthru
        _
      %p8584 = scmp.le.s32.totalorder 2, %s18
      // Predicated region
      $region53: #{tpu_custom_call.1} parent=5 // pred_check
        %p8585 = pneg %p8584
      $region54: #{tpu_custom_call.1} parent=5 // pred_check_branch
        %8587 = sbr.rel (%p8585) target = $region56
      $region55: #{tpu_custom_call.1} parent=5 // pred_region
        %s8588 = ssub.s32 %s18, 2
        // Predicated region
        $region57: #{tpu_custom_call.1} parent=55 // pred_check
          %p8589 = pneg %p194
        $region58: #{tpu_custom_call.1} parent=55 // pred_check_branch
          %8591 = sbr.rel (%p8589) target = $region60
        $region59: #{tpu_custom_call.1} parent=55 // pred_region
          %s8592 = sand.u32 %s179, 1
          %s8593 = scalar_lea.sflag [#allocation6], %s8592
          %s8594 = sand.u32 %s179, 1
          %s8595 = smul.addr %s8594, 16
          %s8596 = scalar_lea.vmem [#allocation7], %s8595
          %8597 = dma.done %s8593, 256
        $region60: #{tpu_custom_call.1} parent=55 // pred_fallthru
          _
      $region56: #{tpu_custom_call.1} parent=5 // pred_fallthru
        _
    $region6: #{tpu_custom_call.1} parent=1 // loop_footer
      %s22 = sadd.s32 1, %s18
    $region7: #{tpu_custom_call.1} parent=1 // loop_footer_branch
      %17 = sbr.rel target = $region3
    $region8: #{tpu_custom_call.1} parent=1 // loop_exit
      _
    %8598 = vsyncpa [#allocation5], 1
    %s8599 = scalar_lea.sflag [#allocation5], 1
    %8600 = vsyncpa %s8599, 1
    %8601 = vsyncpa [#allocation6], 1
    %s8602 = scalar_lea.sflag [#allocation6], 1
    %8603 = vsyncpa %s8602, 1

</llo_original>
